<compile_context>
chip_gen: v5e
topology: v5e:2x2
jax: 0.10.0
libtpu: 0.0.40
codegen_flags: <defaults>
</compile_context>

<pallas_src>
import jax
import jax.numpy as jnp
from jax import lax
from jax.experimental import pallas as pl
from jax.experimental.pallas import tpu as pltpu


def _round_up(x, m):
    return (x + m - 1) // m * m


LIN1_TK = 2304          # K tile: 4500 -> 4608 = 2 * 2304  =>  grid (2,)
NEG_INF = -1e30         # softmax mask for padded lin3 output lanes


# ---------------------------------------------------------------------------
# Kernel 1: fused  lin1 (streamed bf16 weight, f32 accumulation)
#           + bn1-shift + relu + lin2 + bn2 + relu + lin3 + softmax
#           (the whole tail lives in the last-k epilogue)
# ---------------------------------------------------------------------------
def _lin_tail_kernel(x_ref, w1_ref, shift1_ref, w2_ref, s2_ref, t2_ref,
                     w3_ref, b3_ref, o_ref, acc_ref):
    k = pl.program_id(0)

    @pl.when(k == 0)
    def _():
        acc_ref[...] = jnp.zeros_like(acc_ref)

    # bf16 x bf16 -> f32 accumulation on the MXU.  BN1's scale is already
    # folded into w1's columns, so only the shift remains for the epilogue.
    acc_ref[...] += jnp.dot(x_ref[...], w1_ref[...],
                            preferred_element_type=jnp.float32)

    @pl.when(k == pl.num_programs(0) - 1)
    def _():
        # lin1 epilogue (f32): + shift, relu
        h = jnp.maximum(acc_ref[...] + shift1_ref[...], 0.0)        # (Mp, 1024)
        # lin2 + bn2 fold + relu
        z = jnp.dot(h, w2_ref[...], preferred_element_type=jnp.float32)
        z = jnp.maximum(z * s2_ref[...] + t2_ref[...], 0.0)         # (Mp, 128)
        # lin3 + softmax.  b3's padding is -1e30 and w3's padded columns are
        # exactly 0, so padded lanes contribute exp(-1e30) == 0 to the
        # softmax denominator -> softmax over the 3 real classes is exact.
        z = (jnp.dot(z, w3_ref[...], preferred_element_type=jnp.float32)
             + b3_ref[...])
        m = jnp.max(z, axis=-1, keepdims=True)
        e = jnp.exp(z - m)
        o_ref[...] = e / jnp.sum(e, axis=-1, keepdims=True)


def lin_tail_fused(x_bf16, w1_p, shift1_p, w2_p, s2_p, t2_p, w3_p, b3_p, *, tk):
    Mp, K1p = x_bf16.shape
    _, N1p = w1_p.shape
    N2p = w2_p.shape[1]
    N3p = w3_p.shape[1]
    assert K1p % tk == 0 and Mp % 16 == 0
    grid = (K1p // tk,)
    return pl.pallas_call(
        _lin_tail_kernel,
        out_shape=jax.ShapeDtypeStruct((Mp, N3p), jnp.float32),
        grid_spec=pltpu.PrefetchScalarGridSpec(
            num_scalar_prefetch=0,
            grid=grid,
            in_specs=[
                pl.BlockSpec((Mp, tk), lambda k: (0, k)),      # x    (bf16)
                pl.BlockSpec((tk, N1p), lambda k: (k, 0)),     # w1   (bf16, streamed)
                pl.BlockSpec((1, N1p), lambda k: (0, 0)),      # shift1 (resident)
                pl.BlockSpec((N1p, N2p), lambda k: (0, 0)),    # w2     (resident)
                pl.BlockSpec((1, N2p), lambda k: (0, 0)),      # scale2
                pl.BlockSpec((1, N2p), lambda k: (0, 0)),      # shift2
                pl.BlockSpec((N2p, N3p), lambda k: (0, 0)),    # w3
                pl.BlockSpec((1, N3p), lambda k: (0, 0)),      # b3
            ],
            out_specs=pl.BlockSpec((Mp, N3p), lambda k: (0, 0)),
            scratch_shapes=[pltpu.VMEM((Mp, N1p), jnp.float32)],
        ),
        compiler_params=pltpu.CompilerParams(
            dimension_semantics=("arbitrary",),           # reduction axis
            vmem_limit_bytes=24 * 1024 * 1024,            # ~11 MiB working set
        ),
    )(x_bf16, w1_p, shift1_p, w2_p, s2_p, t2_p, w3_p, b3_p)


# ---------------------------------------------------------------------------
# Kernel 2: small single-step matmul + bias for the conv im2col matmuls
#           (lane-dense 128-wide output)
# ---------------------------------------------------------------------------
def _conv_matmul_kernel(p_ref, w_ref, b_ref, o_ref):
    o_ref[...] = (jnp.dot(p_ref[...], w_ref[...],
                          preferred_element_type=jnp.float32) + b_ref[...])


def conv2d_nhwc(x, w_mat_p, b_p, *, cout, ksize=5):
    """Valid conv, stride 1.  x: (B,H,W,Cin) NHWC f32.
    w_mat_p: (Kp, Coutp) pre-padded im2col weight, row order (ci, kh, kw)
    (matches lax.conv_general_dilated_patches' feature ordering).
    b_p: (1, Coutp)."""
    B, H, W_, Cin = x.shape
    OH, OW = H - ksize + 1, W_ - ksize + 1
    patches = lax.conv_general_dilated_patches(
        x, filter_shape=(ksize, ksize), window_strides=(1, 1),
        padding='VALID', dimension_numbers=('NHWC', 'HWIO', 'NHWC'))
    patches = patches.reshape(B * OH * OW, Cin * ksize * ksize)
    Kp, Coutp = w_mat_p.shape
    patches = jnp.pad(patches, ((0, 0), (0, Kp - patches.shape[1])))
    y = pl.pallas_call(
        _conv_matmul_kernel,
        out_shape=jax.ShapeDtypeStruct((B * OH * OW, Coutp), jnp.float32),
    )(patches, w_mat_p, b_p)
    return y[:, :cout].reshape(B, OH, OW, cout)


def adaptive_avg_pool_nhwc(x, out_hw):
    B, H, W_, C = x.shape
    OH, OW = out_hw
    if (H, W_) == (OH, OW):
        return x                       # identity for the 38x38 input path
    # TODO(synk): fractional (overlapping-window) adaptive pooling not implemented.
    assert H % OH == 0 and W_ % OW == 0
    return x.reshape(B, OH, H // OH, OW, W_ // OW, C).mean(axis=(2, 4))


# ---------------------------------------------------------------------------
# One-time parameter preparation: layout permutes + BN folding + all padding
# ---------------------------------------------------------------------------
def _bn_fold(lin_bias, gamma, beta, mean, var, eps=1e-5):
    inv = gamma / jnp.sqrt(var + eps)
    scale = inv
    shift = lin_bias * inv + (beta - mean * inv)
    return scale, shift


def prepare_params(p):
    """Expects PyTorch layouts: conv weights (Cout, Cin, KH, KW), linear
    weights (out_features, in_features), BatchNorm1d eval-mode stats."""
    f32 = jnp.float32
    pp = {}

    # conv weights -> im2col matrices (Cin*KH*KW, Cout), row order (ci,kh,kw);
    # rows zero-padded to 128 (patch dim), cols zero-padded to 128 (lane-dense).
    for name in ('conv1', 'conv2'):
        w = p[f'w_{name}'].astype(f32)                         # (Cout,Cin,KH,KW)
        cout = w.shape[0]
        w = jnp.transpose(w, (1, 2, 3, 0)).reshape(-1, cout)   # (Cin*KH*KW, Cout)
        kp = _round_up(w.shape[0], 128)
        cp = _round_up(cout, 128)
        pp[f'w_{name}_p'] = jnp.pad(w, ((0, kp - w.shape[0]), (0, cp - cout)))
        pp[f'b_{name}_p'] = jnp.pad(p[f'b_{name}'].astype(f32),
                                    (0, cp - cout)).reshape(1, cp)

    # lin1 + bn1: scale folded into weight columns (before the bf16 cast),
    # shift carries bias + bn shift.  Padded to (4608, 1024); pads are zero.
    s1, h1 = _bn_fold(p['b_lin1'], p['bn1_gamma'], p['bn1_beta'],
                      p['bn1_mean'], p['bn1_var'])
    w1 = p['w_lin1'].astype(f32).T * s1.astype(f32)[None, :]   # (4500, 1000)
    K1, N1 = w1.shape
    K1p, N1p = _round_up(K1, LIN1_TK), _round_up(N1, 128)
    pp['w_lin1_p'] = jnp.pad(w1, ((0, K1p - K1),
                                  (0, N1p - N1))).astype(jnp.bfloat16)
    pp['shift1_p'] = jnp.pad(h1.astype(f32), (0, N1p - N1)).reshape(1, N1p)

    # lin2 + bn2 fold; K padded to N1p (matches lin1's padded output), N -> 128.
    s2, h2 = _bn_fold(p['b_lin2'], p['bn2_gamma'], p['bn2_beta'],
                      p['bn2_mean'], p['bn2_var'])
    w2 = p['w_lin2'].astype(f32).T                             # (1000, 50)
    K2, N2 = w2.shape
    N2p = 128
    pp['w_lin2_p'] = jnp.zeros((N1p, N2p), f32).at[:K2, :N2].set(w2)
    pp['scale2_p'] = jnp.pad(s2.astype(f32), (0, N2p - N2)).reshape(1, N2p)
    pp['shift2_p'] = jnp.pad(h2.astype(f32), (0, N2p - N2)).reshape(1, N2p)

    # lin3: (50, 3) -> (128, 128).  Softmax-exactness invariants: padded
    # columns of w_lin3_p must stay EXACTLY 0 and padded entries of b_lin3_p
    # must stay -1e30, so padded lanes vanish from the softmax denominator.
    w3 = p['w_lin3'].astype(f32).T                             # (50, 3)
    K3, N3 = w3.shape
    N3p = 128
    pp['w_lin3_p'] = jnp.zeros((N2p, N3p), f32).at[:K3, :N3].set(w3)
    pp['b_lin3_p'] = jnp.full((1, N3p), NEG_INF, f32).at[0, :N3].set(
        p['b_lin3'].astype(f32))
    return pp


# ---------------------------------------------------------------------------
# Conv2 forward
# ---------------------------------------------------------------------------
def conv2_forward(x_nchw, pp):
    B = x_nchw.shape[0]
    x = jnp.transpose(x_nchw, (0, 2, 3, 1))                        # NCHW -> NHWC
    x = conv2d_nhwc(x, pp['w_conv1_p'], pp['b_conv1_p'], cout=4)   # (B,34,34,4)
    x = conv2d_nhwc(x, pp['w_conv2_p'], pp['b_conv2_p'], cout=5)   # (B,30,30,5)
    x = adaptive_avg_pool_nhwc(x, (30, 30))                        # identity here
    x = jnp.transpose(x, (0, 3, 1, 2)).reshape(B, -1)              # torch view order

    # Pad only the tiny activation to the pre-padded lin1 layout; cast to bf16.
    # Rows padded to 16 (bf16 sublane packing); padded rows produce finite
    # garbage that the final [:B] slice drops.
    Mp = _round_up(B, 16)
    K1p = pp['w_lin1_p'].shape[0]
    xp = jnp.pad(x, ((0, Mp - B), (0, K1p - x.shape[1]))).astype(jnp.bfloat16)

    out = lin_tail_fused(xp, pp['w_lin1_p'], pp['shift1_p'],
                         pp['w_lin2_p'], pp['scale2_p'], pp['shift2_p'],
                         pp['w_lin3_p'], pp['b_lin3_p'], tk=LIN1_TK)  # (Mp,128)
    return out[:B, :3]


if __name__ == "__main__":
    key = jax.random.PRNGKey(0)
    ks = jax.random.split(key, 12)
    B = 2
    # Input (B, 3, 38, 38): conv stack yields exactly 30x30, so the adaptive
    # pool is an identity and the flatten width is 5*30*30 = 4500.
    x = jax.random.normal(ks[0], (B, 3, 38, 38), jnp.float32)

    params = {
        # PyTorch layouts: conv (Cout, Cin, KH, KW), linear (out, in).
        'w_conv1': jax.random.normal(ks[1], (4, 3, 5, 5), jnp.float32) * 0.1,
        'b_conv1': jax.random.normal(ks[2], (4,), jnp.float32) * 0.1,
        'w_conv2': jax.random.normal(ks[3], (5, 4, 5, 5), jnp.float32) * 0.1,
        'b_conv2': jax.random.normal(ks[4], (5,), jnp.float32) * 0.1,
        'w_lin1': jax.random.normal(ks[5], (1000, 4500), jnp.float32) * 0.02,
        'b_lin1': jax.random.normal(ks[6], (1000,), jnp.float32) * 0.01,
        'w_lin2': jax.random.normal(ks[7], (50, 1000), jnp.float32) * 0.03,
        'b_lin2': jax.random.normal(ks[8], (50,), jnp.float32) * 0.01,
        'w_lin3': jax.random.normal(ks[9], (3, 50), jnp.float32) * 0.1,
        'b_lin3': jax.random.normal(ks[10], (3,), jnp.float32) * 0.01,
        # BatchNorm1d eval-mode (PyTorch default init / running stats).
        'bn1_gamma': jnp.ones((1000,), jnp.float32),
        'bn1_beta': jnp.zeros((1000,), jnp.float32),
        'bn1_mean': jnp.zeros((1000,), jnp.float32),
        'bn1_var': jnp.ones((1000,), jnp.float32),
        'bn2_gamma': jnp.ones((50,), jnp.float32),
        'bn2_beta': jnp.zeros((50,), jnp.float32),
        'bn2_mean': jnp.zeros((50,), jnp.float32),
        'bn2_var': jnp.ones((50,), jnp.float32),
    }

    # One-time fold + permute + pad + bf16 cast (outside the jitted forward).
    pp = prepare_params(params)

    fwd = jax.jit(conv2_forward)
    out = jax.block_until_ready(fwd(x, pp))

    assert out.shape == (B, 3)
    assert bool(jnp.all(jnp.isfinite(out)))
    assert bool(jnp.allclose(jnp.sum(out, axis=1), 1.0, atol=1e-5))
    print("KERNEL_OK")
</pallas_src>

<mosaic_0001>
module attributes {stable_mosaic.version = 11 : i64} {
  func.func @_conv_matmul_kernel(%arg0: memref<2312x128xf32, #tpu.memory_space<vmem>>, %arg1: memref<128x128xf32, #tpu.memory_space<vmem>>, %arg2: memref<1x128xf32, #tpu.memory_space<vmem>>, %arg3: memref<2312x128xf32, #tpu.memory_space<vmem>>) attributes {dimension_semantics = [], scalar_prefetch = 0 : i64, scratch_operands = 0 : i64, tpu.core_type = #tpu.core_type<tc>} {
    %c0 = arith.constant 0 : index
    %c0_0 = arith.constant 0 : index
    %0 = vector.load %arg0[%c0, %c0_0] : memref<2312x128xf32, #tpu.memory_space<vmem>>, vector<2312x128xf32>
    %c0_1 = arith.constant 0 : index
    %c0_2 = arith.constant 0 : index
    %1 = vector.load %arg1[%c0_1, %c0_2] : memref<128x128xf32, #tpu.memory_space<vmem>>, vector<128x128xf32>
    %cst = arith.constant dense<0.000000e+00> : vector<2312x128xf32>
    %2 = tpu.matmul %0, %1, %cst {dimension_numbers = #tpu.dot_dimension_numbers<[1], [0], [0], [1], [0, 0, 1, 1], [], []>} : vector<2312x128xf32>, vector<128x128xf32>, vector<2312x128xf32> -> vector<2312x128xf32>
    %c0_3 = arith.constant 0 : index
    %c0_4 = arith.constant 0 : index
    %3 = vector.load %arg2[%c0_3, %c0_4] : memref<1x128xf32, #tpu.memory_space<vmem>>, vector<1x128xf32>
    %4 = vector.broadcast %3 : vector<1x128xf32> to vector<2312x128xf32>
    %5 = arith.addf %2, %4 : vector<2312x128xf32>
    %c0_5 = arith.constant 0 : index
    %c0_6 = arith.constant 0 : index
    %6 = vector.load %arg3[%c0_5, %c0_6] : memref<2312x128xf32, #tpu.memory_space<vmem>>, vector<2312x128xf32>
    tpu.vector_store %arg3[%c0_5, %c0_6], %5 {strides = array<i32>} : memref<2312x128xf32, #tpu.memory_space<vmem>>, vector<2312x128xf32>,
    return
  }
}

module attributes {stable_mosaic.version = 11 : i64} {
  func.func @_conv_matmul_kernel(%arg0: memref<1800x128xf32, #tpu.memory_space<vmem>>, %arg1: memref<128x128xf32, #tpu.memory_space<vmem>>, %arg2: memref<1x128xf32, #tpu.memory_space<vmem>>, %arg3: memref<1800x128xf32, #tpu.memory_space<vmem>>) attributes {dimension_semantics = [], scalar_prefetch = 0 : i64, scratch_operands = 0 : i64, tpu.core_type = #tpu.core_type<tc>} {
    %c0 = arith.constant 0 : index
    %c0_0 = arith.constant 0 : index
    %0 = vector.load %arg0[%c0, %c0_0] : memref<1800x128xf32, #tpu.memory_space<vmem>>, vector<1800x128xf32>
    %c0_1 = arith.constant 0 : index
    %c0_2 = arith.constant 0 : index
    %1 = vector.load %arg1[%c0_1, %c0_2] : memref<128x128xf32, #tpu.memory_space<vmem>>, vector<128x128xf32>
    %cst = arith.constant dense<0.000000e+00> : vector<1800x128xf32>
    %2 = tpu.matmul %0, %1, %cst {dimension_numbers = #tpu.dot_dimension_numbers<[1], [0], [0], [1], [0, 0, 1, 1], [], []>} : vector<1800x128xf32>, vector<128x128xf32>, vector<1800x128xf32> -> vector<1800x128xf32>
    %c0_3 = arith.constant 0 : index
    %c0_4 = arith.constant 0 : index
    %3 = vector.load %arg2[%c0_3, %c0_4] : memref<1x128xf32, #tpu.memory_space<vmem>>, vector<1x128xf32>
    %4 = vector.broadcast %3 : vector<1x128xf32> to vector<1800x128xf32>
    %5 = arith.addf %2, %4 : vector<1800x128xf32>
    %c0_5 = arith.constant 0 : index
    %c0_6 = arith.constant 0 : index
    %6 = vector.load %arg3[%c0_5, %c0_6] : memref<1800x128xf32, #tpu.memory_space<vmem>>, vector<1800x128xf32>
    tpu.vector_store %arg3[%c0_5, %c0_6], %5 {strides = array<i32>} : memref<1800x128xf32, #tpu.memory_space<vmem>>, vector<1800x128xf32>,
    return
  }
}

module attributes {stable_mosaic.version = 11 : i64} {
  func.func @_lin_tail_kernel(%arg0: i32, %arg1: memref<16x2304xbf16, #tpu.memory_space<vmem>>, %arg2: memref<2304x1024xbf16, #tpu.memory_space<vmem>>, %arg3: memref<1x1024xf32, #tpu.memory_space<vmem>>, %arg4: memref<1024x128xf32, #tpu.memory_space<vmem>>, %arg5: memref<1x128xf32, #tpu.memory_space<vmem>>, %arg6: memref<1x128xf32, #tpu.memory_space<vmem>>, %arg7: memref<128x128xf32, #tpu.memory_space<vmem>>, %arg8: memref<1x128xf32, #tpu.memory_space<vmem>>, %arg9: memref<16x128xf32, #tpu.memory_space<vmem>>, %arg10: memref<16x1024xf32, #tpu.memory_space<vmem>>) attributes {dimension_semantics = [#tpu.dimension_semantics<arbitrary>], iteration_bounds = array<i64: 2>, scalar_prefetch = 0 : i64, scratch_operands = 1 : i64, tpu.core_type = #tpu.core_type<tc>, window_params = [{transform_indices = @transform_0, window_bounds = array<i64: 16, 2304>}, {transform_indices = @transform_1, window_bounds = array<i64: 2304, 1024>}, {pipeline_mode = #tpu.pipeline_mode<synchronous>, transform_indices = @transform_2, window_bounds = array<i64: 1, 1024>}, {pipeline_mode = #tpu.pipeline_mode<synchronous>, transform_indices = @transform_3, window_bounds = array<i64: 1024, 128>}, {pipeline_mode = #tpu.pipeline_mode<synchronous>, transform_indices = @transform_4, window_bounds = array<i64: 1, 128>}, {pipeline_mode = #tpu.pipeline_mode<synchronous>, transform_indices = @transform_5, window_bounds = array<i64: 1, 128>}, {pipeline_mode = #tpu.pipeline_mode<synchronous>, transform_indices = @transform_6, window_bounds = array<i64: 128, 128>}, {pipeline_mode = #tpu.pipeline_mode<synchronous>, transform_indices = @transform_7, window_bounds = array<i64: 1, 128>}, {pipeline_mode = #tpu.pipeline_mode<synchronous>, transform_indices = @transform_8, window_bounds = array<i64: 16, 128>}]} {
    %c0_i32 = arith.constant 0 : i32
    %0 = arith.cmpi eq, %arg0, %c0_i32 : i32
    %1 = arith.extui %0 : i1 to i32
    %c0_i32_0 = arith.constant 0 : i32
    %2 = arith.cmpi ne, %1, %c0_i32_0 : i32
    scf.if %2 {
      %cst_9 = arith.constant 0.000000e+00 : f32
      %12 = vector.broadcast %cst_9 : f32 to vector<16x1024xf32>
      %c0_10 = arith.constant 0 : index
      %c0_11 = arith.constant 0 : index
      %13 = vector.load %arg10[%c0_10, %c0_11] : memref<16x1024xf32, #tpu.memory_space<vmem>>, vector<16x1024xf32>
      tpu.vector_store %arg10[%c0_10, %c0_11], %12 {strides = array<i32>} : memref<16x1024xf32, #tpu.memory_space<vmem>>, vector<16x1024xf32>,
    } else {
    }
    %c0 = arith.constant 0 : index
    %c0_1 = arith.constant 0 : index
    %3 = vector.load %arg10[%c0, %c0_1] : memref<16x1024xf32, #tpu.memory_space<vmem>>, vector<16x1024xf32>
    %c0_2 = arith.constant 0 : index
    %c0_3 = arith.constant 0 : index
    %4 = vector.load %arg1[%c0_2, %c0_3] : memref<16x2304xbf16, #tpu.memory_space<vmem>>, vector<16x2304xbf16>
    %c0_4 = arith.constant 0 : index
    %c0_5 = arith.constant 0 : index
    %5 = vector.load %arg2[%c0_4, %c0_5] : memref<2304x1024xbf16, #tpu.memory_space<vmem>>, vector<2304x1024xbf16>
    %cst = arith.constant dense<0.000000e+00> : vector<16x1024xf32>
    %6 = tpu.matmul %4, %5, %cst {dimension_numbers = #tpu.dot_dimension_numbers<[1], [0], [0], [1], [0, 0, 1, 1], [], []>} : vector<16x2304xbf16>, vector<2304x1024xbf16>, vector<16x1024xf32> -> vector<16x1024xf32>
    %7 = arith.addf %3, %6 : vector<16x1024xf32>
    %c0_6 = arith.constant 0 : index
    %c0_7 = arith.constant 0 : index
    %8 = vector.load %arg10[%c0_6, %c0_7] : memref<16x1024xf32, #tpu.memory_space<vmem>>, vector<16x1024xf32>
    tpu.vector_store %arg10[%c0_6, %c0_7], %7 {strides = array<i32>} : memref<16x1024xf32, #tpu.memory_space<vmem>>, vector<16x1024xf32>,
    %c1_i32 = arith.constant 1 : i32
    %9 = arith.cmpi eq, %arg0, %c1_i32 : i32
    %10 = arith.extui %9 : i1 to i32
    %c0_i32_8 = arith.constant 0 : i32
    %11 = arith.cmpi ne, %10, %c0_i32_8 : i32
    scf.if %11 {
      %c0_9 = arith.constant 0 : index
      %c0_10 = arith.constant 0 : index
      %12 = vector.load %arg10[%c0_9, %c0_10] : memref<16x1024xf32, #tpu.memory_space<vmem>>, vector<16x1024xf32>
      %c0_11 = arith.constant 0 : index
      %c0_12 = arith.constant 0 : index
      %13 = vector.load %arg3[%c0_11, %c0_12] : memref<1x1024xf32, #tpu.memory_space<vmem>>, vector<1x1024xf32>
      %14 = vector.broadcast %13 : vector<1x1024xf32> to vector<16x1024xf32>
      %15 = arith.addf %12, %14 : vector<16x1024xf32>
      %cst_13 = arith.constant 0.000000e+00 : f32
      %16 = vector.broadcast %cst_13 : f32 to vector<16x1024xf32>
      %17 = arith.maximumf %15, %16 : vector<16x1024xf32>
      %c0_14 = arith.constant 0 : index
      %c0_15 = arith.constant 0 : index
      %18 = vector.load %arg4[%c0_14, %c0_15] : memref<1024x128xf32, #tpu.memory_space<vmem>>, vector<1024x128xf32>
      %cst_16 = arith.constant dense<0.000000e+00> : vector<16x128xf32>
      %19 = tpu.matmul %17, %18, %cst_16 {dimension_numbers = #tpu.dot_dimension_numbers<[1], [0], [0], [1], [0, 0, 1, 1], [], []>} : vector<16x1024xf32>, vector<1024x128xf32>, vector<16x128xf32> -> vector<16x128xf32>
      %c0_17 = arith.constant 0 : index
      %c0_18 = arith.constant 0 : index
      %20 = vector.load %arg5[%c0_17, %c0_18] : memref<1x128xf32, #tpu.memory_space<vmem>>, vector<1x128xf32>
      %21 = vector.broadcast %20 : vector<1x128xf32> to vector<16x128xf32>
      %22 = arith.mulf %19, %21 : vector<16x128xf32>
      %c0_19 = arith.constant 0 : index
      %c0_20 = arith.constant 0 : index
      %23 = vector.load %arg6[%c0_19, %c0_20] : memref<1x128xf32, #tpu.memory_space<vmem>>, vector<1x128xf32>
      %24 = vector.broadcast %23 : vector<1x128xf32> to vector<16x128xf32>
      %25 = arith.addf %22, %24 : vector<16x128xf32>
      %cst_21 = arith.constant 0.000000e+00 : f32
      %26 = vector.broadcast %cst_21 : f32 to vector<16x128xf32>
      %27 = arith.maximumf %25, %26 : vector<16x128xf32>
      %c0_22 = arith.constant 0 : index
      %c0_23 = arith.constant 0 : index
      %28 = vector.load %arg7[%c0_22, %c0_23] : memref<128x128xf32, #tpu.memory_space<vmem>>, vector<128x128xf32>
      %cst_24 = arith.constant dense<0.000000e+00> : vector<16x128xf32>
      %29 = tpu.matmul %27, %28, %cst_24 {dimension_numbers = #tpu.dot_dimension_numbers<[1], [0], [0], [1], [0, 0, 1, 1], [], []>} : vector<16x128xf32>, vector<128x128xf32>, vector<16x128xf32> -> vector<16x128xf32>
      %c0_25 = arith.constant 0 : index
      %c0_26 = arith.constant 0 : index
      %30 = vector.load %arg8[%c0_25, %c0_26] : memref<1x128xf32, #tpu.memory_space<vmem>>, vector<1x128xf32>
      %31 = vector.broadcast %30 : vector<1x128xf32> to vector<16x128xf32>
      %32 = arith.addf %29, %31 : vector<16x128xf32>
      %cst_27 = arith.constant dense<0xFF800000> : vector<16xf32>
      %33 = vector.multi_reduction <maximumf>, %32, %cst_27 [1] : vector<16x128xf32> to vector<16xf32>
      %34 = vector.shape_cast %33 : vector<16xf32> to vector<16x1xf32>
      %35 = vector.broadcast %34 : vector<16x1xf32> to vector<16x128xf32>
      %36 = arith.subf %32, %35 : vector<16x128xf32>
      %37 = math.exp %36 : vector<16x128xf32>
      %cst_28 = arith.constant dense<0.000000e+00> : vector<16xf32>
      %38 = vector.multi_reduction <add>, %37, %cst_28 [1] : vector<16x128xf32> to vector<16xf32>
      %39 = vector.shape_cast %38 : vector<16xf32> to vector<16x1xf32>
      %40 = vector.broadcast %39 : vector<16x1xf32> to vector<16x128xf32>
      %41 = arith.divf %37, %40 : vector<16x128xf32>
      %c0_29 = arith.constant 0 : index
      %c0_30 = arith.constant 0 : index
      %42 = vector.load %arg9[%c0_29, %c0_30] : memref<16x128xf32, #tpu.memory_space<vmem>>, vector<16x128xf32>
      tpu.vector_store %arg9[%c0_29, %c0_30], %41 {strides = array<i32>} : memref<16x128xf32, #tpu.memory_space<vmem>>, vector<16x128xf32>,
    } else {
    }
    return
  }
  func.func @transform_0(%arg0: i32) -> (i32, i32) {
    %c0_i32 = arith.constant 0 : i32
    %c0_i32_0 = arith.constant 0 : i32
    return %c0_i32, %arg0 : i32, i32
  }
  func.func @transform_1(%arg0: i32) -> (i32, i32) {
    %c0_i32 = arith.constant 0 : i32
    %c0_i32_0 = arith.constant 0 : i32
    return %arg0, %c0_i32 : i32, i32
  }
  func.func @transform_2(%arg0: i32) -> (i32, i32) {
    %c0_i32 = arith.constant 0 : i32
    %c0_i32_0 = arith.constant 0 : i32
    %c0_i32_1 = arith.constant 0 : i32
    return %c0_i32, %c0_i32_0 : i32, i32
  }
  func.func @transform_3(%arg0: i32) -> (i32, i32) {
    %c0_i32 = arith.constant 0 : i32
    %c0_i32_0 = arith.constant 0 : i32
    %c0_i32_1 = arith.constant 0 : i32
    return %c0_i32, %c0_i32_0 : i32, i32
  }
  func.func @transform_4(%arg0: i32) -> (i32, i32) {
    %c0_i32 = arith.constant 0 : i32
    %c0_i32_0 = arith.constant 0 : i32
    %c0_i32_1 = arith.constant 0 : i32
    return %c0_i32, %c0_i32_0 : i32, i32
  }
  func.func @transform_5(%arg0: i32) -> (i32, i32) {
    %c0_i32 = arith.constant 0 : i32
    %c0_i32_0 = arith.constant 0 : i32
    %c0_i32_1 = arith.constant 0 : i32
    return %c0_i32, %c0_i32_0 : i32, i32
  }
  func.func @transform_6(%arg0: i32) -> (i32, i32) {
    %c0_i32 = arith.constant 0 : i32
    %c0_i32_0 = arith.constant 0 : i32
    %c0_i32_1 = arith.constant 0 : i32
    return %c0_i32, %c0_i32_0 : i32, i32
  }
  func.func @transform_7(%arg0: i32) -> (i32, i32) {
    %c0_i32 = arith.constant 0 : i32
    %c0_i32_0 = arith.constant 0 : i32
    %c0_i32_1 = arith.constant 0 : i32
    return %c0_i32, %c0_i32_0 : i32, i32
  }
  func.func @transform_8(%arg0: i32) -> (i32, i32) {
    %c0_i32 = arith.constant 0 : i32
    %c0_i32_0 = arith.constant 0 : i32
    %c0_i32_1 = arith.constant 0 : i32
    return %c0_i32, %c0_i32_0 : i32, i32
  }
}

</mosaic_0001>

<llo_original>
// kernel: conv2_forward.3
$region0: #{conv2_forward.3}
  #allocation0 [shape = 'u32[]', space=smem, size = 0x4, offset = 0x4, fixed_abs, tag = 'smem constant byte address 0x4 - core index']
  #allocation1 [shape = 'u32[72,128]{1,0:T(1,128)}', space=vmem, size = 0x9000, scoped, tag = 'internal scratch']
  %s0 = inlined_call_operand.vmem [shape: f32[2312,128], index: 0, kind: input, shape index: {}]
  %s1 = inlined_call_operand.vmem [shape: f32[128,128], index: 1, kind: input, shape index: {}]
  %s2 = inlined_call_operand.vmem [shape: f32[1,128], index: 2, kind: input, shape index: {}]
  %s3 = inlined_call_operand.vmem [shape: f32[2312,128], index: 3, kind: output, shape index: {}]
  %s4 = sld [smem:[#allocation0]]
  $region22: #{conv2_forward.3} parent=0
    _
  %s6 = ssub.s32 1, %s4
  %s7 = scalar_select 0, %s6, %s4
  // Predicated region
  $region2: #{conv2_forward.3} parent=0 // pred_check
    _
  $region3: #{conv2_forward.3} parent=0 // pred_check_branch
    %9 = sbr.rel (0) target = $region5
  $region4: #{conv2_forward.3} parent=0 // pred_region
    _
  $region5: #{conv2_forward.3} parent=0 // pred_fallthru
    _
  // Predicated region
  $region6: #{conv2_forward.3} parent=0 // pred_check
    _
  $region7: #{conv2_forward.3} parent=0 // pred_check_branch
    %11 = sbr.rel (0) target = $region9
  $region8: #{conv2_forward.3} parent=0 // pred_region
    _
  $region9: #{conv2_forward.3} parent=0 // pred_fallthru
    _
  // Predicated region
  $region10: #{conv2_forward.3} parent=0 // pred_check
    _
  $region11: #{conv2_forward.3} parent=0 // pred_check_branch
    %13 = sbr.rel (0) target = $region13
  $region12: #{conv2_forward.3} parent=0 // pred_region
    _
  $region13: #{conv2_forward.3} parent=0 // pred_fallthru
    _
  %v14 = vld [vmem:[%s0] sm:$0xff]
  %v15 = vld [vmem:[%s0 + $0x8] sm:$0xff]
  %v16 = vld [vmem:[%s0 + $0x10] sm:$0xff]
  %v17 = vld [vmem:[%s0 + $0x18] sm:$0xff]
  %v18 = vld [vmem:[%s0 + $0x20] sm:$0xff]
  %v19 = vld [vmem:[%s0 + $0x28] sm:$0xff]
  %v20 = vld [vmem:[%s0 + $0x30] sm:$0xff]
  %v21 = vld [vmem:[%s0 + $0x38] sm:$0xff]
  %v22 = vld [vmem:[%s0 + $0x40] sm:$0xff]
  %v23 = vld [vmem:[%s0 + $0x48] sm:$0xff]
  %v24 = vld [vmem:[%s0 + $0x50] sm:$0xff]
  %v25 = vld [vmem:[%s0 + $0x58] sm:$0xff]
  %v26 = vld [vmem:[%s0 + $0x60] sm:$0xff]
  %v27 = vld [vmem:[%s0 + $0x68] sm:$0xff]
  %v28 = vld [vmem:[%s0 + $0x70] sm:$0xff]
  %v29 = vld [vmem:[%s0 + $0x78] sm:$0xff]
  %v30 = vld [vmem:[%s0 + $0x80] sm:$0xff]
  %v31 = vld [vmem:[%s0 + $0x88] sm:$0xff]
  %v32 = vld [vmem:[%s0 + $0x90] sm:$0xff]
  %v33 = vld [vmem:[%s0 + $0x98] sm:$0xff]
  %v34 = vld [vmem:[%s0 + $0xa0] sm:$0xff]
  %v35 = vld [vmem:[%s0 + $0xa8] sm:$0xff]
  %v36 = vld [vmem:[%s0 + $0xb0] sm:$0xff]
  %v37 = vld [vmem:[%s0 + $0xb8] sm:$0xff]
  %v38 = vld [vmem:[%s0 + $0xc0] sm:$0xff]
  %v39 = vld [vmem:[%s0 + $0xc8] sm:$0xff]
  %v40 = vld [vmem:[%s0 + $0xd0] sm:$0xff]
  %v41 = vld [vmem:[%s0 + $0xd8] sm:$0xff]
  %v42 = vld [vmem:[%s0 + $0xe0] sm:$0xff]
  %v43 = vld [vmem:[%s0 + $0xe8] sm:$0xff]
  %v44 = vld [vmem:[%s0 + $0xf0] sm:$0xff]
  %v45 = vld [vmem:[%s0 + $0xf8] sm:$0xff]
  %v46 = vld [vmem:[%s0 + $0x100] sm:$0xff]
  %v47 = vld [vmem:[%s0 + $0x108] sm:$0xff]
  %v48 = vld [vmem:[%s0 + $0x110] sm:$0xff]
  %v49 = vld [vmem:[%s0 + $0x118] sm:$0xff]
  %v50 = vld [vmem:[%s0 + $0x120] sm:$0xff]
  %v51 = vld [vmem:[%s0 + $0x128] sm:$0xff]
  %v52 = vld [vmem:[%s0 + $0x130] sm:$0xff]
  %v53 = vld [vmem:[%s0 + $0x138] sm:$0xff]
  %v54 = vld [vmem:[%s0 + $0x140] sm:$0xff]
  %v55 = vld [vmem:[%s0 + $0x148] sm:$0xff]
  %v56 = vld [vmem:[%s0 + $0x150] sm:$0xff]
  %v57 = vld [vmem:[%s0 + $0x158] sm:$0xff]
  %v58 = vld [vmem:[%s0 + $0x160] sm:$0xff]
  %v59 = vld [vmem:[%s0 + $0x168] sm:$0xff]
  %v60 = vld [vmem:[%s0 + $0x170] sm:$0xff]
  %v61 = vld [vmem:[%s0 + $0x178] sm:$0xff]
  %v62 = vld [vmem:[%s0 + $0x180] sm:$0xff]
  %v63 = vld [vmem:[%s0 + $0x188] sm:$0xff]
  %v64 = vld [vmem:[%s0 + $0x190] sm:$0xff]
  %v65 = vld [vmem:[%s0 + $0x198] sm:$0xff]
  %v66 = vld [vmem:[%s0 + $0x1a0] sm:$0xff]
  %v67 = vld [vmem:[%s0 + $0x1a8] sm:$0xff]
  %v68 = vld [vmem:[%s0 + $0x1b0] sm:$0xff]
  %v69 = vld [vmem:[%s0 + $0x1b8] sm:$0xff]
  %v70 = vld [vmem:[%s0 + $0x1c0] sm:$0xff]
  %v71 = vld [vmem:[%s0 + $0x1c8] sm:$0xff]
  %v72 = vld [vmem:[%s0 + $0x1d0] sm:$0xff]
  %v73 = vld [vmem:[%s0 + $0x1d8] sm:$0xff]
  %v74 = vld [vmem:[%s0 + $0x1e0] sm:$0xff]
  %v75 = vld [vmem:[%s0 + $0x1e8] sm:$0xff]
  %v76 = vld [vmem:[%s0 + $0x1f0] sm:$0xff]
  %v77 = vld [vmem:[%s0 + $0x1f8] sm:$0xff]
  %v78 = vld [vmem:[%s0 + $0x200] sm:$0xff]
  %v79 = vld [vmem:[%s0 + $0x208] sm:$0xff]
  %v80 = vld [vmem:[%s0 + $0x210] sm:$0xff]
  %v81 = vld [vmem:[%s0 + $0x218] sm:$0xff]
  %v82 = vld [vmem:[%s0 + $0x220] sm:$0xff]
  %v83 = vld [vmem:[%s0 + $0x228] sm:$0xff]
  %v84 = vld [vmem:[%s0 + $0x230] sm:$0xff]
  %v85 = vld [vmem:[%s0 + $0x238] sm:$0xff]
  %v86 = vld [vmem:[%s0 + $0x240] sm:$0xff]
  %v87 = vld [vmem:[%s0 + $0x248] sm:$0xff]
  %v88 = vld [vmem:[%s0 + $0x250] sm:$0xff]
  %v89 = vld [vmem:[%s0 + $0x258] sm:$0xff]
  %v90 = vld [vmem:[%s0 + $0x260] sm:$0xff]
  %v91 = vld [vmem:[%s0 + $0x268] sm:$0xff]
  %v92 = vld [vmem:[%s0 + $0x270] sm:$0xff]
  %v93 = vld [vmem:[%s0 + $0x278] sm:$0xff]
  %v94 = vld [vmem:[%s0 + $0x280] sm:$0xff]
  %v95 = vld [vmem:[%s0 + $0x288] sm:$0xff]
  %v96 = vld [vmem:[%s0 + $0x290] sm:$0xff]
  %v97 = vld [vmem:[%s0 + $0x298] sm:$0xff]
  %v98 = vld [vmem:[%s0 + $0x2a0] sm:$0xff]
  %v99 = vld [vmem:[%s0 + $0x2a8] sm:$0xff]
  %v100 = vld [vmem:[%s0 + $0x2b0] sm:$0xff]
  %v101 = vld [vmem:[%s0 + $0x2b8] sm:$0xff]
  %v102 = vld [vmem:[%s0 + $0x2c0] sm:$0xff]
  %v103 = vld [vmem:[%s0 + $0x2c8] sm:$0xff]
  %v104 = vld [vmem:[%s0 + $0x2d0] sm:$0xff]
  %v105 = vld [vmem:[%s0 + $0x2d8] sm:$0xff]
  %v106 = vld [vmem:[%s0 + $0x2e0] sm:$0xff]
  %v107 = vld [vmem:[%s0 + $0x2e8] sm:$0xff]
  %v108 = vld [vmem:[%s0 + $0x2f0] sm:$0xff]
  %v109 = vld [vmem:[%s0 + $0x2f8] sm:$0xff]
  %v110 = vld [vmem:[%s0 + $0x300] sm:$0xff]
  %v111 = vld [vmem:[%s0 + $0x308] sm:$0xff]
  %v112 = vld [vmem:[%s0 + $0x310] sm:$0xff]
  %v113 = vld [vmem:[%s0 + $0x318] sm:$0xff]
  %v114 = vld [vmem:[%s0 + $0x320] sm:$0xff]
  %v115 = vld [vmem:[%s0 + $0x328] sm:$0xff]
  %v116 = vld [vmem:[%s0 + $0x330] sm:$0xff]
  %v117 = vld [vmem:[%s0 + $0x338] sm:$0xff]
  %v118 = vld [vmem:[%s0 + $0x340] sm:$0xff]
  %v119 = vld [vmem:[%s0 + $0x348] sm:$0xff]
  %v120 = vld [vmem:[%s0 + $0x350] sm:$0xff]
  %v121 = vld [vmem:[%s0 + $0x358] sm:$0xff]
  %v122 = vld [vmem:[%s0 + $0x360] sm:$0xff]
  %v123 = vld [vmem:[%s0 + $0x368] sm:$0xff]
  %v124 = vld [vmem:[%s0 + $0x370] sm:$0xff]
  %v125 = vld [vmem:[%s0 + $0x378] sm:$0xff]
  %v126 = vld [vmem:[%s0 + $0x380] sm:$0xff]
  %v127 = vld [vmem:[%s0 + $0x388] sm:$0xff]
  %v128 = vld [vmem:[%s0 + $0x390] sm:$0xff]
  %v129 = vld [vmem:[%s0 + $0x398] sm:$0xff]
  %v130 = vld [vmem:[%s0 + $0x3a0] sm:$0xff]
  %v131 = vld [vmem:[%s0 + $0x3a8] sm:$0xff]
  %v132 = vld [vmem:[%s0 + $0x3b0] sm:$0xff]
  %v133 = vld [vmem:[%s0 + $0x3b8] sm:$0xff]
  %v134 = vld [vmem:[%s0 + $0x3c0] sm:$0xff]
  %v135 = vld [vmem:[%s0 + $0x3c8] sm:$0xff]
  %v136 = vld [vmem:[%s0 + $0x3d0] sm:$0xff]
  %v137 = vld [vmem:[%s0 + $0x3d8] sm:$0xff]
  %v138 = vld [vmem:[%s0 + $0x3e0] sm:$0xff]
  %v139 = vld [vmem:[%s0 + $0x3e8] sm:$0xff]
  %v140 = vld [vmem:[%s0 + $0x3f0] sm:$0xff]
  %v141 = vld [vmem:[%s0 + $0x3f8] sm:$0xff]
  %v142 = vld [vmem:[%s0 + $0x400] sm:$0xff]
  %v143 = vld [vmem:[%s0 + $0x408] sm:$0xff]
  %v144 = vld [vmem:[%s0 + $0x410] sm:$0xff]
  %v145 = vld [vmem:[%s0 + $0x418] sm:$0xff]
  %v146 = vld [vmem:[%s0 + $0x420] sm:$0xff]
  %v147 = vld [vmem:[%s0 + $0x428] sm:$0xff]
  %v148 = vld [vmem:[%s0 + $0x430] sm:$0xff]
  %v149 = vld [vmem:[%s0 + $0x438] sm:$0xff]
  %v150 = vld [vmem:[%s0 + $0x440] sm:$0xff]
  %v151 = vld [vmem:[%s0 + $0x448] sm:$0xff]
  %v152 = vld [vmem:[%s0 + $0x450] sm:$0xff]
  %v153 = vld [vmem:[%s0 + $0x458] sm:$0xff]
  %v154 = vld [vmem:[%s0 + $0x460] sm:$0xff]
  %v155 = vld [vmem:[%s0 + $0x468] sm:$0xff]
  %v156 = vld [vmem:[%s0 + $0x470] sm:$0xff]
  %v157 = vld [vmem:[%s0 + $0x478] sm:$0xff]
  %v158 = vld [vmem:[%s0 + $0x480] sm:$0xff]
  %v159 = vld [vmem:[%s0 + $0x488] sm:$0xff]
  %v160 = vld [vmem:[%s0 + $0x490] sm:$0xff]
  %v161 = vld [vmem:[%s0 + $0x498] sm:$0xff]
  %v162 = vld [vmem:[%s0 + $0x4a0] sm:$0xff]
  %v163 = vld [vmem:[%s0 + $0x4a8] sm:$0xff]
  %v164 = vld [vmem:[%s0 + $0x4b0] sm:$0xff]
  %v165 = vld [vmem:[%s0 + $0x4b8] sm:$0xff]
  %v166 = vld [vmem:[%s0 + $0x4c0] sm:$0xff]
  %v167 = vld [vmem:[%s0 + $0x4c8] sm:$0xff]
  %v168 = vld [vmem:[%s0 + $0x4d0] sm:$0xff]
  %v169 = vld [vmem:[%s0 + $0x4d8] sm:$0xff]
  %v170 = vld [vmem:[%s0 + $0x4e0] sm:$0xff]
  %v171 = vld [vmem:[%s0 + $0x4e8] sm:$0xff]
  %v172 = vld [vmem:[%s0 + $0x4f0] sm:$0xff]
  %v173 = vld [vmem:[%s0 + $0x4f8] sm:$0xff]
  %v174 = vld [vmem:[%s0 + $0x500] sm:$0xff]
  %v175 = vld [vmem:[%s0 + $0x508] sm:$0xff]
  %v176 = vld [vmem:[%s0 + $0x510] sm:$0xff]
  %v177 = vld [vmem:[%s0 + $0x518] sm:$0xff]
  %v178 = vld [vmem:[%s0 + $0x520] sm:$0xff]
  %v179 = vld [vmem:[%s0 + $0x528] sm:$0xff]
  %v180 = vld [vmem:[%s0 + $0x530] sm:$0xff]
  %v181 = vld [vmem:[%s0 + $0x538] sm:$0xff]
  %v182 = vld [vmem:[%s0 + $0x540] sm:$0xff]
  %v183 = vld [vmem:[%s0 + $0x548] sm:$0xff]
  %v184 = vld [vmem:[%s0 + $0x550] sm:$0xff]
  %v185 = vld [vmem:[%s0 + $0x558] sm:$0xff]
  %v186 = vld [vmem:[%s0 + $0x560] sm:$0xff]
  %v187 = vld [vmem:[%s0 + $0x568] sm:$0xff]
  %v188 = vld [vmem:[%s0 + $0x570] sm:$0xff]
  %v189 = vld [vmem:[%s0 + $0x578] sm:$0xff]
  %v190 = vld [vmem:[%s0 + $0x580] sm:$0xff]
  %v191 = vld [vmem:[%s0 + $0x588] sm:$0xff]
  %v192 = vld [vmem:[%s0 + $0x590] sm:$0xff]
  %v193 = vld [vmem:[%s0 + $0x598] sm:$0xff]
  %v194 = vld [vmem:[%s0 + $0x5a0] sm:$0xff]
  %v195 = vld [vmem:[%s0 + $0x5a8] sm:$0xff]
  %v196 = vld [vmem:[%s0 + $0x5b0] sm:$0xff]
  %v197 = vld [vmem:[%s0 + $0x5b8] sm:$0xff]
  %v198 = vld [vmem:[%s0 + $0x5c0] sm:$0xff]
  %v199 = vld [vmem:[%s0 + $0x5c8] sm:$0xff]
  %v200 = vld [vmem:[%s0 + $0x5d0] sm:$0xff]
  %v201 = vld [vmem:[%s0 + $0x5d8] sm:$0xff]
  %v202 = vld [vmem:[%s0 + $0x5e0] sm:$0xff]
  %v203 = vld [vmem:[%s0 + $0x5e8] sm:$0xff]
  %v204 = vld [vmem:[%s0 + $0x5f0] sm:$0xff]
  %v205 = vld [vmem:[%s0 + $0x5f8] sm:$0xff]
  %v206 = vld [vmem:[%s0 + $0x600] sm:$0xff]
  %v207 = vld [vmem:[%s0 + $0x608] sm:$0xff]
  %v208 = vld [vmem:[%s0 + $0x610] sm:$0xff]
  %v209 = vld [vmem:[%s0 + $0x618] sm:$0xff]
  %v210 = vld [vmem:[%s0 + $0x620] sm:$0xff]
  %v211 = vld [vmem:[%s0 + $0x628] sm:$0xff]
  %v212 = vld [vmem:[%s0 + $0x630] sm:$0xff]
  %v213 = vld [vmem:[%s0 + $0x638] sm:$0xff]
  %v214 = vld [vmem:[%s0 + $0x640] sm:$0xff]
  %v215 = vld [vmem:[%s0 + $0x648] sm:$0xff]
  %v216 = vld [vmem:[%s0 + $0x650] sm:$0xff]
  %v217 = vld [vmem:[%s0 + $0x658] sm:$0xff]
  %v218 = vld [vmem:[%s0 + $0x660] sm:$0xff]
  %v219 = vld [vmem:[%s0 + $0x668] sm:$0xff]
  %v220 = vld [vmem:[%s0 + $0x670] sm:$0xff]
  %v221 = vld [vmem:[%s0 + $0x678] sm:$0xff]
  %v222 = vld [vmem:[%s0 + $0x680] sm:$0xff]
  %v223 = vld [vmem:[%s0 + $0x688] sm:$0xff]
  %v224 = vld [vmem:[%s0 + $0x690] sm:$0xff]
  %v225 = vld [vmem:[%s0 + $0x698] sm:$0xff]
  %v226 = vld [vmem:[%s0 + $0x6a0] sm:$0xff]
  %v227 = vld [vmem:[%s0 + $0x6a8] sm:$0xff]
  %v228 = vld [vmem:[%s0 + $0x6b0] sm:$0xff]
  %v229 = vld [vmem:[%s0 + $0x6b8] sm:$0xff]
  %v230 = vld [vmem:[%s0 + $0x6c0] sm:$0xff]
  %v231 = vld [vmem:[%s0 + $0x6c8] sm:$0xff]
  %v232 = vld [vmem:[%s0 + $0x6d0] sm:$0xff]
  %v233 = vld [vmem:[%s0 + $0x6d8] sm:$0xff]
  %v234 = vld [vmem:[%s0 + $0x6e0] sm:$0xff]
  %v235 = vld [vmem:[%s0 + $0x6e8] sm:$0xff]
  %v236 = vld [vmem:[%s0 + $0x6f0] sm:$0xff]
  %v237 = vld [vmem:[%s0 + $0x6f8] sm:$0xff]
  %v238 = vld [vmem:[%s0 + $0x700] sm:$0xff]
  %v239 = vld [vmem:[%s0 + $0x708] sm:$0xff]
  %v240 = vld [vmem:[%s0 + $0x710] sm:$0xff]
  %v241 = vld [vmem:[%s0 + $0x718] sm:$0xff]
  %v242 = vld [vmem:[%s0 + $0x720] sm:$0xff]
  %v243 = vld [vmem:[%s0 + $0x728] sm:$0xff]
  %v244 = vld [vmem:[%s0 + $0x730] sm:$0xff]
  %v245 = vld [vmem:[%s0 + $0x738] sm:$0xff]
  %v246 = vld [vmem:[%s0 + $0x740] sm:$0xff]
  %v247 = vld [vmem:[%s0 + $0x748] sm:$0xff]
  %v248 = vld [vmem:[%s0 + $0x750] sm:$0xff]
  %v249 = vld [vmem:[%s0 + $0x758] sm:$0xff]
  %v250 = vld [vmem:[%s0 + $0x760] sm:$0xff]
  %v251 = vld [vmem:[%s0 + $0x768] sm:$0xff]
  %v252 = vld [vmem:[%s0 + $0x770] sm:$0xff]
  %v253 = vld [vmem:[%s0 + $0x778] sm:$0xff]
  %v254 = vld [vmem:[%s0 + $0x780] sm:$0xff]
  %v255 = vld [vmem:[%s0 + $0x788] sm:$0xff]
  %v256 = vld [vmem:[%s0 + $0x790] sm:$0xff]
  %v257 = vld [vmem:[%s0 + $0x798] sm:$0xff]
  %v258 = vld [vmem:[%s0 + $0x7a0] sm:$0xff]
  %v259 = vld [vmem:[%s0 + $0x7a8] sm:$0xff]
  %v260 = vld [vmem:[%s0 + $0x7b0] sm:$0xff]
  %v261 = vld [vmem:[%s0 + $0x7b8] sm:$0xff]
  %v262 = vld [vmem:[%s0 + $0x7c0] sm:$0xff]
  %v263 = vld [vmem:[%s0 + $0x7c8] sm:$0xff]
  %v264 = vld [vmem:[%s0 + $0x7d0] sm:$0xff]
  %v265 = vld [vmem:[%s0 + $0x7d8] sm:$0xff]
  %v266 = vld [vmem:[%s0 + $0x7e0] sm:$0xff]
  %v267 = vld [vmem:[%s0 + $0x7e8] sm:$0xff]
  %v268 = vld [vmem:[%s0 + $0x7f0] sm:$0xff]
  %v269 = vld [vmem:[%s0 + $0x7f8] sm:$0xff]
  %v270 = vld [vmem:[%s0 + $0x800] sm:$0xff]
  %v271 = vld [vmem:[%s0 + $0x808] sm:$0xff]
  %v272 = vld [vmem:[%s0 + $0x810] sm:$0xff]
  %v273 = vld [vmem:[%s0 + $0x818] sm:$0xff]
  %v274 = vld [vmem:[%s0 + $0x820] sm:$0xff]
  %v275 = vld [vmem:[%s0 + $0x828] sm:$0xff]
  %v276 = vld [vmem:[%s0 + $0x830] sm:$0xff]
  %v277 = vld [vmem:[%s0 + $0x838] sm:$0xff]
  %v278 = vld [vmem:[%s0 + $0x840] sm:$0xff]
  %v279 = vld [vmem:[%s0 + $0x848] sm:$0xff]
  %v280 = vld [vmem:[%s0 + $0x850] sm:$0xff]
  %v281 = vld [vmem:[%s0 + $0x858] sm:$0xff]
  %v282 = vld [vmem:[%s0 + $0x860] sm:$0xff]
  %v283 = vld [vmem:[%s0 + $0x868] sm:$0xff]
  %v284 = vld [vmem:[%s0 + $0x870] sm:$0xff]
  %v285 = vld [vmem:[%s0 + $0x878] sm:$0xff]
  %v286 = vld [vmem:[%s0 + $0x880] sm:$0xff]
  %v287 = vld [vmem:[%s0 + $0x888] sm:$0xff]
  %v288 = vld [vmem:[%s0 + $0x890] sm:$0xff]
  %v289 = vld [vmem:[%s0 + $0x898] sm:$0xff]
  %v290 = vld [vmem:[%s0 + $0x8a0] sm:$0xff]
  %v291 = vld [vmem:[%s0 + $0x8a8] sm:$0xff]
  %v292 = vld [vmem:[%s0 + $0x8b0] sm:$0xff]
  %v293 = vld [vmem:[%s0 + $0x8b8] sm:$0xff]
  %v294 = vld [vmem:[%s0 + $0x8c0] sm:$0xff]
  %v295 = vld [vmem:[%s0 + $0x8c8] sm:$0xff]
  %v296 = vld [vmem:[%s0 + $0x8d0] sm:$0xff]
  %v297 = vld [vmem:[%s0 + $0x8d8] sm:$0xff]
  %v298 = vld [vmem:[%s0 + $0x8e0] sm:$0xff]
  %v299 = vld [vmem:[%s0 + $0x8e8] sm:$0xff]
  %v300 = vld [vmem:[%s0 + $0x8f0] sm:$0xff]
  %v301 = vld [vmem:[%s0 + $0x8f8] sm:$0xff]
  %v302 = vld [vmem:[%s0 + $0x900] sm:$0xff]
  %v303 = vld [vmem:[%s1] sm:$0xff]
  %v304 = vld [vmem:[%s1 + $0x8] sm:$0xff]
  %v305 = vld [vmem:[%s1 + $0x10] sm:$0xff]
  %v306 = vld [vmem:[%s1 + $0x18] sm:$0xff]
  %v307 = vld [vmem:[%s1 + $0x20] sm:$0xff]
  %v308 = vld [vmem:[%s1 + $0x28] sm:$0xff]
  %v309 = vld [vmem:[%s1 + $0x30] sm:$0xff]
  %v310 = vld [vmem:[%s1 + $0x38] sm:$0xff]
  %v311 = vld [vmem:[%s1 + $0x40] sm:$0xff]
  %v312 = vld [vmem:[%s1 + $0x48] sm:$0xff]
  %v313 = vld [vmem:[%s1 + $0x50] sm:$0xff]
  %v314 = vld [vmem:[%s1 + $0x58] sm:$0xff]
  %v315 = vld [vmem:[%s1 + $0x60] sm:$0xff]
  %v316 = vld [vmem:[%s1 + $0x68] sm:$0xff]
  %v317 = vld [vmem:[%s1 + $0x70] sm:$0xff]
  %v318 = vld [vmem:[%s1 + $0x78] sm:$0xff]
  %v319 = vld [vmem:[%s2] sm:$0x1]
  %v321 = vperm.slane %v319, 0
  %323 = vmatpush.msra.mxu0 %v318
  %324 = vmatpush.msra.mxu0 %v317
  %325 = vmatpush.msra.mxu0 %v316
  %326 = vmatpush.msra.mxu0 %v315
  %327 = vmatpush.msra.mxu0 %v314
  %328 = vmatpush.msra.mxu0 %v313
  %329 = vmatpush.msra.mxu0 %v312
  %330 = vmatpush.msra.mxu0 %v311
  %331 = vmatpush.msra.mxu0 %v310
  %332 = vmatpush.msra.mxu0 %v309
  %333 = vmatpush.msra.mxu0 %v308
  %334 = vmatpush.msra.mxu0 %v307
  %335 = vmatpush.msra.mxu0 %v306
  %336 = vmatpush.msra.mxu0 %v305
  %337 = vmatpush.msra.mxu0 %v304
  %338 = vmatpush.msra.mxu0 %v303
  %339 = vmatmul.f32.gmra.mxu0 %v14
  %v340 = vpop.f32.mrf.mxu0
  %v341 = vadd.f32 %v321, %v340
  %342 = vmatmul.f32.gmra.mxu0 %v15
  %v343 = vpop.f32.mrf.mxu0
  %v344 = vadd.f32 %v321, %v343
  %345 = vmatmul.f32.gmra.mxu0 %v16
  %v346 = vpop.f32.mrf.mxu0
  %v347 = vadd.f32 %v321, %v346
  %348 = vmatmul.f32.gmra.mxu0 %v17
  %v349 = vpop.f32.mrf.mxu0
  %v350 = vadd.f32 %v321, %v349
  %351 = vmatmul.f32.gmra.mxu0 %v18
  %v352 = vpop.f32.mrf.mxu0
  %v353 = vadd.f32 %v321, %v352
  %354 = vmatmul.f32.gmra.mxu0 %v19
  %v355 = vpop.f32.mrf.mxu0
  %v356 = vadd.f32 %v321, %v355
  %357 = vmatmul.f32.gmra.mxu0 %v20
  %v358 = vpop.f32.mrf.mxu0
  %v359 = vadd.f32 %v321, %v358
  %360 = vmatmul.f32.gmra.mxu0 %v21
  %v361 = vpop.f32.mrf.mxu0
  %v362 = vadd.f32 %v321, %v361
  %363 = vmatmul.f32.gmra.mxu0 %v22
  %v364 = vpop.f32.mrf.mxu0
  %v365 = vadd.f32 %v321, %v364
  %366 = vmatmul.f32.gmra.mxu0 %v23
  %v367 = vpop.f32.mrf.mxu0
  %v368 = vadd.f32 %v321, %v367
  %369 = vmatmul.f32.gmra.mxu0 %v24
  %v370 = vpop.f32.mrf.mxu0
  %v371 = vadd.f32 %v321, %v370
  %372 = vmatmul.f32.gmra.mxu0 %v25
  %v373 = vpop.f32.mrf.mxu0
  %v374 = vadd.f32 %v321, %v373
  %375 = vmatmul.f32.gmra.mxu0 %v26
  %v376 = vpop.f32.mrf.mxu0
  %v377 = vadd.f32 %v321, %v376
  %378 = vmatmul.f32.gmra.mxu0 %v27
  %v379 = vpop.f32.mrf.mxu0
  %v380 = vadd.f32 %v321, %v379
  %381 = vmatmul.f32.gmra.mxu0 %v28
  %v382 = vpop.f32.mrf.mxu0
  %v383 = vadd.f32 %v321, %v382
  %384 = vmatmul.f32.gmra.mxu0 %v29
  %v385 = vpop.f32.mrf.mxu0
  %v386 = vadd.f32 %v321, %v385
  %387 = vmatmul.f32.gmra.mxu0 %v30
  %v388 = vpop.f32.mrf.mxu0
  %v389 = vadd.f32 %v321, %v388
  %390 = vmatmul.f32.gmra.mxu0 %v31
  %v391 = vpop.f32.mrf.mxu0
  %v392 = vadd.f32 %v321, %v391
  %393 = vmatmul.f32.gmra.mxu0 %v32
  %v394 = vpop.f32.mrf.mxu0
  %v395 = vadd.f32 %v321, %v394
  %396 = vmatmul.f32.gmra.mxu0 %v33
  %v397 = vpop.f32.mrf.mxu0
  %v398 = vadd.f32 %v321, %v397
  %399 = vmatmul.f32.gmra.mxu0 %v34
  %v400 = vpop.f32.mrf.mxu0
  %v401 = vadd.f32 %v321, %v400
  %402 = vmatmul.f32.gmra.mxu0 %v35
  %v403 = vpop.f32.mrf.mxu0
  %v404 = vadd.f32 %v321, %v403
  %405 = vmatmul.f32.gmra.mxu0 %v36
  %v406 = vpop.f32.mrf.mxu0
  %v407 = vadd.f32 %v321, %v406
  %408 = vmatmul.f32.gmra.mxu0 %v37
  %v409 = vpop.f32.mrf.mxu0
  %v410 = vadd.f32 %v321, %v409
  %411 = vmatmul.f32.gmra.mxu0 %v38
  %v412 = vpop.f32.mrf.mxu0
  %v413 = vadd.f32 %v321, %v412
  %414 = vmatmul.f32.gmra.mxu0 %v39
  %v415 = vpop.f32.mrf.mxu0
  %v416 = vadd.f32 %v321, %v415
  %417 = vmatmul.f32.gmra.mxu0 %v40
  %v418 = vpop.f32.mrf.mxu0
  %v419 = vadd.f32 %v321, %v418
  %420 = vmatmul.f32.gmra.mxu0 %v41
  %v421 = vpop.f32.mrf.mxu0
  %v422 = vadd.f32 %v321, %v421
  %423 = vmatmul.f32.gmra.mxu0 %v42
  %v424 = vpop.f32.mrf.mxu0
  %v425 = vadd.f32 %v321, %v424
  %426 = vmatmul.f32.gmra.mxu0 %v43
  %v427 = vpop.f32.mrf.mxu0
  %v428 = vadd.f32 %v321, %v427
  %429 = vmatmul.f32.gmra.mxu0 %v44
  %v430 = vpop.f32.mrf.mxu0
  %v431 = vadd.f32 %v321, %v430
  %432 = vmatmul.f32.gmra.mxu0 %v45
  %v433 = vpop.f32.mrf.mxu0
  %v434 = vadd.f32 %v321, %v433
  %435 = vmatmul.f32.gmra.mxu0 %v46
  %v436 = vpop.f32.mrf.mxu0
  %v437 = vadd.f32 %v321, %v436
  %438 = vmatmul.f32.gmra.mxu0 %v47
  %v439 = vpop.f32.mrf.mxu0
  %v440 = vadd.f32 %v321, %v439
  %441 = vmatmul.f32.gmra.mxu0 %v48
  %v442 = vpop.f32.mrf.mxu0
  %v443 = vadd.f32 %v321, %v442
  %444 = vmatmul.f32.gmra.mxu0 %v49
  %v445 = vpop.f32.mrf.mxu0
  %v446 = vadd.f32 %v321, %v445
  %447 = vmatmul.f32.gmra.mxu0 %v50
  %v448 = vpop.f32.mrf.mxu0
  %v449 = vadd.f32 %v321, %v448
  %450 = vmatmul.f32.gmra.mxu0 %v51
  %v451 = vpop.f32.mrf.mxu0
  %v452 = vadd.f32 %v321, %v451
  %453 = vmatmul.f32.gmra.mxu0 %v52
  %v454 = vpop.f32.mrf.mxu0
  %v455 = vadd.f32 %v321, %v454
  %456 = vmatmul.f32.gmra.mxu0 %v53
  %v457 = vpop.f32.mrf.mxu0
  %v458 = vadd.f32 %v321, %v457
  %459 = vmatmul.f32.gmra.mxu0 %v54
  %v460 = vpop.f32.mrf.mxu0
  %v461 = vadd.f32 %v321, %v460
  %462 = vmatmul.f32.gmra.mxu0 %v55
  %v463 = vpop.f32.mrf.mxu0
  %v464 = vadd.f32 %v321, %v463
  %465 = vmatmul.f32.gmra.mxu0 %v56
  %v466 = vpop.f32.mrf.mxu0
  %v467 = vadd.f32 %v321, %v466
  %468 = vmatmul.f32.gmra.mxu0 %v57
  %v469 = vpop.f32.mrf.mxu0
  %v470 = vadd.f32 %v321, %v469
  %471 = vmatmul.f32.gmra.mxu0 %v58
  %v472 = vpop.f32.mrf.mxu0
  %v473 = vadd.f32 %v321, %v472
  %474 = vmatmul.f32.gmra.mxu0 %v59
  %v475 = vpop.f32.mrf.mxu0
  %v476 = vadd.f32 %v321, %v475
  %477 = vmatmul.f32.gmra.mxu0 %v60
  %v478 = vpop.f32.mrf.mxu0
  %v479 = vadd.f32 %v321, %v478
  %480 = vmatmul.f32.gmra.mxu0 %v61
  %v481 = vpop.f32.mrf.mxu0
  %v482 = vadd.f32 %v321, %v481
  %483 = vmatmul.f32.gmra.mxu0 %v62
  %v484 = vpop.f32.mrf.mxu0
  %v485 = vadd.f32 %v321, %v484
  %486 = vmatmul.f32.gmra.mxu0 %v63
  %v487 = vpop.f32.mrf.mxu0
  %v488 = vadd.f32 %v321, %v487
  %489 = vmatmul.f32.gmra.mxu0 %v64
  %v490 = vpop.f32.mrf.mxu0
  %v491 = vadd.f32 %v321, %v490
  %492 = vmatmul.f32.gmra.mxu0 %v65
  %v493 = vpop.f32.mrf.mxu0
  %v494 = vadd.f32 %v321, %v493
  %495 = vmatmul.f32.gmra.mxu0 %v66
  %v496 = vpop.f32.mrf.mxu0
  %v497 = vadd.f32 %v321, %v496
  %498 = vmatmul.f32.gmra.mxu0 %v67
  %v499 = vpop.f32.mrf.mxu0
  %v500 = vadd.f32 %v321, %v499
  %501 = vmatmul.f32.gmra.mxu0 %v68
  %v502 = vpop.f32.mrf.mxu0
  %v503 = vadd.f32 %v321, %v502
  %504 = vmatmul.f32.gmra.mxu0 %v69
  %v505 = vpop.f32.mrf.mxu0
  %v506 = vadd.f32 %v321, %v505
  %507 = vmatmul.f32.gmra.mxu0 %v70
  %v508 = vpop.f32.mrf.mxu0
  %v509 = vadd.f32 %v321, %v508
  %510 = vmatmul.f32.gmra.mxu0 %v71
  %v511 = vpop.f32.mrf.mxu0
  %v512 = vadd.f32 %v321, %v511
  %513 = vmatmul.f32.gmra.mxu0 %v72
  %v514 = vpop.f32.mrf.mxu0
  %v515 = vadd.f32 %v321, %v514
  %516 = vmatmul.f32.gmra.mxu0 %v73
  %v517 = vpop.f32.mrf.mxu0
  %v518 = vadd.f32 %v321, %v517
  %519 = vmatmul.f32.gmra.mxu0 %v74
  %v520 = vpop.f32.mrf.mxu0
  %v521 = vadd.f32 %v321, %v520
  %522 = vmatmul.f32.gmra.mxu0 %v75
  %v523 = vpop.f32.mrf.mxu0
  %v524 = vadd.f32 %v321, %v523
  %525 = vmatmul.f32.gmra.mxu0 %v76
  %v526 = vpop.f32.mrf.mxu0
  %v527 = vadd.f32 %v321, %v526
  %528 = vmatmul.f32.gmra.mxu0 %v77
  %v529 = vpop.f32.mrf.mxu0
  %v530 = vadd.f32 %v321, %v529
  %531 = vmatmul.f32.gmra.mxu0 %v78
  %v532 = vpop.f32.mrf.mxu0
  %v533 = vadd.f32 %v321, %v532
  %534 = vmatmul.f32.gmra.mxu0 %v79
  %v535 = vpop.f32.mrf.mxu0
  %v536 = vadd.f32 %v321, %v535
  %537 = vmatmul.f32.gmra.mxu0 %v80
  %v538 = vpop.f32.mrf.mxu0
  %v539 = vadd.f32 %v321, %v538
  %540 = vmatmul.f32.gmra.mxu0 %v81
  %v541 = vpop.f32.mrf.mxu0
  %v542 = vadd.f32 %v321, %v541
  %543 = vmatmul.f32.gmra.mxu0 %v82
  %v544 = vpop.f32.mrf.mxu0
  %v545 = vadd.f32 %v321, %v544
  %546 = vmatmul.f32.gmra.mxu0 %v83
  %v547 = vpop.f32.mrf.mxu0
  %v548 = vadd.f32 %v321, %v547
  %549 = vmatmul.f32.gmra.mxu0 %v84
  %v550 = vpop.f32.mrf.mxu0
  %v551 = vadd.f32 %v321, %v550
  %552 = vmatmul.f32.gmra.mxu0 %v85
  %v553 = vpop.f32.mrf.mxu0
  %v554 = vadd.f32 %v321, %v553
  %555 = vmatmul.f32.gmra.mxu0 %v86
  %v556 = vpop.f32.mrf.mxu0
  %v557 = vadd.f32 %v321, %v556
  %558 = vmatmul.f32.gmra.mxu0 %v87
  %v559 = vpop.f32.mrf.mxu0
  %v560 = vadd.f32 %v321, %v559
  %561 = vmatmul.f32.gmra.mxu0 %v88
  %v562 = vpop.f32.mrf.mxu0
  %v563 = vadd.f32 %v321, %v562
  %564 = vmatmul.f32.gmra.mxu0 %v89
  %v565 = vpop.f32.mrf.mxu0
  %v566 = vadd.f32 %v321, %v565
  %567 = vmatmul.f32.gmra.mxu0 %v90
  %v568 = vpop.f32.mrf.mxu0
  %v569 = vadd.f32 %v321, %v568
  %570 = vmatmul.f32.gmra.mxu0 %v91
  %v571 = vpop.f32.mrf.mxu0
  %v572 = vadd.f32 %v321, %v571
  %573 = vmatmul.f32.gmra.mxu0 %v92
  %v574 = vpop.f32.mrf.mxu0
  %v575 = vadd.f32 %v321, %v574
  %576 = vmatmul.f32.gmra.mxu0 %v93
  %v577 = vpop.f32.mrf.mxu0
  %v578 = vadd.f32 %v321, %v577
  %579 = vmatmul.f32.gmra.mxu0 %v94
  %v580 = vpop.f32.mrf.mxu0
  %v581 = vadd.f32 %v321, %v580
  %582 = vmatmul.f32.gmra.mxu0 %v95
  %v583 = vpop.f32.mrf.mxu0
  %v584 = vadd.f32 %v321, %v583
  %585 = vmatmul.f32.gmra.mxu0 %v96
  %v586 = vpop.f32.mrf.mxu0
  %v587 = vadd.f32 %v321, %v586
  %588 = vmatmul.f32.gmra.mxu0 %v97
  %v589 = vpop.f32.mrf.mxu0
  %v590 = vadd.f32 %v321, %v589
  %591 = vmatmul.f32.gmra.mxu0 %v98
  %v592 = vpop.f32.mrf.mxu0
  %v593 = vadd.f32 %v321, %v592
  %594 = vmatmul.f32.gmra.mxu0 %v99
  %v595 = vpop.f32.mrf.mxu0
  %v596 = vadd.f32 %v321, %v595
  %597 = vmatmul.f32.gmra.mxu0 %v100
  %v598 = vpop.f32.mrf.mxu0
  %v599 = vadd.f32 %v321, %v598
  %600 = vmatmul.f32.gmra.mxu0 %v101
  %v601 = vpop.f32.mrf.mxu0
  %v602 = vadd.f32 %v321, %v601
  %603 = vmatmul.f32.gmra.mxu0 %v102
  %v604 = vpop.f32.mrf.mxu0
  %v605 = vadd.f32 %v321, %v604
  %606 = vmatmul.f32.gmra.mxu0 %v103
  %v607 = vpop.f32.mrf.mxu0
  %v608 = vadd.f32 %v321, %v607
  %609 = vmatmul.f32.gmra.mxu0 %v104
  %v610 = vpop.f32.mrf.mxu0
  %v611 = vadd.f32 %v321, %v610
  %612 = vmatmul.f32.gmra.mxu0 %v105
  %v613 = vpop.f32.mrf.mxu0
  %v614 = vadd.f32 %v321, %v613
  %615 = vmatmul.f32.gmra.mxu0 %v106
  %v616 = vpop.f32.mrf.mxu0
  %v617 = vadd.f32 %v321, %v616
  %618 = vmatmul.f32.gmra.mxu0 %v107
  %v619 = vpop.f32.mrf.mxu0
  %v620 = vadd.f32 %v321, %v619
  %621 = vmatmul.f32.gmra.mxu0 %v108
  %v622 = vpop.f32.mrf.mxu0
  %v623 = vadd.f32 %v321, %v622
  %624 = vmatmul.f32.gmra.mxu0 %v109
  %v625 = vpop.f32.mrf.mxu0
  %v626 = vadd.f32 %v321, %v625
  %627 = vmatmul.f32.gmra.mxu0 %v110
  %v628 = vpop.f32.mrf.mxu0
  %v629 = vadd.f32 %v321, %v628
  %630 = vmatmul.f32.gmra.mxu0 %v111
  %v631 = vpop.f32.mrf.mxu0
  %v632 = vadd.f32 %v321, %v631
  %633 = vmatmul.f32.gmra.mxu0 %v112
  %v634 = vpop.f32.mrf.mxu0
  %v635 = vadd.f32 %v321, %v634
  %636 = vmatmul.f32.gmra.mxu0 %v113
  %v637 = vpop.f32.mrf.mxu0
  %v638 = vadd.f32 %v321, %v637
  %639 = vmatmul.f32.gmra.mxu0 %v114
  %v640 = vpop.f32.mrf.mxu0
  %v641 = vadd.f32 %v321, %v640
  %642 = vmatmul.f32.gmra.mxu0 %v115
  %v643 = vpop.f32.mrf.mxu0
  %v644 = vadd.f32 %v321, %v643
  %645 = vmatmul.f32.gmra.mxu0 %v116
  %v646 = vpop.f32.mrf.mxu0
  %v647 = vadd.f32 %v321, %v646
  %648 = vmatmul.f32.gmra.mxu0 %v117
  %v649 = vpop.f32.mrf.mxu0
  %v650 = vadd.f32 %v321, %v649
  %651 = vmatmul.f32.gmra.mxu0 %v118
  %v652 = vpop.f32.mrf.mxu0
  %v653 = vadd.f32 %v321, %v652
  %654 = vmatmul.f32.gmra.mxu0 %v119
  %v655 = vpop.f32.mrf.mxu0
  %v656 = vadd.f32 %v321, %v655
  %657 = vmatmul.f32.gmra.mxu0 %v120
  %v658 = vpop.f32.mrf.mxu0
  %v659 = vadd.f32 %v321, %v658
  %660 = vmatmul.f32.gmra.mxu0 %v121
  %v661 = vpop.f32.mrf.mxu0
  %v662 = vadd.f32 %v321, %v661
  %663 = vmatmul.f32.gmra.mxu0 %v122
  %v664 = vpop.f32.mrf.mxu0
  %v665 = vadd.f32 %v321, %v664
  %666 = vmatmul.f32.gmra.mxu0 %v123
  %v667 = vpop.f32.mrf.mxu0
  %v668 = vadd.f32 %v321, %v667
  %669 = vmatmul.f32.gmra.mxu0 %v124
  %v670 = vpop.f32.mrf.mxu0
  %v671 = vadd.f32 %v321, %v670
  %672 = vmatmul.f32.gmra.mxu0 %v125
  %v673 = vpop.f32.mrf.mxu0
  %v674 = vadd.f32 %v321, %v673
  %675 = vmatmul.f32.gmra.mxu0 %v126
  %v676 = vpop.f32.mrf.mxu0
  %v677 = vadd.f32 %v321, %v676
  %678 = vmatmul.f32.gmra.mxu0 %v127
  %v679 = vpop.f32.mrf.mxu0
  %v680 = vadd.f32 %v321, %v679
  %681 = vmatmul.f32.gmra.mxu0 %v128
  %v682 = vpop.f32.mrf.mxu0
  %v683 = vadd.f32 %v321, %v682
  %684 = vmatmul.f32.gmra.mxu0 %v129
  %v685 = vpop.f32.mrf.mxu0
  %v686 = vadd.f32 %v321, %v685
  %687 = vmatmul.f32.gmra.mxu0 %v130
  %v688 = vpop.f32.mrf.mxu0
  %v689 = vadd.f32 %v321, %v688
  %690 = vmatmul.f32.gmra.mxu0 %v131
  %v691 = vpop.f32.mrf.mxu0
  %v692 = vadd.f32 %v321, %v691
  %693 = vmatmul.f32.gmra.mxu0 %v132
  %v694 = vpop.f32.mrf.mxu0
  %v695 = vadd.f32 %v321, %v694
  %696 = vmatmul.f32.gmra.mxu0 %v133
  %v697 = vpop.f32.mrf.mxu0
  %v698 = vadd.f32 %v321, %v697
  %699 = vmatmul.f32.gmra.mxu0 %v134
  %v700 = vpop.f32.mrf.mxu0
  %v701 = vadd.f32 %v321, %v700
  %702 = vmatmul.f32.gmra.mxu0 %v135
  %v703 = vpop.f32.mrf.mxu0
  %v704 = vadd.f32 %v321, %v703
  %705 = vmatmul.f32.gmra.mxu0 %v136
  %v706 = vpop.f32.mrf.mxu0
  %v707 = vadd.f32 %v321, %v706
  %708 = vmatmul.f32.gmra.mxu0 %v137
  %v709 = vpop.f32.mrf.mxu0
  %v710 = vadd.f32 %v321, %v709
  %711 = vmatmul.f32.gmra.mxu0 %v138
  %v712 = vpop.f32.mrf.mxu0
  %v713 = vadd.f32 %v321, %v712
  %714 = vmatmul.f32.gmra.mxu0 %v139
  %v715 = vpop.f32.mrf.mxu0
  %v716 = vadd.f32 %v321, %v715
  %717 = vmatmul.f32.gmra.mxu0 %v140
  %v718 = vpop.f32.mrf.mxu0
  %v719 = vadd.f32 %v321, %v718
  %720 = vmatmul.f32.gmra.mxu0 %v141
  %v721 = vpop.f32.mrf.mxu0
  %v722 = vadd.f32 %v321, %v721
  %723 = vmatmul.f32.gmra.mxu0 %v142
  %v724 = vpop.f32.mrf.mxu0
  %v725 = vadd.f32 %v321, %v724
  %726 = vmatmul.f32.gmra.mxu0 %v143
  %v727 = vpop.f32.mrf.mxu0
  %v728 = vadd.f32 %v321, %v727
  %729 = vmatmul.f32.gmra.mxu0 %v144
  %v730 = vpop.f32.mrf.mxu0
  %v731 = vadd.f32 %v321, %v730
  %732 = vmatmul.f32.gmra.mxu0 %v145
  %v733 = vpop.f32.mrf.mxu0
  %v734 = vadd.f32 %v321, %v733
  %735 = vmatmul.f32.gmra.mxu0 %v146
  %v736 = vpop.f32.mrf.mxu0
  %v737 = vadd.f32 %v321, %v736
  %738 = vmatmul.f32.gmra.mxu0 %v147
  %v739 = vpop.f32.mrf.mxu0
  %v740 = vadd.f32 %v321, %v739
  %741 = vmatmul.f32.gmra.mxu0 %v148
  %v742 = vpop.f32.mrf.mxu0
  %v743 = vadd.f32 %v321, %v742
  %744 = vmatmul.f32.gmra.mxu0 %v149
  %v745 = vpop.f32.mrf.mxu0
  %v746 = vadd.f32 %v321, %v745
  %747 = vmatmul.f32.gmra.mxu0 %v150
  %v748 = vpop.f32.mrf.mxu0
  %v749 = vadd.f32 %v321, %v748
  %750 = vmatmul.f32.gmra.mxu0 %v151
  %v751 = vpop.f32.mrf.mxu0
  %v752 = vadd.f32 %v321, %v751
  %753 = vmatmul.f32.gmra.mxu0 %v152
  %v754 = vpop.f32.mrf.mxu0
  %v755 = vadd.f32 %v321, %v754
  %756 = vmatmul.f32.gmra.mxu0 %v153
  %v757 = vpop.f32.mrf.mxu0
  %v758 = vadd.f32 %v321, %v757
  %759 = vmatmul.f32.gmra.mxu0 %v154
  %v760 = vpop.f32.mrf.mxu0
  %v761 = vadd.f32 %v321, %v760
  %762 = vmatmul.f32.gmra.mxu0 %v155
  %v763 = vpop.f32.mrf.mxu0
  %v764 = vadd.f32 %v321, %v763
  %765 = vmatmul.f32.gmra.mxu0 %v156
  %v766 = vpop.f32.mrf.mxu0
  %v767 = vadd.f32 %v321, %v766
  %768 = vmatmul.f32.gmra.mxu0 %v157
  %v769 = vpop.f32.mrf.mxu0
  %v770 = vadd.f32 %v321, %v769
  %771 = vmatmul.f32.gmra.mxu0 %v158
  %v772 = vpop.f32.mrf.mxu0
  %v773 = vadd.f32 %v321, %v772
  %774 = vmatmul.f32.gmra.mxu0 %v159
  %v775 = vpop.f32.mrf.mxu0
  %v776 = vadd.f32 %v321, %v775
  %777 = vmatmul.f32.gmra.mxu0 %v160
  %v778 = vpop.f32.mrf.mxu0
  %v779 = vadd.f32 %v321, %v778
  %780 = vmatmul.f32.gmra.mxu0 %v161
  %v781 = vpop.f32.mrf.mxu0
  %v782 = vadd.f32 %v321, %v781
  %783 = vmatmul.f32.gmra.mxu0 %v162
  %v784 = vpop.f32.mrf.mxu0
  %v785 = vadd.f32 %v321, %v784
  %786 = vmatmul.f32.gmra.mxu0 %v163
  %v787 = vpop.f32.mrf.mxu0
  %v788 = vadd.f32 %v321, %v787
  %789 = vmatmul.f32.gmra.mxu0 %v164
  %v790 = vpop.f32.mrf.mxu0
  %v791 = vadd.f32 %v321, %v790
  %792 = vmatmul.f32.gmra.mxu0 %v165
  %v793 = vpop.f32.mrf.mxu0
  %v794 = vadd.f32 %v321, %v793
  %795 = vmatmul.f32.gmra.mxu0 %v166
  %v796 = vpop.f32.mrf.mxu0
  %v797 = vadd.f32 %v321, %v796
  %798 = vmatmul.f32.gmra.mxu0 %v167
  %v799 = vpop.f32.mrf.mxu0
  %v800 = vadd.f32 %v321, %v799
  %801 = vmatmul.f32.gmra.mxu0 %v168
  %v802 = vpop.f32.mrf.mxu0
  %v803 = vadd.f32 %v321, %v802
  %804 = vmatmul.f32.gmra.mxu0 %v169
  %v805 = vpop.f32.mrf.mxu0
  %v806 = vadd.f32 %v321, %v805
  %807 = vmatmul.f32.gmra.mxu0 %v170
  %v808 = vpop.f32.mrf.mxu0
  %v809 = vadd.f32 %v321, %v808
  %810 = vmatmul.f32.gmra.mxu0 %v171
  %v811 = vpop.f32.mrf.mxu0
  %v812 = vadd.f32 %v321, %v811
  %813 = vmatmul.f32.gmra.mxu0 %v172
  %v814 = vpop.f32.mrf.mxu0
  %v815 = vadd.f32 %v321, %v814
  %816 = vmatmul.f32.gmra.mxu0 %v173
  %v817 = vpop.f32.mrf.mxu0
  %v818 = vadd.f32 %v321, %v817
  %819 = vmatmul.f32.gmra.mxu0 %v174
  %v820 = vpop.f32.mrf.mxu0
  %v821 = vadd.f32 %v321, %v820
  %822 = vmatmul.f32.gmra.mxu0 %v175
  %v823 = vpop.f32.mrf.mxu0
  %v824 = vadd.f32 %v321, %v823
  %825 = vmatmul.f32.gmra.mxu0 %v176
  %v826 = vpop.f32.mrf.mxu0
  %v827 = vadd.f32 %v321, %v826
  %828 = vmatmul.f32.gmra.mxu0 %v177
  %v829 = vpop.f32.mrf.mxu0
  %v830 = vadd.f32 %v321, %v829
  %831 = vmatmul.f32.gmra.mxu0 %v178
  %v832 = vpop.f32.mrf.mxu0
  %v833 = vadd.f32 %v321, %v832
  %834 = vmatmul.f32.gmra.mxu0 %v179
  %v835 = vpop.f32.mrf.mxu0
  %v836 = vadd.f32 %v321, %v835
  %837 = vmatmul.f32.gmra.mxu0 %v180
  %v838 = vpop.f32.mrf.mxu0
  %v839 = vadd.f32 %v321, %v838
  %840 = vmatmul.f32.gmra.mxu0 %v181
  %v841 = vpop.f32.mrf.mxu0
  %v842 = vadd.f32 %v321, %v841
  %843 = vmatmul.f32.gmra.mxu0 %v182
  %v844 = vpop.f32.mrf.mxu0
  %v845 = vadd.f32 %v321, %v844
  %846 = vmatmul.f32.gmra.mxu0 %v183
  %v847 = vpop.f32.mrf.mxu0
  %v848 = vadd.f32 %v321, %v847
  %849 = vmatmul.f32.gmra.mxu0 %v184
  %v850 = vpop.f32.mrf.mxu0
  %v851 = vadd.f32 %v321, %v850
  %852 = vmatmul.f32.gmra.mxu0 %v185
  %v853 = vpop.f32.mrf.mxu0
  %v854 = vadd.f32 %v321, %v853
  %855 = vmatmul.f32.gmra.mxu0 %v186
  %v856 = vpop.f32.mrf.mxu0
  %v857 = vadd.f32 %v321, %v856
  %858 = vmatmul.f32.gmra.mxu0 %v187
  %v859 = vpop.f32.mrf.mxu0
  %v860 = vadd.f32 %v321, %v859
  %861 = vmatmul.f32.gmra.mxu0 %v188
  %v862 = vpop.f32.mrf.mxu0
  %v863 = vadd.f32 %v321, %v862
  %864 = vmatmul.f32.gmra.mxu0 %v189
  %v865 = vpop.f32.mrf.mxu0
  %v866 = vadd.f32 %v321, %v865
  %867 = vmatmul.f32.gmra.mxu0 %v190
  %v868 = vpop.f32.mrf.mxu0
  %v869 = vadd.f32 %v321, %v868
  %870 = vmatmul.f32.gmra.mxu0 %v191
  %v871 = vpop.f32.mrf.mxu0
  %v872 = vadd.f32 %v321, %v871
  %873 = vmatmul.f32.gmra.mxu0 %v192
  %v874 = vpop.f32.mrf.mxu0
  %v875 = vadd.f32 %v321, %v874
  %876 = vmatmul.f32.gmra.mxu0 %v193
  %v877 = vpop.f32.mrf.mxu0
  %v878 = vadd.f32 %v321, %v877
  %879 = vmatmul.f32.gmra.mxu0 %v194
  %v880 = vpop.f32.mrf.mxu0
  %v881 = vadd.f32 %v321, %v880
  %882 = vmatmul.f32.gmra.mxu0 %v195
  %v883 = vpop.f32.mrf.mxu0
  %v884 = vadd.f32 %v321, %v883
  %885 = vmatmul.f32.gmra.mxu0 %v196
  %v886 = vpop.f32.mrf.mxu0
  %v887 = vadd.f32 %v321, %v886
  %888 = vmatmul.f32.gmra.mxu0 %v197
  %v889 = vpop.f32.mrf.mxu0
  %v890 = vadd.f32 %v321, %v889
  %891 = vmatmul.f32.gmra.mxu0 %v198
  %v892 = vpop.f32.mrf.mxu0
  %v893 = vadd.f32 %v321, %v892
  %894 = vmatmul.f32.gmra.mxu0 %v199
  %v895 = vpop.f32.mrf.mxu0
  %v896 = vadd.f32 %v321, %v895
  %897 = vmatmul.f32.gmra.mxu0 %v200
  %v898 = vpop.f32.mrf.mxu0
  %v899 = vadd.f32 %v321, %v898
  %900 = vmatmul.f32.gmra.mxu0 %v201
  %v901 = vpop.f32.mrf.mxu0
  %v902 = vadd.f32 %v321, %v901
  %903 = vmatmul.f32.gmra.mxu0 %v202
  %v904 = vpop.f32.mrf.mxu0
  %v905 = vadd.f32 %v321, %v904
  %906 = vmatmul.f32.gmra.mxu0 %v203
  %v907 = vpop.f32.mrf.mxu0
  %v908 = vadd.f32 %v321, %v907
  %909 = vmatmul.f32.gmra.mxu0 %v204
  %v910 = vpop.f32.mrf.mxu0
  %v911 = vadd.f32 %v321, %v910
  %912 = vmatmul.f32.gmra.mxu0 %v205
  %v913 = vpop.f32.mrf.mxu0
  %v914 = vadd.f32 %v321, %v913
  %915 = vmatmul.f32.gmra.mxu0 %v206
  %v916 = vpop.f32.mrf.mxu0
  %v917 = vadd.f32 %v321, %v916
  %918 = vmatmul.f32.gmra.mxu0 %v207
  %v919 = vpop.f32.mrf.mxu0
  %v920 = vadd.f32 %v321, %v919
  %921 = vmatmul.f32.gmra.mxu0 %v208
  %v922 = vpop.f32.mrf.mxu0
  %v923 = vadd.f32 %v321, %v922
  %924 = vmatmul.f32.gmra.mxu0 %v209
  %v925 = vpop.f32.mrf.mxu0
  %v926 = vadd.f32 %v321, %v925
  %927 = vmatmul.f32.gmra.mxu0 %v210
  %v928 = vpop.f32.mrf.mxu0
  %v929 = vadd.f32 %v321, %v928
  %930 = vmatmul.f32.gmra.mxu0 %v211
  %v931 = vpop.f32.mrf.mxu0
  %v932 = vadd.f32 %v321, %v931
  %933 = vmatmul.f32.gmra.mxu0 %v212
  %v934 = vpop.f32.mrf.mxu0
  %v935 = vadd.f32 %v321, %v934
  %936 = vmatmul.f32.gmra.mxu0 %v213
  %v937 = vpop.f32.mrf.mxu0
  %v938 = vadd.f32 %v321, %v937
  %939 = vmatmul.f32.gmra.mxu0 %v214
  %v940 = vpop.f32.mrf.mxu0
  %v941 = vadd.f32 %v321, %v940
  %942 = vmatmul.f32.gmra.mxu0 %v215
  %v943 = vpop.f32.mrf.mxu0
  %v944 = vadd.f32 %v321, %v943
  %945 = vmatmul.f32.gmra.mxu0 %v216
  %v946 = vpop.f32.mrf.mxu0
  %v947 = vadd.f32 %v321, %v946
  %948 = vmatmul.f32.gmra.mxu0 %v217
  %v949 = vpop.f32.mrf.mxu0
  %v950 = vadd.f32 %v321, %v949
  %951 = vmatmul.f32.gmra.mxu0 %v218
  %v952 = vpop.f32.mrf.mxu0
  %v953 = vadd.f32 %v321, %v952
  %954 = vmatmul.f32.gmra.mxu0 %v219
  %v955 = vpop.f32.mrf.mxu0
  %v956 = vadd.f32 %v321, %v955
  %957 = vmatmul.f32.gmra.mxu0 %v220
  %v958 = vpop.f32.mrf.mxu0
  %v959 = vadd.f32 %v321, %v958
  %960 = vmatmul.f32.gmra.mxu0 %v221
  %v961 = vpop.f32.mrf.mxu0
  %v962 = vadd.f32 %v321, %v961
  %963 = vmatmul.f32.gmra.mxu0 %v222
  %v964 = vpop.f32.mrf.mxu0
  %v965 = vadd.f32 %v321, %v964
  %966 = vmatmul.f32.gmra.mxu0 %v223
  %v967 = vpop.f32.mrf.mxu0
  %v968 = vadd.f32 %v321, %v967
  %969 = vmatmul.f32.gmra.mxu0 %v224
  %v970 = vpop.f32.mrf.mxu0
  %v971 = vadd.f32 %v321, %v970
  %972 = vmatmul.f32.gmra.mxu0 %v225
  %v973 = vpop.f32.mrf.mxu0
  %v974 = vadd.f32 %v321, %v973
  %975 = vmatmul.f32.gmra.mxu0 %v226
  %v976 = vpop.f32.mrf.mxu0
  %v977 = vadd.f32 %v321, %v976
  %978 = vmatmul.f32.gmra.mxu0 %v227
  %v979 = vpop.f32.mrf.mxu0
  %v980 = vadd.f32 %v321, %v979
  %981 = vmatmul.f32.gmra.mxu0 %v228
  %v982 = vpop.f32.mrf.mxu0
  %v983 = vadd.f32 %v321, %v982
  %984 = vmatmul.f32.gmra.mxu0 %v229
  %v985 = vpop.f32.mrf.mxu0
  %v986 = vadd.f32 %v321, %v985
  %987 = vmatmul.f32.gmra.mxu0 %v230
  %v988 = vpop.f32.mrf.mxu0
  %v989 = vadd.f32 %v321, %v988
  %990 = vmatmul.f32.gmra.mxu0 %v231
  %v991 = vpop.f32.mrf.mxu0
  %v992 = vadd.f32 %v321, %v991
  %993 = vmatmul.f32.gmra.mxu0 %v232
  %v994 = vpop.f32.mrf.mxu0
  %v995 = vadd.f32 %v321, %v994
  %996 = vmatmul.f32.gmra.mxu0 %v233
  %v997 = vpop.f32.mrf.mxu0
  %v998 = vadd.f32 %v321, %v997
  %999 = vmatmul.f32.gmra.mxu0 %v234
  %v1000 = vpop.f32.mrf.mxu0
  %v1001 = vadd.f32 %v321, %v1000
  %1002 = vmatmul.f32.gmra.mxu0 %v235
  %v1003 = vpop.f32.mrf.mxu0
  %v1004 = vadd.f32 %v321, %v1003
  %1005 = vmatmul.f32.gmra.mxu0 %v236
  %v1006 = vpop.f32.mrf.mxu0
  %v1007 = vadd.f32 %v321, %v1006
  %1008 = vmatmul.f32.gmra.mxu0 %v237
  %v1009 = vpop.f32.mrf.mxu0
  %v1010 = vadd.f32 %v321, %v1009
  %1011 = vmatmul.f32.gmra.mxu0 %v238
  %v1012 = vpop.f32.mrf.mxu0
  %v1013 = vadd.f32 %v321, %v1012
  %1014 = vmatmul.f32.gmra.mxu0 %v239
  %v1015 = vpop.f32.mrf.mxu0
  %v1016 = vadd.f32 %v321, %v1015
  %1017 = vmatmul.f32.gmra.mxu0 %v240
  %v1018 = vpop.f32.mrf.mxu0
  %v1019 = vadd.f32 %v321, %v1018
  %1020 = vmatmul.f32.gmra.mxu0 %v241
  %v1021 = vpop.f32.mrf.mxu0
  %v1022 = vadd.f32 %v321, %v1021
  %1023 = vmatmul.f32.gmra.mxu0 %v242
  %v1024 = vpop.f32.mrf.mxu0
  %v1025 = vadd.f32 %v321, %v1024
  %1026 = vmatmul.f32.gmra.mxu0 %v243
  %v1027 = vpop.f32.mrf.mxu0
  %v1028 = vadd.f32 %v321, %v1027
  %1029 = vmatmul.f32.gmra.mxu0 %v244
  %v1030 = vpop.f32.mrf.mxu0
  %v1031 = vadd.f32 %v321, %v1030
  %1032 = vmatmul.f32.gmra.mxu0 %v245
  %v1033 = vpop.f32.mrf.mxu0
  %v1034 = vadd.f32 %v321, %v1033
  %1035 = vmatmul.f32.gmra.mxu0 %v246
  %v1036 = vpop.f32.mrf.mxu0
  %v1037 = vadd.f32 %v321, %v1036
  %1038 = vmatmul.f32.gmra.mxu0 %v247
  %v1039 = vpop.f32.mrf.mxu0
  %v1040 = vadd.f32 %v321, %v1039
  %1041 = vmatmul.f32.gmra.mxu0 %v248
  %v1042 = vpop.f32.mrf.mxu0
  %v1043 = vadd.f32 %v321, %v1042
  %1044 = vmatmul.f32.gmra.mxu0 %v249
  %v1045 = vpop.f32.mrf.mxu0
  %v1046 = vadd.f32 %v321, %v1045
  %1047 = vmatmul.f32.gmra.mxu0 %v250
  %v1048 = vpop.f32.mrf.mxu0
  %v1049 = vadd.f32 %v321, %v1048
  %1050 = vmatmul.f32.gmra.mxu0 %v251
  %v1051 = vpop.f32.mrf.mxu0
  %v1052 = vadd.f32 %v321, %v1051
  %1053 = vmatmul.f32.gmra.mxu0 %v252
  %v1054 = vpop.f32.mrf.mxu0
  %v1055 = vadd.f32 %v321, %v1054
  %1056 = vmatmul.f32.gmra.mxu0 %v253
  %v1057 = vpop.f32.mrf.mxu0
  %v1058 = vadd.f32 %v321, %v1057
  %1059 = vmatmul.f32.gmra.mxu0 %v254
  %v1060 = vpop.f32.mrf.mxu0
  %v1061 = vadd.f32 %v321, %v1060
  %1062 = vmatmul.f32.gmra.mxu0 %v255
  %v1063 = vpop.f32.mrf.mxu0
  %v1064 = vadd.f32 %v321, %v1063
  %1065 = vmatmul.f32.gmra.mxu0 %v256
  %v1066 = vpop.f32.mrf.mxu0
  %v1067 = vadd.f32 %v321, %v1066
  %1068 = vmatmul.f32.gmra.mxu0 %v257
  %v1069 = vpop.f32.mrf.mxu0
  %v1070 = vadd.f32 %v321, %v1069
  %1071 = vmatmul.f32.gmra.mxu0 %v258
  %v1072 = vpop.f32.mrf.mxu0
  %v1073 = vadd.f32 %v321, %v1072
  %1074 = vmatmul.f32.gmra.mxu0 %v259
  %v1075 = vpop.f32.mrf.mxu0
  %v1076 = vadd.f32 %v321, %v1075
  %1077 = vmatmul.f32.gmra.mxu0 %v260
  %v1078 = vpop.f32.mrf.mxu0
  %v1079 = vadd.f32 %v321, %v1078
  %1080 = vmatmul.f32.gmra.mxu0 %v261
  %v1081 = vpop.f32.mrf.mxu0
  %v1082 = vadd.f32 %v321, %v1081
  %1083 = vmatmul.f32.gmra.mxu0 %v262
  %v1084 = vpop.f32.mrf.mxu0
  %v1085 = vadd.f32 %v321, %v1084
  %1086 = vmatmul.f32.gmra.mxu0 %v263
  %v1087 = vpop.f32.mrf.mxu0
  %v1088 = vadd.f32 %v321, %v1087
  %1089 = vmatmul.f32.gmra.mxu0 %v264
  %v1090 = vpop.f32.mrf.mxu0
  %v1091 = vadd.f32 %v321, %v1090
  %1092 = vmatmul.f32.gmra.mxu0 %v265
  %v1093 = vpop.f32.mrf.mxu0
  %v1094 = vadd.f32 %v321, %v1093
  %1095 = vmatmul.f32.gmra.mxu0 %v266
  %v1096 = vpop.f32.mrf.mxu0
  %v1097 = vadd.f32 %v321, %v1096
  %1098 = vmatmul.f32.gmra.mxu0 %v267
  %v1099 = vpop.f32.mrf.mxu0
  %v1100 = vadd.f32 %v321, %v1099
  %1101 = vmatmul.f32.gmra.mxu0 %v268
  %v1102 = vpop.f32.mrf.mxu0
  %v1103 = vadd.f32 %v321, %v1102
  %1104 = vmatmul.f32.gmra.mxu0 %v269
  %v1105 = vpop.f32.mrf.mxu0
  %v1106 = vadd.f32 %v321, %v1105
  %1107 = vmatmul.f32.gmra.mxu0 %v270
  %v1108 = vpop.f32.mrf.mxu0
  %v1109 = vadd.f32 %v321, %v1108
  %1110 = vmatmul.f32.gmra.mxu0 %v271
  %v1111 = vpop.f32.mrf.mxu0
  %v1112 = vadd.f32 %v321, %v1111
  %1113 = vmatmul.f32.gmra.mxu0 %v272
  %v1114 = vpop.f32.mrf.mxu0
  %v1115 = vadd.f32 %v321, %v1114
  %1116 = vmatmul.f32.gmra.mxu0 %v273
  %v1117 = vpop.f32.mrf.mxu0
  %v1118 = vadd.f32 %v321, %v1117
  %1119 = vmatmul.f32.gmra.mxu0 %v274
  %v1120 = vpop.f32.mrf.mxu0
  %v1121 = vadd.f32 %v321, %v1120
  %1122 = vmatmul.f32.gmra.mxu0 %v275
  %v1123 = vpop.f32.mrf.mxu0
  %v1124 = vadd.f32 %v321, %v1123
  %1125 = vmatmul.f32.gmra.mxu0 %v276
  %v1126 = vpop.f32.mrf.mxu0
  %v1127 = vadd.f32 %v321, %v1126
  %1128 = vmatmul.f32.gmra.mxu0 %v277
  %v1129 = vpop.f32.mrf.mxu0
  %v1130 = vadd.f32 %v321, %v1129
  %1131 = vmatmul.f32.gmra.mxu0 %v278
  %v1132 = vpop.f32.mrf.mxu0
  %v1133 = vadd.f32 %v321, %v1132
  %1134 = vmatmul.f32.gmra.mxu0 %v279
  %v1135 = vpop.f32.mrf.mxu0
  %v1136 = vadd.f32 %v321, %v1135
  %1137 = vmatmul.f32.gmra.mxu0 %v280
  %v1138 = vpop.f32.mrf.mxu0
  %v1139 = vadd.f32 %v321, %v1138
  %1140 = vmatmul.f32.gmra.mxu0 %v281
  %v1141 = vpop.f32.mrf.mxu0
  %v1142 = vadd.f32 %v321, %v1141
  %1143 = vmatmul.f32.gmra.mxu0 %v282
  %v1144 = vpop.f32.mrf.mxu0
  %v1145 = vadd.f32 %v321, %v1144
  %1146 = vmatmul.f32.gmra.mxu0 %v283
  %v1147 = vpop.f32.mrf.mxu0
  %v1148 = vadd.f32 %v321, %v1147
  %1149 = vmatmul.f32.gmra.mxu0 %v284
  %v1150 = vpop.f32.mrf.mxu0
  %v1151 = vadd.f32 %v321, %v1150
  %1152 = vmatmul.f32.gmra.mxu0 %v285
  %v1153 = vpop.f32.mrf.mxu0
  %v1154 = vadd.f32 %v321, %v1153
  %1155 = vmatmul.f32.gmra.mxu0 %v286
  %v1156 = vpop.f32.mrf.mxu0
  %v1157 = vadd.f32 %v321, %v1156
  %1158 = vmatmul.f32.gmra.mxu0 %v287
  %v1159 = vpop.f32.mrf.mxu0
  %v1160 = vadd.f32 %v321, %v1159
  %1161 = vmatmul.f32.gmra.mxu0 %v288
  %v1162 = vpop.f32.mrf.mxu0
  %v1163 = vadd.f32 %v321, %v1162
  %1164 = vmatmul.f32.gmra.mxu0 %v289
  %v1165 = vpop.f32.mrf.mxu0
  %v1166 = vadd.f32 %v321, %v1165
  %1167 = vmatmul.f32.gmra.mxu0 %v290
  %v1168 = vpop.f32.mrf.mxu0
  %v1169 = vadd.f32 %v321, %v1168
  %1170 = vmatmul.f32.gmra.mxu0 %v291
  %v1171 = vpop.f32.mrf.mxu0
  %v1172 = vadd.f32 %v321, %v1171
  %1173 = vmatmul.f32.gmra.mxu0 %v292
  %v1174 = vpop.f32.mrf.mxu0
  %v1175 = vadd.f32 %v321, %v1174
  %1176 = vmatmul.f32.gmra.mxu0 %v293
  %v1177 = vpop.f32.mrf.mxu0
  %v1178 = vadd.f32 %v321, %v1177
  %1179 = vmatmul.f32.gmra.mxu0 %v294
  %v1180 = vpop.f32.mrf.mxu0
  %v1181 = vadd.f32 %v321, %v1180
  %1182 = vmatmul.f32.gmra.mxu0 %v295
  %v1183 = vpop.f32.mrf.mxu0
  %v1184 = vadd.f32 %v321, %v1183
  %1185 = vmatmul.f32.gmra.mxu0 %v296
  %v1186 = vpop.f32.mrf.mxu0
  %v1187 = vadd.f32 %v321, %v1186
  %1188 = vmatmul.f32.gmra.mxu0 %v297
  %v1189 = vpop.f32.mrf.mxu0
  %v1190 = vadd.f32 %v321, %v1189
  %1191 = vmatmul.f32.gmra.mxu0 %v298
  %v1192 = vpop.f32.mrf.mxu0
  %v1193 = vadd.f32 %v321, %v1192
  %1194 = vmatmul.f32.gmra.mxu0 %v299
  %v1195 = vpop.f32.mrf.mxu0
  %v1196 = vadd.f32 %v321, %v1195
  %1197 = vmatmul.f32.gmra.mxu0 %v300
  %v1198 = vpop.f32.mrf.mxu0
  %v1199 = vadd.f32 %v321, %v1198
  %1200 = vmatmul.f32.gmra.mxu0 %v301
  %v1201 = vpop.f32.mrf.mxu0
  %v1202 = vadd.f32 %v321, %v1201
  %1203 = vmatmul.f32.gmra.mxu0 %v302
  %v1204 = vpop.f32.mrf.mxu0
  %v1205 = vadd.f32 %v321, %v1204
  %1206 = vdwg.mxu0
  %1207 = vst [vmem:[%s3] sm:$0xff] %v341
  %1208 = vst [vmem:[%s3 + $0x8] sm:$0xff] %v344
  %1209 = vst [vmem:[%s3 + $0x10] sm:$0xff] %v347
  %1210 = vst [vmem:[%s3 + $0x18] sm:$0xff] %v350
  %1211 = vst [vmem:[%s3 + $0x20] sm:$0xff] %v353
  %1212 = vst [vmem:[%s3 + $0x28] sm:$0xff] %v356
  %1213 = vst [vmem:[%s3 + $0x30] sm:$0xff] %v359
  %1214 = vst [vmem:[%s3 + $0x38] sm:$0xff] %v362
  %1215 = vst [vmem:[%s3 + $0x40] sm:$0xff] %v365
  %1216 = vst [vmem:[%s3 + $0x48] sm:$0xff] %v368
  %1217 = vst [vmem:[%s3 + $0x50] sm:$0xff] %v371
  %1218 = vst [vmem:[%s3 + $0x58] sm:$0xff] %v374
  %1219 = vst [vmem:[%s3 + $0x60] sm:$0xff] %v377
  %1220 = vst [vmem:[%s3 + $0x68] sm:$0xff] %v380
  %1221 = vst [vmem:[%s3 + $0x70] sm:$0xff] %v383
  %1222 = vst [vmem:[%s3 + $0x78] sm:$0xff] %v386
  %1223 = vst [vmem:[%s3 + $0x80] sm:$0xff] %v389
  %1224 = vst [vmem:[%s3 + $0x88] sm:$0xff] %v392
  %1225 = vst [vmem:[%s3 + $0x90] sm:$0xff] %v395
  %1226 = vst [vmem:[%s3 + $0x98] sm:$0xff] %v398
  %1227 = vst [vmem:[%s3 + $0xa0] sm:$0xff] %v401
  %1228 = vst [vmem:[%s3 + $0xa8] sm:$0xff] %v404
  %1229 = vst [vmem:[%s3 + $0xb0] sm:$0xff] %v407
  %1230 = vst [vmem:[%s3 + $0xb8] sm:$0xff] %v410
  %1231 = vst [vmem:[%s3 + $0xc0] sm:$0xff] %v413
  %1232 = vst [vmem:[%s3 + $0xc8] sm:$0xff] %v416
  %1233 = vst [vmem:[%s3 + $0xd0] sm:$0xff] %v419
  %1234 = vst [vmem:[%s3 + $0xd8] sm:$0xff] %v422
  %1235 = vst [vmem:[%s3 + $0xe0] sm:$0xff] %v425
  %1236 = vst [vmem:[%s3 + $0xe8] sm:$0xff] %v428
  %1237 = vst [vmem:[%s3 + $0xf0] sm:$0xff] %v431
  %1238 = vst [vmem:[%s3 + $0xf8] sm:$0xff] %v434
  %1239 = vst [vmem:[%s3 + $0x100] sm:$0xff] %v437
  %1240 = vst [vmem:[%s3 + $0x108] sm:$0xff] %v440
  %1241 = vst [vmem:[%s3 + $0x110] sm:$0xff] %v443
  %1242 = vst [vmem:[%s3 + $0x118] sm:$0xff] %v446
  %1243 = vst [vmem:[%s3 + $0x120] sm:$0xff] %v449
  %1244 = vst [vmem:[%s3 + $0x128] sm:$0xff] %v452
  %1245 = vst [vmem:[%s3 + $0x130] sm:$0xff] %v455
  %1246 = vst [vmem:[%s3 + $0x138] sm:$0xff] %v458
  %1247 = vst [vmem:[%s3 + $0x140] sm:$0xff] %v461
  %1248 = vst [vmem:[%s3 + $0x148] sm:$0xff] %v464
  %1249 = vst [vmem:[%s3 + $0x150] sm:$0xff] %v467
  %1250 = vst [vmem:[%s3 + $0x158] sm:$0xff] %v470
  %1251 = vst [vmem:[%s3 + $0x160] sm:$0xff] %v473
  %1252 = vst [vmem:[%s3 + $0x168] sm:$0xff] %v476
  %1253 = vst [vmem:[%s3 + $0x170] sm:$0xff] %v479
  %1254 = vst [vmem:[%s3 + $0x178] sm:$0xff] %v482
  %1255 = vst [vmem:[%s3 + $0x180] sm:$0xff] %v485
  %1256 = vst [vmem:[%s3 + $0x188] sm:$0xff] %v488
  %1257 = vst [vmem:[%s3 + $0x190] sm:$0xff] %v491
  %1258 = vst [vmem:[%s3 + $0x198] sm:$0xff] %v494
  %1259 = vst [vmem:[%s3 + $0x1a0] sm:$0xff] %v497
  %1260 = vst [vmem:[%s3 + $0x1a8] sm:$0xff] %v500
  %1261 = vst [vmem:[%s3 + $0x1b0] sm:$0xff] %v503
  %1262 = vst [vmem:[%s3 + $0x1b8] sm:$0xff] %v506
  %1263 = vst [vmem:[%s3 + $0x1c0] sm:$0xff] %v509
  %1264 = vst [vmem:[%s3 + $0x1c8] sm:$0xff] %v512
  %1265 = vst [vmem:[%s3 + $0x1d0] sm:$0xff] %v515
  %1266 = vst [vmem:[%s3 + $0x1d8] sm:$0xff] %v518
  %1267 = vst [vmem:[%s3 + $0x1e0] sm:$0xff] %v521
  %1268 = vst [vmem:[%s3 + $0x1e8] sm:$0xff] %v524
  %1269 = vst [vmem:[%s3 + $0x1f0] sm:$0xff] %v527
  %1270 = vst [vmem:[%s3 + $0x1f8] sm:$0xff] %v530
  %1271 = vst [vmem:[%s3 + $0x200] sm:$0xff] %v533
  %1272 = vst [vmem:[%s3 + $0x208] sm:$0xff] %v536
  %1273 = vst [vmem:[%s3 + $0x210] sm:$0xff] %v539
  %1274 = vst [vmem:[%s3 + $0x218] sm:$0xff] %v542
  %1275 = vst [vmem:[%s3 + $0x220] sm:$0xff] %v545
  %1276 = vst [vmem:[%s3 + $0x228] sm:$0xff] %v548
  %1277 = vst [vmem:[%s3 + $0x230] sm:$0xff] %v551
  %1278 = vst [vmem:[%s3 + $0x238] sm:$0xff] %v554
  %1279 = vst [vmem:[%s3 + $0x240] sm:$0xff] %v557
  %1280 = vst [vmem:[%s3 + $0x248] sm:$0xff] %v560
  %1281 = vst [vmem:[%s3 + $0x250] sm:$0xff] %v563
  %1282 = vst [vmem:[%s3 + $0x258] sm:$0xff] %v566
  %1283 = vst [vmem:[%s3 + $0x260] sm:$0xff] %v569
  %1284 = vst [vmem:[%s3 + $0x268] sm:$0xff] %v572
  %1285 = vst [vmem:[%s3 + $0x270] sm:$0xff] %v575
  %1286 = vst [vmem:[%s3 + $0x278] sm:$0xff] %v578
  %1287 = vst [vmem:[%s3 + $0x280] sm:$0xff] %v581
  %1288 = vst [vmem:[%s3 + $0x288] sm:$0xff] %v584
  %1289 = vst [vmem:[%s3 + $0x290] sm:$0xff] %v587
  %1290 = vst [vmem:[%s3 + $0x298] sm:$0xff] %v590
  %1291 = vst [vmem:[%s3 + $0x2a0] sm:$0xff] %v593
  %1292 = vst [vmem:[%s3 + $0x2a8] sm:$0xff] %v596
  %1293 = vst [vmem:[%s3 + $0x2b0] sm:$0xff] %v599
  %1294 = vst [vmem:[%s3 + $0x2b8] sm:$0xff] %v602
  %1295 = vst [vmem:[%s3 + $0x2c0] sm:$0xff] %v605
  %1296 = vst [vmem:[%s3 + $0x2c8] sm:$0xff] %v608
  %1297 = vst [vmem:[%s3 + $0x2d0] sm:$0xff] %v611
  %1298 = vst [vmem:[%s3 + $0x2d8] sm:$0xff] %v614
  %1299 = vst [vmem:[%s3 + $0x2e0] sm:$0xff] %v617
  %1300 = vst [vmem:[%s3 + $0x2e8] sm:$0xff] %v620
  %1301 = vst [vmem:[%s3 + $0x2f0] sm:$0xff] %v623
  %1302 = vst [vmem:[%s3 + $0x2f8] sm:$0xff] %v626
  %1303 = vst [vmem:[%s3 + $0x300] sm:$0xff] %v629
  %1304 = vst [vmem:[%s3 + $0x308] sm:$0xff] %v632
  %1305 = vst [vmem:[%s3 + $0x310] sm:$0xff] %v635
  %1306 = vst [vmem:[%s3 + $0x318] sm:$0xff] %v638
  %1307 = vst [vmem:[%s3 + $0x320] sm:$0xff] %v641
  %1308 = vst [vmem:[%s3 + $0x328] sm:$0xff] %v644
  %1309 = vst [vmem:[%s3 + $0x330] sm:$0xff] %v647
  %1310 = vst [vmem:[%s3 + $0x338] sm:$0xff] %v650
  %1311 = vst [vmem:[%s3 + $0x340] sm:$0xff] %v653
  %1312 = vst [vmem:[%s3 + $0x348] sm:$0xff] %v656
  %1313 = vst [vmem:[%s3 + $0x350] sm:$0xff] %v659
  %1314 = vst [vmem:[%s3 + $0x358] sm:$0xff] %v662
  %1315 = vst [vmem:[%s3 + $0x360] sm:$0xff] %v665
  %1316 = vst [vmem:[%s3 + $0x368] sm:$0xff] %v668
  %1317 = vst [vmem:[%s3 + $0x370] sm:$0xff] %v671
  %1318 = vst [vmem:[%s3 + $0x378] sm:$0xff] %v674
  %1319 = vst [vmem:[%s3 + $0x380] sm:$0xff] %v677
  %1320 = vst [vmem:[%s3 + $0x388] sm:$0xff] %v680
  %1321 = vst [vmem:[%s3 + $0x390] sm:$0xff] %v683
  %1322 = vst [vmem:[%s3 + $0x398] sm:$0xff] %v686
  %1323 = vst [vmem:[%s3 + $0x3a0] sm:$0xff] %v689
  %1324 = vst [vmem:[%s3 + $0x3a8] sm:$0xff] %v692
  %1325 = vst [vmem:[%s3 + $0x3b0] sm:$0xff] %v695
  %1326 = vst [vmem:[%s3 + $0x3b8] sm:$0xff] %v698
  %1327 = vst [vmem:[%s3 + $0x3c0] sm:$0xff] %v701
  %1328 = vst [vmem:[%s3 + $0x3c8] sm:$0xff] %v704
  %1329 = vst [vmem:[%s3 + $0x3d0] sm:$0xff] %v707
  %1330 = vst [vmem:[%s3 + $0x3d8] sm:$0xff] %v710
  %1331 = vst [vmem:[%s3 + $0x3e0] sm:$0xff] %v713
  %1332 = vst [vmem:[%s3 + $0x3e8] sm:$0xff] %v716
  %1333 = vst [vmem:[%s3 + $0x3f0] sm:$0xff] %v719
  %1334 = vst [vmem:[%s3 + $0x3f8] sm:$0xff] %v722
  %1335 = vst [vmem:[%s3 + $0x400] sm:$0xff] %v725
  %1336 = vst [vmem:[%s3 + $0x408] sm:$0xff] %v728
  %1337 = vst [vmem:[%s3 + $0x410] sm:$0xff] %v731
  %1338 = vst [vmem:[%s3 + $0x418] sm:$0xff] %v734
  %1339 = vst [vmem:[%s3 + $0x420] sm:$0xff] %v737
  %1340 = vst [vmem:[%s3 + $0x428] sm:$0xff] %v740
  %1341 = vst [vmem:[%s3 + $0x430] sm:$0xff] %v743
  %1342 = vst [vmem:[%s3 + $0x438] sm:$0xff] %v746
  %1343 = vst [vmem:[%s3 + $0x440] sm:$0xff] %v749
  %1344 = vst [vmem:[%s3 + $0x448] sm:$0xff] %v752
  %1345 = vst [vmem:[%s3 + $0x450] sm:$0xff] %v755
  %1346 = vst [vmem:[%s3 + $0x458] sm:$0xff] %v758
  %1347 = vst [vmem:[%s3 + $0x460] sm:$0xff] %v761
  %1348 = vst [vmem:[%s3 + $0x468] sm:$0xff] %v764
  %1349 = vst [vmem:[%s3 + $0x470] sm:$0xff] %v767
  %1350 = vst [vmem:[%s3 + $0x478] sm:$0xff] %v770
  %1351 = vst [vmem:[%s3 + $0x480] sm:$0xff] %v773
  %1352 = vst [vmem:[%s3 + $0x488] sm:$0xff] %v776
  %1353 = vst [vmem:[%s3 + $0x490] sm:$0xff] %v779
  %1354 = vst [vmem:[%s3 + $0x498] sm:$0xff] %v782
  %1355 = vst [vmem:[%s3 + $0x4a0] sm:$0xff] %v785
  %1356 = vst [vmem:[%s3 + $0x4a8] sm:$0xff] %v788
  %1357 = vst [vmem:[%s3 + $0x4b0] sm:$0xff] %v791
  %1358 = vst [vmem:[%s3 + $0x4b8] sm:$0xff] %v794
  %1359 = vst [vmem:[%s3 + $0x4c0] sm:$0xff] %v797
  %1360 = vst [vmem:[%s3 + $0x4c8] sm:$0xff] %v800
  %1361 = vst [vmem:[%s3 + $0x4d0] sm:$0xff] %v803
  %1362 = vst [vmem:[%s3 + $0x4d8] sm:$0xff] %v806
  %1363 = vst [vmem:[%s3 + $0x4e0] sm:$0xff] %v809
  %1364 = vst [vmem:[%s3 + $0x4e8] sm:$0xff] %v812
  %1365 = vst [vmem:[%s3 + $0x4f0] sm:$0xff] %v815
  %1366 = vst [vmem:[%s3 + $0x4f8] sm:$0xff] %v818
  %1367 = vst [vmem:[%s3 + $0x500] sm:$0xff] %v821
  %1368 = vst [vmem:[%s3 + $0x508] sm:$0xff] %v824
  %1369 = vst [vmem:[%s3 + $0x510] sm:$0xff] %v827
  %1370 = vst [vmem:[%s3 + $0x518] sm:$0xff] %v830
  %1371 = vst [vmem:[%s3 + $0x520] sm:$0xff] %v833
  %1372 = vst [vmem:[%s3 + $0x528] sm:$0xff] %v836
  %1373 = vst [vmem:[%s3 + $0x530] sm:$0xff] %v839
  %1374 = vst [vmem:[%s3 + $0x538] sm:$0xff] %v842
  %1375 = vst [vmem:[%s3 + $0x540] sm:$0xff] %v845
  %1376 = vst [vmem:[%s3 + $0x548] sm:$0xff] %v848
  %1377 = vst [vmem:[%s3 + $0x550] sm:$0xff] %v851
  %1378 = vst [vmem:[%s3 + $0x558] sm:$0xff] %v854
  %1379 = vst [vmem:[%s3 + $0x560] sm:$0xff] %v857
  %1380 = vst [vmem:[%s3 + $0x568] sm:$0xff] %v860
  %1381 = vst [vmem:[%s3 + $0x570] sm:$0xff] %v863
  %1382 = vst [vmem:[%s3 + $0x578] sm:$0xff] %v866
  %1383 = vst [vmem:[%s3 + $0x580] sm:$0xff] %v869
  %1384 = vst [vmem:[%s3 + $0x588] sm:$0xff] %v872
  %1385 = vst [vmem:[%s3 + $0x590] sm:$0xff] %v875
  %1386 = vst [vmem:[%s3 + $0x598] sm:$0xff] %v878
  %1387 = vst [vmem:[%s3 + $0x5a0] sm:$0xff] %v881
  %1388 = vst [vmem:[%s3 + $0x5a8] sm:$0xff] %v884
  %1389 = vst [vmem:[%s3 + $0x5b0] sm:$0xff] %v887
  %1390 = vst [vmem:[%s3 + $0x5b8] sm:$0xff] %v890
  %1391 = vst [vmem:[%s3 + $0x5c0] sm:$0xff] %v893
  %1392 = vst [vmem:[%s3 + $0x5c8] sm:$0xff] %v896
  %1393 = vst [vmem:[%s3 + $0x5d0] sm:$0xff] %v899
  %1394 = vst [vmem:[%s3 + $0x5d8] sm:$0xff] %v902
  %1395 = vst [vmem:[%s3 + $0x5e0] sm:$0xff] %v905
  %1396 = vst [vmem:[%s3 + $0x5e8] sm:$0xff] %v908
  %1397 = vst [vmem:[%s3 + $0x5f0] sm:$0xff] %v911
  %1398 = vst [vmem:[%s3 + $0x5f8] sm:$0xff] %v914
  %1399 = vst [vmem:[%s3 + $0x600] sm:$0xff] %v917
  %1400 = vst [vmem:[%s3 + $0x608] sm:$0xff] %v920
  %1401 = vst [vmem:[%s3 + $0x610] sm:$0xff] %v923
  %1402 = vst [vmem:[%s3 + $0x618] sm:$0xff] %v926
  %1403 = vst [vmem:[%s3 + $0x620] sm:$0xff] %v929
  %1404 = vst [vmem:[%s3 + $0x628] sm:$0xff] %v932
  %1405 = vst [vmem:[%s3 + $0x630] sm:$0xff] %v935
  %1406 = vst [vmem:[%s3 + $0x638] sm:$0xff] %v938
  %1407 = vst [vmem:[%s3 + $0x640] sm:$0xff] %v941
  %1408 = vst [vmem:[%s3 + $0x648] sm:$0xff] %v944
  %1409 = vst [vmem:[%s3 + $0x650] sm:$0xff] %v947
  %1410 = vst [vmem:[%s3 + $0x658] sm:$0xff] %v950
  %1411 = vst [vmem:[%s3 + $0x660] sm:$0xff] %v953
  %1412 = vst [vmem:[%s3 + $0x668] sm:$0xff] %v956
  %1413 = vst [vmem:[%s3 + $0x670] sm:$0xff] %v959
  %1414 = vst [vmem:[%s3 + $0x678] sm:$0xff] %v962
  %1415 = vst [vmem:[%s3 + $0x680] sm:$0xff] %v965
  %1416 = vst [vmem:[%s3 + $0x688] sm:$0xff] %v968
  %1417 = vst [vmem:[%s3 + $0x690] sm:$0xff] %v971
  %1418 = vst [vmem:[%s3 + $0x698] sm:$0xff] %v974
  %1419 = vst [vmem:[%s3 + $0x6a0] sm:$0xff] %v977
  %1420 = vst [vmem:[%s3 + $0x6a8] sm:$0xff] %v980
  %1421 = vst [vmem:[%s3 + $0x6b0] sm:$0xff] %v983
  %1422 = vst [vmem:[%s3 + $0x6b8] sm:$0xff] %v986
  %1423 = vst [vmem:[%s3 + $0x6c0] sm:$0xff] %v989
  %1424 = vst [vmem:[%s3 + $0x6c8] sm:$0xff] %v992
  %1425 = vst [vmem:[%s3 + $0x6d0] sm:$0xff] %v995
  %1426 = vst [vmem:[%s3 + $0x6d8] sm:$0xff] %v998
  %1427 = vst [vmem:[%s3 + $0x6e0] sm:$0xff] %v1001
  %1428 = vst [vmem:[%s3 + $0x6e8] sm:$0xff] %v1004
  %1429 = vst [vmem:[%s3 + $0x6f0] sm:$0xff] %v1007
  %1430 = vst [vmem:[%s3 + $0x6f8] sm:$0xff] %v1010
  %1431 = vst [vmem:[%s3 + $0x700] sm:$0xff] %v1013
  %1432 = vst [vmem:[%s3 + $0x708] sm:$0xff] %v1016
  %1433 = vst [vmem:[%s3 + $0x710] sm:$0xff] %v1019
  %1434 = vst [vmem:[%s3 + $0x718] sm:$0xff] %v1022
  %1435 = vst [vmem:[%s3 + $0x720] sm:$0xff] %v1025
  %1436 = vst [vmem:[%s3 + $0x728] sm:$0xff] %v1028
  %1437 = vst [vmem:[%s3 + $0x730] sm:$0xff] %v1031
  %1438 = vst [vmem:[%s3 + $0x738] sm:$0xff] %v1034
  %1439 = vst [vmem:[%s3 + $0x740] sm:$0xff] %v1037
  %1440 = vst [vmem:[%s3 + $0x748] sm:$0xff] %v1040
  %1441 = vst [vmem:[%s3 + $0x750] sm:$0xff] %v1043
  %1442 = vst [vmem:[%s3 + $0x758] sm:$0xff] %v1046
  %1443 = vst [vmem:[%s3 + $0x760] sm:$0xff] %v1049
  %1444 = vst [vmem:[%s3 + $0x768] sm:$0xff] %v1052
  %1445 = vst [vmem:[%s3 + $0x770] sm:$0xff] %v1055
  %1446 = vst [vmem:[%s3 + $0x778] sm:$0xff] %v1058
  %1447 = vst [vmem:[%s3 + $0x780] sm:$0xff] %v1061
  %1448 = vst [vmem:[%s3 + $0x788] sm:$0xff] %v1064
  %1449 = vst [vmem:[%s3 + $0x790] sm:$0xff] %v1067
  %1450 = vst [vmem:[%s3 + $0x798] sm:$0xff] %v1070
  %1451 = vst [vmem:[%s3 + $0x7a0] sm:$0xff] %v1073
  %1452 = vst [vmem:[%s3 + $0x7a8] sm:$0xff] %v1076
  %1453 = vst [vmem:[%s3 + $0x7b0] sm:$0xff] %v1079
  %1454 = vst [vmem:[%s3 + $0x7b8] sm:$0xff] %v1082
  %1455 = vst [vmem:[%s3 + $0x7c0] sm:$0xff] %v1085
  %1456 = vst [vmem:[%s3 + $0x7c8] sm:$0xff] %v1088
  %1457 = vst [vmem:[%s3 + $0x7d0] sm:$0xff] %v1091
  %1458 = vst [vmem:[%s3 + $0x7d8] sm:$0xff] %v1094
  %1459 = vst [vmem:[%s3 + $0x7e0] sm:$0xff] %v1097
  %1460 = vst [vmem:[%s3 + $0x7e8] sm:$0xff] %v1100
  %1461 = vst [vmem:[%s3 + $0x7f0] sm:$0xff] %v1103
  %1462 = vst [vmem:[%s3 + $0x7f8] sm:$0xff] %v1106
  %1463 = vst [vmem:[%s3 + $0x800] sm:$0xff] %v1109
  %1464 = vst [vmem:[%s3 + $0x808] sm:$0xff] %v1112
  %1465 = vst [vmem:[%s3 + $0x810] sm:$0xff] %v1115
  %1466 = vst [vmem:[%s3 + $0x818] sm:$0xff] %v1118
  %1467 = vst [vmem:[%s3 + $0x820] sm:$0xff] %v1121
  %1468 = vst [vmem:[%s3 + $0x828] sm:$0xff] %v1124
  %1469 = vst [vmem:[%s3 + $0x830] sm:$0xff] %v1127
  %1470 = vst [vmem:[%s3 + $0x838] sm:$0xff] %v1130
  %1471 = vst [vmem:[%s3 + $0x840] sm:$0xff] %v1133
  %1472 = vst [vmem:[%s3 + $0x848] sm:$0xff] %v1136
  %1473 = vst [vmem:[%s3 + $0x850] sm:$0xff] %v1139
  %1474 = vst [vmem:[%s3 + $0x858] sm:$0xff] %v1142
  %1475 = vst [vmem:[%s3 + $0x860] sm:$0xff] %v1145
  %1476 = vst [vmem:[%s3 + $0x868] sm:$0xff] %v1148
  %1477 = vst [vmem:[%s3 + $0x870] sm:$0xff] %v1151
  %1478 = vst [vmem:[%s3 + $0x878] sm:$0xff] %v1154
  %1479 = vst [vmem:[%s3 + $0x880] sm:$0xff] %v1157
  %1480 = vst [vmem:[%s3 + $0x888] sm:$0xff] %v1160
  %1481 = vst [vmem:[%s3 + $0x890] sm:$0xff] %v1163
  %1482 = vst [vmem:[%s3 + $0x898] sm:$0xff] %v1166
  %1483 = vst [vmem:[%s3 + $0x8a0] sm:$0xff] %v1169
  %1484 = vst [vmem:[%s3 + $0x8a8] sm:$0xff] %v1172
  %1485 = vst [vmem:[%s3 + $0x8b0] sm:$0xff] %v1175
  %1486 = vst [vmem:[%s3 + $0x8b8] sm:$0xff] %v1178
  %1487 = vst [vmem:[%s3 + $0x8c0] sm:$0xff] %v1181
  %1488 = vst [vmem:[%s3 + $0x8c8] sm:$0xff] %v1184
  %1489 = vst [vmem:[%s3 + $0x8d0] sm:$0xff] %v1187
  %1490 = vst [vmem:[%s3 + $0x8d8] sm:$0xff] %v1190
  %1491 = vst [vmem:[%s3 + $0x8e0] sm:$0xff] %v1193
  %1492 = vst [vmem:[%s3 + $0x8e8] sm:$0xff] %v1196
  %1493 = vst [vmem:[%s3 + $0x8f0] sm:$0xff] %v1199
  %1494 = vst [vmem:[%s3 + $0x8f8] sm:$0xff] %v1202
  %1495 = vst [vmem:[%s3 + $0x900] sm:$0xff] %v1205
  // Predicated region
  $region14: #{conv2_forward.3} parent=0 // pred_check
    _
  $region15: #{conv2_forward.3} parent=0 // pred_check_branch
    %1497 = sbr.rel (0) target = $region17
  $region16: #{conv2_forward.3} parent=0 // pred_region
    _
  $region17: #{conv2_forward.3} parent=0 // pred_fallthru
    _
  // Predicated region
  $region18: #{conv2_forward.3} parent=0 // pred_check
    _
  $region19: #{conv2_forward.3} parent=0 // pred_check_branch
    %1499 = sbr.rel (0) target = $region21
  $region20: #{conv2_forward.3} parent=0 // pred_region
    _
  $region21: #{conv2_forward.3} parent=0 // pred_fallthru
    _

// kernel: conv2_forward.4
$region0: #{conv2_forward.4}
  #allocation0 [shape = 'u32[]', space=smem, size = 0x4, offset = 0x4, fixed_abs, tag = 'smem constant byte address 0x4 - core index']
  #allocation1 [shape = 'u32[72,128]{1,0:T(1,128)}', space=vmem, size = 0x9000, scoped, tag = 'internal scratch']
  %s0 = inlined_call_operand.vmem [shape: f32[1800,128], index: 0, kind: input, shape index: {}]
  %s1 = inlined_call_operand.vmem [shape: f32[128,128], index: 1, kind: input, shape index: {}]
  %s2 = inlined_call_operand.vmem [shape: f32[1,128], index: 2, kind: input, shape index: {}]
  %s3 = inlined_call_operand.vmem [shape: f32[1800,128], index: 3, kind: output, shape index: {}]
  %s4 = sld [smem:[#allocation0]]
  $region22: #{conv2_forward.4} parent=0
    _
  %s6 = ssub.s32 1, %s4
  %s7 = scalar_select 0, %s6, %s4
  // Predicated region
  $region2: #{conv2_forward.4} parent=0 // pred_check
    _
  $region3: #{conv2_forward.4} parent=0 // pred_check_branch
    %9 = sbr.rel (0) target = $region5
  $region4: #{conv2_forward.4} parent=0 // pred_region
    _
  $region5: #{conv2_forward.4} parent=0 // pred_fallthru
    _
  // Predicated region
  $region6: #{conv2_forward.4} parent=0 // pred_check
    _
  $region7: #{conv2_forward.4} parent=0 // pred_check_branch
    %11 = sbr.rel (0) target = $region9
  $region8: #{conv2_forward.4} parent=0 // pred_region
    _
  $region9: #{conv2_forward.4} parent=0 // pred_fallthru
    _
  // Predicated region
  $region10: #{conv2_forward.4} parent=0 // pred_check
    _
  $region11: #{conv2_forward.4} parent=0 // pred_check_branch
    %13 = sbr.rel (0) target = $region13
  $region12: #{conv2_forward.4} parent=0 // pred_region
    _
  $region13: #{conv2_forward.4} parent=0 // pred_fallthru
    _
  %v14 = vld [vmem:[%s0] sm:$0xff]
  %v15 = vld [vmem:[%s0 + $0x8] sm:$0xff]
  %v16 = vld [vmem:[%s0 + $0x10] sm:$0xff]
  %v17 = vld [vmem:[%s0 + $0x18] sm:$0xff]
  %v18 = vld [vmem:[%s0 + $0x20] sm:$0xff]
  %v19 = vld [vmem:[%s0 + $0x28] sm:$0xff]
  %v20 = vld [vmem:[%s0 + $0x30] sm:$0xff]
  %v21 = vld [vmem:[%s0 + $0x38] sm:$0xff]
  %v22 = vld [vmem:[%s0 + $0x40] sm:$0xff]
  %v23 = vld [vmem:[%s0 + $0x48] sm:$0xff]
  %v24 = vld [vmem:[%s0 + $0x50] sm:$0xff]
  %v25 = vld [vmem:[%s0 + $0x58] sm:$0xff]
  %v26 = vld [vmem:[%s0 + $0x60] sm:$0xff]
  %v27 = vld [vmem:[%s0 + $0x68] sm:$0xff]
  %v28 = vld [vmem:[%s0 + $0x70] sm:$0xff]
  %v29 = vld [vmem:[%s0 + $0x78] sm:$0xff]
  %v30 = vld [vmem:[%s0 + $0x80] sm:$0xff]
  %v31 = vld [vmem:[%s0 + $0x88] sm:$0xff]
  %v32 = vld [vmem:[%s0 + $0x90] sm:$0xff]
  %v33 = vld [vmem:[%s0 + $0x98] sm:$0xff]
  %v34 = vld [vmem:[%s0 + $0xa0] sm:$0xff]
  %v35 = vld [vmem:[%s0 + $0xa8] sm:$0xff]
  %v36 = vld [vmem:[%s0 + $0xb0] sm:$0xff]
  %v37 = vld [vmem:[%s0 + $0xb8] sm:$0xff]
  %v38 = vld [vmem:[%s0 + $0xc0] sm:$0xff]
  %v39 = vld [vmem:[%s0 + $0xc8] sm:$0xff]
  %v40 = vld [vmem:[%s0 + $0xd0] sm:$0xff]
  %v41 = vld [vmem:[%s0 + $0xd8] sm:$0xff]
  %v42 = vld [vmem:[%s0 + $0xe0] sm:$0xff]
  %v43 = vld [vmem:[%s0 + $0xe8] sm:$0xff]
  %v44 = vld [vmem:[%s0 + $0xf0] sm:$0xff]
  %v45 = vld [vmem:[%s0 + $0xf8] sm:$0xff]
  %v46 = vld [vmem:[%s0 + $0x100] sm:$0xff]
  %v47 = vld [vmem:[%s0 + $0x108] sm:$0xff]
  %v48 = vld [vmem:[%s0 + $0x110] sm:$0xff]
  %v49 = vld [vmem:[%s0 + $0x118] sm:$0xff]
  %v50 = vld [vmem:[%s0 + $0x120] sm:$0xff]
  %v51 = vld [vmem:[%s0 + $0x128] sm:$0xff]
  %v52 = vld [vmem:[%s0 + $0x130] sm:$0xff]
  %v53 = vld [vmem:[%s0 + $0x138] sm:$0xff]
  %v54 = vld [vmem:[%s0 + $0x140] sm:$0xff]
  %v55 = vld [vmem:[%s0 + $0x148] sm:$0xff]
  %v56 = vld [vmem:[%s0 + $0x150] sm:$0xff]
  %v57 = vld [vmem:[%s0 + $0x158] sm:$0xff]
  %v58 = vld [vmem:[%s0 + $0x160] sm:$0xff]
  %v59 = vld [vmem:[%s0 + $0x168] sm:$0xff]
  %v60 = vld [vmem:[%s0 + $0x170] sm:$0xff]
  %v61 = vld [vmem:[%s0 + $0x178] sm:$0xff]
  %v62 = vld [vmem:[%s0 + $0x180] sm:$0xff]
  %v63 = vld [vmem:[%s0 + $0x188] sm:$0xff]
  %v64 = vld [vmem:[%s0 + $0x190] sm:$0xff]
  %v65 = vld [vmem:[%s0 + $0x198] sm:$0xff]
  %v66 = vld [vmem:[%s0 + $0x1a0] sm:$0xff]
  %v67 = vld [vmem:[%s0 + $0x1a8] sm:$0xff]
  %v68 = vld [vmem:[%s0 + $0x1b0] sm:$0xff]
  %v69 = vld [vmem:[%s0 + $0x1b8] sm:$0xff]
  %v70 = vld [vmem:[%s0 + $0x1c0] sm:$0xff]
  %v71 = vld [vmem:[%s0 + $0x1c8] sm:$0xff]
  %v72 = vld [vmem:[%s0 + $0x1d0] sm:$0xff]
  %v73 = vld [vmem:[%s0 + $0x1d8] sm:$0xff]
  %v74 = vld [vmem:[%s0 + $0x1e0] sm:$0xff]
  %v75 = vld [vmem:[%s0 + $0x1e8] sm:$0xff]
  %v76 = vld [vmem:[%s0 + $0x1f0] sm:$0xff]
  %v77 = vld [vmem:[%s0 + $0x1f8] sm:$0xff]
  %v78 = vld [vmem:[%s0 + $0x200] sm:$0xff]
  %v79 = vld [vmem:[%s0 + $0x208] sm:$0xff]
  %v80 = vld [vmem:[%s0 + $0x210] sm:$0xff]
  %v81 = vld [vmem:[%s0 + $0x218] sm:$0xff]
  %v82 = vld [vmem:[%s0 + $0x220] sm:$0xff]
  %v83 = vld [vmem:[%s0 + $0x228] sm:$0xff]
  %v84 = vld [vmem:[%s0 + $0x230] sm:$0xff]
  %v85 = vld [vmem:[%s0 + $0x238] sm:$0xff]
  %v86 = vld [vmem:[%s0 + $0x240] sm:$0xff]
  %v87 = vld [vmem:[%s0 + $0x248] sm:$0xff]
  %v88 = vld [vmem:[%s0 + $0x250] sm:$0xff]
  %v89 = vld [vmem:[%s0 + $0x258] sm:$0xff]
  %v90 = vld [vmem:[%s0 + $0x260] sm:$0xff]
  %v91 = vld [vmem:[%s0 + $0x268] sm:$0xff]
  %v92 = vld [vmem:[%s0 + $0x270] sm:$0xff]
  %v93 = vld [vmem:[%s0 + $0x278] sm:$0xff]
  %v94 = vld [vmem:[%s0 + $0x280] sm:$0xff]
  %v95 = vld [vmem:[%s0 + $0x288] sm:$0xff]
  %v96 = vld [vmem:[%s0 + $0x290] sm:$0xff]
  %v97 = vld [vmem:[%s0 + $0x298] sm:$0xff]
  %v98 = vld [vmem:[%s0 + $0x2a0] sm:$0xff]
  %v99 = vld [vmem:[%s0 + $0x2a8] sm:$0xff]
  %v100 = vld [vmem:[%s0 + $0x2b0] sm:$0xff]
  %v101 = vld [vmem:[%s0 + $0x2b8] sm:$0xff]
  %v102 = vld [vmem:[%s0 + $0x2c0] sm:$0xff]
  %v103 = vld [vmem:[%s0 + $0x2c8] sm:$0xff]
  %v104 = vld [vmem:[%s0 + $0x2d0] sm:$0xff]
  %v105 = vld [vmem:[%s0 + $0x2d8] sm:$0xff]
  %v106 = vld [vmem:[%s0 + $0x2e0] sm:$0xff]
  %v107 = vld [vmem:[%s0 + $0x2e8] sm:$0xff]
  %v108 = vld [vmem:[%s0 + $0x2f0] sm:$0xff]
  %v109 = vld [vmem:[%s0 + $0x2f8] sm:$0xff]
  %v110 = vld [vmem:[%s0 + $0x300] sm:$0xff]
  %v111 = vld [vmem:[%s0 + $0x308] sm:$0xff]
  %v112 = vld [vmem:[%s0 + $0x310] sm:$0xff]
  %v113 = vld [vmem:[%s0 + $0x318] sm:$0xff]
  %v114 = vld [vmem:[%s0 + $0x320] sm:$0xff]
  %v115 = vld [vmem:[%s0 + $0x328] sm:$0xff]
  %v116 = vld [vmem:[%s0 + $0x330] sm:$0xff]
  %v117 = vld [vmem:[%s0 + $0x338] sm:$0xff]
  %v118 = vld [vmem:[%s0 + $0x340] sm:$0xff]
  %v119 = vld [vmem:[%s0 + $0x348] sm:$0xff]
  %v120 = vld [vmem:[%s0 + $0x350] sm:$0xff]
  %v121 = vld [vmem:[%s0 + $0x358] sm:$0xff]
  %v122 = vld [vmem:[%s0 + $0x360] sm:$0xff]
  %v123 = vld [vmem:[%s0 + $0x368] sm:$0xff]
  %v124 = vld [vmem:[%s0 + $0x370] sm:$0xff]
  %v125 = vld [vmem:[%s0 + $0x378] sm:$0xff]
  %v126 = vld [vmem:[%s0 + $0x380] sm:$0xff]
  %v127 = vld [vmem:[%s0 + $0x388] sm:$0xff]
  %v128 = vld [vmem:[%s0 + $0x390] sm:$0xff]
  %v129 = vld [vmem:[%s0 + $0x398] sm:$0xff]
  %v130 = vld [vmem:[%s0 + $0x3a0] sm:$0xff]
  %v131 = vld [vmem:[%s0 + $0x3a8] sm:$0xff]
  %v132 = vld [vmem:[%s0 + $0x3b0] sm:$0xff]
  %v133 = vld [vmem:[%s0 + $0x3b8] sm:$0xff]
  %v134 = vld [vmem:[%s0 + $0x3c0] sm:$0xff]
  %v135 = vld [vmem:[%s0 + $0x3c8] sm:$0xff]
  %v136 = vld [vmem:[%s0 + $0x3d0] sm:$0xff]
  %v137 = vld [vmem:[%s0 + $0x3d8] sm:$0xff]
  %v138 = vld [vmem:[%s0 + $0x3e0] sm:$0xff]
  %v139 = vld [vmem:[%s0 + $0x3e8] sm:$0xff]
  %v140 = vld [vmem:[%s0 + $0x3f0] sm:$0xff]
  %v141 = vld [vmem:[%s0 + $0x3f8] sm:$0xff]
  %v142 = vld [vmem:[%s0 + $0x400] sm:$0xff]
  %v143 = vld [vmem:[%s0 + $0x408] sm:$0xff]
  %v144 = vld [vmem:[%s0 + $0x410] sm:$0xff]
  %v145 = vld [vmem:[%s0 + $0x418] sm:$0xff]
  %v146 = vld [vmem:[%s0 + $0x420] sm:$0xff]
  %v147 = vld [vmem:[%s0 + $0x428] sm:$0xff]
  %v148 = vld [vmem:[%s0 + $0x430] sm:$0xff]
  %v149 = vld [vmem:[%s0 + $0x438] sm:$0xff]
  %v150 = vld [vmem:[%s0 + $0x440] sm:$0xff]
  %v151 = vld [vmem:[%s0 + $0x448] sm:$0xff]
  %v152 = vld [vmem:[%s0 + $0x450] sm:$0xff]
  %v153 = vld [vmem:[%s0 + $0x458] sm:$0xff]
  %v154 = vld [vmem:[%s0 + $0x460] sm:$0xff]
  %v155 = vld [vmem:[%s0 + $0x468] sm:$0xff]
  %v156 = vld [vmem:[%s0 + $0x470] sm:$0xff]
  %v157 = vld [vmem:[%s0 + $0x478] sm:$0xff]
  %v158 = vld [vmem:[%s0 + $0x480] sm:$0xff]
  %v159 = vld [vmem:[%s0 + $0x488] sm:$0xff]
  %v160 = vld [vmem:[%s0 + $0x490] sm:$0xff]
  %v161 = vld [vmem:[%s0 + $0x498] sm:$0xff]
  %v162 = vld [vmem:[%s0 + $0x4a0] sm:$0xff]
  %v163 = vld [vmem:[%s0 + $0x4a8] sm:$0xff]
  %v164 = vld [vmem:[%s0 + $0x4b0] sm:$0xff]
  %v165 = vld [vmem:[%s0 + $0x4b8] sm:$0xff]
  %v166 = vld [vmem:[%s0 + $0x4c0] sm:$0xff]
  %v167 = vld [vmem:[%s0 + $0x4c8] sm:$0xff]
  %v168 = vld [vmem:[%s0 + $0x4d0] sm:$0xff]
  %v169 = vld [vmem:[%s0 + $0x4d8] sm:$0xff]
  %v170 = vld [vmem:[%s0 + $0x4e0] sm:$0xff]
  %v171 = vld [vmem:[%s0 + $0x4e8] sm:$0xff]
  %v172 = vld [vmem:[%s0 + $0x4f0] sm:$0xff]
  %v173 = vld [vmem:[%s0 + $0x4f8] sm:$0xff]
  %v174 = vld [vmem:[%s0 + $0x500] sm:$0xff]
  %v175 = vld [vmem:[%s0 + $0x508] sm:$0xff]
  %v176 = vld [vmem:[%s0 + $0x510] sm:$0xff]
  %v177 = vld [vmem:[%s0 + $0x518] sm:$0xff]
  %v178 = vld [vmem:[%s0 + $0x520] sm:$0xff]
  %v179 = vld [vmem:[%s0 + $0x528] sm:$0xff]
  %v180 = vld [vmem:[%s0 + $0x530] sm:$0xff]
  %v181 = vld [vmem:[%s0 + $0x538] sm:$0xff]
  %v182 = vld [vmem:[%s0 + $0x540] sm:$0xff]
  %v183 = vld [vmem:[%s0 + $0x548] sm:$0xff]
  %v184 = vld [vmem:[%s0 + $0x550] sm:$0xff]
  %v185 = vld [vmem:[%s0 + $0x558] sm:$0xff]
  %v186 = vld [vmem:[%s0 + $0x560] sm:$0xff]
  %v187 = vld [vmem:[%s0 + $0x568] sm:$0xff]
  %v188 = vld [vmem:[%s0 + $0x570] sm:$0xff]
  %v189 = vld [vmem:[%s0 + $0x578] sm:$0xff]
  %v190 = vld [vmem:[%s0 + $0x580] sm:$0xff]
  %v191 = vld [vmem:[%s0 + $0x588] sm:$0xff]
  %v192 = vld [vmem:[%s0 + $0x590] sm:$0xff]
  %v193 = vld [vmem:[%s0 + $0x598] sm:$0xff]
  %v194 = vld [vmem:[%s0 + $0x5a0] sm:$0xff]
  %v195 = vld [vmem:[%s0 + $0x5a8] sm:$0xff]
  %v196 = vld [vmem:[%s0 + $0x5b0] sm:$0xff]
  %v197 = vld [vmem:[%s0 + $0x5b8] sm:$0xff]
  %v198 = vld [vmem:[%s0 + $0x5c0] sm:$0xff]
  %v199 = vld [vmem:[%s0 + $0x5c8] sm:$0xff]
  %v200 = vld [vmem:[%s0 + $0x5d0] sm:$0xff]
  %v201 = vld [vmem:[%s0 + $0x5d8] sm:$0xff]
  %v202 = vld [vmem:[%s0 + $0x5e0] sm:$0xff]
  %v203 = vld [vmem:[%s0 + $0x5e8] sm:$0xff]
  %v204 = vld [vmem:[%s0 + $0x5f0] sm:$0xff]
  %v205 = vld [vmem:[%s0 + $0x5f8] sm:$0xff]
  %v206 = vld [vmem:[%s0 + $0x600] sm:$0xff]
  %v207 = vld [vmem:[%s0 + $0x608] sm:$0xff]
  %v208 = vld [vmem:[%s0 + $0x610] sm:$0xff]
  %v209 = vld [vmem:[%s0 + $0x618] sm:$0xff]
  %v210 = vld [vmem:[%s0 + $0x620] sm:$0xff]
  %v211 = vld [vmem:[%s0 + $0x628] sm:$0xff]
  %v212 = vld [vmem:[%s0 + $0x630] sm:$0xff]
  %v213 = vld [vmem:[%s0 + $0x638] sm:$0xff]
  %v214 = vld [vmem:[%s0 + $0x640] sm:$0xff]
  %v215 = vld [vmem:[%s0 + $0x648] sm:$0xff]
  %v216 = vld [vmem:[%s0 + $0x650] sm:$0xff]
  %v217 = vld [vmem:[%s0 + $0x658] sm:$0xff]
  %v218 = vld [vmem:[%s0 + $0x660] sm:$0xff]
  %v219 = vld [vmem:[%s0 + $0x668] sm:$0xff]
  %v220 = vld [vmem:[%s0 + $0x670] sm:$0xff]
  %v221 = vld [vmem:[%s0 + $0x678] sm:$0xff]
  %v222 = vld [vmem:[%s0 + $0x680] sm:$0xff]
  %v223 = vld [vmem:[%s0 + $0x688] sm:$0xff]
  %v224 = vld [vmem:[%s0 + $0x690] sm:$0xff]
  %v225 = vld [vmem:[%s0 + $0x698] sm:$0xff]
  %v226 = vld [vmem:[%s0 + $0x6a0] sm:$0xff]
  %v227 = vld [vmem:[%s0 + $0x6a8] sm:$0xff]
  %v228 = vld [vmem:[%s0 + $0x6b0] sm:$0xff]
  %v229 = vld [vmem:[%s0 + $0x6b8] sm:$0xff]
  %v230 = vld [vmem:[%s0 + $0x6c0] sm:$0xff]
  %v231 = vld [vmem:[%s0 + $0x6c8] sm:$0xff]
  %v232 = vld [vmem:[%s0 + $0x6d0] sm:$0xff]
  %v233 = vld [vmem:[%s0 + $0x6d8] sm:$0xff]
  %v234 = vld [vmem:[%s0 + $0x6e0] sm:$0xff]
  %v235 = vld [vmem:[%s0 + $0x6e8] sm:$0xff]
  %v236 = vld [vmem:[%s0 + $0x6f0] sm:$0xff]
  %v237 = vld [vmem:[%s0 + $0x6f8] sm:$0xff]
  %v238 = vld [vmem:[%s0 + $0x700] sm:$0xff]
  %v239 = vld [vmem:[%s1] sm:$0xff]
  %v240 = vld [vmem:[%s1 + $0x8] sm:$0xff]
  %v241 = vld [vmem:[%s1 + $0x10] sm:$0xff]
  %v242 = vld [vmem:[%s1 + $0x18] sm:$0xff]
  %v243 = vld [vmem:[%s1 + $0x20] sm:$0xff]
  %v244 = vld [vmem:[%s1 + $0x28] sm:$0xff]
  %v245 = vld [vmem:[%s1 + $0x30] sm:$0xff]
  %v246 = vld [vmem:[%s1 + $0x38] sm:$0xff]
  %v247 = vld [vmem:[%s1 + $0x40] sm:$0xff]
  %v248 = vld [vmem:[%s1 + $0x48] sm:$0xff]
  %v249 = vld [vmem:[%s1 + $0x50] sm:$0xff]
  %v250 = vld [vmem:[%s1 + $0x58] sm:$0xff]
  %v251 = vld [vmem:[%s1 + $0x60] sm:$0xff]
  %v252 = vld [vmem:[%s1 + $0x68] sm:$0xff]
  %v253 = vld [vmem:[%s1 + $0x70] sm:$0xff]
  %v254 = vld [vmem:[%s1 + $0x78] sm:$0xff]
  %v255 = vld [vmem:[%s2] sm:$0x1]
  %v257 = vperm.slane %v255, 0
  %259 = vmatpush.msra.mxu0 %v254
  %260 = vmatpush.msra.mxu0 %v253
  %261 = vmatpush.msra.mxu0 %v252
  %262 = vmatpush.msra.mxu0 %v251
  %263 = vmatpush.msra.mxu0 %v250
  %264 = vmatpush.msra.mxu0 %v249
  %265 = vmatpush.msra.mxu0 %v248
  %266 = vmatpush.msra.mxu0 %v247
  %267 = vmatpush.msra.mxu0 %v246
  %268 = vmatpush.msra.mxu0 %v245
  %269 = vmatpush.msra.mxu0 %v244
  %270 = vmatpush.msra.mxu0 %v243
  %271 = vmatpush.msra.mxu0 %v242
  %272 = vmatpush.msra.mxu0 %v241
  %273 = vmatpush.msra.mxu0 %v240
  %274 = vmatpush.msra.mxu0 %v239
  %275 = vmatmul.f32.gmra.mxu0 %v14
  %v276 = vpop.f32.mrf.mxu0
  %v277 = vadd.f32 %v257, %v276
  %278 = vmatmul.f32.gmra.mxu0 %v15
  %v279 = vpop.f32.mrf.mxu0
  %v280 = vadd.f32 %v257, %v279
  %281 = vmatmul.f32.gmra.mxu0 %v16
  %v282 = vpop.f32.mrf.mxu0
  %v283 = vadd.f32 %v257, %v282
  %284 = vmatmul.f32.gmra.mxu0 %v17
  %v285 = vpop.f32.mrf.mxu0
  %v286 = vadd.f32 %v257, %v285
  %287 = vmatmul.f32.gmra.mxu0 %v18
  %v288 = vpop.f32.mrf.mxu0
  %v289 = vadd.f32 %v257, %v288
  %290 = vmatmul.f32.gmra.mxu0 %v19
  %v291 = vpop.f32.mrf.mxu0
  %v292 = vadd.f32 %v257, %v291
  %293 = vmatmul.f32.gmra.mxu0 %v20
  %v294 = vpop.f32.mrf.mxu0
  %v295 = vadd.f32 %v257, %v294
  %296 = vmatmul.f32.gmra.mxu0 %v21
  %v297 = vpop.f32.mrf.mxu0
  %v298 = vadd.f32 %v257, %v297
  %299 = vmatmul.f32.gmra.mxu0 %v22
  %v300 = vpop.f32.mrf.mxu0
  %v301 = vadd.f32 %v257, %v300
  %302 = vmatmul.f32.gmra.mxu0 %v23
  %v303 = vpop.f32.mrf.mxu0
  %v304 = vadd.f32 %v257, %v303
  %305 = vmatmul.f32.gmra.mxu0 %v24
  %v306 = vpop.f32.mrf.mxu0
  %v307 = vadd.f32 %v257, %v306
  %308 = vmatmul.f32.gmra.mxu0 %v25
  %v309 = vpop.f32.mrf.mxu0
  %v310 = vadd.f32 %v257, %v309
  %311 = vmatmul.f32.gmra.mxu0 %v26
  %v312 = vpop.f32.mrf.mxu0
  %v313 = vadd.f32 %v257, %v312
  %314 = vmatmul.f32.gmra.mxu0 %v27
  %v315 = vpop.f32.mrf.mxu0
  %v316 = vadd.f32 %v257, %v315
  %317 = vmatmul.f32.gmra.mxu0 %v28
  %v318 = vpop.f32.mrf.mxu0
  %v319 = vadd.f32 %v257, %v318
  %320 = vmatmul.f32.gmra.mxu0 %v29
  %v321 = vpop.f32.mrf.mxu0
  %v322 = vadd.f32 %v257, %v321
  %323 = vmatmul.f32.gmra.mxu0 %v30
  %v324 = vpop.f32.mrf.mxu0
  %v325 = vadd.f32 %v257, %v324
  %326 = vmatmul.f32.gmra.mxu0 %v31
  %v327 = vpop.f32.mrf.mxu0
  %v328 = vadd.f32 %v257, %v327
  %329 = vmatmul.f32.gmra.mxu0 %v32
  %v330 = vpop.f32.mrf.mxu0
  %v331 = vadd.f32 %v257, %v330
  %332 = vmatmul.f32.gmra.mxu0 %v33
  %v333 = vpop.f32.mrf.mxu0
  %v334 = vadd.f32 %v257, %v333
  %335 = vmatmul.f32.gmra.mxu0 %v34
  %v336 = vpop.f32.mrf.mxu0
  %v337 = vadd.f32 %v257, %v336
  %338 = vmatmul.f32.gmra.mxu0 %v35
  %v339 = vpop.f32.mrf.mxu0
  %v340 = vadd.f32 %v257, %v339
  %341 = vmatmul.f32.gmra.mxu0 %v36
  %v342 = vpop.f32.mrf.mxu0
  %v343 = vadd.f32 %v257, %v342
  %344 = vmatmul.f32.gmra.mxu0 %v37
  %v345 = vpop.f32.mrf.mxu0
  %v346 = vadd.f32 %v257, %v345
  %347 = vmatmul.f32.gmra.mxu0 %v38
  %v348 = vpop.f32.mrf.mxu0
  %v349 = vadd.f32 %v257, %v348
  %350 = vmatmul.f32.gmra.mxu0 %v39
  %v351 = vpop.f32.mrf.mxu0
  %v352 = vadd.f32 %v257, %v351
  %353 = vmatmul.f32.gmra.mxu0 %v40
  %v354 = vpop.f32.mrf.mxu0
  %v355 = vadd.f32 %v257, %v354
  %356 = vmatmul.f32.gmra.mxu0 %v41
  %v357 = vpop.f32.mrf.mxu0
  %v358 = vadd.f32 %v257, %v357
  %359 = vmatmul.f32.gmra.mxu0 %v42
  %v360 = vpop.f32.mrf.mxu0
  %v361 = vadd.f32 %v257, %v360
  %362 = vmatmul.f32.gmra.mxu0 %v43
  %v363 = vpop.f32.mrf.mxu0
  %v364 = vadd.f32 %v257, %v363
  %365 = vmatmul.f32.gmra.mxu0 %v44
  %v366 = vpop.f32.mrf.mxu0
  %v367 = vadd.f32 %v257, %v366
  %368 = vmatmul.f32.gmra.mxu0 %v45
  %v369 = vpop.f32.mrf.mxu0
  %v370 = vadd.f32 %v257, %v369
  %371 = vmatmul.f32.gmra.mxu0 %v46
  %v372 = vpop.f32.mrf.mxu0
  %v373 = vadd.f32 %v257, %v372
  %374 = vmatmul.f32.gmra.mxu0 %v47
  %v375 = vpop.f32.mrf.mxu0
  %v376 = vadd.f32 %v257, %v375
  %377 = vmatmul.f32.gmra.mxu0 %v48
  %v378 = vpop.f32.mrf.mxu0
  %v379 = vadd.f32 %v257, %v378
  %380 = vmatmul.f32.gmra.mxu0 %v49
  %v381 = vpop.f32.mrf.mxu0
  %v382 = vadd.f32 %v257, %v381
  %383 = vmatmul.f32.gmra.mxu0 %v50
  %v384 = vpop.f32.mrf.mxu0
  %v385 = vadd.f32 %v257, %v384
  %386 = vmatmul.f32.gmra.mxu0 %v51
  %v387 = vpop.f32.mrf.mxu0
  %v388 = vadd.f32 %v257, %v387
  %389 = vmatmul.f32.gmra.mxu0 %v52
  %v390 = vpop.f32.mrf.mxu0
  %v391 = vadd.f32 %v257, %v390
  %392 = vmatmul.f32.gmra.mxu0 %v53
  %v393 = vpop.f32.mrf.mxu0
  %v394 = vadd.f32 %v257, %v393
  %395 = vmatmul.f32.gmra.mxu0 %v54
  %v396 = vpop.f32.mrf.mxu0
  %v397 = vadd.f32 %v257, %v396
  %398 = vmatmul.f32.gmra.mxu0 %v55
  %v399 = vpop.f32.mrf.mxu0
  %v400 = vadd.f32 %v257, %v399
  %401 = vmatmul.f32.gmra.mxu0 %v56
  %v402 = vpop.f32.mrf.mxu0
  %v403 = vadd.f32 %v257, %v402
  %404 = vmatmul.f32.gmra.mxu0 %v57
  %v405 = vpop.f32.mrf.mxu0
  %v406 = vadd.f32 %v257, %v405
  %407 = vmatmul.f32.gmra.mxu0 %v58
  %v408 = vpop.f32.mrf.mxu0
  %v409 = vadd.f32 %v257, %v408
  %410 = vmatmul.f32.gmra.mxu0 %v59
  %v411 = vpop.f32.mrf.mxu0
  %v412 = vadd.f32 %v257, %v411
  %413 = vmatmul.f32.gmra.mxu0 %v60
  %v414 = vpop.f32.mrf.mxu0
  %v415 = vadd.f32 %v257, %v414
  %416 = vmatmul.f32.gmra.mxu0 %v61
  %v417 = vpop.f32.mrf.mxu0
  %v418 = vadd.f32 %v257, %v417
  %419 = vmatmul.f32.gmra.mxu0 %v62
  %v420 = vpop.f32.mrf.mxu0
  %v421 = vadd.f32 %v257, %v420
  %422 = vmatmul.f32.gmra.mxu0 %v63
  %v423 = vpop.f32.mrf.mxu0
  %v424 = vadd.f32 %v257, %v423
  %425 = vmatmul.f32.gmra.mxu0 %v64
  %v426 = vpop.f32.mrf.mxu0
  %v427 = vadd.f32 %v257, %v426
  %428 = vmatmul.f32.gmra.mxu0 %v65
  %v429 = vpop.f32.mrf.mxu0
  %v430 = vadd.f32 %v257, %v429
  %431 = vmatmul.f32.gmra.mxu0 %v66
  %v432 = vpop.f32.mrf.mxu0
  %v433 = vadd.f32 %v257, %v432
  %434 = vmatmul.f32.gmra.mxu0 %v67
  %v435 = vpop.f32.mrf.mxu0
  %v436 = vadd.f32 %v257, %v435
  %437 = vmatmul.f32.gmra.mxu0 %v68
  %v438 = vpop.f32.mrf.mxu0
  %v439 = vadd.f32 %v257, %v438
  %440 = vmatmul.f32.gmra.mxu0 %v69
  %v441 = vpop.f32.mrf.mxu0
  %v442 = vadd.f32 %v257, %v441
  %443 = vmatmul.f32.gmra.mxu0 %v70
  %v444 = vpop.f32.mrf.mxu0
  %v445 = vadd.f32 %v257, %v444
  %446 = vmatmul.f32.gmra.mxu0 %v71
  %v447 = vpop.f32.mrf.mxu0
  %v448 = vadd.f32 %v257, %v447
  %449 = vmatmul.f32.gmra.mxu0 %v72
  %v450 = vpop.f32.mrf.mxu0
  %v451 = vadd.f32 %v257, %v450
  %452 = vmatmul.f32.gmra.mxu0 %v73
  %v453 = vpop.f32.mrf.mxu0
  %v454 = vadd.f32 %v257, %v453
  %455 = vmatmul.f32.gmra.mxu0 %v74
  %v456 = vpop.f32.mrf.mxu0
  %v457 = vadd.f32 %v257, %v456
  %458 = vmatmul.f32.gmra.mxu0 %v75
  %v459 = vpop.f32.mrf.mxu0
  %v460 = vadd.f32 %v257, %v459
  %461 = vmatmul.f32.gmra.mxu0 %v76
  %v462 = vpop.f32.mrf.mxu0
  %v463 = vadd.f32 %v257, %v462
  %464 = vmatmul.f32.gmra.mxu0 %v77
  %v465 = vpop.f32.mrf.mxu0
  %v466 = vadd.f32 %v257, %v465
  %467 = vmatmul.f32.gmra.mxu0 %v78
  %v468 = vpop.f32.mrf.mxu0
  %v469 = vadd.f32 %v257, %v468
  %470 = vmatmul.f32.gmra.mxu0 %v79
  %v471 = vpop.f32.mrf.mxu0
  %v472 = vadd.f32 %v257, %v471
  %473 = vmatmul.f32.gmra.mxu0 %v80
  %v474 = vpop.f32.mrf.mxu0
  %v475 = vadd.f32 %v257, %v474
  %476 = vmatmul.f32.gmra.mxu0 %v81
  %v477 = vpop.f32.mrf.mxu0
  %v478 = vadd.f32 %v257, %v477
  %479 = vmatmul.f32.gmra.mxu0 %v82
  %v480 = vpop.f32.mrf.mxu0
  %v481 = vadd.f32 %v257, %v480
  %482 = vmatmul.f32.gmra.mxu0 %v83
  %v483 = vpop.f32.mrf.mxu0
  %v484 = vadd.f32 %v257, %v483
  %485 = vmatmul.f32.gmra.mxu0 %v84
  %v486 = vpop.f32.mrf.mxu0
  %v487 = vadd.f32 %v257, %v486
  %488 = vmatmul.f32.gmra.mxu0 %v85
  %v489 = vpop.f32.mrf.mxu0
  %v490 = vadd.f32 %v257, %v489
  %491 = vmatmul.f32.gmra.mxu0 %v86
  %v492 = vpop.f32.mrf.mxu0
  %v493 = vadd.f32 %v257, %v492
  %494 = vmatmul.f32.gmra.mxu0 %v87
  %v495 = vpop.f32.mrf.mxu0
  %v496 = vadd.f32 %v257, %v495
  %497 = vmatmul.f32.gmra.mxu0 %v88
  %v498 = vpop.f32.mrf.mxu0
  %v499 = vadd.f32 %v257, %v498
  %500 = vmatmul.f32.gmra.mxu0 %v89
  %v501 = vpop.f32.mrf.mxu0
  %v502 = vadd.f32 %v257, %v501
  %503 = vmatmul.f32.gmra.mxu0 %v90
  %v504 = vpop.f32.mrf.mxu0
  %v505 = vadd.f32 %v257, %v504
  %506 = vmatmul.f32.gmra.mxu0 %v91
  %v507 = vpop.f32.mrf.mxu0
  %v508 = vadd.f32 %v257, %v507
  %509 = vmatmul.f32.gmra.mxu0 %v92
  %v510 = vpop.f32.mrf.mxu0
  %v511 = vadd.f32 %v257, %v510
  %512 = vmatmul.f32.gmra.mxu0 %v93
  %v513 = vpop.f32.mrf.mxu0
  %v514 = vadd.f32 %v257, %v513
  %515 = vmatmul.f32.gmra.mxu0 %v94
  %v516 = vpop.f32.mrf.mxu0
  %v517 = vadd.f32 %v257, %v516
  %518 = vmatmul.f32.gmra.mxu0 %v95
  %v519 = vpop.f32.mrf.mxu0
  %v520 = vadd.f32 %v257, %v519
  %521 = vmatmul.f32.gmra.mxu0 %v96
  %v522 = vpop.f32.mrf.mxu0
  %v523 = vadd.f32 %v257, %v522
  %524 = vmatmul.f32.gmra.mxu0 %v97
  %v525 = vpop.f32.mrf.mxu0
  %v526 = vadd.f32 %v257, %v525
  %527 = vmatmul.f32.gmra.mxu0 %v98
  %v528 = vpop.f32.mrf.mxu0
  %v529 = vadd.f32 %v257, %v528
  %530 = vmatmul.f32.gmra.mxu0 %v99
  %v531 = vpop.f32.mrf.mxu0
  %v532 = vadd.f32 %v257, %v531
  %533 = vmatmul.f32.gmra.mxu0 %v100
  %v534 = vpop.f32.mrf.mxu0
  %v535 = vadd.f32 %v257, %v534
  %536 = vmatmul.f32.gmra.mxu0 %v101
  %v537 = vpop.f32.mrf.mxu0
  %v538 = vadd.f32 %v257, %v537
  %539 = vmatmul.f32.gmra.mxu0 %v102
  %v540 = vpop.f32.mrf.mxu0
  %v541 = vadd.f32 %v257, %v540
  %542 = vmatmul.f32.gmra.mxu0 %v103
  %v543 = vpop.f32.mrf.mxu0
  %v544 = vadd.f32 %v257, %v543
  %545 = vmatmul.f32.gmra.mxu0 %v104
  %v546 = vpop.f32.mrf.mxu0
  %v547 = vadd.f32 %v257, %v546
  %548 = vmatmul.f32.gmra.mxu0 %v105
  %v549 = vpop.f32.mrf.mxu0
  %v550 = vadd.f32 %v257, %v549
  %551 = vmatmul.f32.gmra.mxu0 %v106
  %v552 = vpop.f32.mrf.mxu0
  %v553 = vadd.f32 %v257, %v552
  %554 = vmatmul.f32.gmra.mxu0 %v107
  %v555 = vpop.f32.mrf.mxu0
  %v556 = vadd.f32 %v257, %v555
  %557 = vmatmul.f32.gmra.mxu0 %v108
  %v558 = vpop.f32.mrf.mxu0
  %v559 = vadd.f32 %v257, %v558
  %560 = vmatmul.f32.gmra.mxu0 %v109
  %v561 = vpop.f32.mrf.mxu0
  %v562 = vadd.f32 %v257, %v561
  %563 = vmatmul.f32.gmra.mxu0 %v110
  %v564 = vpop.f32.mrf.mxu0
  %v565 = vadd.f32 %v257, %v564
  %566 = vmatmul.f32.gmra.mxu0 %v111
  %v567 = vpop.f32.mrf.mxu0
  %v568 = vadd.f32 %v257, %v567
  %569 = vmatmul.f32.gmra.mxu0 %v112
  %v570 = vpop.f32.mrf.mxu0
  %v571 = vadd.f32 %v257, %v570
  %572 = vmatmul.f32.gmra.mxu0 %v113
  %v573 = vpop.f32.mrf.mxu0
  %v574 = vadd.f32 %v257, %v573
  %575 = vmatmul.f32.gmra.mxu0 %v114
  %v576 = vpop.f32.mrf.mxu0
  %v577 = vadd.f32 %v257, %v576
  %578 = vmatmul.f32.gmra.mxu0 %v115
  %v579 = vpop.f32.mrf.mxu0
  %v580 = vadd.f32 %v257, %v579
  %581 = vmatmul.f32.gmra.mxu0 %v116
  %v582 = vpop.f32.mrf.mxu0
  %v583 = vadd.f32 %v257, %v582
  %584 = vmatmul.f32.gmra.mxu0 %v117
  %v585 = vpop.f32.mrf.mxu0
  %v586 = vadd.f32 %v257, %v585
  %587 = vmatmul.f32.gmra.mxu0 %v118
  %v588 = vpop.f32.mrf.mxu0
  %v589 = vadd.f32 %v257, %v588
  %590 = vmatmul.f32.gmra.mxu0 %v119
  %v591 = vpop.f32.mrf.mxu0
  %v592 = vadd.f32 %v257, %v591
  %593 = vmatmul.f32.gmra.mxu0 %v120
  %v594 = vpop.f32.mrf.mxu0
  %v595 = vadd.f32 %v257, %v594
  %596 = vmatmul.f32.gmra.mxu0 %v121
  %v597 = vpop.f32.mrf.mxu0
  %v598 = vadd.f32 %v257, %v597
  %599 = vmatmul.f32.gmra.mxu0 %v122
  %v600 = vpop.f32.mrf.mxu0
  %v601 = vadd.f32 %v257, %v600
  %602 = vmatmul.f32.gmra.mxu0 %v123
  %v603 = vpop.f32.mrf.mxu0
  %v604 = vadd.f32 %v257, %v603
  %605 = vmatmul.f32.gmra.mxu0 %v124
  %v606 = vpop.f32.mrf.mxu0
  %v607 = vadd.f32 %v257, %v606
  %608 = vmatmul.f32.gmra.mxu0 %v125
  %v609 = vpop.f32.mrf.mxu0
  %v610 = vadd.f32 %v257, %v609
  %611 = vmatmul.f32.gmra.mxu0 %v126
  %v612 = vpop.f32.mrf.mxu0
  %v613 = vadd.f32 %v257, %v612
  %614 = vmatmul.f32.gmra.mxu0 %v127
  %v615 = vpop.f32.mrf.mxu0
  %v616 = vadd.f32 %v257, %v615
  %617 = vmatmul.f32.gmra.mxu0 %v128
  %v618 = vpop.f32.mrf.mxu0
  %v619 = vadd.f32 %v257, %v618
  %620 = vmatmul.f32.gmra.mxu0 %v129
  %v621 = vpop.f32.mrf.mxu0
  %v622 = vadd.f32 %v257, %v621
  %623 = vmatmul.f32.gmra.mxu0 %v130
  %v624 = vpop.f32.mrf.mxu0
  %v625 = vadd.f32 %v257, %v624
  %626 = vmatmul.f32.gmra.mxu0 %v131
  %v627 = vpop.f32.mrf.mxu0
  %v628 = vadd.f32 %v257, %v627
  %629 = vmatmul.f32.gmra.mxu0 %v132
  %v630 = vpop.f32.mrf.mxu0
  %v631 = vadd.f32 %v257, %v630
  %632 = vmatmul.f32.gmra.mxu0 %v133
  %v633 = vpop.f32.mrf.mxu0
  %v634 = vadd.f32 %v257, %v633
  %635 = vmatmul.f32.gmra.mxu0 %v134
  %v636 = vpop.f32.mrf.mxu0
  %v637 = vadd.f32 %v257, %v636
  %638 = vmatmul.f32.gmra.mxu0 %v135
  %v639 = vpop.f32.mrf.mxu0
  %v640 = vadd.f32 %v257, %v639
  %641 = vmatmul.f32.gmra.mxu0 %v136
  %v642 = vpop.f32.mrf.mxu0
  %v643 = vadd.f32 %v257, %v642
  %644 = vmatmul.f32.gmra.mxu0 %v137
  %v645 = vpop.f32.mrf.mxu0
  %v646 = vadd.f32 %v257, %v645
  %647 = vmatmul.f32.gmra.mxu0 %v138
  %v648 = vpop.f32.mrf.mxu0
  %v649 = vadd.f32 %v257, %v648
  %650 = vmatmul.f32.gmra.mxu0 %v139
  %v651 = vpop.f32.mrf.mxu0
  %v652 = vadd.f32 %v257, %v651
  %653 = vmatmul.f32.gmra.mxu0 %v140
  %v654 = vpop.f32.mrf.mxu0
  %v655 = vadd.f32 %v257, %v654
  %656 = vmatmul.f32.gmra.mxu0 %v141
  %v657 = vpop.f32.mrf.mxu0
  %v658 = vadd.f32 %v257, %v657
  %659 = vmatmul.f32.gmra.mxu0 %v142
  %v660 = vpop.f32.mrf.mxu0
  %v661 = vadd.f32 %v257, %v660
  %662 = vmatmul.f32.gmra.mxu0 %v143
  %v663 = vpop.f32.mrf.mxu0
  %v664 = vadd.f32 %v257, %v663
  %665 = vmatmul.f32.gmra.mxu0 %v144
  %v666 = vpop.f32.mrf.mxu0
  %v667 = vadd.f32 %v257, %v666
  %668 = vmatmul.f32.gmra.mxu0 %v145
  %v669 = vpop.f32.mrf.mxu0
  %v670 = vadd.f32 %v257, %v669
  %671 = vmatmul.f32.gmra.mxu0 %v146
  %v672 = vpop.f32.mrf.mxu0
  %v673 = vadd.f32 %v257, %v672
  %674 = vmatmul.f32.gmra.mxu0 %v147
  %v675 = vpop.f32.mrf.mxu0
  %v676 = vadd.f32 %v257, %v675
  %677 = vmatmul.f32.gmra.mxu0 %v148
  %v678 = vpop.f32.mrf.mxu0
  %v679 = vadd.f32 %v257, %v678
  %680 = vmatmul.f32.gmra.mxu0 %v149
  %v681 = vpop.f32.mrf.mxu0
  %v682 = vadd.f32 %v257, %v681
  %683 = vmatmul.f32.gmra.mxu0 %v150
  %v684 = vpop.f32.mrf.mxu0
  %v685 = vadd.f32 %v257, %v684
  %686 = vmatmul.f32.gmra.mxu0 %v151
  %v687 = vpop.f32.mrf.mxu0
  %v688 = vadd.f32 %v257, %v687
  %689 = vmatmul.f32.gmra.mxu0 %v152
  %v690 = vpop.f32.mrf.mxu0
  %v691 = vadd.f32 %v257, %v690
  %692 = vmatmul.f32.gmra.mxu0 %v153
  %v693 = vpop.f32.mrf.mxu0
  %v694 = vadd.f32 %v257, %v693
  %695 = vmatmul.f32.gmra.mxu0 %v154
  %v696 = vpop.f32.mrf.mxu0
  %v697 = vadd.f32 %v257, %v696
  %698 = vmatmul.f32.gmra.mxu0 %v155
  %v699 = vpop.f32.mrf.mxu0
  %v700 = vadd.f32 %v257, %v699
  %701 = vmatmul.f32.gmra.mxu0 %v156
  %v702 = vpop.f32.mrf.mxu0
  %v703 = vadd.f32 %v257, %v702
  %704 = vmatmul.f32.gmra.mxu0 %v157
  %v705 = vpop.f32.mrf.mxu0
  %v706 = vadd.f32 %v257, %v705
  %707 = vmatmul.f32.gmra.mxu0 %v158
  %v708 = vpop.f32.mrf.mxu0
  %v709 = vadd.f32 %v257, %v708
  %710 = vmatmul.f32.gmra.mxu0 %v159
  %v711 = vpop.f32.mrf.mxu0
  %v712 = vadd.f32 %v257, %v711
  %713 = vmatmul.f32.gmra.mxu0 %v160
  %v714 = vpop.f32.mrf.mxu0
  %v715 = vadd.f32 %v257, %v714
  %716 = vmatmul.f32.gmra.mxu0 %v161
  %v717 = vpop.f32.mrf.mxu0
  %v718 = vadd.f32 %v257, %v717
  %719 = vmatmul.f32.gmra.mxu0 %v162
  %v720 = vpop.f32.mrf.mxu0
  %v721 = vadd.f32 %v257, %v720
  %722 = vmatmul.f32.gmra.mxu0 %v163
  %v723 = vpop.f32.mrf.mxu0
  %v724 = vadd.f32 %v257, %v723
  %725 = vmatmul.f32.gmra.mxu0 %v164
  %v726 = vpop.f32.mrf.mxu0
  %v727 = vadd.f32 %v257, %v726
  %728 = vmatmul.f32.gmra.mxu0 %v165
  %v729 = vpop.f32.mrf.mxu0
  %v730 = vadd.f32 %v257, %v729
  %731 = vmatmul.f32.gmra.mxu0 %v166
  %v732 = vpop.f32.mrf.mxu0
  %v733 = vadd.f32 %v257, %v732
  %734 = vmatmul.f32.gmra.mxu0 %v167
  %v735 = vpop.f32.mrf.mxu0
  %v736 = vadd.f32 %v257, %v735
  %737 = vmatmul.f32.gmra.mxu0 %v168
  %v738 = vpop.f32.mrf.mxu0
  %v739 = vadd.f32 %v257, %v738
  %740 = vmatmul.f32.gmra.mxu0 %v169
  %v741 = vpop.f32.mrf.mxu0
  %v742 = vadd.f32 %v257, %v741
  %743 = vmatmul.f32.gmra.mxu0 %v170
  %v744 = vpop.f32.mrf.mxu0
  %v745 = vadd.f32 %v257, %v744
  %746 = vmatmul.f32.gmra.mxu0 %v171
  %v747 = vpop.f32.mrf.mxu0
  %v748 = vadd.f32 %v257, %v747
  %749 = vmatmul.f32.gmra.mxu0 %v172
  %v750 = vpop.f32.mrf.mxu0
  %v751 = vadd.f32 %v257, %v750
  %752 = vmatmul.f32.gmra.mxu0 %v173
  %v753 = vpop.f32.mrf.mxu0
  %v754 = vadd.f32 %v257, %v753
  %755 = vmatmul.f32.gmra.mxu0 %v174
  %v756 = vpop.f32.mrf.mxu0
  %v757 = vadd.f32 %v257, %v756
  %758 = vmatmul.f32.gmra.mxu0 %v175
  %v759 = vpop.f32.mrf.mxu0
  %v760 = vadd.f32 %v257, %v759
  %761 = vmatmul.f32.gmra.mxu0 %v176
  %v762 = vpop.f32.mrf.mxu0
  %v763 = vadd.f32 %v257, %v762
  %764 = vmatmul.f32.gmra.mxu0 %v177
  %v765 = vpop.f32.mrf.mxu0
  %v766 = vadd.f32 %v257, %v765
  %767 = vmatmul.f32.gmra.mxu0 %v178
  %v768 = vpop.f32.mrf.mxu0
  %v769 = vadd.f32 %v257, %v768
  %770 = vmatmul.f32.gmra.mxu0 %v179
  %v771 = vpop.f32.mrf.mxu0
  %v772 = vadd.f32 %v257, %v771
  %773 = vmatmul.f32.gmra.mxu0 %v180
  %v774 = vpop.f32.mrf.mxu0
  %v775 = vadd.f32 %v257, %v774
  %776 = vmatmul.f32.gmra.mxu0 %v181
  %v777 = vpop.f32.mrf.mxu0
  %v778 = vadd.f32 %v257, %v777
  %779 = vmatmul.f32.gmra.mxu0 %v182
  %v780 = vpop.f32.mrf.mxu0
  %v781 = vadd.f32 %v257, %v780
  %782 = vmatmul.f32.gmra.mxu0 %v183
  %v783 = vpop.f32.mrf.mxu0
  %v784 = vadd.f32 %v257, %v783
  %785 = vmatmul.f32.gmra.mxu0 %v184
  %v786 = vpop.f32.mrf.mxu0
  %v787 = vadd.f32 %v257, %v786
  %788 = vmatmul.f32.gmra.mxu0 %v185
  %v789 = vpop.f32.mrf.mxu0
  %v790 = vadd.f32 %v257, %v789
  %791 = vmatmul.f32.gmra.mxu0 %v186
  %v792 = vpop.f32.mrf.mxu0
  %v793 = vadd.f32 %v257, %v792
  %794 = vmatmul.f32.gmra.mxu0 %v187
  %v795 = vpop.f32.mrf.mxu0
  %v796 = vadd.f32 %v257, %v795
  %797 = vmatmul.f32.gmra.mxu0 %v188
  %v798 = vpop.f32.mrf.mxu0
  %v799 = vadd.f32 %v257, %v798
  %800 = vmatmul.f32.gmra.mxu0 %v189
  %v801 = vpop.f32.mrf.mxu0
  %v802 = vadd.f32 %v257, %v801
  %803 = vmatmul.f32.gmra.mxu0 %v190
  %v804 = vpop.f32.mrf.mxu0
  %v805 = vadd.f32 %v257, %v804
  %806 = vmatmul.f32.gmra.mxu0 %v191
  %v807 = vpop.f32.mrf.mxu0
  %v808 = vadd.f32 %v257, %v807
  %809 = vmatmul.f32.gmra.mxu0 %v192
  %v810 = vpop.f32.mrf.mxu0
  %v811 = vadd.f32 %v257, %v810
  %812 = vmatmul.f32.gmra.mxu0 %v193
  %v813 = vpop.f32.mrf.mxu0
  %v814 = vadd.f32 %v257, %v813
  %815 = vmatmul.f32.gmra.mxu0 %v194
  %v816 = vpop.f32.mrf.mxu0
  %v817 = vadd.f32 %v257, %v816
  %818 = vmatmul.f32.gmra.mxu0 %v195
  %v819 = vpop.f32.mrf.mxu0
  %v820 = vadd.f32 %v257, %v819
  %821 = vmatmul.f32.gmra.mxu0 %v196
  %v822 = vpop.f32.mrf.mxu0
  %v823 = vadd.f32 %v257, %v822
  %824 = vmatmul.f32.gmra.mxu0 %v197
  %v825 = vpop.f32.mrf.mxu0
  %v826 = vadd.f32 %v257, %v825
  %827 = vmatmul.f32.gmra.mxu0 %v198
  %v828 = vpop.f32.mrf.mxu0
  %v829 = vadd.f32 %v257, %v828
  %830 = vmatmul.f32.gmra.mxu0 %v199
  %v831 = vpop.f32.mrf.mxu0
  %v832 = vadd.f32 %v257, %v831
  %833 = vmatmul.f32.gmra.mxu0 %v200
  %v834 = vpop.f32.mrf.mxu0
  %v835 = vadd.f32 %v257, %v834
  %836 = vmatmul.f32.gmra.mxu0 %v201
  %v837 = vpop.f32.mrf.mxu0
  %v838 = vadd.f32 %v257, %v837
  %839 = vmatmul.f32.gmra.mxu0 %v202
  %v840 = vpop.f32.mrf.mxu0
  %v841 = vadd.f32 %v257, %v840
  %842 = vmatmul.f32.gmra.mxu0 %v203
  %v843 = vpop.f32.mrf.mxu0
  %v844 = vadd.f32 %v257, %v843
  %845 = vmatmul.f32.gmra.mxu0 %v204
  %v846 = vpop.f32.mrf.mxu0
  %v847 = vadd.f32 %v257, %v846
  %848 = vmatmul.f32.gmra.mxu0 %v205
  %v849 = vpop.f32.mrf.mxu0
  %v850 = vadd.f32 %v257, %v849
  %851 = vmatmul.f32.gmra.mxu0 %v206
  %v852 = vpop.f32.mrf.mxu0
  %v853 = vadd.f32 %v257, %v852
  %854 = vmatmul.f32.gmra.mxu0 %v207
  %v855 = vpop.f32.mrf.mxu0
  %v856 = vadd.f32 %v257, %v855
  %857 = vmatmul.f32.gmra.mxu0 %v208
  %v858 = vpop.f32.mrf.mxu0
  %v859 = vadd.f32 %v257, %v858
  %860 = vmatmul.f32.gmra.mxu0 %v209
  %v861 = vpop.f32.mrf.mxu0
  %v862 = vadd.f32 %v257, %v861
  %863 = vmatmul.f32.gmra.mxu0 %v210
  %v864 = vpop.f32.mrf.mxu0
  %v865 = vadd.f32 %v257, %v864
  %866 = vmatmul.f32.gmra.mxu0 %v211
  %v867 = vpop.f32.mrf.mxu0
  %v868 = vadd.f32 %v257, %v867
  %869 = vmatmul.f32.gmra.mxu0 %v212
  %v870 = vpop.f32.mrf.mxu0
  %v871 = vadd.f32 %v257, %v870
  %872 = vmatmul.f32.gmra.mxu0 %v213
  %v873 = vpop.f32.mrf.mxu0
  %v874 = vadd.f32 %v257, %v873
  %875 = vmatmul.f32.gmra.mxu0 %v214
  %v876 = vpop.f32.mrf.mxu0
  %v877 = vadd.f32 %v257, %v876
  %878 = vmatmul.f32.gmra.mxu0 %v215
  %v879 = vpop.f32.mrf.mxu0
  %v880 = vadd.f32 %v257, %v879
  %881 = vmatmul.f32.gmra.mxu0 %v216
  %v882 = vpop.f32.mrf.mxu0
  %v883 = vadd.f32 %v257, %v882
  %884 = vmatmul.f32.gmra.mxu0 %v217
  %v885 = vpop.f32.mrf.mxu0
  %v886 = vadd.f32 %v257, %v885
  %887 = vmatmul.f32.gmra.mxu0 %v218
  %v888 = vpop.f32.mrf.mxu0
  %v889 = vadd.f32 %v257, %v888
  %890 = vmatmul.f32.gmra.mxu0 %v219
  %v891 = vpop.f32.mrf.mxu0
  %v892 = vadd.f32 %v257, %v891
  %893 = vmatmul.f32.gmra.mxu0 %v220
  %v894 = vpop.f32.mrf.mxu0
  %v895 = vadd.f32 %v257, %v894
  %896 = vmatmul.f32.gmra.mxu0 %v221
  %v897 = vpop.f32.mrf.mxu0
  %v898 = vadd.f32 %v257, %v897
  %899 = vmatmul.f32.gmra.mxu0 %v222
  %v900 = vpop.f32.mrf.mxu0
  %v901 = vadd.f32 %v257, %v900
  %902 = vmatmul.f32.gmra.mxu0 %v223
  %v903 = vpop.f32.mrf.mxu0
  %v904 = vadd.f32 %v257, %v903
  %905 = vmatmul.f32.gmra.mxu0 %v224
  %v906 = vpop.f32.mrf.mxu0
  %v907 = vadd.f32 %v257, %v906
  %908 = vmatmul.f32.gmra.mxu0 %v225
  %v909 = vpop.f32.mrf.mxu0
  %v910 = vadd.f32 %v257, %v909
  %911 = vmatmul.f32.gmra.mxu0 %v226
  %v912 = vpop.f32.mrf.mxu0
  %v913 = vadd.f32 %v257, %v912
  %914 = vmatmul.f32.gmra.mxu0 %v227
  %v915 = vpop.f32.mrf.mxu0
  %v916 = vadd.f32 %v257, %v915
  %917 = vmatmul.f32.gmra.mxu0 %v228
  %v918 = vpop.f32.mrf.mxu0
  %v919 = vadd.f32 %v257, %v918
  %920 = vmatmul.f32.gmra.mxu0 %v229
  %v921 = vpop.f32.mrf.mxu0
  %v922 = vadd.f32 %v257, %v921
  %923 = vmatmul.f32.gmra.mxu0 %v230
  %v924 = vpop.f32.mrf.mxu0
  %v925 = vadd.f32 %v257, %v924
  %926 = vmatmul.f32.gmra.mxu0 %v231
  %v927 = vpop.f32.mrf.mxu0
  %v928 = vadd.f32 %v257, %v927
  %929 = vmatmul.f32.gmra.mxu0 %v232
  %v930 = vpop.f32.mrf.mxu0
  %v931 = vadd.f32 %v257, %v930
  %932 = vmatmul.f32.gmra.mxu0 %v233
  %v933 = vpop.f32.mrf.mxu0
  %v934 = vadd.f32 %v257, %v933
  %935 = vmatmul.f32.gmra.mxu0 %v234
  %v936 = vpop.f32.mrf.mxu0
  %v937 = vadd.f32 %v257, %v936
  %938 = vmatmul.f32.gmra.mxu0 %v235
  %v939 = vpop.f32.mrf.mxu0
  %v940 = vadd.f32 %v257, %v939
  %941 = vmatmul.f32.gmra.mxu0 %v236
  %v942 = vpop.f32.mrf.mxu0
  %v943 = vadd.f32 %v257, %v942
  %944 = vmatmul.f32.gmra.mxu0 %v237
  %v945 = vpop.f32.mrf.mxu0
  %v946 = vadd.f32 %v257, %v945
  %947 = vmatmul.f32.gmra.mxu0 %v238
  %v948 = vpop.f32.mrf.mxu0
  %v949 = vadd.f32 %v257, %v948
  %950 = vdwg.mxu0
  %951 = vst [vmem:[%s3] sm:$0xff] %v277
  %952 = vst [vmem:[%s3 + $0x8] sm:$0xff] %v280
  %953 = vst [vmem:[%s3 + $0x10] sm:$0xff] %v283
  %954 = vst [vmem:[%s3 + $0x18] sm:$0xff] %v286
  %955 = vst [vmem:[%s3 + $0x20] sm:$0xff] %v289
  %956 = vst [vmem:[%s3 + $0x28] sm:$0xff] %v292
  %957 = vst [vmem:[%s3 + $0x30] sm:$0xff] %v295
  %958 = vst [vmem:[%s3 + $0x38] sm:$0xff] %v298
  %959 = vst [vmem:[%s3 + $0x40] sm:$0xff] %v301
  %960 = vst [vmem:[%s3 + $0x48] sm:$0xff] %v304
  %961 = vst [vmem:[%s3 + $0x50] sm:$0xff] %v307
  %962 = vst [vmem:[%s3 + $0x58] sm:$0xff] %v310
  %963 = vst [vmem:[%s3 + $0x60] sm:$0xff] %v313
  %964 = vst [vmem:[%s3 + $0x68] sm:$0xff] %v316
  %965 = vst [vmem:[%s3 + $0x70] sm:$0xff] %v319
  %966 = vst [vmem:[%s3 + $0x78] sm:$0xff] %v322
  %967 = vst [vmem:[%s3 + $0x80] sm:$0xff] %v325
  %968 = vst [vmem:[%s3 + $0x88] sm:$0xff] %v328
  %969 = vst [vmem:[%s3 + $0x90] sm:$0xff] %v331
  %970 = vst [vmem:[%s3 + $0x98] sm:$0xff] %v334
  %971 = vst [vmem:[%s3 + $0xa0] sm:$0xff] %v337
  %972 = vst [vmem:[%s3 + $0xa8] sm:$0xff] %v340
  %973 = vst [vmem:[%s3 + $0xb0] sm:$0xff] %v343
  %974 = vst [vmem:[%s3 + $0xb8] sm:$0xff] %v346
  %975 = vst [vmem:[%s3 + $0xc0] sm:$0xff] %v349
  %976 = vst [vmem:[%s3 + $0xc8] sm:$0xff] %v352
  %977 = vst [vmem:[%s3 + $0xd0] sm:$0xff] %v355
  %978 = vst [vmem:[%s3 + $0xd8] sm:$0xff] %v358
  %979 = vst [vmem:[%s3 + $0xe0] sm:$0xff] %v361
  %980 = vst [vmem:[%s3 + $0xe8] sm:$0xff] %v364
  %981 = vst [vmem:[%s3 + $0xf0] sm:$0xff] %v367
  %982 = vst [vmem:[%s3 + $0xf8] sm:$0xff] %v370
  %983 = vst [vmem:[%s3 + $0x100] sm:$0xff] %v373
  %984 = vst [vmem:[%s3 + $0x108] sm:$0xff] %v376
  %985 = vst [vmem:[%s3 + $0x110] sm:$0xff] %v379
  %986 = vst [vmem:[%s3 + $0x118] sm:$0xff] %v382
  %987 = vst [vmem:[%s3 + $0x120] sm:$0xff] %v385
  %988 = vst [vmem:[%s3 + $0x128] sm:$0xff] %v388
  %989 = vst [vmem:[%s3 + $0x130] sm:$0xff] %v391
  %990 = vst [vmem:[%s3 + $0x138] sm:$0xff] %v394
  %991 = vst [vmem:[%s3 + $0x140] sm:$0xff] %v397
  %992 = vst [vmem:[%s3 + $0x148] sm:$0xff] %v400
  %993 = vst [vmem:[%s3 + $0x150] sm:$0xff] %v403
  %994 = vst [vmem:[%s3 + $0x158] sm:$0xff] %v406
  %995 = vst [vmem:[%s3 + $0x160] sm:$0xff] %v409
  %996 = vst [vmem:[%s3 + $0x168] sm:$0xff] %v412
  %997 = vst [vmem:[%s3 + $0x170] sm:$0xff] %v415
  %998 = vst [vmem:[%s3 + $0x178] sm:$0xff] %v418
  %999 = vst [vmem:[%s3 + $0x180] sm:$0xff] %v421
  %1000 = vst [vmem:[%s3 + $0x188] sm:$0xff] %v424
  %1001 = vst [vmem:[%s3 + $0x190] sm:$0xff] %v427
  %1002 = vst [vmem:[%s3 + $0x198] sm:$0xff] %v430
  %1003 = vst [vmem:[%s3 + $0x1a0] sm:$0xff] %v433
  %1004 = vst [vmem:[%s3 + $0x1a8] sm:$0xff] %v436
  %1005 = vst [vmem:[%s3 + $0x1b0] sm:$0xff] %v439
  %1006 = vst [vmem:[%s3 + $0x1b8] sm:$0xff] %v442
  %1007 = vst [vmem:[%s3 + $0x1c0] sm:$0xff] %v445
  %1008 = vst [vmem:[%s3 + $0x1c8] sm:$0xff] %v448
  %1009 = vst [vmem:[%s3 + $0x1d0] sm:$0xff] %v451
  %1010 = vst [vmem:[%s3 + $0x1d8] sm:$0xff] %v454
  %1011 = vst [vmem:[%s3 + $0x1e0] sm:$0xff] %v457
  %1012 = vst [vmem:[%s3 + $0x1e8] sm:$0xff] %v460
  %1013 = vst [vmem:[%s3 + $0x1f0] sm:$0xff] %v463
  %1014 = vst [vmem:[%s3 + $0x1f8] sm:$0xff] %v466
  %1015 = vst [vmem:[%s3 + $0x200] sm:$0xff] %v469
  %1016 = vst [vmem:[%s3 + $0x208] sm:$0xff] %v472
  %1017 = vst [vmem:[%s3 + $0x210] sm:$0xff] %v475
  %1018 = vst [vmem:[%s3 + $0x218] sm:$0xff] %v478
  %1019 = vst [vmem:[%s3 + $0x220] sm:$0xff] %v481
  %1020 = vst [vmem:[%s3 + $0x228] sm:$0xff] %v484
  %1021 = vst [vmem:[%s3 + $0x230] sm:$0xff] %v487
  %1022 = vst [vmem:[%s3 + $0x238] sm:$0xff] %v490
  %1023 = vst [vmem:[%s3 + $0x240] sm:$0xff] %v493
  %1024 = vst [vmem:[%s3 + $0x248] sm:$0xff] %v496
  %1025 = vst [vmem:[%s3 + $0x250] sm:$0xff] %v499
  %1026 = vst [vmem:[%s3 + $0x258] sm:$0xff] %v502
  %1027 = vst [vmem:[%s3 + $0x260] sm:$0xff] %v505
  %1028 = vst [vmem:[%s3 + $0x268] sm:$0xff] %v508
  %1029 = vst [vmem:[%s3 + $0x270] sm:$0xff] %v511
  %1030 = vst [vmem:[%s3 + $0x278] sm:$0xff] %v514
  %1031 = vst [vmem:[%s3 + $0x280] sm:$0xff] %v517
  %1032 = vst [vmem:[%s3 + $0x288] sm:$0xff] %v520
  %1033 = vst [vmem:[%s3 + $0x290] sm:$0xff] %v523
  %1034 = vst [vmem:[%s3 + $0x298] sm:$0xff] %v526
  %1035 = vst [vmem:[%s3 + $0x2a0] sm:$0xff] %v529
  %1036 = vst [vmem:[%s3 + $0x2a8] sm:$0xff] %v532
  %1037 = vst [vmem:[%s3 + $0x2b0] sm:$0xff] %v535
  %1038 = vst [vmem:[%s3 + $0x2b8] sm:$0xff] %v538
  %1039 = vst [vmem:[%s3 + $0x2c0] sm:$0xff] %v541
  %1040 = vst [vmem:[%s3 + $0x2c8] sm:$0xff] %v544
  %1041 = vst [vmem:[%s3 + $0x2d0] sm:$0xff] %v547
  %1042 = vst [vmem:[%s3 + $0x2d8] sm:$0xff] %v550
  %1043 = vst [vmem:[%s3 + $0x2e0] sm:$0xff] %v553
  %1044 = vst [vmem:[%s3 + $0x2e8] sm:$0xff] %v556
  %1045 = vst [vmem:[%s3 + $0x2f0] sm:$0xff] %v559
  %1046 = vst [vmem:[%s3 + $0x2f8] sm:$0xff] %v562
  %1047 = vst [vmem:[%s3 + $0x300] sm:$0xff] %v565
  %1048 = vst [vmem:[%s3 + $0x308] sm:$0xff] %v568
  %1049 = vst [vmem:[%s3 + $0x310] sm:$0xff] %v571
  %1050 = vst [vmem:[%s3 + $0x318] sm:$0xff] %v574
  %1051 = vst [vmem:[%s3 + $0x320] sm:$0xff] %v577
  %1052 = vst [vmem:[%s3 + $0x328] sm:$0xff] %v580
  %1053 = vst [vmem:[%s3 + $0x330] sm:$0xff] %v583
  %1054 = vst [vmem:[%s3 + $0x338] sm:$0xff] %v586
  %1055 = vst [vmem:[%s3 + $0x340] sm:$0xff] %v589
  %1056 = vst [vmem:[%s3 + $0x348] sm:$0xff] %v592
  %1057 = vst [vmem:[%s3 + $0x350] sm:$0xff] %v595
  %1058 = vst [vmem:[%s3 + $0x358] sm:$0xff] %v598
  %1059 = vst [vmem:[%s3 + $0x360] sm:$0xff] %v601
  %1060 = vst [vmem:[%s3 + $0x368] sm:$0xff] %v604
  %1061 = vst [vmem:[%s3 + $0x370] sm:$0xff] %v607
  %1062 = vst [vmem:[%s3 + $0x378] sm:$0xff] %v610
  %1063 = vst [vmem:[%s3 + $0x380] sm:$0xff] %v613
  %1064 = vst [vmem:[%s3 + $0x388] sm:$0xff] %v616
  %1065 = vst [vmem:[%s3 + $0x390] sm:$0xff] %v619
  %1066 = vst [vmem:[%s3 + $0x398] sm:$0xff] %v622
  %1067 = vst [vmem:[%s3 + $0x3a0] sm:$0xff] %v625
  %1068 = vst [vmem:[%s3 + $0x3a8] sm:$0xff] %v628
  %1069 = vst [vmem:[%s3 + $0x3b0] sm:$0xff] %v631
  %1070 = vst [vmem:[%s3 + $0x3b8] sm:$0xff] %v634
  %1071 = vst [vmem:[%s3 + $0x3c0] sm:$0xff] %v637
  %1072 = vst [vmem:[%s3 + $0x3c8] sm:$0xff] %v640
  %1073 = vst [vmem:[%s3 + $0x3d0] sm:$0xff] %v643
  %1074 = vst [vmem:[%s3 + $0x3d8] sm:$0xff] %v646
  %1075 = vst [vmem:[%s3 + $0x3e0] sm:$0xff] %v649
  %1076 = vst [vmem:[%s3 + $0x3e8] sm:$0xff] %v652
  %1077 = vst [vmem:[%s3 + $0x3f0] sm:$0xff] %v655
  %1078 = vst [vmem:[%s3 + $0x3f8] sm:$0xff] %v658
  %1079 = vst [vmem:[%s3 + $0x400] sm:$0xff] %v661
  %1080 = vst [vmem:[%s3 + $0x408] sm:$0xff] %v664
  %1081 = vst [vmem:[%s3 + $0x410] sm:$0xff] %v667
  %1082 = vst [vmem:[%s3 + $0x418] sm:$0xff] %v670
  %1083 = vst [vmem:[%s3 + $0x420] sm:$0xff] %v673
  %1084 = vst [vmem:[%s3 + $0x428] sm:$0xff] %v676
  %1085 = vst [vmem:[%s3 + $0x430] sm:$0xff] %v679
  %1086 = vst [vmem:[%s3 + $0x438] sm:$0xff] %v682
  %1087 = vst [vmem:[%s3 + $0x440] sm:$0xff] %v685
  %1088 = vst [vmem:[%s3 + $0x448] sm:$0xff] %v688
  %1089 = vst [vmem:[%s3 + $0x450] sm:$0xff] %v691
  %1090 = vst [vmem:[%s3 + $0x458] sm:$0xff] %v694
  %1091 = vst [vmem:[%s3 + $0x460] sm:$0xff] %v697
  %1092 = vst [vmem:[%s3 + $0x468] sm:$0xff] %v700
  %1093 = vst [vmem:[%s3 + $0x470] sm:$0xff] %v703
  %1094 = vst [vmem:[%s3 + $0x478] sm:$0xff] %v706
  %1095 = vst [vmem:[%s3 + $0x480] sm:$0xff] %v709
  %1096 = vst [vmem:[%s3 + $0x488] sm:$0xff] %v712
  %1097 = vst [vmem:[%s3 + $0x490] sm:$0xff] %v715
  %1098 = vst [vmem:[%s3 + $0x498] sm:$0xff] %v718
  %1099 = vst [vmem:[%s3 + $0x4a0] sm:$0xff] %v721
  %1100 = vst [vmem:[%s3 + $0x4a8] sm:$0xff] %v724
  %1101 = vst [vmem:[%s3 + $0x4b0] sm:$0xff] %v727
  %1102 = vst [vmem:[%s3 + $0x4b8] sm:$0xff] %v730
  %1103 = vst [vmem:[%s3 + $0x4c0] sm:$0xff] %v733
  %1104 = vst [vmem:[%s3 + $0x4c8] sm:$0xff] %v736
  %1105 = vst [vmem:[%s3 + $0x4d0] sm:$0xff] %v739
  %1106 = vst [vmem:[%s3 + $0x4d8] sm:$0xff] %v742
  %1107 = vst [vmem:[%s3 + $0x4e0] sm:$0xff] %v745
  %1108 = vst [vmem:[%s3 + $0x4e8] sm:$0xff] %v748
  %1109 = vst [vmem:[%s3 + $0x4f0] sm:$0xff] %v751
  %1110 = vst [vmem:[%s3 + $0x4f8] sm:$0xff] %v754
  %1111 = vst [vmem:[%s3 + $0x500] sm:$0xff] %v757
  %1112 = vst [vmem:[%s3 + $0x508] sm:$0xff] %v760
  %1113 = vst [vmem:[%s3 + $0x510] sm:$0xff] %v763
  %1114 = vst [vmem:[%s3 + $0x518] sm:$0xff] %v766
  %1115 = vst [vmem:[%s3 + $0x520] sm:$0xff] %v769
  %1116 = vst [vmem:[%s3 + $0x528] sm:$0xff] %v772
  %1117 = vst [vmem:[%s3 + $0x530] sm:$0xff] %v775
  %1118 = vst [vmem:[%s3 + $0x538] sm:$0xff] %v778
  %1119 = vst [vmem:[%s3 + $0x540] sm:$0xff] %v781
  %1120 = vst [vmem:[%s3 + $0x548] sm:$0xff] %v784
  %1121 = vst [vmem:[%s3 + $0x550] sm:$0xff] %v787
  %1122 = vst [vmem:[%s3 + $0x558] sm:$0xff] %v790
  %1123 = vst [vmem:[%s3 + $0x560] sm:$0xff] %v793
  %1124 = vst [vmem:[%s3 + $0x568] sm:$0xff] %v796
  %1125 = vst [vmem:[%s3 + $0x570] sm:$0xff] %v799
  %1126 = vst [vmem:[%s3 + $0x578] sm:$0xff] %v802
  %1127 = vst [vmem:[%s3 + $0x580] sm:$0xff] %v805
  %1128 = vst [vmem:[%s3 + $0x588] sm:$0xff] %v808
  %1129 = vst [vmem:[%s3 + $0x590] sm:$0xff] %v811
  %1130 = vst [vmem:[%s3 + $0x598] sm:$0xff] %v814
  %1131 = vst [vmem:[%s3 + $0x5a0] sm:$0xff] %v817
  %1132 = vst [vmem:[%s3 + $0x5a8] sm:$0xff] %v820
  %1133 = vst [vmem:[%s3 + $0x5b0] sm:$0xff] %v823
  %1134 = vst [vmem:[%s3 + $0x5b8] sm:$0xff] %v826
  %1135 = vst [vmem:[%s3 + $0x5c0] sm:$0xff] %v829
  %1136 = vst [vmem:[%s3 + $0x5c8] sm:$0xff] %v832
  %1137 = vst [vmem:[%s3 + $0x5d0] sm:$0xff] %v835
  %1138 = vst [vmem:[%s3 + $0x5d8] sm:$0xff] %v838
  %1139 = vst [vmem:[%s3 + $0x5e0] sm:$0xff] %v841
  %1140 = vst [vmem:[%s3 + $0x5e8] sm:$0xff] %v844
  %1141 = vst [vmem:[%s3 + $0x5f0] sm:$0xff] %v847
  %1142 = vst [vmem:[%s3 + $0x5f8] sm:$0xff] %v850
  %1143 = vst [vmem:[%s3 + $0x600] sm:$0xff] %v853
  %1144 = vst [vmem:[%s3 + $0x608] sm:$0xff] %v856
  %1145 = vst [vmem:[%s3 + $0x610] sm:$0xff] %v859
  %1146 = vst [vmem:[%s3 + $0x618] sm:$0xff] %v862
  %1147 = vst [vmem:[%s3 + $0x620] sm:$0xff] %v865
  %1148 = vst [vmem:[%s3 + $0x628] sm:$0xff] %v868
  %1149 = vst [vmem:[%s3 + $0x630] sm:$0xff] %v871
  %1150 = vst [vmem:[%s3 + $0x638] sm:$0xff] %v874
  %1151 = vst [vmem:[%s3 + $0x640] sm:$0xff] %v877
  %1152 = vst [vmem:[%s3 + $0x648] sm:$0xff] %v880
  %1153 = vst [vmem:[%s3 + $0x650] sm:$0xff] %v883
  %1154 = vst [vmem:[%s3 + $0x658] sm:$0xff] %v886
  %1155 = vst [vmem:[%s3 + $0x660] sm:$0xff] %v889
  %1156 = vst [vmem:[%s3 + $0x668] sm:$0xff] %v892
  %1157 = vst [vmem:[%s3 + $0x670] sm:$0xff] %v895
  %1158 = vst [vmem:[%s3 + $0x678] sm:$0xff] %v898
  %1159 = vst [vmem:[%s3 + $0x680] sm:$0xff] %v901
  %1160 = vst [vmem:[%s3 + $0x688] sm:$0xff] %v904
  %1161 = vst [vmem:[%s3 + $0x690] sm:$0xff] %v907
  %1162 = vst [vmem:[%s3 + $0x698] sm:$0xff] %v910
  %1163 = vst [vmem:[%s3 + $0x6a0] sm:$0xff] %v913
  %1164 = vst [vmem:[%s3 + $0x6a8] sm:$0xff] %v916
  %1165 = vst [vmem:[%s3 + $0x6b0] sm:$0xff] %v919
  %1166 = vst [vmem:[%s3 + $0x6b8] sm:$0xff] %v922
  %1167 = vst [vmem:[%s3 + $0x6c0] sm:$0xff] %v925
  %1168 = vst [vmem:[%s3 + $0x6c8] sm:$0xff] %v928
  %1169 = vst [vmem:[%s3 + $0x6d0] sm:$0xff] %v931
  %1170 = vst [vmem:[%s3 + $0x6d8] sm:$0xff] %v934
  %1171 = vst [vmem:[%s3 + $0x6e0] sm:$0xff] %v937
  %1172 = vst [vmem:[%s3 + $0x6e8] sm:$0xff] %v940
  %1173 = vst [vmem:[%s3 + $0x6f0] sm:$0xff] %v943
  %1174 = vst [vmem:[%s3 + $0x6f8] sm:$0xff] %v946
  %1175 = vst [vmem:[%s3 + $0x700] sm:$0xff] %v949
  // Predicated region
  $region14: #{conv2_forward.4} parent=0 // pred_check
    _
  $region15: #{conv2_forward.4} parent=0 // pred_check_branch
    %1177 = sbr.rel (0) target = $region17
  $region16: #{conv2_forward.4} parent=0 // pred_region
    _
  $region17: #{conv2_forward.4} parent=0 // pred_fallthru
    _
  // Predicated region
  $region18: #{conv2_forward.4} parent=0 // pred_check
    _
  $region19: #{conv2_forward.4} parent=0 // pred_check_branch
    %1179 = sbr.rel (0) target = $region21
  $region20: #{conv2_forward.4} parent=0 // pred_region
    _
  $region21: #{conv2_forward.4} parent=0 // pred_fallthru
    _

// kernel: conv2_forward.5
$region0: #{conv2_forward.5}
  #allocation0 [shape = 'u32[]', space=smem, size = 0x4, offset = 0x4, fixed_abs, tag = 'smem constant byte address 0x4 - core index']
  #allocation1 [shape = 'u32[72,128]{1,0:T(1,128)}', space=vmem, size = 0x9000, scoped, tag = 'internal scratch']
  #allocation2 [shape = 'f32[16,1024]{1,0:T(8,128)}', space=vmem, size = 0x10000, scoped, tag = 'scratch operand']
  %s0 = inlined_call_operand.vmem [shape: bf16[16,4608], index: 0, kind: input, shape index: {}]
  %s1 = inlined_call_operand.vmem [shape: bf16[4608,1024], index: 1, kind: input, shape index: {}]
  %s2 = inlined_call_operand.vmem [shape: f32[1,1024], index: 2, kind: input, shape index: {}]
  %s3 = inlined_call_operand.vmem [shape: f32[1024,128], index: 3, kind: input, shape index: {}]
  %s4 = inlined_call_operand.vmem [shape: f32[1,128], index: 4, kind: input, shape index: {}]
  %s5 = inlined_call_operand.vmem [shape: f32[1,128], index: 5, kind: input, shape index: {}]
  %s6 = inlined_call_operand.vmem [shape: f32[128,128], index: 6, kind: input, shape index: {}]
  %s7 = inlined_call_operand.vmem [shape: f32[1,128], index: 7, kind: input, shape index: {}]
  %s8 = inlined_call_operand.vmem [shape: f32[16,128], index: 8, kind: output, shape index: {}]
  %s9 = sld [smem:[#allocation0]]
  $region96: #{conv2_forward.5} parent=0
    _
  %s11 = ssub.s32 1, %s9
  %s12 = scalar_select 0, %s11, %s9
  $region1: #{conv2_forward.5} parent=0
    #allocation3 [shape = 'u8[147456]{0}', space=vmem, size = 0x24000, scoped, tag = 'input window, operand 0']
    loop: start=0, step=1, limit=4
    $region2: #{conv2_forward.5} parent=1 // loop_pre_header
      _
    $region3: #{conv2_forward.5} parent=1 // loop_header
      %s14 = sphi 0, %s18
      %p15 = scmp.ge.s32.totalorder %s14, 4
      %s24 = sphi 0, %s26
      %s27 = sphi 0, %s24
      %s28 = sphi 0, %s27
      %s44 = sphi 0, %s28
      %s50 = sphi 0, %s52
      %s53 = sphi 0, %s50
      %s54 = sphi 0, %s53
      %s70 = sphi 0, %s54
      %s74 = sphi 0, %s74
      %s76 = sphi 0, %s74
      %s77 = sphi 0, %s76
      %s91 = sphi 0, %s77
      %s95 = sphi 0, %s95
      %s97 = sphi 0, %s95
      %s98 = sphi 0, %s97
      %s112 = sphi 0, %s98
      %s116 = sphi 0, %s116
      %s118 = sphi 0, %s116
      %s119 = sphi 0, %s118
      %s133 = sphi 0, %s119
      %s137 = sphi 0, %s137
      %s139 = sphi 0, %s137
      %s140 = sphi 0, %s139
      %s154 = sphi 0, %s140
      %s158 = sphi 0, %s158
      %s160 = sphi 0, %s158
      %s161 = sphi 0, %s160
      %s175 = sphi 0, %s161
      %s179 = sphi 0, %s179
      %s181 = sphi 0, %s179
      %s182 = sphi 0, %s181
      %s196 = sphi 0, %s182
      %s200 = sphi 0, %s200
      %s202 = sphi 0, %s200
      %s203 = sphi 0, %s202
      %s217 = sphi 0, %s203
    $region4: #{conv2_forward.5} parent=1 // loop_header_branch
      %17 = sbr.rel (%p15) target = $region8
    $region5: #{conv2_forward.5} parent=1 // loop_body
      %s19 = ssub.s32 %s14, 1
      %s20 = ssub.s32 %s14, 2
      %s21 = sadd.s32 %s14, 1
      %s22 = ssub.s32 %s14, %s21
      %p23 = scmp.eq.s32.totalorder %s22, 0
      %s25 = sadd.s32 %s24, 1
      %s26 = scalar_select %p23, %s24, %s25
      %p29 = pneg %p23
      %p30 = scmp.eq.s32.totalorder %s14, 1
      %p31 = por %p29, %p30
      %p32 = scmp.ne.s32.totalorder %s24, %s27
      %p33 = scmp.eq.s32.totalorder %s14, 0
      %p34 = por %p32, %p33
      %p35 = scmp.ne.s32.totalorder %s24, %s27
      %p36 = scmp.eq.s32.totalorder %s19, 1
      %p37 = por %p35, %p36
      %p38 = scmp.ne.s32.totalorder %s27, %s28
      %p39 = scmp.eq.s32.totalorder %s19, 0
      %p40 = por %p38, %p39
      %p41 = scmp.ne.s32.totalorder %s27, %s28
      %p42 = scmp.eq.s32.totalorder %s20, 1
      %p43 = por %p41, %p42
      %p45 = scmp.ne.s32.totalorder %s28, %s44
      %p46 = scmp.eq.s32.totalorder %s20, 0
      %p47 = por %p45, %p46
      %s48 = ssub.s32 %s14, %s21
      %p49 = scmp.eq.s32.totalorder %s48, 0
      %s51 = sadd.s32 %s50, 1
      %s52 = scalar_select %p49, %s50, %s51
      %p55 = pneg %p49
      %p56 = scmp.eq.s32.totalorder %s14, 1
      %p57 = por %p55, %p56
      %p58 = scmp.ne.s32.totalorder %s50, %s53
      %p59 = scmp.eq.s32.totalorder %s14, 0
      %p60 = por %p58, %p59
      %p61 = scmp.ne.s32.totalorder %s50, %s53
      %p62 = scmp.eq.s32.totalorder %s19, 1
      %p63 = por %p61, %p62
      %p64 = scmp.ne.s32.totalorder %s53, %s54
      %p65 = scmp.eq.s32.totalorder %s19, 0
      %p66 = por %p64, %p65
      %p67 = scmp.ne.s32.totalorder %s53, %s54
      %p68 = scmp.eq.s32.totalorder %s20, 1
      %p69 = por %p67, %p68
      %p71 = scmp.ne.s32.totalorder %s54, %s70
      %p72 = scmp.eq.s32.totalorder %s20, 0
      %p73 = por %p71, %p72
      %s75 = sadd.s32 %s74, 1
      %p78 = scmp.eq.s32.totalorder %s14, 1
      %p79 = scmp.ne.s32.totalorder %s74, %s76
      %p80 = scmp.eq.s32.totalorder %s14, 0
      %p81 = por %p79, %p80
      %p82 = scmp.ne.s32.totalorder %s74, %s76
      %p83 = scmp.eq.s32.totalorder %s19, 1
      %p84 = por %p82, %p83
      %p85 = scmp.ne.s32.totalorder %s76, %s77
      %p86 = scmp.eq.s32.totalorder %s19, 0
      %p87 = por %p85, %p86
      %p88 = scmp.ne.s32.totalorder %s76, %s77
      %p89 = scmp.eq.s32.totalorder %s20, 1
      %p90 = por %p88, %p89
      %p92 = scmp.ne.s32.totalorder %s77, %s91
      %p93 = scmp.eq.s32.totalorder %s20, 0
      %p94 = por %p92, %p93
      %s96 = sadd.s32 %s95, 1
      %p99 = scmp.eq.s32.totalorder %s14, 1
      %p100 = scmp.ne.s32.totalorder %s95, %s97
      %p101 = scmp.eq.s32.totalorder %s14, 0
      %p102 = por %p100, %p101
      %p103 = scmp.ne.s32.totalorder %s95, %s97
      %p104 = scmp.eq.s32.totalorder %s19, 1
      %p105 = por %p103, %p104
      %p106 = scmp.ne.s32.totalorder %s97, %s98
      %p107 = scmp.eq.s32.totalorder %s19, 0
      %p108 = por %p106, %p107
      %p109 = scmp.ne.s32.totalorder %s97, %s98
      %p110 = scmp.eq.s32.totalorder %s20, 1
      %p111 = por %p109, %p110
      %p113 = scmp.ne.s32.totalorder %s98, %s112
      %p114 = scmp.eq.s32.totalorder %s20, 0
      %p115 = por %p113, %p114
      %s117 = sadd.s32 %s116, 1
      %p120 = scmp.eq.s32.totalorder %s14, 1
      %p121 = scmp.ne.s32.totalorder %s116, %s118
      %p122 = scmp.eq.s32.totalorder %s14, 0
      %p123 = por %p121, %p122
      %p124 = scmp.ne.s32.totalorder %s116, %s118
      %p125 = scmp.eq.s32.totalorder %s19, 1
      %p126 = por %p124, %p125
      %p127 = scmp.ne.s32.totalorder %s118, %s119
      %p128 = scmp.eq.s32.totalorder %s19, 0
      %p129 = por %p127, %p128
      %p130 = scmp.ne.s32.totalorder %s118, %s119
      %p131 = scmp.eq.s32.totalorder %s20, 1
      %p132 = por %p130, %p131
      %p134 = scmp.ne.s32.totalorder %s119, %s133
      %p135 = scmp.eq.s32.totalorder %s20, 0
      %p136 = por %p134, %p135
      %s138 = sadd.s32 %s137, 1
      %p141 = scmp.eq.s32.totalorder %s14, 1
      %p142 = scmp.ne.s32.totalorder %s137, %s139
      %p143 = scmp.eq.s32.totalorder %s14, 0
      %p144 = por %p142, %p143
      %p145 = scmp.ne.s32.totalorder %s137, %s139
      %p146 = scmp.eq.s32.totalorder %s19, 1
      %p147 = por %p145, %p146
      %p148 = scmp.ne.s32.totalorder %s139, %s140
      %p149 = scmp.eq.s32.totalorder %s19, 0
      %p150 = por %p148, %p149
      %p151 = scmp.ne.s32.totalorder %s139, %s140
      %p152 = scmp.eq.s32.totalorder %s20, 1
      %p153 = por %p151, %p152
      %p155 = scmp.ne.s32.totalorder %s140, %s154
      %p156 = scmp.eq.s32.totalorder %s20, 0
      %p157 = por %p155, %p156
      %s159 = sadd.s32 %s158, 1
      %p162 = scmp.eq.s32.totalorder %s14, 1
      %p163 = scmp.ne.s32.totalorder %s158, %s160
      %p164 = scmp.eq.s32.totalorder %s14, 0
      %p165 = por %p163, %p164
      %p166 = scmp.ne.s32.totalorder %s158, %s160
      %p167 = scmp.eq.s32.totalorder %s19, 1
      %p168 = por %p166, %p167
      %p169 = scmp.ne.s32.totalorder %s160, %s161
      %p170 = scmp.eq.s32.totalorder %s19, 0
      %p171 = por %p169, %p170
      %p172 = scmp.ne.s32.totalorder %s160, %s161
      %p173 = scmp.eq.s32.totalorder %s20, 1
      %p174 = por %p172, %p173
      %p176 = scmp.ne.s32.totalorder %s161, %s175
      %p177 = scmp.eq.s32.totalorder %s20, 0
      %p178 = por %p176, %p177
      %s180 = sadd.s32 %s179, 1
      %p183 = scmp.eq.s32.totalorder %s14, 1
      %p184 = scmp.ne.s32.totalorder %s179, %s181
      %p185 = scmp.eq.s32.totalorder %s14, 0
      %p186 = por %p184, %p185
      %p187 = scmp.ne.s32.totalorder %s179, %s181
      %p188 = scmp.eq.s32.totalorder %s19, 1
      %p189 = por %p187, %p188
      %p190 = scmp.ne.s32.totalorder %s181, %s182
      %p191 = scmp.eq.s32.totalorder %s19, 0
      %p192 = por %p190, %p191
      %p193 = scmp.ne.s32.totalorder %s181, %s182
      %p194 = scmp.eq.s32.totalorder %s20, 1
      %p195 = por %p193, %p194
      %p197 = scmp.ne.s32.totalorder %s182, %s196
      %p198 = scmp.eq.s32.totalorder %s20, 0
      %p199 = por %p197, %p198
      %s201 = sadd.s32 %s200, 1
      %p204 = scmp.eq.s32.totalorder %s14, 1
      %p205 = scmp.ne.s32.totalorder %s200, %s202
      %p206 = scmp.eq.s32.totalorder %s14, 0
      %p207 = por %p205, %p206
      %p208 = scmp.ne.s32.totalorder %s200, %s202
      %p209 = scmp.eq.s32.totalorder %s19, 1
      %p210 = por %p208, %p209
      %p211 = scmp.ne.s32.totalorder %s202, %s203
      %p212 = scmp.eq.s32.totalorder %s19, 0
      %p213 = por %p211, %p212
      %p214 = scmp.ne.s32.totalorder %s202, %s203
      %p215 = scmp.eq.s32.totalorder %s20, 1
      %p216 = por %p214, %p215
      %p218 = scmp.ne.s32.totalorder %s203, %s217
      %p219 = scmp.eq.s32.totalorder %s20, 0
      %p220 = por %p218, %p219
      %p221 = scmp.le.s32.totalorder 1, %s14
      %p222 = scmp.lt.s32.totalorder %s14, 3
      %p223 = pnand %p221, %p222
      %p224 = pneg %p223
      // Predicated region
      $region9: #{conv2_forward.5} parent=5 // pred_check
        _
      $region10: #{conv2_forward.5} parent=5 // pred_check_branch
        %226 = sbr.rel (%p223) target = $region12
      $region11: #{conv2_forward.5} parent=5 // pred_region
        %s227 = ssub.s32 %s14, 1
        // Predicated region
        $region13: #{conv2_forward.5} parent=11 // pred_check
          %p228 = pneg %p87
        $region14: #{conv2_forward.5} parent=11 // pred_check_branch
          %230 = sbr.rel (%p228) target = $region16
        $region15: #{conv2_forward.5} parent=11 // pred_region
          _
        $region16: #{conv2_forward.5} parent=11 // pred_fallthru
          _
        // Predicated region
        $region17: #{conv2_forward.5} parent=11 // pred_check
          %p231 = pneg %p108
        $region18: #{conv2_forward.5} parent=11 // pred_check_branch
          %233 = sbr.rel (%p231) target = $region20
        $region19: #{conv2_forward.5} parent=11 // pred_region
          _
        $region20: #{conv2_forward.5} parent=11 // pred_fallthru
          _
        // Predicated region
        $region21: #{conv2_forward.5} parent=11 // pred_check
          %p234 = pneg %p129
        $region22: #{conv2_forward.5} parent=11 // pred_check_branch
          %236 = sbr.rel (%p234) target = $region24
        $region23: #{conv2_forward.5} parent=11 // pred_region
          _
        $region24: #{conv2_forward.5} parent=11 // pred_fallthru
          _
        // Predicated region
        $region25: #{conv2_forward.5} parent=11 // pred_check
          %p237 = pneg %p150
        $region26: #{conv2_forward.5} parent=11 // pred_check_branch
          %239 = sbr.rel (%p237) target = $region28
        $region27: #{conv2_forward.5} parent=11 // pred_region
          _
        $region28: #{conv2_forward.5} parent=11 // pred_fallthru
          _
        // Predicated region
        $region29: #{conv2_forward.5} parent=11 // pred_check
          %p240 = pneg %p171
        $region30: #{conv2_forward.5} parent=11 // pred_check_branch
          %242 = sbr.rel (%p240) target = $region32
        $region31: #{conv2_forward.5} parent=11 // pred_region
          _
        $region32: #{conv2_forward.5} parent=11 // pred_fallthru
          _
        // Predicated region
        $region33: #{conv2_forward.5} parent=11 // pred_check
          %p243 = pneg %p192
        $region34: #{conv2_forward.5} parent=11 // pred_check_branch
          %245 = sbr.rel (%p243) target = $region36
        $region35: #{conv2_forward.5} parent=11 // pred_region
          _
        $region36: #{conv2_forward.5} parent=11 // pred_fallthru
          _
      $region12: #{conv2_forward.5} parent=5 // pred_fallthru
        _
      %p246 = scmp.lt.s32.totalorder %s14, 2
      // Predicated region
      $region37: #{conv2_forward.5} parent=5 // pred_check
        %p247 = pneg %p246
      $region38: #{conv2_forward.5} parent=5 // pred_check_branch
        %249 = sbr.rel (%p247) target = $region40
      $region39: #{conv2_forward.5} parent=5 // pred_region
        // Predicated region
        $region41: #{conv2_forward.5} parent=39 // pred_check
          %p250 = pneg %p34
        $region42: #{conv2_forward.5} parent=39 // pred_check_branch
          %252 = sbr.rel (%p250) target = $region44
        $region43: #{conv2_forward.5} parent=39 // pred_region
          %s253 = sand.u32 %s24, 1
          %s254 = sand.u32 %s24, 1
          %s255 = smul.addr %s254, 144
          %s256 = scalar_lea.vmem [#allocation3], %s255
          %s257 = smul.u32 18, %s14
          %s258 = smul.addr %s257, 4
          %s259 = scalar_lea.vmem %s0, %s258
          // Predicated region
          $region45: #{conv2_forward.5} parent=43 // pred_check
            _
          $region46: #{conv2_forward.5} parent=43 // pred_check_branch
            %261 = sbr.rel (0) target = $region48
          $region47: #{conv2_forward.5} parent=43 // pred_region
            // Predicated region
            $region49: #{conv2_forward.5} parent=47 // pred_check
              _
            $region50: #{conv2_forward.5} parent=47 // pred_check_branch
              %263 = sbr.rel (0) target = $region52
            $region51: #{conv2_forward.5} parent=47 // pred_region
              loop: start=0, step=1, limit=1
              $region53: #{conv2_forward.5} parent=51 // loop_pre_header
                _
              $region54: #{conv2_forward.5} parent=51 // loop_header
                %s265 = sphi 0, %s269
                %p266 = scmp.ge.s32.totalorder %s265, 1
                %s270 = sphi %s259, %s259
                %s271 = sphi %s256, %s256
              $region55: #{conv2_forward.5} parent=51 // loop_header_branch
                %268 = sbr.rel (%p266) target = $region59
              $region56: #{conv2_forward.5} parent=51 // loop_body
                %v272 = vld [vmem:[%s270] sm:$0xff]
                %273 = vst [vmem:[%s271] sm:$0xff] %v272
                %v274 = vld [vmem:[%s270 + $0x8] sm:$0xff]
                %275 = vst [vmem:[%s271 + $0x8] sm:$0xff] %v274
                %v276 = vld [vmem:[%s270 + $0x10] sm:$0xff]
                %277 = vst [vmem:[%s271 + $0x10] sm:$0xff] %v276
                %v278 = vld [vmem:[%s270 + $0x18] sm:$0xff]
                %279 = vst [vmem:[%s271 + $0x18] sm:$0xff] %v278
                %v280 = vld [vmem:[%s270 + $0x20] sm:$0xff]
                %281 = vst [vmem:[%s271 + $0x20] sm:$0xff] %v280
                %v282 = vld [vmem:[%s270 + $0x28] sm:$0xff]
                %283 = vst [vmem:[%s271 + $0x28] sm:$0xff] %v282
                %v284 = vld [vmem:[%s270 + $0x30] sm:$0xff]
                %285 = vst [vmem:[%s271 + $0x30] sm:$0xff] %v284
                %v286 = vld [vmem:[%s270 + $0x38] sm:$0xff]
                %287 = vst [vmem:[%s271 + $0x38] sm:$0xff] %v286
                %v288 = vld [vmem:[%s270 + $0x40] sm:$0xff]
                %289 = vst [vmem:[%s271 + $0x40] sm:$0xff] %v288
                %v290 = vld [vmem:[%s270 + $0x90] sm:$0xff]
                %291 = vst [vmem:[%s271 + $0x48] sm:$0xff] %v290
                %v292 = vld [vmem:[%s270 + $0x98] sm:$0xff]
                %293 = vst [vmem:[%s271 + $0x50] sm:$0xff] %v292
                %v294 = vld [vmem:[%s270 + $0xa0] sm:$0xff]
                %295 = vst [vmem:[%s271 + $0x58] sm:$0xff] %v294
                %v296 = vld [vmem:[%s270 + $0xa8] sm:$0xff]
                %297 = vst [vmem:[%s271 + $0x60] sm:$0xff] %v296
                %v298 = vld [vmem:[%s270 + $0xb0] sm:$0xff]
                %299 = vst [vmem:[%s271 + $0x68] sm:$0xff] %v298
                %v300 = vld [vmem:[%s270 + $0xb8] sm:$0xff]
                %301 = vst [vmem:[%s271 + $0x70] sm:$0xff] %v300
                %v302 = vld [vmem:[%s270 + $0xc0] sm:$0xff]
                %303 = vst [vmem:[%s271 + $0x78] sm:$0xff] %v302
                %v304 = vld [vmem:[%s270 + $0xc8] sm:$0xff]
                %305 = vst [vmem:[%s271 + $0x80] sm:$0xff] %v304
                %v306 = vld [vmem:[%s270 + $0xd0] sm:$0xff]
                %307 = vst [vmem:[%s271 + $0x88] sm:$0xff] %v306
              $region57: #{conv2_forward.5} parent=51 // loop_footer
                %s269 = sadd.s32 1, %s265
              $region58: #{conv2_forward.5} parent=51 // loop_footer_branch
                %264 = sbr.rel target = $region54
              $region59: #{conv2_forward.5} parent=51 // loop_exit
                _
            $region52: #{conv2_forward.5} parent=47 // pred_fallthru
              _
            // Predicated region
            $region60: #{conv2_forward.5} parent=47 // pred_check
              _
            $region61: #{conv2_forward.5} parent=47 // pred_check_branch
              %309 = sbr.rel target = $region63
            $region62: #{conv2_forward.5} parent=47 // pred_region
              _
            $region63: #{conv2_forward.5} parent=47 // pred_fallthru
              _
          $region48: #{conv2_forward.5} parent=43 // pred_fallthru
            _
          %310 = vnop
        $region44: #{conv2_forward.5} parent=39 // pred_fallthru
          _
        // Predicated region
        $region64: #{conv2_forward.5} parent=39 // pred_check
          %p311 = pneg %p60
        $region65: #{conv2_forward.5} parent=39 // pred_check_branch
          %313 = sbr.rel (%p311) target = $region67
        $region66: #{conv2_forward.5} parent=39 // pred_region
          %s314 = smul.u32 288, %s14
          %p315 = scmp.lt.s32.totalorder %s314, 575
          %s316 = scalar_select %p315, %s314, 575
          %s317 = smul.addr %s316, 8
          %s318 = smul.addr %s317, 4
          %s319 = scalar_lea.vmem %s1, %s318
          %s320 = smul.u32 288, %s14
        $region67: #{conv2_forward.5} parent=39 // pred_fallthru
          _
      $region40: #{conv2_forward.5} parent=5 // pred_fallthru
        _
      %p321 = scmp.le.s32.totalorder 1, %s14
      %p322 = scmp.lt.s32.totalorder %s14, 3
      %p323 = pnand %p321, %p322
      %p324 = pneg %p323
      // Predicated region
      $region68: #{conv2_forward.5} parent=5 // pred_check
        _
      $region69: #{conv2_forward.5} parent=5 // pred_check_branch
        %326 = sbr.rel (%p323) target = $region71
      $region70: #{conv2_forward.5} parent=5 // pred_region
        %s327 = ssub.s32 %s14, 1
        %s328 = sand.u32 %s27, 1
        %s329 = sand.u32 %s27, 1
        %s330 = smul.addr %s329, 144
        %s331 = scalar_lea.vmem [#allocation3], %s330
        // Predicated region
        $region72: #{conv2_forward.5} parent=70 // pred_check
          %p332 = pneg %p40
        $region73: #{conv2_forward.5} parent=70 // pred_check_branch
          %334 = sbr.rel (%p332) target = $region75
        $region74: #{conv2_forward.5} parent=70 // pred_region
          _
        $region75: #{conv2_forward.5} parent=70 // pred_fallthru
          _
        %s335 = sand.u32 %s27, 1
        %s336 = sand.u32 %s27, 1
        %s337 = smul.addr %s336, 144
        %s338 = scalar_lea.vmem [#allocation3], %s337
        %p339 = pneg %p40
        %p340 = pneg %p37
        %s341 = smul.u32 288, %s19
        %p342 = scmp.lt.s32.totalorder %s341, 575
        %s343 = scalar_select %p342, %s341, 575
        %s344 = smul.addr %s343, 8
        %s345 = smul.addr %s344, 4
        %s346 = scalar_lea.vmem %s1, %s345
        %p347 = pneg %p66
        %p348 = pneg %p63
        %p349 = pneg %p87
        %p350 = pneg %p84
        %p351 = pneg %p108
        %p352 = pneg %p105
        %p353 = pneg %p129
        %p354 = pneg %p126
        %p355 = pneg %p150
        %p356 = pneg %p147
        %p357 = pneg %p171
        %p358 = pneg %p168
        %p359 = pneg %p192
        %p360 = pneg %p189
        %p361 = pneg %p213
        %p362 = pneg %p210
        %s363 = smul.u32 18, %s19
        %s364 = smul.u32 288, %s19
        %p365 = scmp.lt.s32.totalorder %s364, 575
        %s366 = scalar_select %p365, %s364, 575
        %s367 = smul.addr %s366, 8
        %s368 = smul.addr %s367, 4
        %s369 = scalar_lea.vmem %s1, %s368
        %s370 = smul.u32 288, %s19
        %p371 = scmp.eq.s32.totalorder %s19, 0
        // Predicated region
        $region76: #{conv2_forward.5} parent=70 // pred_check
          %p372 = pneg %p371
        $region77: #{conv2_forward.5} parent=70 // pred_check_branch
          %374 = sbr.rel (%p372) target = $region79
        $region78: #{conv2_forward.5} parent=70 // pred_region
          %375 = vst [vmem:[#allocation2] sm:$0xff] 0.0
          %376 = vst [vmem:[#allocation2 + $0x8] sm:$0xff] 0.0
          %377 = vst [vmem:[#allocation2 + $0x10] sm:$0xff] 0.0
          %378 = vst [vmem:[#allocation2 + $0x18] sm:$0xff] 0.0
          %379 = vst [vmem:[#allocation2 + $0x20] sm:$0xff] 0.0
          %380 = vst [vmem:[#allocation2 + $0x28] sm:$0xff] 0.0
          %381 = vst [vmem:[#allocation2 + $0x30] sm:$0xff] 0.0
          %382 = vst [vmem:[#allocation2 + $0x38] sm:$0xff] 0.0
          %383 = vst [vmem:[#allocation2 + $0x40] sm:$0xff] 0.0
          %384 = vst [vmem:[#allocation2 + $0x48] sm:$0xff] 0.0
          %385 = vst [vmem:[#allocation2 + $0x50] sm:$0xff] 0.0
          %386 = vst [vmem:[#allocation2 + $0x58] sm:$0xff] 0.0
          %387 = vst [vmem:[#allocation2 + $0x60] sm:$0xff] 0.0
          %388 = vst [vmem:[#allocation2 + $0x68] sm:$0xff] 0.0
          %389 = vst [vmem:[#allocation2 + $0x70] sm:$0xff] 0.0
          %390 = vst [vmem:[#allocation2 + $0x78] sm:$0xff] 0.0
        $region79: #{conv2_forward.5} parent=70 // pred_fallthru
          _
        %v391 = vld [vmem:[#allocation2] sm:$0xff]
        %v392 = vld [vmem:[#allocation2 + $0x8] sm:$0xff]
        %v393 = vld [vmem:[#allocation2 + $0x10] sm:$0xff]
        %v394 = vld [vmem:[#allocation2 + $0x18] sm:$0xff]
        %v395 = vld [vmem:[#allocation2 + $0x20] sm:$0xff]
        %v396 = vld [vmem:[#allocation2 + $0x28] sm:$0xff]
        %v397 = vld [vmem:[#allocation2 + $0x30] sm:$0xff]
        %v398 = vld [vmem:[#allocation2 + $0x38] sm:$0xff]
        %v399 = vld [vmem:[#allocation2 + $0x40] sm:$0xff]
        %v400 = vld [vmem:[#allocation2 + $0x48] sm:$0xff]
        %v401 = vld [vmem:[#allocation2 + $0x50] sm:$0xff]
        %v402 = vld [vmem:[#allocation2 + $0x58] sm:$0xff]
        %v403 = vld [vmem:[#allocation2 + $0x60] sm:$0xff]
        %v404 = vld [vmem:[#allocation2 + $0x68] sm:$0xff]
        %v405 = vld [vmem:[#allocation2 + $0x70] sm:$0xff]
        %v406 = vld [vmem:[#allocation2 + $0x78] sm:$0xff]
        %v407 = vld [vmem:[%s331] sm:$0xff]
        %v408 = vld [vmem:[%s331 + $0x8] sm:$0xff]
        %v409 = vld [vmem:[%s331 + $0x10] sm:$0xff]
        %v410 = vld [vmem:[%s331 + $0x18] sm:$0xff]
        %v411 = vld [vmem:[%s331 + $0x20] sm:$0xff]
        %v412 = vld [vmem:[%s331 + $0x28] sm:$0xff]
        %v413 = vld [vmem:[%s331 + $0x30] sm:$0xff]
        %v414 = vld [vmem:[%s331 + $0x38] sm:$0xff]
        %v415 = vld [vmem:[%s331 + $0x40] sm:$0xff]
        %v416 = vld [vmem:[%s331 + $0x48] sm:$0xff]
        %v417 = vld [vmem:[%s331 + $0x50] sm:$0xff]
        %v418 = vld [vmem:[%s331 + $0x58] sm:$0xff]
        %v419 = vld [vmem:[%s331 + $0x60] sm:$0xff]
        %v420 = vld [vmem:[%s331 + $0x68] sm:$0xff]
        %v421 = vld [vmem:[%s331 + $0x70] sm:$0xff]
        %v422 = vld [vmem:[%s331 + $0x78] sm:$0xff]
        %v423 = vld [vmem:[%s331 + $0x80] sm:$0xff]
        %v424 = vld [vmem:[%s331 + $0x88] sm:$0xff]
        %v425 = vld [vmem:[%s369] sm:$0xff]
        %v426 = vld [vmem:[%s369 + $0x8] sm:$0xff]
        %v427 = vld [vmem:[%s369 + $0x10] sm:$0xff]
        %v428 = vld [vmem:[%s369 + $0x18] sm:$0xff]
        %v429 = vld [vmem:[%s369 + $0x20] sm:$0xff]
        %v430 = vld [vmem:[%s369 + $0x28] sm:$0xff]
        %v431 = vld [vmem:[%s369 + $0x30] sm:$0xff]
        %v432 = vld [vmem:[%s369 + $0x38] sm:$0xff]
        %v433 = vld [vmem:[%s369 + $0x40] sm:$0xff]
        %v434 = vld [vmem:[%s369 + $0x48] sm:$0xff]
        %v435 = vld [vmem:[%s369 + $0x50] sm:$0xff]
        %v436 = vld [vmem:[%s369 + $0x58] sm:$0xff]
        %v437 = vld [vmem:[%s369 + $0x60] sm:$0xff]
        %v438 = vld [vmem:[%s369 + $0x68] sm:$0xff]
        %v439 = vld [vmem:[%s369 + $0x70] sm:$0xff]
        %v440 = vld [vmem:[%s369 + $0x78] sm:$0xff]
        %v441 = vld [vmem:[%s369 + $0x80] sm:$0xff]
        %v442 = vld [vmem:[%s369 + $0x88] sm:$0xff]
        %v443 = vld [vmem:[%s369 + $0x90] sm:$0xff]
        %v444 = vld [vmem:[%s369 + $0x98] sm:$0xff]
        %v445 = vld [vmem:[%s369 + $0xa0] sm:$0xff]
        %v446 = vld [vmem:[%s369 + $0xa8] sm:$0xff]
        %v447 = vld [vmem:[%s369 + $0xb0] sm:$0xff]
        %v448 = vld [vmem:[%s369 + $0xb8] sm:$0xff]
        %v449 = vld [vmem:[%s369 + $0xc0] sm:$0xff]
        %v450 = vld [vmem:[%s369 + $0xc8] sm:$0xff]
        %v451 = vld [vmem:[%s369 + $0xd0] sm:$0xff]
        %v452 = vld [vmem:[%s369 + $0xd8] sm:$0xff]
        %v453 = vld [vmem:[%s369 + $0xe0] sm:$0xff]
        %v454 = vld [vmem:[%s369 + $0xe8] sm:$0xff]
        %v455 = vld [vmem:[%s369 + $0xf0] sm:$0xff]
        %v456 = vld [vmem:[%s369 + $0xf8] sm:$0xff]
        %v457 = vld [vmem:[%s369 + $0x100] sm:$0xff]
        %v458 = vld [vmem:[%s369 + $0x108] sm:$0xff]
        %v459 = vld [vmem:[%s369 + $0x110] sm:$0xff]
        %v460 = vld [vmem:[%s369 + $0x118] sm:$0xff]
        %v461 = vld [vmem:[%s369 + $0x120] sm:$0xff]
        %v462 = vld [vmem:[%s369 + $0x128] sm:$0xff]
        %v463 = vld [vmem:[%s369 + $0x130] sm:$0xff]
        %v464 = vld [vmem:[%s369 + $0x138] sm:$0xff]
        %v465 = vld [vmem:[%s369 + $0x140] sm:$0xff]
        %v466 = vld [vmem:[%s369 + $0x148] sm:$0xff]
        %v467 = vld [vmem:[%s369 + $0x150] sm:$0xff]
        %v468 = vld [vmem:[%s369 + $0x158] sm:$0xff]
        %v469 = vld [vmem:[%s369 + $0x160] sm:$0xff]
        %v470 = vld [vmem:[%s369 + $0x168] sm:$0xff]
        %v471 = vld [vmem:[%s369 + $0x170] sm:$0xff]
        %v472 = vld [vmem:[%s369 + $0x178] sm:$0xff]
        %v473 = vld [vmem:[%s369 + $0x180] sm:$0xff]
        %v474 = vld [vmem:[%s369 + $0x188] sm:$0xff]
        %v475 = vld [vmem:[%s369 + $0x190] sm:$0xff]
        %v476 = vld [vmem:[%s369 + $0x198] sm:$0xff]
        %v477 = vld [vmem:[%s369 + $0x1a0] sm:$0xff]
        %v478 = vld [vmem:[%s369 + $0x1a8] sm:$0xff]
        %v479 = vld [vmem:[%s369 + $0x1b0] sm:$0xff]
        %v480 = vld [vmem:[%s369 + $0x1b8] sm:$0xff]
        %v481 = vld [vmem:[%s369 + $0x1c0] sm:$0xff]
        %v482 = vld [vmem:[%s369 + $0x1c8] sm:$0xff]
        %v483 = vld [vmem:[%s369 + $0x1d0] sm:$0xff]
        %v484 = vld [vmem:[%s369 + $0x1d8] sm:$0xff]
        %v485 = vld [vmem:[%s369 + $0x1e0] sm:$0xff]
        %v486 = vld [vmem:[%s369 + $0x1e8] sm:$0xff]
        %v487 = vld [vmem:[%s369 + $0x1f0] sm:$0xff]
        %v488 = vld [vmem:[%s369 + $0x1f8] sm:$0xff]
        %v489 = vld [vmem:[%s369 + $0x200] sm:$0xff]
        %v490 = vld [vmem:[%s369 + $0x208] sm:$0xff]
        %v491 = vld [vmem:[%s369 + $0x210] sm:$0xff]
        %v492 = vld [vmem:[%s369 + $0x218] sm:$0xff]
        %v493 = vld [vmem:[%s369 + $0x220] sm:$0xff]
        %v494 = vld [vmem:[%s369 + $0x228] sm:$0xff]
        %v495 = vld [vmem:[%s369 + $0x230] sm:$0xff]
        %v496 = vld [vmem:[%s369 + $0x238] sm:$0xff]
        %v497 = vld [vmem:[%s369 + $0x240] sm:$0xff]
        %v498 = vld [vmem:[%s369 + $0x248] sm:$0xff]
        %v499 = vld [vmem:[%s369 + $0x250] sm:$0xff]
        %v500 = vld [vmem:[%s369 + $0x258] sm:$0xff]
        %v501 = vld [vmem:[%s369 + $0x260] sm:$0xff]
        %v502 = vld [vmem:[%s369 + $0x268] sm:$0xff]
        %v503 = vld [vmem:[%s369 + $0x270] sm:$0xff]
        %v504 = vld [vmem:[%s369 + $0x278] sm:$0xff]
        %v505 = vld [vmem:[%s369 + $0x280] sm:$0xff]
        %v506 = vld [vmem:[%s369 + $0x288] sm:$0xff]
        %v507 = vld [vmem:[%s369 + $0x290] sm:$0xff]
        %v508 = vld [vmem:[%s369 + $0x298] sm:$0xff]
        %v509 = vld [vmem:[%s369 + $0x2a0] sm:$0xff]
        %v510 = vld [vmem:[%s369 + $0x2a8] sm:$0xff]
        %v511 = vld [vmem:[%s369 + $0x2b0] sm:$0xff]
        %v512 = vld [vmem:[%s369 + $0x2b8] sm:$0xff]
        %v513 = vld [vmem:[%s369 + $0x2c0] sm:$0xff]
        %v514 = vld [vmem:[%s369 + $0x2c8] sm:$0xff]
        %v515 = vld [vmem:[%s369 + $0x2d0] sm:$0xff]
        %v516 = vld [vmem:[%s369 + $0x2d8] sm:$0xff]
        %v517 = vld [vmem:[%s369 + $0x2e0] sm:$0xff]
        %v518 = vld [vmem:[%s369 + $0x2e8] sm:$0xff]
        %v519 = vld [vmem:[%s369 + $0x2f0] sm:$0xff]
        %v520 = vld [vmem:[%s369 + $0x2f8] sm:$0xff]
        %v521 = vld [vmem:[%s369 + $0x300] sm:$0xff]
        %v522 = vld [vmem:[%s369 + $0x308] sm:$0xff]
        %v523 = vld [vmem:[%s369 + $0x310] sm:$0xff]
        %v524 = vld [vmem:[%s369 + $0x318] sm:$0xff]
        %v525 = vld [vmem:[%s369 + $0x320] sm:$0xff]
        %v526 = vld [vmem:[%s369 + $0x328] sm:$0xff]
        %v527 = vld [vmem:[%s369 + $0x330] sm:$0xff]
        %v528 = vld [vmem:[%s369 + $0x338] sm:$0xff]
        %v529 = vld [vmem:[%s369 + $0x340] sm:$0xff]
        %v530 = vld [vmem:[%s369 + $0x348] sm:$0xff]
        %v531 = vld [vmem:[%s369 + $0x350] sm:$0xff]
        %v532 = vld [vmem:[%s369 + $0x358] sm:$0xff]
        %v533 = vld [vmem:[%s369 + $0x360] sm:$0xff]
        %v534 = vld [vmem:[%s369 + $0x368] sm:$0xff]
        %v535 = vld [vmem:[%s369 + $0x370] sm:$0xff]
        %v536 = vld [vmem:[%s369 + $0x378] sm:$0xff]
        %v537 = vld [vmem:[%s369 + $0x380] sm:$0xff]
        %v538 = vld [vmem:[%s369 + $0x388] sm:$0xff]
        %v539 = vld [vmem:[%s369 + $0x390] sm:$0xff]
        %v540 = vld [vmem:[%s369 + $0x398] sm:$0xff]
        %v541 = vld [vmem:[%s369 + $0x3a0] sm:$0xff]
        %v542 = vld [vmem:[%s369 + $0x3a8] sm:$0xff]
        %v543 = vld [vmem:[%s369 + $0x3b0] sm:$0xff]
        %v544 = vld [vmem:[%s369 + $0x3b8] sm:$0xff]
        %v545 = vld [vmem:[%s369 + $0x3c0] sm:$0xff]
        %v546 = vld [vmem:[%s369 + $0x3c8] sm:$0xff]
        %v547 = vld [vmem:[%s369 + $0x3d0] sm:$0xff]
        %v548 = vld [vmem:[%s369 + $0x3d8] sm:$0xff]
        %v549 = vld [vmem:[%s369 + $0x3e0] sm:$0xff]
        %v550 = vld [vmem:[%s369 + $0x3e8] sm:$0xff]
        %v551 = vld [vmem:[%s369 + $0x3f0] sm:$0xff]
        %v552 = vld [vmem:[%s369 + $0x3f8] sm:$0xff]
        %v553 = vld [vmem:[%s369 + $0x400] sm:$0xff]
        %v554 = vld [vmem:[%s369 + $0x408] sm:$0xff]
        %v555 = vld [vmem:[%s369 + $0x410] sm:$0xff]
        %v556 = vld [vmem:[%s369 + $0x418] sm:$0xff]
        %v557 = vld [vmem:[%s369 + $0x420] sm:$0xff]
        %v558 = vld [vmem:[%s369 + $0x428] sm:$0xff]
        %v559 = vld [vmem:[%s369 + $0x430] sm:$0xff]
        %v560 = vld [vmem:[%s369 + $0x438] sm:$0xff]
        %v561 = vld [vmem:[%s369 + $0x440] sm:$0xff]
        %v562 = vld [vmem:[%s369 + $0x448] sm:$0xff]
        %v563 = vld [vmem:[%s369 + $0x450] sm:$0xff]
        %v564 = vld [vmem:[%s369 + $0x458] sm:$0xff]
        %v565 = vld [vmem:[%s369 + $0x460] sm:$0xff]
        %v566 = vld [vmem:[%s369 + $0x468] sm:$0xff]
        %v567 = vld [vmem:[%s369 + $0x470] sm:$0xff]
        %v568 = vld [vmem:[%s369 + $0x478] sm:$0xff]
        %v569 = vld [vmem:[%s369 + $0x480] sm:$0xff]
        %v570 = vld [vmem:[%s369 + $0x488] sm:$0xff]
        %v571 = vld [vmem:[%s369 + $0x490] sm:$0xff]
        %v572 = vld [vmem:[%s369 + $0x498] sm:$0xff]
        %v573 = vld [vmem:[%s369 + $0x4a0] sm:$0xff]
        %v574 = vld [vmem:[%s369 + $0x4a8] sm:$0xff]
        %v575 = vld [vmem:[%s369 + $0x4b0] sm:$0xff]
        %v576 = vld [vmem:[%s369 + $0x4b8] sm:$0xff]
        %v577 = vld [vmem:[%s369 + $0x4c0] sm:$0xff]
        %v578 = vld [vmem:[%s369 + $0x4c8] sm:$0xff]
        %v579 = vld [vmem:[%s369 + $0x4d0] sm:$0xff]
        %v580 = vld [vmem:[%s369 + $0x4d8] sm:$0xff]
        %v581 = vld [vmem:[%s369 + $0x4e0] sm:$0xff]
        %v582 = vld [vmem:[%s369 + $0x4e8] sm:$0xff]
        %v583 = vld [vmem:[%s369 + $0x4f0] sm:$0xff]
        %v584 = vld [vmem:[%s369 + $0x4f8] sm:$0xff]
        %v585 = vld [vmem:[%s369 + $0x500] sm:$0xff]
        %v586 = vld [vmem:[%s369 + $0x508] sm:$0xff]
        %v587 = vld [vmem:[%s369 + $0x510] sm:$0xff]
        %v588 = vld [vmem:[%s369 + $0x518] sm:$0xff]
        %v589 = vld [vmem:[%s369 + $0x520] sm:$0xff]
        %v590 = vld [vmem:[%s369 + $0x528] sm:$0xff]
        %v591 = vld [vmem:[%s369 + $0x530] sm:$0xff]
        %v592 = vld [vmem:[%s369 + $0x538] sm:$0xff]
        %v593 = vld [vmem:[%s369 + $0x540] sm:$0xff]
        %v594 = vld [vmem:[%s369 + $0x548] sm:$0xff]
        %v595 = vld [vmem:[%s369 + $0x550] sm:$0xff]
        %v596 = vld [vmem:[%s369 + $0x558] sm:$0xff]
        %v597 = vld [vmem:[%s369 + $0x560] sm:$0xff]
        %v598 = vld [vmem:[%s369 + $0x568] sm:$0xff]
        %v599 = vld [vmem:[%s369 + $0x570] sm:$0xff]
        %v600 = vld [vmem:[%s369 + $0x578] sm:$0xff]
        %v601 = vld [vmem:[%s369 + $0x580] sm:$0xff]
        %v602 = vld [vmem:[%s369 + $0x588] sm:$0xff]
        %v603 = vld [vmem:[%s369 + $0x590] sm:$0xff]
        %v604 = vld [vmem:[%s369 + $0x598] sm:$0xff]
        %v605 = vld [vmem:[%s369 + $0x5a0] sm:$0xff]
        %v606 = vld [vmem:[%s369 + $0x5a8] sm:$0xff]
        %v607 = vld [vmem:[%s369 + $0x5b0] sm:$0xff]
        %v608 = vld [vmem:[%s369 + $0x5b8] sm:$0xff]
        %v609 = vld [vmem:[%s369 + $0x5c0] sm:$0xff]
        %v610 = vld [vmem:[%s369 + $0x5c8] sm:$0xff]
        %v611 = vld [vmem:[%s369 + $0x5d0] sm:$0xff]
        %v612 = vld [vmem:[%s369 + $0x5d8] sm:$0xff]
        %v613 = vld [vmem:[%s369 + $0x5e0] sm:$0xff]
        %v614 = vld [vmem:[%s369 + $0x5e8] sm:$0xff]
        %v615 = vld [vmem:[%s369 + $0x5f0] sm:$0xff]
        %v616 = vld [vmem:[%s369 + $0x5f8] sm:$0xff]
        %v617 = vld [vmem:[%s369 + $0x600] sm:$0xff]
        %v618 = vld [vmem:[%s369 + $0x608] sm:$0xff]
        %v619 = vld [vmem:[%s369 + $0x610] sm:$0xff]
        %v620 = vld [vmem:[%s369 + $0x618] sm:$0xff]
        %v621 = vld [vmem:[%s369 + $0x620] sm:$0xff]
        %v622 = vld [vmem:[%s369 + $0x628] sm:$0xff]
        %v623 = vld [vmem:[%s369 + $0x630] sm:$0xff]
        %v624 = vld [vmem:[%s369 + $0x638] sm:$0xff]
        %v625 = vld [vmem:[%s369 + $0x640] sm:$0xff]
        %v626 = vld [vmem:[%s369 + $0x648] sm:$0xff]
        %v627 = vld [vmem:[%s369 + $0x650] sm:$0xff]
        %v628 = vld [vmem:[%s369 + $0x658] sm:$0xff]
        %v629 = vld [vmem:[%s369 + $0x660] sm:$0xff]
        %v630 = vld [vmem:[%s369 + $0x668] sm:$0xff]
        %v631 = vld [vmem:[%s369 + $0x670] sm:$0xff]
        %v632 = vld [vmem:[%s369 + $0x678] sm:$0xff]
        %v633 = vld [vmem:[%s369 + $0x680] sm:$0xff]
        %v634 = vld [vmem:[%s369 + $0x688] sm:$0xff]
        %v635 = vld [vmem:[%s369 + $0x690] sm:$0xff]
        %v636 = vld [vmem:[%s369 + $0x698] sm:$0xff]
        %v637 = vld [vmem:[%s369 + $0x6a0] sm:$0xff]
        %v638 = vld [vmem:[%s369 + $0x6a8] sm:$0xff]
        %v639 = vld [vmem:[%s369 + $0x6b0] sm:$0xff]
        %v640 = vld [vmem:[%s369 + $0x6b8] sm:$0xff]
        %v641 = vld [vmem:[%s369 + $0x6c0] sm:$0xff]
        %v642 = vld [vmem:[%s369 + $0x6c8] sm:$0xff]
        %v643 = vld [vmem:[%s369 + $0x6d0] sm:$0xff]
        %v644 = vld [vmem:[%s369 + $0x6d8] sm:$0xff]
        %v645 = vld [vmem:[%s369 + $0x6e0] sm:$0xff]
        %v646 = vld [vmem:[%s369 + $0x6e8] sm:$0xff]
        %v647 = vld [vmem:[%s369 + $0x6f0] sm:$0xff]
        %v648 = vld [vmem:[%s369 + $0x6f8] sm:$0xff]
        %v649 = vld [vmem:[%s369 + $0x700] sm:$0xff]
        %v650 = vld [vmem:[%s369 + $0x708] sm:$0xff]
        %v651 = vld [vmem:[%s369 + $0x710] sm:$0xff]
        %v652 = vld [vmem:[%s369 + $0x718] sm:$0xff]
        %v653 = vld [vmem:[%s369 + $0x720] sm:$0xff]
        %v654 = vld [vmem:[%s369 + $0x728] sm:$0xff]
        %v655 = vld [vmem:[%s369 + $0x730] sm:$0xff]
        %v656 = vld [vmem:[%s369 + $0x738] sm:$0xff]
        %v657 = vld [vmem:[%s369 + $0x740] sm:$0xff]
        %v658 = vld [vmem:[%s369 + $0x748] sm:$0xff]
        %v659 = vld [vmem:[%s369 + $0x750] sm:$0xff]
        %v660 = vld [vmem:[%s369 + $0x758] sm:$0xff]
        %v661 = vld [vmem:[%s369 + $0x760] sm:$0xff]
        %v662 = vld [vmem:[%s369 + $0x768] sm:$0xff]
        %v663 = vld [vmem:[%s369 + $0x770] sm:$0xff]
        %v664 = vld [vmem:[%s369 + $0x778] sm:$0xff]
        %v665 = vld [vmem:[%s369 + $0x780] sm:$0xff]
        %v666 = vld [vmem:[%s369 + $0x788] sm:$0xff]
        %v667 = vld [vmem:[%s369 + $0x790] sm:$0xff]
        %v668 = vld [vmem:[%s369 + $0x798] sm:$0xff]
        %v669 = vld [vmem:[%s369 + $0x7a0] sm:$0xff]
        %v670 = vld [vmem:[%s369 + $0x7a8] sm:$0xff]
        %v671 = vld [vmem:[%s369 + $0x7b0] sm:$0xff]
        %v672 = vld [vmem:[%s369 + $0x7b8] sm:$0xff]
        %v673 = vld [vmem:[%s369 + $0x7c0] sm:$0xff]
        %v674 = vld [vmem:[%s369 + $0x7c8] sm:$0xff]
        %v675 = vld [vmem:[%s369 + $0x7d0] sm:$0xff]
        %v676 = vld [vmem:[%s369 + $0x7d8] sm:$0xff]
        %v677 = vld [vmem:[%s369 + $0x7e0] sm:$0xff]
        %v678 = vld [vmem:[%s369 + $0x7e8] sm:$0xff]
        %v679 = vld [vmem:[%s369 + $0x7f0] sm:$0xff]
        %v680 = vld [vmem:[%s369 + $0x7f8] sm:$0xff]
        %v681 = vld [vmem:[%s369 + $0x800] sm:$0xff]
        %v682 = vld [vmem:[%s369 + $0x808] sm:$0xff]
        %v683 = vld [vmem:[%s369 + $0x810] sm:$0xff]
        %v684 = vld [vmem:[%s369 + $0x818] sm:$0xff]
        %v685 = vld [vmem:[%s369 + $0x820] sm:$0xff]
        %v686 = vld [vmem:[%s369 + $0x828] sm:$0xff]
        %v687 = vld [vmem:[%s369 + $0x830] sm:$0xff]
        %v688 = vld [vmem:[%s369 + $0x838] sm:$0xff]
        %v689 = vld [vmem:[%s369 + $0x840] sm:$0xff]
        %v690 = vld [vmem:[%s369 + $0x848] sm:$0xff]
        %v691 = vld [vmem:[%s369 + $0x850] sm:$0xff]
        %v692 = vld [vmem:[%s369 + $0x858] sm:$0xff]
        %v693 = vld [vmem:[%s369 + $0x860] sm:$0xff]
        %v694 = vld [vmem:[%s369 + $0x868] sm:$0xff]
        %v695 = vld [vmem:[%s369 + $0x870] sm:$0xff]
        %v696 = vld [vmem:[%s369 + $0x878] sm:$0xff]
        %v697 = vld [vmem:[%s369 + $0x880] sm:$0xff]
        %v698 = vld [vmem:[%s369 + $0x888] sm:$0xff]
        %v699 = vld [vmem:[%s369 + $0x890] sm:$0xff]
        %v700 = vld [vmem:[%s369 + $0x898] sm:$0xff]
        %v701 = vld [vmem:[%s369 + $0x8a0] sm:$0xff]
        %v702 = vld [vmem:[%s369 + $0x8a8] sm:$0xff]
        %v703 = vld [vmem:[%s369 + $0x8b0] sm:$0xff]
        %v704 = vld [vmem:[%s369 + $0x8b8] sm:$0xff]
        %v705 = vld [vmem:[%s369 + $0x8c0] sm:$0xff]
        %v706 = vld [vmem:[%s369 + $0x8c8] sm:$0xff]
        %v707 = vld [vmem:[%s369 + $0x8d0] sm:$0xff]
        %v708 = vld [vmem:[%s369 + $0x8d8] sm:$0xff]
        %v709 = vld [vmem:[%s369 + $0x8e0] sm:$0xff]
        %v710 = vld [vmem:[%s369 + $0x8e8] sm:$0xff]
        %v711 = vld [vmem:[%s369 + $0x8f0] sm:$0xff]
        %v712 = vld [vmem:[%s369 + $0x8f8] sm:$0xff]
        %v713 = vld [vmem:[%s369 + $0x900] sm:$0xff]
        %v714 = vld [vmem:[%s369 + $0x908] sm:$0xff]
        %v715 = vld [vmem:[%s369 + $0x910] sm:$0xff]
        %v716 = vld [vmem:[%s369 + $0x918] sm:$0xff]
        %v717 = vld [vmem:[%s369 + $0x920] sm:$0xff]
        %v718 = vld [vmem:[%s369 + $0x928] sm:$0xff]
        %v719 = vld [vmem:[%s369 + $0x930] sm:$0xff]
        %v720 = vld [vmem:[%s369 + $0x938] sm:$0xff]
        %v721 = vld [vmem:[%s369 + $0x940] sm:$0xff]
        %v722 = vld [vmem:[%s369 + $0x948] sm:$0xff]
        %v723 = vld [vmem:[%s369 + $0x950] sm:$0xff]
        %v724 = vld [vmem:[%s369 + $0x958] sm:$0xff]
        %v725 = vld [vmem:[%s369 + $0x960] sm:$0xff]
        %v726 = vld [vmem:[%s369 + $0x968] sm:$0xff]
        %v727 = vld [vmem:[%s369 + $0x970] sm:$0xff]
        %v728 = vld [vmem:[%s369 + $0x978] sm:$0xff]
        %v729 = vld [vmem:[%s369 + $0x980] sm:$0xff]
        %v730 = vld [vmem:[%s369 + $0x988] sm:$0xff]
        %v731 = vld [vmem:[%s369 + $0x990] sm:$0xff]
        %v732 = vld [vmem:[%s369 + $0x998] sm:$0xff]
        %v733 = vld [vmem:[%s369 + $0x9a0] sm:$0xff]
        %v734 = vld [vmem:[%s369 + $0x9a8] sm:$0xff]
        %v735 = vld [vmem:[%s369 + $0x9b0] sm:$0xff]
        %v736 = vld [vmem:[%s369 + $0x9b8] sm:$0xff]
        %v737 = vld [vmem:[%s369 + $0x9c0] sm:$0xff]
        %v738 = vld [vmem:[%s369 + $0x9c8] sm:$0xff]
        %v739 = vld [vmem:[%s369 + $0x9d0] sm:$0xff]
        %v740 = vld [vmem:[%s369 + $0x9d8] sm:$0xff]
        %v741 = vld [vmem:[%s369 + $0x9e0] sm:$0xff]
        %v742 = vld [vmem:[%s369 + $0x9e8] sm:$0xff]
        %v743 = vld [vmem:[%s369 + $0x9f0] sm:$0xff]
        %v744 = vld [vmem:[%s369 + $0x9f8] sm:$0xff]
        %v745 = vld [vmem:[%s369 + $0xa00] sm:$0xff]
        %v746 = vld [vmem:[%s369 + $0xa08] sm:$0xff]
        %v747 = vld [vmem:[%s369 + $0xa10] sm:$0xff]
        %v748 = vld [vmem:[%s369 + $0xa18] sm:$0xff]
        %v749 = vld [vmem:[%s369 + $0xa20] sm:$0xff]
        %v750 = vld [vmem:[%s369 + $0xa28] sm:$0xff]
        %v751 = vld [vmem:[%s369 + $0xa30] sm:$0xff]
        %v752 = vld [vmem:[%s369 + $0xa38] sm:$0xff]
        %v753 = vld [vmem:[%s369 + $0xa40] sm:$0xff]
        %v754 = vld [vmem:[%s369 + $0xa48] sm:$0xff]
        %v755 = vld [vmem:[%s369 + $0xa50] sm:$0xff]
        %v756 = vld [vmem:[%s369 + $0xa58] sm:$0xff]
        %v757 = vld [vmem:[%s369 + $0xa60] sm:$0xff]
        %v758 = vld [vmem:[%s369 + $0xa68] sm:$0xff]
        %v759 = vld [vmem:[%s369 + $0xa70] sm:$0xff]
        %v760 = vld [vmem:[%s369 + $0xa78] sm:$0xff]
        %v761 = vld [vmem:[%s369 + $0xa80] sm:$0xff]
        %v762 = vld [vmem:[%s369 + $0xa88] sm:$0xff]
        %v763 = vld [vmem:[%s369 + $0xa90] sm:$0xff]
        %v764 = vld [vmem:[%s369 + $0xa98] sm:$0xff]
        %v765 = vld [vmem:[%s369 + $0xaa0] sm:$0xff]
        %v766 = vld [vmem:[%s369 + $0xaa8] sm:$0xff]
        %v767 = vld [vmem:[%s369 + $0xab0] sm:$0xff]
        %v768 = vld [vmem:[%s369 + $0xab8] sm:$0xff]
        %v769 = vld [vmem:[%s369 + $0xac0] sm:$0xff]
        %v770 = vld [vmem:[%s369 + $0xac8] sm:$0xff]
        %v771 = vld [vmem:[%s369 + $0xad0] sm:$0xff]
        %v772 = vld [vmem:[%s369 + $0xad8] sm:$0xff]
        %v773 = vld [vmem:[%s369 + $0xae0] sm:$0xff]
        %v774 = vld [vmem:[%s369 + $0xae8] sm:$0xff]
        %v775 = vld [vmem:[%s369 + $0xaf0] sm:$0xff]
        %v776 = vld [vmem:[%s369 + $0xaf8] sm:$0xff]
        %v777 = vld [vmem:[%s369 + $0xb00] sm:$0xff]
        %v778 = vld [vmem:[%s369 + $0xb08] sm:$0xff]
        %v779 = vld [vmem:[%s369 + $0xb10] sm:$0xff]
        %v780 = vld [vmem:[%s369 + $0xb18] sm:$0xff]
        %v781 = vld [vmem:[%s369 + $0xb20] sm:$0xff]
        %v782 = vld [vmem:[%s369 + $0xb28] sm:$0xff]
        %v783 = vld [vmem:[%s369 + $0xb30] sm:$0xff]
        %v784 = vld [vmem:[%s369 + $0xb38] sm:$0xff]
        %v785 = vld [vmem:[%s369 + $0xb40] sm:$0xff]
        %v786 = vld [vmem:[%s369 + $0xb48] sm:$0xff]
        %v787 = vld [vmem:[%s369 + $0xb50] sm:$0xff]
        %v788 = vld [vmem:[%s369 + $0xb58] sm:$0xff]
        %v789 = vld [vmem:[%s369 + $0xb60] sm:$0xff]
        %v790 = vld [vmem:[%s369 + $0xb68] sm:$0xff]
        %v791 = vld [vmem:[%s369 + $0xb70] sm:$0xff]
        %v792 = vld [vmem:[%s369 + $0xb78] sm:$0xff]
        %v793 = vld [vmem:[%s369 + $0xb80] sm:$0xff]
        %v794 = vld [vmem:[%s369 + $0xb88] sm:$0xff]
        %v795 = vld [vmem:[%s369 + $0xb90] sm:$0xff]
        %v796 = vld [vmem:[%s369 + $0xb98] sm:$0xff]
        %v797 = vld [vmem:[%s369 + $0xba0] sm:$0xff]
        %v798 = vld [vmem:[%s369 + $0xba8] sm:$0xff]
        %v799 = vld [vmem:[%s369 + $0xbb0] sm:$0xff]
        %v800 = vld [vmem:[%s369 + $0xbb8] sm:$0xff]
        %v801 = vld [vmem:[%s369 + $0xbc0] sm:$0xff]
        %v802 = vld [vmem:[%s369 + $0xbc8] sm:$0xff]
        %v803 = vld [vmem:[%s369 + $0xbd0] sm:$0xff]
        %v804 = vld [vmem:[%s369 + $0xbd8] sm:$0xff]
        %v805 = vld [vmem:[%s369 + $0xbe0] sm:$0xff]
        %v806 = vld [vmem:[%s369 + $0xbe8] sm:$0xff]
        %v807 = vld [vmem:[%s369 + $0xbf0] sm:$0xff]
        %v808 = vld [vmem:[%s369 + $0xbf8] sm:$0xff]
        %v809 = vld [vmem:[%s369 + $0xc00] sm:$0xff]
        %v810 = vld [vmem:[%s369 + $0xc08] sm:$0xff]
        %v811 = vld [vmem:[%s369 + $0xc10] sm:$0xff]
        %v812 = vld [vmem:[%s369 + $0xc18] sm:$0xff]
        %v813 = vld [vmem:[%s369 + $0xc20] sm:$0xff]
        %v814 = vld [vmem:[%s369 + $0xc28] sm:$0xff]
        %v815 = vld [vmem:[%s369 + $0xc30] sm:$0xff]
        %v816 = vld [vmem:[%s369 + $0xc38] sm:$0xff]
        %v817 = vld [vmem:[%s369 + $0xc40] sm:$0xff]
        %v818 = vld [vmem:[%s369 + $0xc48] sm:$0xff]
        %v819 = vld [vmem:[%s369 + $0xc50] sm:$0xff]
        %v820 = vld [vmem:[%s369 + $0xc58] sm:$0xff]
        %v821 = vld [vmem:[%s369 + $0xc60] sm:$0xff]
        %v822 = vld [vmem:[%s369 + $0xc68] sm:$0xff]
        %v823 = vld [vmem:[%s369 + $0xc70] sm:$0xff]
        %v824 = vld [vmem:[%s369 + $0xc78] sm:$0xff]
        %v825 = vld [vmem:[%s369 + $0xc80] sm:$0xff]
        %v826 = vld [vmem:[%s369 + $0xc88] sm:$0xff]
        %v827 = vld [vmem:[%s369 + $0xc90] sm:$0xff]
        %v828 = vld [vmem:[%s369 + $0xc98] sm:$0xff]
        %v829 = vld [vmem:[%s369 + $0xca0] sm:$0xff]
        %v830 = vld [vmem:[%s369 + $0xca8] sm:$0xff]
        %v831 = vld [vmem:[%s369 + $0xcb0] sm:$0xff]
        %v832 = vld [vmem:[%s369 + $0xcb8] sm:$0xff]
        %v833 = vld [vmem:[%s369 + $0xcc0] sm:$0xff]
        %v834 = vld [vmem:[%s369 + $0xcc8] sm:$0xff]
        %v835 = vld [vmem:[%s369 + $0xcd0] sm:$0xff]
        %v836 = vld [vmem:[%s369 + $0xcd8] sm:$0xff]
        %v837 = vld [vmem:[%s369 + $0xce0] sm:$0xff]
        %v838 = vld [vmem:[%s369 + $0xce8] sm:$0xff]
        %v839 = vld [vmem:[%s369 + $0xcf0] sm:$0xff]
        %v840 = vld [vmem:[%s369 + $0xcf8] sm:$0xff]
        %v841 = vld [vmem:[%s369 + $0xd00] sm:$0xff]
        %v842 = vld [vmem:[%s369 + $0xd08] sm:$0xff]
        %v843 = vld [vmem:[%s369 + $0xd10] sm:$0xff]
        %v844 = vld [vmem:[%s369 + $0xd18] sm:$0xff]
        %v845 = vld [vmem:[%s369 + $0xd20] sm:$0xff]
        %v846 = vld [vmem:[%s369 + $0xd28] sm:$0xff]
        %v847 = vld [vmem:[%s369 + $0xd30] sm:$0xff]
        %v848 = vld [vmem:[%s369 + $0xd38] sm:$0xff]
        %v849 = vld [vmem:[%s369 + $0xd40] sm:$0xff]
        %v850 = vld [vmem:[%s369 + $0xd48] sm:$0xff]
        %v851 = vld [vmem:[%s369 + $0xd50] sm:$0xff]
        %v852 = vld [vmem:[%s369 + $0xd58] sm:$0xff]
        %v853 = vld [vmem:[%s369 + $0xd60] sm:$0xff]
        %v854 = vld [vmem:[%s369 + $0xd68] sm:$0xff]
        %v855 = vld [vmem:[%s369 + $0xd70] sm:$0xff]
        %v856 = vld [vmem:[%s369 + $0xd78] sm:$0xff]
        %v857 = vld [vmem:[%s369 + $0xd80] sm:$0xff]
        %v858 = vld [vmem:[%s369 + $0xd88] sm:$0xff]
        %v859 = vld [vmem:[%s369 + $0xd90] sm:$0xff]
        %v860 = vld [vmem:[%s369 + $0xd98] sm:$0xff]
        %v861 = vld [vmem:[%s369 + $0xda0] sm:$0xff]
        %v862 = vld [vmem:[%s369 + $0xda8] sm:$0xff]
        %v863 = vld [vmem:[%s369 + $0xdb0] sm:$0xff]
        %v864 = vld [vmem:[%s369 + $0xdb8] sm:$0xff]
        %v865 = vld [vmem:[%s369 + $0xdc0] sm:$0xff]
        %v866 = vld [vmem:[%s369 + $0xdc8] sm:$0xff]
        %v867 = vld [vmem:[%s369 + $0xdd0] sm:$0xff]
        %v868 = vld [vmem:[%s369 + $0xdd8] sm:$0xff]
        %v869 = vld [vmem:[%s369 + $0xde0] sm:$0xff]
        %v870 = vld [vmem:[%s369 + $0xde8] sm:$0xff]
        %v871 = vld [vmem:[%s369 + $0xdf0] sm:$0xff]
        %v872 = vld [vmem:[%s369 + $0xdf8] sm:$0xff]
        %v873 = vld [vmem:[%s369 + $0xe00] sm:$0xff]
        %v874 = vld [vmem:[%s369 + $0xe08] sm:$0xff]
        %v875 = vld [vmem:[%s369 + $0xe10] sm:$0xff]
        %v876 = vld [vmem:[%s369 + $0xe18] sm:$0xff]
        %v877 = vld [vmem:[%s369 + $0xe20] sm:$0xff]
        %v878 = vld [vmem:[%s369 + $0xe28] sm:$0xff]
        %v879 = vld [vmem:[%s369 + $0xe30] sm:$0xff]
        %v880 = vld [vmem:[%s369 + $0xe38] sm:$0xff]
        %v881 = vld [vmem:[%s369 + $0xe40] sm:$0xff]
        %v882 = vld [vmem:[%s369 + $0xe48] sm:$0xff]
        %v883 = vld [vmem:[%s369 + $0xe50] sm:$0xff]
        %v884 = vld [vmem:[%s369 + $0xe58] sm:$0xff]
        %v885 = vld [vmem:[%s369 + $0xe60] sm:$0xff]
        %v886 = vld [vmem:[%s369 + $0xe68] sm:$0xff]
        %v887 = vld [vmem:[%s369 + $0xe70] sm:$0xff]
        %v888 = vld [vmem:[%s369 + $0xe78] sm:$0xff]
        %v889 = vld [vmem:[%s369 + $0xe80] sm:$0xff]
        %v890 = vld [vmem:[%s369 + $0xe88] sm:$0xff]
        %v891 = vld [vmem:[%s369 + $0xe90] sm:$0xff]
        %v892 = vld [vmem:[%s369 + $0xe98] sm:$0xff]
        %v893 = vld [vmem:[%s369 + $0xea0] sm:$0xff]
        %v894 = vld [vmem:[%s369 + $0xea8] sm:$0xff]
        %v895 = vld [vmem:[%s369 + $0xeb0] sm:$0xff]
        %v896 = vld [vmem:[%s369 + $0xeb8] sm:$0xff]
        %v897 = vld [vmem:[%s369 + $0xec0] sm:$0xff]
        %v898 = vld [vmem:[%s369 + $0xec8] sm:$0xff]
        %v899 = vld [vmem:[%s369 + $0xed0] sm:$0xff]
        %v900 = vld [vmem:[%s369 + $0xed8] sm:$0xff]
        %v901 = vld [vmem:[%s369 + $0xee0] sm:$0xff]
        %v902 = vld [vmem:[%s369 + $0xee8] sm:$0xff]
        %v903 = vld [vmem:[%s369 + $0xef0] sm:$0xff]
        %v904 = vld [vmem:[%s369 + $0xef8] sm:$0xff]
        %v905 = vld [vmem:[%s369 + $0xf00] sm:$0xff]
        %v906 = vld [vmem:[%s369 + $0xf08] sm:$0xff]
        %v907 = vld [vmem:[%s369 + $0xf10] sm:$0xff]
        %v908 = vld [vmem:[%s369 + $0xf18] sm:$0xff]
        %v909 = vld [vmem:[%s369 + $0xf20] sm:$0xff]
        %v910 = vld [vmem:[%s369 + $0xf28] sm:$0xff]
        %v911 = vld [vmem:[%s369 + $0xf30] sm:$0xff]
        %v912 = vld [vmem:[%s369 + $0xf38] sm:$0xff]
        %v913 = vld [vmem:[%s369 + $0xf40] sm:$0xff]
        %v914 = vld [vmem:[%s369 + $0xf48] sm:$0xff]
        %v915 = vld [vmem:[%s369 + $0xf50] sm:$0xff]
        %v916 = vld [vmem:[%s369 + $0xf58] sm:$0xff]
        %v917 = vld [vmem:[%s369 + $0xf60] sm:$0xff]
        %v918 = vld [vmem:[%s369 + $0xf68] sm:$0xff]
        %v919 = vld [vmem:[%s369 + $0xf70] sm:$0xff]
        %v920 = vld [vmem:[%s369 + $0xf78] sm:$0xff]
        %v921 = vld [vmem:[%s369 + $0xf80] sm:$0xff]
        %v922 = vld [vmem:[%s369 + $0xf88] sm:$0xff]
        %v923 = vld [vmem:[%s369 + $0xf90] sm:$0xff]
        %v924 = vld [vmem:[%s369 + $0xf98] sm:$0xff]
        %v925 = vld [vmem:[%s369 + $0xfa0] sm:$0xff]
        %v926 = vld [vmem:[%s369 + $0xfa8] sm:$0xff]
        %v927 = vld [vmem:[%s369 + $0xfb0] sm:$0xff]
        %v928 = vld [vmem:[%s369 + $0xfb8] sm:$0xff]
        %v929 = vld [vmem:[%s369 + $0xfc0] sm:$0xff]
        %v930 = vld [vmem:[%s369 + $0xfc8] sm:$0xff]
        %v931 = vld [vmem:[%s369 + $0xfd0] sm:$0xff]
        %v932 = vld [vmem:[%s369 + $0xfd8] sm:$0xff]
        %v933 = vld [vmem:[%s369 + $0xfe0] sm:$0xff]
        %v934 = vld [vmem:[%s369 + $0xfe8] sm:$0xff]
        %v935 = vld [vmem:[%s369 + $0xff0] sm:$0xff]
        %v936 = vld [vmem:[%s369 + $0xff8] sm:$0xff]
        %v937 = vld [vmem:[%s369 + $0x1000] sm:$0xff]
        %v938 = vld [vmem:[%s369 + $0x1008] sm:$0xff]
        %v939 = vld [vmem:[%s369 + $0x1010] sm:$0xff]
        %v940 = vld [vmem:[%s369 + $0x1018] sm:$0xff]
        %v941 = vld [vmem:[%s369 + $0x1020] sm:$0xff]
        %v942 = vld [vmem:[%s369 + $0x1028] sm:$0xff]
        %v943 = vld [vmem:[%s369 + $0x1030] sm:$0xff]
        %v944 = vld [vmem:[%s369 + $0x1038] sm:$0xff]
        %v945 = vld [vmem:[%s369 + $0x1040] sm:$0xff]
        %v946 = vld [vmem:[%s369 + $0x1048] sm:$0xff]
        %v947 = vld [vmem:[%s369 + $0x1050] sm:$0xff]
        %v948 = vld [vmem:[%s369 + $0x1058] sm:$0xff]
        %v949 = vld [vmem:[%s369 + $0x1060] sm:$0xff]
        %v950 = vld [vmem:[%s369 + $0x1068] sm:$0xff]
        %v951 = vld [vmem:[%s369 + $0x1070] sm:$0xff]
        %v952 = vld [vmem:[%s369 + $0x1078] sm:$0xff]
        %v953 = vld [vmem:[%s369 + $0x1080] sm:$0xff]
        %v954 = vld [vmem:[%s369 + $0x1088] sm:$0xff]
        %v955 = vld [vmem:[%s369 + $0x1090] sm:$0xff]
        %v956 = vld [vmem:[%s369 + $0x1098] sm:$0xff]
        %v957 = vld [vmem:[%s369 + $0x10a0] sm:$0xff]
        %v958 = vld [vmem:[%s369 + $0x10a8] sm:$0xff]
        %v959 = vld [vmem:[%s369 + $0x10b0] sm:$0xff]
        %v960 = vld [vmem:[%s369 + $0x10b8] sm:$0xff]
        %v961 = vld [vmem:[%s369 + $0x10c0] sm:$0xff]
        %v962 = vld [vmem:[%s369 + $0x10c8] sm:$0xff]
        %v963 = vld [vmem:[%s369 + $0x10d0] sm:$0xff]
        %v964 = vld [vmem:[%s369 + $0x10d8] sm:$0xff]
        %v965 = vld [vmem:[%s369 + $0x10e0] sm:$0xff]
        %v966 = vld [vmem:[%s369 + $0x10e8] sm:$0xff]
        %v967 = vld [vmem:[%s369 + $0x10f0] sm:$0xff]
        %v968 = vld [vmem:[%s369 + $0x10f8] sm:$0xff]
        %v969 = vld [vmem:[%s369 + $0x1100] sm:$0xff]
        %v970 = vld [vmem:[%s369 + $0x1108] sm:$0xff]
        %v971 = vld [vmem:[%s369 + $0x1110] sm:$0xff]
        %v972 = vld [vmem:[%s369 + $0x1118] sm:$0xff]
        %v973 = vld [vmem:[%s369 + $0x1120] sm:$0xff]
        %v974 = vld [vmem:[%s369 + $0x1128] sm:$0xff]
        %v975 = vld [vmem:[%s369 + $0x1130] sm:$0xff]
        %v976 = vld [vmem:[%s369 + $0x1138] sm:$0xff]
        %v977 = vld [vmem:[%s369 + $0x1140] sm:$0xff]
        %v978 = vld [vmem:[%s369 + $0x1148] sm:$0xff]
        %v979 = vld [vmem:[%s369 + $0x1150] sm:$0xff]
        %v980 = vld [vmem:[%s369 + $0x1158] sm:$0xff]
        %v981 = vld [vmem:[%s369 + $0x1160] sm:$0xff]
        %v982 = vld [vmem:[%s369 + $0x1168] sm:$0xff]
        %v983 = vld [vmem:[%s369 + $0x1170] sm:$0xff]
        %v984 = vld [vmem:[%s369 + $0x1178] sm:$0xff]
        %v985 = vld [vmem:[%s369 + $0x1180] sm:$0xff]
        %v986 = vld [vmem:[%s369 + $0x1188] sm:$0xff]
        %v987 = vld [vmem:[%s369 + $0x1190] sm:$0xff]
        %v988 = vld [vmem:[%s369 + $0x1198] sm:$0xff]
        %v989 = vld [vmem:[%s369 + $0x11a0] sm:$0xff]
        %v990 = vld [vmem:[%s369 + $0x11a8] sm:$0xff]
        %v991 = vld [vmem:[%s369 + $0x11b0] sm:$0xff]
        %v992 = vld [vmem:[%s369 + $0x11b8] sm:$0xff]
        %v993 = vld [vmem:[%s369 + $0x11c0] sm:$0xff]
        %v994 = vld [vmem:[%s369 + $0x11c8] sm:$0xff]
        %v995 = vld [vmem:[%s369 + $0x11d0] sm:$0xff]
        %v996 = vld [vmem:[%s369 + $0x11d8] sm:$0xff]
        %v997 = vld [vmem:[%s369 + $0x11e0] sm:$0xff]
        %v998 = vld [vmem:[%s369 + $0x11e8] sm:$0xff]
        %v999 = vld [vmem:[%s369 + $0x11f0] sm:$0xff]
        %v1000 = vld [vmem:[%s369 + $0x11f8] sm:$0xff]
        %v1001 = vld [vmem:[%s369 + $0x1200] sm:$0xff]
        %v1002 = vld [vmem:[%s369 + $0x1208] sm:$0xff]
        %v1003 = vld [vmem:[%s369 + $0x1210] sm:$0xff]
        %v1004 = vld [vmem:[%s369 + $0x1218] sm:$0xff]
        %v1005 = vld [vmem:[%s369 + $0x1220] sm:$0xff]
        %v1006 = vld [vmem:[%s369 + $0x1228] sm:$0xff]
        %v1007 = vld [vmem:[%s369 + $0x1230] sm:$0xff]
        %v1008 = vld [vmem:[%s369 + $0x1238] sm:$0xff]
        %v1009 = vld [vmem:[%s369 + $0x1240] sm:$0xff]
        %v1010 = vld [vmem:[%s369 + $0x1248] sm:$0xff]
        %v1011 = vld [vmem:[%s369 + $0x1250] sm:$0xff]
        %v1012 = vld [vmem:[%s369 + $0x1258] sm:$0xff]
        %v1013 = vld [vmem:[%s369 + $0x1260] sm:$0xff]
        %v1014 = vld [vmem:[%s369 + $0x1268] sm:$0xff]
        %v1015 = vld [vmem:[%s369 + $0x1270] sm:$0xff]
        %v1016 = vld [vmem:[%s369 + $0x1278] sm:$0xff]
        %v1017 = vld [vmem:[%s369 + $0x1280] sm:$0xff]
        %v1018 = vld [vmem:[%s369 + $0x1288] sm:$0xff]
        %v1019 = vld [vmem:[%s369 + $0x1290] sm:$0xff]
        %v1020 = vld [vmem:[%s369 + $0x1298] sm:$0xff]
        %v1021 = vld [vmem:[%s369 + $0x12a0] sm:$0xff]
        %v1022 = vld [vmem:[%s369 + $0x12a8] sm:$0xff]
        %v1023 = vld [vmem:[%s369 + $0x12b0] sm:$0xff]
        %v1024 = vld [vmem:[%s369 + $0x12b8] sm:$0xff]
        %v1025 = vld [vmem:[%s369 + $0x12c0] sm:$0xff]
        %v1026 = vld [vmem:[%s369 + $0x12c8] sm:$0xff]
        %v1027 = vld [vmem:[%s369 + $0x12d0] sm:$0xff]
        %v1028 = vld [vmem:[%s369 + $0x12d8] sm:$0xff]
        %v1029 = vld [vmem:[%s369 + $0x12e0] sm:$0xff]
        %v1030 = vld [vmem:[%s369 + $0x12e8] sm:$0xff]
        %v1031 = vld [vmem:[%s369 + $0x12f0] sm:$0xff]
        %v1032 = vld [vmem:[%s369 + $0x12f8] sm:$0xff]
        %v1033 = vld [vmem:[%s369 + $0x1300] sm:$0xff]
        %v1034 = vld [vmem:[%s369 + $0x1308] sm:$0xff]
        %v1035 = vld [vmem:[%s369 + $0x1310] sm:$0xff]
        %v1036 = vld [vmem:[%s369 + $0x1318] sm:$0xff]
        %v1037 = vld [vmem:[%s369 + $0x1320] sm:$0xff]
        %v1038 = vld [vmem:[%s369 + $0x1328] sm:$0xff]
        %v1039 = vld [vmem:[%s369 + $0x1330] sm:$0xff]
        %v1040 = vld [vmem:[%s369 + $0x1338] sm:$0xff]
        %v1041 = vld [vmem:[%s369 + $0x1340] sm:$0xff]
        %v1042 = vld [vmem:[%s369 + $0x1348] sm:$0xff]
        %v1043 = vld [vmem:[%s369 + $0x1350] sm:$0xff]
        %v1044 = vld [vmem:[%s369 + $0x1358] sm:$0xff]
        %v1045 = vld [vmem:[%s369 + $0x1360] sm:$0xff]
        %v1046 = vld [vmem:[%s369 + $0x1368] sm:$0xff]
        %v1047 = vld [vmem:[%s369 + $0x1370] sm:$0xff]
        %v1048 = vld [vmem:[%s369 + $0x1378] sm:$0xff]
        %v1049 = vld [vmem:[%s369 + $0x1380] sm:$0xff]
        %v1050 = vld [vmem:[%s369 + $0x1388] sm:$0xff]
        %v1051 = vld [vmem:[%s369 + $0x1390] sm:$0xff]
        %v1052 = vld [vmem:[%s369 + $0x1398] sm:$0xff]
        %v1053 = vld [vmem:[%s369 + $0x13a0] sm:$0xff]
        %v1054 = vld [vmem:[%s369 + $0x13a8] sm:$0xff]
        %v1055 = vld [vmem:[%s369 + $0x13b0] sm:$0xff]
        %v1056 = vld [vmem:[%s369 + $0x13b8] sm:$0xff]
        %v1057 = vld [vmem:[%s369 + $0x13c0] sm:$0xff]
        %v1058 = vld [vmem:[%s369 + $0x13c8] sm:$0xff]
        %v1059 = vld [vmem:[%s369 + $0x13d0] sm:$0xff]
        %v1060 = vld [vmem:[%s369 + $0x13d8] sm:$0xff]
        %v1061 = vld [vmem:[%s369 + $0x13e0] sm:$0xff]
        %v1062 = vld [vmem:[%s369 + $0x13e8] sm:$0xff]
        %v1063 = vld [vmem:[%s369 + $0x13f0] sm:$0xff]
        %v1064 = vld [vmem:[%s369 + $0x13f8] sm:$0xff]
        %v1065 = vld [vmem:[%s369 + $0x1400] sm:$0xff]
        %v1066 = vld [vmem:[%s369 + $0x1408] sm:$0xff]
        %v1067 = vld [vmem:[%s369 + $0x1410] sm:$0xff]
        %v1068 = vld [vmem:[%s369 + $0x1418] sm:$0xff]
        %v1069 = vld [vmem:[%s369 + $0x1420] sm:$0xff]
        %v1070 = vld [vmem:[%s369 + $0x1428] sm:$0xff]
        %v1071 = vld [vmem:[%s369 + $0x1430] sm:$0xff]
        %v1072 = vld [vmem:[%s369 + $0x1438] sm:$0xff]
        %v1073 = vld [vmem:[%s369 + $0x1440] sm:$0xff]
        %v1074 = vld [vmem:[%s369 + $0x1448] sm:$0xff]
        %v1075 = vld [vmem:[%s369 + $0x1450] sm:$0xff]
        %v1076 = vld [vmem:[%s369 + $0x1458] sm:$0xff]
        %v1077 = vld [vmem:[%s369 + $0x1460] sm:$0xff]
        %v1078 = vld [vmem:[%s369 + $0x1468] sm:$0xff]
        %v1079 = vld [vmem:[%s369 + $0x1470] sm:$0xff]
        %v1080 = vld [vmem:[%s369 + $0x1478] sm:$0xff]
        %v1081 = vld [vmem:[%s369 + $0x1480] sm:$0xff]
        %v1082 = vld [vmem:[%s369 + $0x1488] sm:$0xff]
        %v1083 = vld [vmem:[%s369 + $0x1490] sm:$0xff]
        %v1084 = vld [vmem:[%s369 + $0x1498] sm:$0xff]
        %v1085 = vld [vmem:[%s369 + $0x14a0] sm:$0xff]
        %v1086 = vld [vmem:[%s369 + $0x14a8] sm:$0xff]
        %v1087 = vld [vmem:[%s369 + $0x14b0] sm:$0xff]
        %v1088 = vld [vmem:[%s369 + $0x14b8] sm:$0xff]
        %v1089 = vld [vmem:[%s369 + $0x14c0] sm:$0xff]
        %v1090 = vld [vmem:[%s369 + $0x14c8] sm:$0xff]
        %v1091 = vld [vmem:[%s369 + $0x14d0] sm:$0xff]
        %v1092 = vld [vmem:[%s369 + $0x14d8] sm:$0xff]
        %v1093 = vld [vmem:[%s369 + $0x14e0] sm:$0xff]
        %v1094 = vld [vmem:[%s369 + $0x14e8] sm:$0xff]
        %v1095 = vld [vmem:[%s369 + $0x14f0] sm:$0xff]
        %v1096 = vld [vmem:[%s369 + $0x14f8] sm:$0xff]
        %v1097 = vld [vmem:[%s369 + $0x1500] sm:$0xff]
        %v1098 = vld [vmem:[%s369 + $0x1508] sm:$0xff]
        %v1099 = vld [vmem:[%s369 + $0x1510] sm:$0xff]
        %v1100 = vld [vmem:[%s369 + $0x1518] sm:$0xff]
        %v1101 = vld [vmem:[%s369 + $0x1520] sm:$0xff]
        %v1102 = vld [vmem:[%s369 + $0x1528] sm:$0xff]
        %v1103 = vld [vmem:[%s369 + $0x1530] sm:$0xff]
        %v1104 = vld [vmem:[%s369 + $0x1538] sm:$0xff]
        %v1105 = vld [vmem:[%s369 + $0x1540] sm:$0xff]
        %v1106 = vld [vmem:[%s369 + $0x1548] sm:$0xff]
        %v1107 = vld [vmem:[%s369 + $0x1550] sm:$0xff]
        %v1108 = vld [vmem:[%s369 + $0x1558] sm:$0xff]
        %v1109 = vld [vmem:[%s369 + $0x1560] sm:$0xff]
        %v1110 = vld [vmem:[%s369 + $0x1568] sm:$0xff]
        %v1111 = vld [vmem:[%s369 + $0x1570] sm:$0xff]
        %v1112 = vld [vmem:[%s369 + $0x1578] sm:$0xff]
        %v1113 = vld [vmem:[%s369 + $0x1580] sm:$0xff]
        %v1114 = vld [vmem:[%s369 + $0x1588] sm:$0xff]
        %v1115 = vld [vmem:[%s369 + $0x1590] sm:$0xff]
        %v1116 = vld [vmem:[%s369 + $0x1598] sm:$0xff]
        %v1117 = vld [vmem:[%s369 + $0x15a0] sm:$0xff]
        %v1118 = vld [vmem:[%s369 + $0x15a8] sm:$0xff]
        %v1119 = vld [vmem:[%s369 + $0x15b0] sm:$0xff]
        %v1120 = vld [vmem:[%s369 + $0x15b8] sm:$0xff]
        %v1121 = vld [vmem:[%s369 + $0x15c0] sm:$0xff]
        %v1122 = vld [vmem:[%s369 + $0x15c8] sm:$0xff]
        %v1123 = vld [vmem:[%s369 + $0x15d0] sm:$0xff]
        %v1124 = vld [vmem:[%s369 + $0x15d8] sm:$0xff]
        %v1125 = vld [vmem:[%s369 + $0x15e0] sm:$0xff]
        %v1126 = vld [vmem:[%s369 + $0x15e8] sm:$0xff]
        %v1127 = vld [vmem:[%s369 + $0x15f0] sm:$0xff]
        %v1128 = vld [vmem:[%s369 + $0x15f8] sm:$0xff]
        %v1129 = vld [vmem:[%s369 + $0x1600] sm:$0xff]
        %v1130 = vld [vmem:[%s369 + $0x1608] sm:$0xff]
        %v1131 = vld [vmem:[%s369 + $0x1610] sm:$0xff]
        %v1132 = vld [vmem:[%s369 + $0x1618] sm:$0xff]
        %v1133 = vld [vmem:[%s369 + $0x1620] sm:$0xff]
        %v1134 = vld [vmem:[%s369 + $0x1628] sm:$0xff]
        %v1135 = vld [vmem:[%s369 + $0x1630] sm:$0xff]
        %v1136 = vld [vmem:[%s369 + $0x1638] sm:$0xff]
        %v1137 = vld [vmem:[%s369 + $0x1640] sm:$0xff]
        %v1138 = vld [vmem:[%s369 + $0x1648] sm:$0xff]
        %v1139 = vld [vmem:[%s369 + $0x1650] sm:$0xff]
        %v1140 = vld [vmem:[%s369 + $0x1658] sm:$0xff]
        %v1141 = vld [vmem:[%s369 + $0x1660] sm:$0xff]
        %v1142 = vld [vmem:[%s369 + $0x1668] sm:$0xff]
        %v1143 = vld [vmem:[%s369 + $0x1670] sm:$0xff]
        %v1144 = vld [vmem:[%s369 + $0x1678] sm:$0xff]
        %v1145 = vld [vmem:[%s369 + $0x1680] sm:$0xff]
        %v1146 = vld [vmem:[%s369 + $0x1688] sm:$0xff]
        %v1147 = vld [vmem:[%s369 + $0x1690] sm:$0xff]
        %v1148 = vld [vmem:[%s369 + $0x1698] sm:$0xff]
        %v1149 = vld [vmem:[%s369 + $0x16a0] sm:$0xff]
        %v1150 = vld [vmem:[%s369 + $0x16a8] sm:$0xff]
        %v1151 = vld [vmem:[%s369 + $0x16b0] sm:$0xff]
        %v1152 = vld [vmem:[%s369 + $0x16b8] sm:$0xff]
        %v1153 = vld [vmem:[%s369 + $0x16c0] sm:$0xff]
        %v1154 = vld [vmem:[%s369 + $0x16c8] sm:$0xff]
        %v1155 = vld [vmem:[%s369 + $0x16d0] sm:$0xff]
        %v1156 = vld [vmem:[%s369 + $0x16d8] sm:$0xff]
        %v1157 = vld [vmem:[%s369 + $0x16e0] sm:$0xff]
        %v1158 = vld [vmem:[%s369 + $0x16e8] sm:$0xff]
        %v1159 = vld [vmem:[%s369 + $0x16f0] sm:$0xff]
        %v1160 = vld [vmem:[%s369 + $0x16f8] sm:$0xff]
        %v1161 = vld [vmem:[%s369 + $0x1700] sm:$0xff]
        %v1162 = vld [vmem:[%s369 + $0x1708] sm:$0xff]
        %v1163 = vld [vmem:[%s369 + $0x1710] sm:$0xff]
        %v1164 = vld [vmem:[%s369 + $0x1718] sm:$0xff]
        %v1165 = vld [vmem:[%s369 + $0x1720] sm:$0xff]
        %v1166 = vld [vmem:[%s369 + $0x1728] sm:$0xff]
        %v1167 = vld [vmem:[%s369 + $0x1730] sm:$0xff]
        %v1168 = vld [vmem:[%s369 + $0x1738] sm:$0xff]
        %v1169 = vld [vmem:[%s369 + $0x1740] sm:$0xff]
        %v1170 = vld [vmem:[%s369 + $0x1748] sm:$0xff]
        %v1171 = vld [vmem:[%s369 + $0x1750] sm:$0xff]
        %v1172 = vld [vmem:[%s369 + $0x1758] sm:$0xff]
        %v1173 = vld [vmem:[%s369 + $0x1760] sm:$0xff]
        %v1174 = vld [vmem:[%s369 + $0x1768] sm:$0xff]
        %v1175 = vld [vmem:[%s369 + $0x1770] sm:$0xff]
        %v1176 = vld [vmem:[%s369 + $0x1778] sm:$0xff]
        %v1177 = vld [vmem:[%s369 + $0x1780] sm:$0xff]
        %v1178 = vld [vmem:[%s369 + $0x1788] sm:$0xff]
        %v1179 = vld [vmem:[%s369 + $0x1790] sm:$0xff]
        %v1180 = vld [vmem:[%s369 + $0x1798] sm:$0xff]
        %v1181 = vld [vmem:[%s369 + $0x17a0] sm:$0xff]
        %v1182 = vld [vmem:[%s369 + $0x17a8] sm:$0xff]
        %v1183 = vld [vmem:[%s369 + $0x17b0] sm:$0xff]
        %v1184 = vld [vmem:[%s369 + $0x17b8] sm:$0xff]
        %v1185 = vld [vmem:[%s369 + $0x17c0] sm:$0xff]
        %v1186 = vld [vmem:[%s369 + $0x17c8] sm:$0xff]
        %v1187 = vld [vmem:[%s369 + $0x17d0] sm:$0xff]
        %v1188 = vld [vmem:[%s369 + $0x17d8] sm:$0xff]
        %v1189 = vld [vmem:[%s369 + $0x17e0] sm:$0xff]
        %v1190 = vld [vmem:[%s369 + $0x17e8] sm:$0xff]
        %v1191 = vld [vmem:[%s369 + $0x17f0] sm:$0xff]
        %v1192 = vld [vmem:[%s369 + $0x17f8] sm:$0xff]
        %v1193 = vld [vmem:[%s369 + $0x1800] sm:$0xff]
        %v1194 = vld [vmem:[%s369 + $0x1808] sm:$0xff]
        %v1195 = vld [vmem:[%s369 + $0x1810] sm:$0xff]
        %v1196 = vld [vmem:[%s369 + $0x1818] sm:$0xff]
        %v1197 = vld [vmem:[%s369 + $0x1820] sm:$0xff]
        %v1198 = vld [vmem:[%s369 + $0x1828] sm:$0xff]
        %v1199 = vld [vmem:[%s369 + $0x1830] sm:$0xff]
        %v1200 = vld [vmem:[%s369 + $0x1838] sm:$0xff]
        %v1201 = vld [vmem:[%s369 + $0x1840] sm:$0xff]
        %v1202 = vld [vmem:[%s369 + $0x1848] sm:$0xff]
        %v1203 = vld [vmem:[%s369 + $0x1850] sm:$0xff]
        %v1204 = vld [vmem:[%s369 + $0x1858] sm:$0xff]
        %v1205 = vld [vmem:[%s369 + $0x1860] sm:$0xff]
        %v1206 = vld [vmem:[%s369 + $0x1868] sm:$0xff]
        %v1207 = vld [vmem:[%s369 + $0x1870] sm:$0xff]
        %v1208 = vld [vmem:[%s369 + $0x1878] sm:$0xff]
        %v1209 = vld [vmem:[%s369 + $0x1880] sm:$0xff]
        %v1210 = vld [vmem:[%s369 + $0x1888] sm:$0xff]
        %v1211 = vld [vmem:[%s369 + $0x1890] sm:$0xff]
        %v1212 = vld [vmem:[%s369 + $0x1898] sm:$0xff]
        %v1213 = vld [vmem:[%s369 + $0x18a0] sm:$0xff]
        %v1214 = vld [vmem:[%s369 + $0x18a8] sm:$0xff]
        %v1215 = vld [vmem:[%s369 + $0x18b0] sm:$0xff]
        %v1216 = vld [vmem:[%s369 + $0x18b8] sm:$0xff]
        %v1217 = vld [vmem:[%s369 + $0x18c0] sm:$0xff]
        %v1218 = vld [vmem:[%s369 + $0x18c8] sm:$0xff]
        %v1219 = vld [vmem:[%s369 + $0x18d0] sm:$0xff]
        %v1220 = vld [vmem:[%s369 + $0x18d8] sm:$0xff]
        %v1221 = vld [vmem:[%s369 + $0x18e0] sm:$0xff]
        %v1222 = vld [vmem:[%s369 + $0x18e8] sm:$0xff]
        %v1223 = vld [vmem:[%s369 + $0x18f0] sm:$0xff]
        %v1224 = vld [vmem:[%s369 + $0x18f8] sm:$0xff]
        %v1225 = vld [vmem:[%s369 + $0x1900] sm:$0xff]
        %v1226 = vld [vmem:[%s369 + $0x1908] sm:$0xff]
        %v1227 = vld [vmem:[%s369 + $0x1910] sm:$0xff]
        %v1228 = vld [vmem:[%s369 + $0x1918] sm:$0xff]
        %v1229 = vld [vmem:[%s369 + $0x1920] sm:$0xff]
        %v1230 = vld [vmem:[%s369 + $0x1928] sm:$0xff]
        %v1231 = vld [vmem:[%s369 + $0x1930] sm:$0xff]
        %v1232 = vld [vmem:[%s369 + $0x1938] sm:$0xff]
        %v1233 = vld [vmem:[%s369 + $0x1940] sm:$0xff]
        %v1234 = vld [vmem:[%s369 + $0x1948] sm:$0xff]
        %v1235 = vld [vmem:[%s369 + $0x1950] sm:$0xff]
        %v1236 = vld [vmem:[%s369 + $0x1958] sm:$0xff]
        %v1237 = vld [vmem:[%s369 + $0x1960] sm:$0xff]
        %v1238 = vld [vmem:[%s369 + $0x1968] sm:$0xff]
        %v1239 = vld [vmem:[%s369 + $0x1970] sm:$0xff]
        %v1240 = vld [vmem:[%s369 + $0x1978] sm:$0xff]
        %v1241 = vld [vmem:[%s369 + $0x1980] sm:$0xff]
        %v1242 = vld [vmem:[%s369 + $0x1988] sm:$0xff]
        %v1243 = vld [vmem:[%s369 + $0x1990] sm:$0xff]
        %v1244 = vld [vmem:[%s369 + $0x1998] sm:$0xff]
        %v1245 = vld [vmem:[%s369 + $0x19a0] sm:$0xff]
        %v1246 = vld [vmem:[%s369 + $0x19a8] sm:$0xff]
        %v1247 = vld [vmem:[%s369 + $0x19b0] sm:$0xff]
        %v1248 = vld [vmem:[%s369 + $0x19b8] sm:$0xff]
        %v1249 = vld [vmem:[%s369 + $0x19c0] sm:$0xff]
        %v1250 = vld [vmem:[%s369 + $0x19c8] sm:$0xff]
        %v1251 = vld [vmem:[%s369 + $0x19d0] sm:$0xff]
        %v1252 = vld [vmem:[%s369 + $0x19d8] sm:$0xff]
        %v1253 = vld [vmem:[%s369 + $0x19e0] sm:$0xff]
        %v1254 = vld [vmem:[%s369 + $0x19e8] sm:$0xff]
        %v1255 = vld [vmem:[%s369 + $0x19f0] sm:$0xff]
        %v1256 = vld [vmem:[%s369 + $0x19f8] sm:$0xff]
        %v1257 = vld [vmem:[%s369 + $0x1a00] sm:$0xff]
        %v1258 = vld [vmem:[%s369 + $0x1a08] sm:$0xff]
        %v1259 = vld [vmem:[%s369 + $0x1a10] sm:$0xff]
        %v1260 = vld [vmem:[%s369 + $0x1a18] sm:$0xff]
        %v1261 = vld [vmem:[%s369 + $0x1a20] sm:$0xff]
        %v1262 = vld [vmem:[%s369 + $0x1a28] sm:$0xff]
        %v1263 = vld [vmem:[%s369 + $0x1a30] sm:$0xff]
        %v1264 = vld [vmem:[%s369 + $0x1a38] sm:$0xff]
        %v1265 = vld [vmem:[%s369 + $0x1a40] sm:$0xff]
        %v1266 = vld [vmem:[%s369 + $0x1a48] sm:$0xff]
        %v1267 = vld [vmem:[%s369 + $0x1a50] sm:$0xff]
        %v1268 = vld [vmem:[%s369 + $0x1a58] sm:$0xff]
        %v1269 = vld [vmem:[%s369 + $0x1a60] sm:$0xff]
        %v1270 = vld [vmem:[%s369 + $0x1a68] sm:$0xff]
        %v1271 = vld [vmem:[%s369 + $0x1a70] sm:$0xff]
        %v1272 = vld [vmem:[%s369 + $0x1a78] sm:$0xff]
        %v1273 = vld [vmem:[%s369 + $0x1a80] sm:$0xff]
        %v1274 = vld [vmem:[%s369 + $0x1a88] sm:$0xff]
        %v1275 = vld [vmem:[%s369 + $0x1a90] sm:$0xff]
        %v1276 = vld [vmem:[%s369 + $0x1a98] sm:$0xff]
        %v1277 = vld [vmem:[%s369 + $0x1aa0] sm:$0xff]
        %v1278 = vld [vmem:[%s369 + $0x1aa8] sm:$0xff]
        %v1279 = vld [vmem:[%s369 + $0x1ab0] sm:$0xff]
        %v1280 = vld [vmem:[%s369 + $0x1ab8] sm:$0xff]
        %v1281 = vld [vmem:[%s369 + $0x1ac0] sm:$0xff]
        %v1282 = vld [vmem:[%s369 + $0x1ac8] sm:$0xff]
        %v1283 = vld [vmem:[%s369 + $0x1ad0] sm:$0xff]
        %v1284 = vld [vmem:[%s369 + $0x1ad8] sm:$0xff]
        %v1285 = vld [vmem:[%s369 + $0x1ae0] sm:$0xff]
        %v1286 = vld [vmem:[%s369 + $0x1ae8] sm:$0xff]
        %v1287 = vld [vmem:[%s369 + $0x1af0] sm:$0xff]
        %v1288 = vld [vmem:[%s369 + $0x1af8] sm:$0xff]
        %v1289 = vld [vmem:[%s369 + $0x1b00] sm:$0xff]
        %v1290 = vld [vmem:[%s369 + $0x1b08] sm:$0xff]
        %v1291 = vld [vmem:[%s369 + $0x1b10] sm:$0xff]
        %v1292 = vld [vmem:[%s369 + $0x1b18] sm:$0xff]
        %v1293 = vld [vmem:[%s369 + $0x1b20] sm:$0xff]
        %v1294 = vld [vmem:[%s369 + $0x1b28] sm:$0xff]
        %v1295 = vld [vmem:[%s369 + $0x1b30] sm:$0xff]
        %v1296 = vld [vmem:[%s369 + $0x1b38] sm:$0xff]
        %v1297 = vld [vmem:[%s369 + $0x1b40] sm:$0xff]
        %v1298 = vld [vmem:[%s369 + $0x1b48] sm:$0xff]
        %v1299 = vld [vmem:[%s369 + $0x1b50] sm:$0xff]
        %v1300 = vld [vmem:[%s369 + $0x1b58] sm:$0xff]
        %v1301 = vld [vmem:[%s369 + $0x1b60] sm:$0xff]
        %v1302 = vld [vmem:[%s369 + $0x1b68] sm:$0xff]
        %v1303 = vld [vmem:[%s369 + $0x1b70] sm:$0xff]
        %v1304 = vld [vmem:[%s369 + $0x1b78] sm:$0xff]
        %v1305 = vld [vmem:[%s369 + $0x1b80] sm:$0xff]
        %v1306 = vld [vmem:[%s369 + $0x1b88] sm:$0xff]
        %v1307 = vld [vmem:[%s369 + $0x1b90] sm:$0xff]
        %v1308 = vld [vmem:[%s369 + $0x1b98] sm:$0xff]
        %v1309 = vld [vmem:[%s369 + $0x1ba0] sm:$0xff]
        %v1310 = vld [vmem:[%s369 + $0x1ba8] sm:$0xff]
        %v1311 = vld [vmem:[%s369 + $0x1bb0] sm:$0xff]
        %v1312 = vld [vmem:[%s369 + $0x1bb8] sm:$0xff]
        %v1313 = vld [vmem:[%s369 + $0x1bc0] sm:$0xff]
        %v1314 = vld [vmem:[%s369 + $0x1bc8] sm:$0xff]
        %v1315 = vld [vmem:[%s369 + $0x1bd0] sm:$0xff]
        %v1316 = vld [vmem:[%s369 + $0x1bd8] sm:$0xff]
        %v1317 = vld [vmem:[%s369 + $0x1be0] sm:$0xff]
        %v1318 = vld [vmem:[%s369 + $0x1be8] sm:$0xff]
        %v1319 = vld [vmem:[%s369 + $0x1bf0] sm:$0xff]
        %v1320 = vld [vmem:[%s369 + $0x1bf8] sm:$0xff]
        %v1321 = vld [vmem:[%s369 + $0x1c00] sm:$0xff]
        %v1322 = vld [vmem:[%s369 + $0x1c08] sm:$0xff]
        %v1323 = vld [vmem:[%s369 + $0x1c10] sm:$0xff]
        %v1324 = vld [vmem:[%s369 + $0x1c18] sm:$0xff]
        %v1325 = vld [vmem:[%s369 + $0x1c20] sm:$0xff]
        %v1326 = vld [vmem:[%s369 + $0x1c28] sm:$0xff]
        %v1327 = vld [vmem:[%s369 + $0x1c30] sm:$0xff]
        %v1328 = vld [vmem:[%s369 + $0x1c38] sm:$0xff]
        %v1329 = vld [vmem:[%s369 + $0x1c40] sm:$0xff]
        %v1330 = vld [vmem:[%s369 + $0x1c48] sm:$0xff]
        %v1331 = vld [vmem:[%s369 + $0x1c50] sm:$0xff]
        %v1332 = vld [vmem:[%s369 + $0x1c58] sm:$0xff]
        %v1333 = vld [vmem:[%s369 + $0x1c60] sm:$0xff]
        %v1334 = vld [vmem:[%s369 + $0x1c68] sm:$0xff]
        %v1335 = vld [vmem:[%s369 + $0x1c70] sm:$0xff]
        %v1336 = vld [vmem:[%s369 + $0x1c78] sm:$0xff]
        %v1337 = vld [vmem:[%s369 + $0x1c80] sm:$0xff]
        %v1338 = vld [vmem:[%s369 + $0x1c88] sm:$0xff]
        %v1339 = vld [vmem:[%s369 + $0x1c90] sm:$0xff]
        %v1340 = vld [vmem:[%s369 + $0x1c98] sm:$0xff]
        %v1341 = vld [vmem:[%s369 + $0x1ca0] sm:$0xff]
        %v1342 = vld [vmem:[%s369 + $0x1ca8] sm:$0xff]
        %v1343 = vld [vmem:[%s369 + $0x1cb0] sm:$0xff]
        %v1344 = vld [vmem:[%s369 + $0x1cb8] sm:$0xff]
        %v1345 = vld [vmem:[%s369 + $0x1cc0] sm:$0xff]
        %v1346 = vld [vmem:[%s369 + $0x1cc8] sm:$0xff]
        %v1347 = vld [vmem:[%s369 + $0x1cd0] sm:$0xff]
        %v1348 = vld [vmem:[%s369 + $0x1cd8] sm:$0xff]
        %v1349 = vld [vmem:[%s369 + $0x1ce0] sm:$0xff]
        %v1350 = vld [vmem:[%s369 + $0x1ce8] sm:$0xff]
        %v1351 = vld [vmem:[%s369 + $0x1cf0] sm:$0xff]
        %v1352 = vld [vmem:[%s369 + $0x1cf8] sm:$0xff]
        %v1353 = vld [vmem:[%s369 + $0x1d00] sm:$0xff]
        %v1354 = vld [vmem:[%s369 + $0x1d08] sm:$0xff]
        %v1355 = vld [vmem:[%s369 + $0x1d10] sm:$0xff]
        %v1356 = vld [vmem:[%s369 + $0x1d18] sm:$0xff]
        %v1357 = vld [vmem:[%s369 + $0x1d20] sm:$0xff]
        %v1358 = vld [vmem:[%s369 + $0x1d28] sm:$0xff]
        %v1359 = vld [vmem:[%s369 + $0x1d30] sm:$0xff]
        %v1360 = vld [vmem:[%s369 + $0x1d38] sm:$0xff]
        %v1361 = vld [vmem:[%s369 + $0x1d40] sm:$0xff]
        %v1362 = vld [vmem:[%s369 + $0x1d48] sm:$0xff]
        %v1363 = vld [vmem:[%s369 + $0x1d50] sm:$0xff]
        %v1364 = vld [vmem:[%s369 + $0x1d58] sm:$0xff]
        %v1365 = vld [vmem:[%s369 + $0x1d60] sm:$0xff]
        %v1366 = vld [vmem:[%s369 + $0x1d68] sm:$0xff]
        %v1367 = vld [vmem:[%s369 + $0x1d70] sm:$0xff]
        %v1368 = vld [vmem:[%s369 + $0x1d78] sm:$0xff]
        %v1369 = vld [vmem:[%s369 + $0x1d80] sm:$0xff]
        %v1370 = vld [vmem:[%s369 + $0x1d88] sm:$0xff]
        %v1371 = vld [vmem:[%s369 + $0x1d90] sm:$0xff]
        %v1372 = vld [vmem:[%s369 + $0x1d98] sm:$0xff]
        %v1373 = vld [vmem:[%s369 + $0x1da0] sm:$0xff]
        %v1374 = vld [vmem:[%s369 + $0x1da8] sm:$0xff]
        %v1375 = vld [vmem:[%s369 + $0x1db0] sm:$0xff]
        %v1376 = vld [vmem:[%s369 + $0x1db8] sm:$0xff]
        %v1377 = vld [vmem:[%s369 + $0x1dc0] sm:$0xff]
        %v1378 = vld [vmem:[%s369 + $0x1dc8] sm:$0xff]
        %v1379 = vld [vmem:[%s369 + $0x1dd0] sm:$0xff]
        %v1380 = vld [vmem:[%s369 + $0x1dd8] sm:$0xff]
        %v1381 = vld [vmem:[%s369 + $0x1de0] sm:$0xff]
        %v1382 = vld [vmem:[%s369 + $0x1de8] sm:$0xff]
        %v1383 = vld [vmem:[%s369 + $0x1df0] sm:$0xff]
        %v1384 = vld [vmem:[%s369 + $0x1df8] sm:$0xff]
        %v1385 = vld [vmem:[%s369 + $0x1e00] sm:$0xff]
        %v1386 = vld [vmem:[%s369 + $0x1e08] sm:$0xff]
        %v1387 = vld [vmem:[%s369 + $0x1e10] sm:$0xff]
        %v1388 = vld [vmem:[%s369 + $0x1e18] sm:$0xff]
        %v1389 = vld [vmem:[%s369 + $0x1e20] sm:$0xff]
        %v1390 = vld [vmem:[%s369 + $0x1e28] sm:$0xff]
        %v1391 = vld [vmem:[%s369 + $0x1e30] sm:$0xff]
        %v1392 = vld [vmem:[%s369 + $0x1e38] sm:$0xff]
        %v1393 = vld [vmem:[%s369 + $0x1e40] sm:$0xff]
        %v1394 = vld [vmem:[%s369 + $0x1e48] sm:$0xff]
        %v1395 = vld [vmem:[%s369 + $0x1e50] sm:$0xff]
        %v1396 = vld [vmem:[%s369 + $0x1e58] sm:$0xff]
        %v1397 = vld [vmem:[%s369 + $0x1e60] sm:$0xff]
        %v1398 = vld [vmem:[%s369 + $0x1e68] sm:$0xff]
        %v1399 = vld [vmem:[%s369 + $0x1e70] sm:$0xff]
        %v1400 = vld [vmem:[%s369 + $0x1e78] sm:$0xff]
        %v1401 = vld [vmem:[%s369 + $0x1e80] sm:$0xff]
        %v1402 = vld [vmem:[%s369 + $0x1e88] sm:$0xff]
        %v1403 = vld [vmem:[%s369 + $0x1e90] sm:$0xff]
        %v1404 = vld [vmem:[%s369 + $0x1e98] sm:$0xff]
        %v1405 = vld [vmem:[%s369 + $0x1ea0] sm:$0xff]
        %v1406 = vld [vmem:[%s369 + $0x1ea8] sm:$0xff]
        %v1407 = vld [vmem:[%s369 + $0x1eb0] sm:$0xff]
        %v1408 = vld [vmem:[%s369 + $0x1eb8] sm:$0xff]
        %v1409 = vld [vmem:[%s369 + $0x1ec0] sm:$0xff]
        %v1410 = vld [vmem:[%s369 + $0x1ec8] sm:$0xff]
        %v1411 = vld [vmem:[%s369 + $0x1ed0] sm:$0xff]
        %v1412 = vld [vmem:[%s369 + $0x1ed8] sm:$0xff]
        %v1413 = vld [vmem:[%s369 + $0x1ee0] sm:$0xff]
        %v1414 = vld [vmem:[%s369 + $0x1ee8] sm:$0xff]
        %v1415 = vld [vmem:[%s369 + $0x1ef0] sm:$0xff]
        %v1416 = vld [vmem:[%s369 + $0x1ef8] sm:$0xff]
        %v1417 = vld [vmem:[%s369 + $0x1f00] sm:$0xff]
        %v1418 = vld [vmem:[%s369 + $0x1f08] sm:$0xff]
        %v1419 = vld [vmem:[%s369 + $0x1f10] sm:$0xff]
        %v1420 = vld [vmem:[%s369 + $0x1f18] sm:$0xff]
        %v1421 = vld [vmem:[%s369 + $0x1f20] sm:$0xff]
        %v1422 = vld [vmem:[%s369 + $0x1f28] sm:$0xff]
        %v1423 = vld [vmem:[%s369 + $0x1f30] sm:$0xff]
        %v1424 = vld [vmem:[%s369 + $0x1f38] sm:$0xff]
        %v1425 = vld [vmem:[%s369 + $0x1f40] sm:$0xff]
        %v1426 = vld [vmem:[%s369 + $0x1f48] sm:$0xff]
        %v1427 = vld [vmem:[%s369 + $0x1f50] sm:$0xff]
        %v1428 = vld [vmem:[%s369 + $0x1f58] sm:$0xff]
        %v1429 = vld [vmem:[%s369 + $0x1f60] sm:$0xff]
        %v1430 = vld [vmem:[%s369 + $0x1f68] sm:$0xff]
        %v1431 = vld [vmem:[%s369 + $0x1f70] sm:$0xff]
        %v1432 = vld [vmem:[%s369 + $0x1f78] sm:$0xff]
        %v1433 = vld [vmem:[%s369 + $0x1f80] sm:$0xff]
        %v1434 = vld [vmem:[%s369 + $0x1f88] sm:$0xff]
        %v1435 = vld [vmem:[%s369 + $0x1f90] sm:$0xff]
        %v1436 = vld [vmem:[%s369 + $0x1f98] sm:$0xff]
        %v1437 = vld [vmem:[%s369 + $0x1fa0] sm:$0xff]
        %v1438 = vld [vmem:[%s369 + $0x1fa8] sm:$0xff]
        %v1439 = vld [vmem:[%s369 + $0x1fb0] sm:$0xff]
        %v1440 = vld [vmem:[%s369 + $0x1fb8] sm:$0xff]
        %v1441 = vld [vmem:[%s369 + $0x1fc0] sm:$0xff]
        %v1442 = vld [vmem:[%s369 + $0x1fc8] sm:$0xff]
        %v1443 = vld [vmem:[%s369 + $0x1fd0] sm:$0xff]
        %v1444 = vld [vmem:[%s369 + $0x1fd8] sm:$0xff]
        %v1445 = vld [vmem:[%s369 + $0x1fe0] sm:$0xff]
        %v1446 = vld [vmem:[%s369 + $0x1fe8] sm:$0xff]
        %v1447 = vld [vmem:[%s369 + $0x1ff0] sm:$0xff]
        %v1448 = vld [vmem:[%s369 + $0x1ff8] sm:$0xff]
        %v1449 = vld [vmem:[%s369 + $0x2000] sm:$0xff]
        %v1450 = vld [vmem:[%s369 + $0x2008] sm:$0xff]
        %v1451 = vld [vmem:[%s369 + $0x2010] sm:$0xff]
        %v1452 = vld [vmem:[%s369 + $0x2018] sm:$0xff]
        %v1453 = vld [vmem:[%s369 + $0x2020] sm:$0xff]
        %v1454 = vld [vmem:[%s369 + $0x2028] sm:$0xff]
        %v1455 = vld [vmem:[%s369 + $0x2030] sm:$0xff]
        %v1456 = vld [vmem:[%s369 + $0x2038] sm:$0xff]
        %v1457 = vld [vmem:[%s369 + $0x2040] sm:$0xff]
        %v1458 = vld [vmem:[%s369 + $0x2048] sm:$0xff]
        %v1459 = vld [vmem:[%s369 + $0x2050] sm:$0xff]
        %v1460 = vld [vmem:[%s369 + $0x2058] sm:$0xff]
        %v1461 = vld [vmem:[%s369 + $0x2060] sm:$0xff]
        %v1462 = vld [vmem:[%s369 + $0x2068] sm:$0xff]
        %v1463 = vld [vmem:[%s369 + $0x2070] sm:$0xff]
        %v1464 = vld [vmem:[%s369 + $0x2078] sm:$0xff]
        %v1465 = vld [vmem:[%s369 + $0x2080] sm:$0xff]
        %v1466 = vld [vmem:[%s369 + $0x2088] sm:$0xff]
        %v1467 = vld [vmem:[%s369 + $0x2090] sm:$0xff]
        %v1468 = vld [vmem:[%s369 + $0x2098] sm:$0xff]
        %v1469 = vld [vmem:[%s369 + $0x20a0] sm:$0xff]
        %v1470 = vld [vmem:[%s369 + $0x20a8] sm:$0xff]
        %v1471 = vld [vmem:[%s369 + $0x20b0] sm:$0xff]
        %v1472 = vld [vmem:[%s369 + $0x20b8] sm:$0xff]
        %v1473 = vld [vmem:[%s369 + $0x20c0] sm:$0xff]
        %v1474 = vld [vmem:[%s369 + $0x20c8] sm:$0xff]
        %v1475 = vld [vmem:[%s369 + $0x20d0] sm:$0xff]
        %v1476 = vld [vmem:[%s369 + $0x20d8] sm:$0xff]
        %v1477 = vld [vmem:[%s369 + $0x20e0] sm:$0xff]
        %v1478 = vld [vmem:[%s369 + $0x20e8] sm:$0xff]
        %v1479 = vld [vmem:[%s369 + $0x20f0] sm:$0xff]
        %v1480 = vld [vmem:[%s369 + $0x20f8] sm:$0xff]
        %v1481 = vld [vmem:[%s369 + $0x2100] sm:$0xff]
        %v1482 = vld [vmem:[%s369 + $0x2108] sm:$0xff]
        %v1483 = vld [vmem:[%s369 + $0x2110] sm:$0xff]
        %v1484 = vld [vmem:[%s369 + $0x2118] sm:$0xff]
        %v1485 = vld [vmem:[%s369 + $0x2120] sm:$0xff]
        %v1486 = vld [vmem:[%s369 + $0x2128] sm:$0xff]
        %v1487 = vld [vmem:[%s369 + $0x2130] sm:$0xff]
        %v1488 = vld [vmem:[%s369 + $0x2138] sm:$0xff]
        %v1489 = vld [vmem:[%s369 + $0x2140] sm:$0xff]
        %v1490 = vld [vmem:[%s369 + $0x2148] sm:$0xff]
        %v1491 = vld [vmem:[%s369 + $0x2150] sm:$0xff]
        %v1492 = vld [vmem:[%s369 + $0x2158] sm:$0xff]
        %v1493 = vld [vmem:[%s369 + $0x2160] sm:$0xff]
        %v1494 = vld [vmem:[%s369 + $0x2168] sm:$0xff]
        %v1495 = vld [vmem:[%s369 + $0x2170] sm:$0xff]
        %v1496 = vld [vmem:[%s369 + $0x2178] sm:$0xff]
        %v1497 = vld [vmem:[%s369 + $0x2180] sm:$0xff]
        %v1498 = vld [vmem:[%s369 + $0x2188] sm:$0xff]
        %v1499 = vld [vmem:[%s369 + $0x2190] sm:$0xff]
        %v1500 = vld [vmem:[%s369 + $0x2198] sm:$0xff]
        %v1501 = vld [vmem:[%s369 + $0x21a0] sm:$0xff]
        %v1502 = vld [vmem:[%s369 + $0x21a8] sm:$0xff]
        %v1503 = vld [vmem:[%s369 + $0x21b0] sm:$0xff]
        %v1504 = vld [vmem:[%s369 + $0x21b8] sm:$0xff]
        %v1505 = vld [vmem:[%s369 + $0x21c0] sm:$0xff]
        %v1506 = vld [vmem:[%s369 + $0x21c8] sm:$0xff]
        %v1507 = vld [vmem:[%s369 + $0x21d0] sm:$0xff]
        %v1508 = vld [vmem:[%s369 + $0x21d8] sm:$0xff]
        %v1509 = vld [vmem:[%s369 + $0x21e0] sm:$0xff]
        %v1510 = vld [vmem:[%s369 + $0x21e8] sm:$0xff]
        %v1511 = vld [vmem:[%s369 + $0x21f0] sm:$0xff]
        %v1512 = vld [vmem:[%s369 + $0x21f8] sm:$0xff]
        %v1513 = vld [vmem:[%s369 + $0x2200] sm:$0xff]
        %v1514 = vld [vmem:[%s369 + $0x2208] sm:$0xff]
        %v1515 = vld [vmem:[%s369 + $0x2210] sm:$0xff]
        %v1516 = vld [vmem:[%s369 + $0x2218] sm:$0xff]
        %v1517 = vld [vmem:[%s369 + $0x2220] sm:$0xff]
        %v1518 = vld [vmem:[%s369 + $0x2228] sm:$0xff]
        %v1519 = vld [vmem:[%s369 + $0x2230] sm:$0xff]
        %v1520 = vld [vmem:[%s369 + $0x2238] sm:$0xff]
        %v1521 = vld [vmem:[%s369 + $0x2240] sm:$0xff]
        %v1522 = vld [vmem:[%s369 + $0x2248] sm:$0xff]
        %v1523 = vld [vmem:[%s369 + $0x2250] sm:$0xff]
        %v1524 = vld [vmem:[%s369 + $0x2258] sm:$0xff]
        %v1525 = vld [vmem:[%s369 + $0x2260] sm:$0xff]
        %v1526 = vld [vmem:[%s369 + $0x2268] sm:$0xff]
        %v1527 = vld [vmem:[%s369 + $0x2270] sm:$0xff]
        %v1528 = vld [vmem:[%s369 + $0x2278] sm:$0xff]
        %v1529 = vld [vmem:[%s369 + $0x2280] sm:$0xff]
        %v1530 = vld [vmem:[%s369 + $0x2288] sm:$0xff]
        %v1531 = vld [vmem:[%s369 + $0x2290] sm:$0xff]
        %v1532 = vld [vmem:[%s369 + $0x2298] sm:$0xff]
        %v1533 = vld [vmem:[%s369 + $0x22a0] sm:$0xff]
        %v1534 = vld [vmem:[%s369 + $0x22a8] sm:$0xff]
        %v1535 = vld [vmem:[%s369 + $0x22b0] sm:$0xff]
        %v1536 = vld [vmem:[%s369 + $0x22b8] sm:$0xff]
        %v1537 = vld [vmem:[%s369 + $0x22c0] sm:$0xff]
        %v1538 = vld [vmem:[%s369 + $0x22c8] sm:$0xff]
        %v1539 = vld [vmem:[%s369 + $0x22d0] sm:$0xff]
        %v1540 = vld [vmem:[%s369 + $0x22d8] sm:$0xff]
        %v1541 = vld [vmem:[%s369 + $0x22e0] sm:$0xff]
        %v1542 = vld [vmem:[%s369 + $0x22e8] sm:$0xff]
        %v1543 = vld [vmem:[%s369 + $0x22f0] sm:$0xff]
        %v1544 = vld [vmem:[%s369 + $0x22f8] sm:$0xff]
        %v1545 = vld [vmem:[%s369 + $0x2300] sm:$0xff]
        %v1546 = vld [vmem:[%s369 + $0x2308] sm:$0xff]
        %v1547 = vld [vmem:[%s369 + $0x2310] sm:$0xff]
        %v1548 = vld [vmem:[%s369 + $0x2318] sm:$0xff]
        %v1549 = vld [vmem:[%s369 + $0x2320] sm:$0xff]
        %v1550 = vld [vmem:[%s369 + $0x2328] sm:$0xff]
        %v1551 = vld [vmem:[%s369 + $0x2330] sm:$0xff]
        %v1552 = vld [vmem:[%s369 + $0x2338] sm:$0xff]
        %v1553 = vld [vmem:[%s369 + $0x2340] sm:$0xff]
        %v1554 = vld [vmem:[%s369 + $0x2348] sm:$0xff]
        %v1555 = vld [vmem:[%s369 + $0x2350] sm:$0xff]
        %v1556 = vld [vmem:[%s369 + $0x2358] sm:$0xff]
        %v1557 = vld [vmem:[%s369 + $0x2360] sm:$0xff]
        %v1558 = vld [vmem:[%s369 + $0x2368] sm:$0xff]
        %v1559 = vld [vmem:[%s369 + $0x2370] sm:$0xff]
        %v1560 = vld [vmem:[%s369 + $0x2378] sm:$0xff]
        %v1561 = vld [vmem:[%s369 + $0x2380] sm:$0xff]
        %v1562 = vld [vmem:[%s369 + $0x2388] sm:$0xff]
        %v1563 = vld [vmem:[%s369 + $0x2390] sm:$0xff]
        %v1564 = vld [vmem:[%s369 + $0x2398] sm:$0xff]
        %v1565 = vld [vmem:[%s369 + $0x23a0] sm:$0xff]
        %v1566 = vld [vmem:[%s369 + $0x23a8] sm:$0xff]
        %v1567 = vld [vmem:[%s369 + $0x23b0] sm:$0xff]
        %v1568 = vld [vmem:[%s369 + $0x23b8] sm:$0xff]
        %v1569 = vld [vmem:[%s369 + $0x23c0] sm:$0xff]
        %v1570 = vld [vmem:[%s369 + $0x23c8] sm:$0xff]
        %v1571 = vld [vmem:[%s369 + $0x23d0] sm:$0xff]
        %v1572 = vld [vmem:[%s369 + $0x23d8] sm:$0xff]
        %v1573 = vld [vmem:[%s369 + $0x23e0] sm:$0xff]
        %v1574 = vld [vmem:[%s369 + $0x23e8] sm:$0xff]
        %v1575 = vld [vmem:[%s369 + $0x23f0] sm:$0xff]
        %v1576 = vld [vmem:[%s369 + $0x23f8] sm:$0xff]
        %v1595 = vunpack.c.l.b16 %v407
        %v1596 = vunpack.c.h.b16 %v407
        %v1597 = vunpack.c.l.b16 %v408
        %v1598 = vunpack.c.h.b16 %v408
        %v1599 = vunpack.c.l.b16 %v409
        %v1600 = vunpack.c.h.b16 %v409
        %v1601 = vunpack.c.l.b16 %v410
        %v1602 = vunpack.c.h.b16 %v410
        %v1603 = vunpack.c.l.b16 %v411
        %v1604 = vunpack.c.h.b16 %v411
        %v1605 = vunpack.c.l.b16 %v412
        %v1606 = vunpack.c.h.b16 %v412
        %v1607 = vunpack.c.l.b16 %v413
        %v1608 = vunpack.c.h.b16 %v413
        %v1609 = vunpack.c.l.b16 %v414
        %v1610 = vunpack.c.h.b16 %v414
        %v1611 = vunpack.c.l.b16 %v415
        %v1612 = vunpack.c.h.b16 %v415
        %v1613 = vunpack.c.l.b16 %v416
        %v1614 = vunpack.c.h.b16 %v416
        %v1615 = vunpack.c.l.b16 %v417
        %v1616 = vunpack.c.h.b16 %v417
        %v1617 = vunpack.c.l.b16 %v418
        %v1618 = vunpack.c.h.b16 %v418
        %v1619 = vunpack.c.l.b16 %v419
        %v1620 = vunpack.c.h.b16 %v419
        %v1621 = vunpack.c.l.b16 %v420
        %v1622 = vunpack.c.h.b16 %v420
        %v1623 = vunpack.c.l.b16 %v421
        %v1624 = vunpack.c.h.b16 %v421
        %v1625 = vunpack.c.l.b16 %v422
        %v1626 = vunpack.c.h.b16 %v422
        %v1627 = vunpack.c.l.b16 %v423
        %v1628 = vunpack.c.h.b16 %v423
        %v1629 = vunpack.c.l.b16 %v424
        %v1630 = vunpack.c.h.b16 %v424
        %v1631 = vpack.c.b16 %v1613, %v1595
        %v1632 = vpack.c.b16 %v1614, %v1596
        %v1633 = vpack.c.b16 %v1615, %v1597
        %v1634 = vpack.c.b16 %v1616, %v1598
        %v1635 = vpack.c.b16 %v1617, %v1599
        %v1636 = vpack.c.b16 %v1618, %v1600
        %v1637 = vpack.c.b16 %v1619, %v1601
        %v1638 = vpack.c.b16 %v1620, %v1602
        %v1639 = vpack.c.b16 %v1621, %v1603
        %v1640 = vpack.c.b16 %v1622, %v1604
        %v1641 = vpack.c.b16 %v1623, %v1605
        %v1642 = vpack.c.b16 %v1624, %v1606
        %v1643 = vpack.c.b16 %v1625, %v1607
        %v1644 = vpack.c.b16 %v1626, %v1608
        %v1645 = vpack.c.b16 %v1627, %v1609
        %v1646 = vpack.c.b16 %v1628, %v1610
        %v1647 = vpack.c.b16 %v1629, %v1611
        %v1648 = vpack.c.b16 %v1630, %v1612
        %v2819 = vunpack.c.l.b16 %v425
        %v2820 = vunpack.c.h.b16 %v425
        %v2821 = vunpack.c.l.b16 %v426
        %v2822 = vunpack.c.h.b16 %v426
        %v2823 = vunpack.c.l.b16 %v427
        %v2824 = vunpack.c.h.b16 %v427
        %v2825 = vunpack.c.l.b16 %v428
        %v2826 = vunpack.c.h.b16 %v428
        %v2827 = vunpack.c.l.b16 %v429
        %v2828 = vunpack.c.h.b16 %v429
        %v2829 = vunpack.c.l.b16 %v430
        %v2830 = vunpack.c.h.b16 %v430
        %v2831 = vunpack.c.l.b16 %v431
        %v2832 = vunpack.c.h.b16 %v431
        %v2833 = vunpack.c.l.b16 %v432
        %v2834 = vunpack.c.h.b16 %v432
        %v2835 = vunpack.c.l.b16 %v433
        %v2836 = vunpack.c.h.b16 %v433
        %v2837 = vunpack.c.l.b16 %v434
        %v2838 = vunpack.c.h.b16 %v434
        %v2839 = vunpack.c.l.b16 %v435
        %v2840 = vunpack.c.h.b16 %v435
        %v2841 = vunpack.c.l.b16 %v436
        %v2842 = vunpack.c.h.b16 %v436
        %v2843 = vunpack.c.l.b16 %v437
        %v2844 = vunpack.c.h.b16 %v437
        %v2845 = vunpack.c.l.b16 %v438
        %v2846 = vunpack.c.h.b16 %v438
        %v2847 = vunpack.c.l.b16 %v439
        %v2848 = vunpack.c.h.b16 %v439
        %v2849 = vunpack.c.l.b16 %v440
        %v2850 = vunpack.c.h.b16 %v440
        %v2851 = vunpack.c.l.b16 %v441
        %v2852 = vunpack.c.h.b16 %v441
        %v2853 = vunpack.c.l.b16 %v442
        %v2854 = vunpack.c.h.b16 %v442
        %v2855 = vunpack.c.l.b16 %v443
        %v2856 = vunpack.c.h.b16 %v443
        %v2857 = vunpack.c.l.b16 %v444
        %v2858 = vunpack.c.h.b16 %v444
        %v2859 = vunpack.c.l.b16 %v445
        %v2860 = vunpack.c.h.b16 %v445
        %v2861 = vunpack.c.l.b16 %v446
        %v2862 = vunpack.c.h.b16 %v446
        %v2863 = vunpack.c.l.b16 %v447
        %v2864 = vunpack.c.h.b16 %v447
        %v2865 = vunpack.c.l.b16 %v448
        %v2866 = vunpack.c.h.b16 %v448
        %v2867 = vunpack.c.l.b16 %v449
        %v2868 = vunpack.c.h.b16 %v449
        %v2869 = vunpack.c.l.b16 %v450
        %v2870 = vunpack.c.h.b16 %v450
        %v2871 = vunpack.c.l.b16 %v451
        %v2872 = vunpack.c.h.b16 %v451
        %v2873 = vunpack.c.l.b16 %v452
        %v2874 = vunpack.c.h.b16 %v452
        %v2875 = vunpack.c.l.b16 %v453
        %v2876 = vunpack.c.h.b16 %v453
        %v2877 = vunpack.c.l.b16 %v454
        %v2878 = vunpack.c.h.b16 %v454
        %v2879 = vunpack.c.l.b16 %v455
        %v2880 = vunpack.c.h.b16 %v455
        %v2881 = vunpack.c.l.b16 %v456
        %v2882 = vunpack.c.h.b16 %v456
        %v2883 = vunpack.c.l.b16 %v457
        %v2884 = vunpack.c.h.b16 %v457
        %v2885 = vunpack.c.l.b16 %v458
        %v2886 = vunpack.c.h.b16 %v458
        %v2887 = vunpack.c.l.b16 %v459
        %v2888 = vunpack.c.h.b16 %v459
        %v2889 = vunpack.c.l.b16 %v460
        %v2890 = vunpack.c.h.b16 %v460
        %v2891 = vunpack.c.l.b16 %v461
        %v2892 = vunpack.c.h.b16 %v461
        %v2893 = vunpack.c.l.b16 %v462
        %v2894 = vunpack.c.h.b16 %v462
        %v2895 = vunpack.c.l.b16 %v463
        %v2896 = vunpack.c.h.b16 %v463
        %v2897 = vunpack.c.l.b16 %v464
        %v2898 = vunpack.c.h.b16 %v464
        %v2899 = vunpack.c.l.b16 %v465
        %v2900 = vunpack.c.h.b16 %v465
        %v2901 = vunpack.c.l.b16 %v466
        %v2902 = vunpack.c.h.b16 %v466
        %v2903 = vunpack.c.l.b16 %v467
        %v2904 = vunpack.c.h.b16 %v467
        %v2905 = vunpack.c.l.b16 %v468
        %v2906 = vunpack.c.h.b16 %v468
        %v2907 = vunpack.c.l.b16 %v469
        %v2908 = vunpack.c.h.b16 %v469
        %v2909 = vunpack.c.l.b16 %v470
        %v2910 = vunpack.c.h.b16 %v470
        %v2911 = vunpack.c.l.b16 %v471
        %v2912 = vunpack.c.h.b16 %v471
        %v2913 = vunpack.c.l.b16 %v472
        %v2914 = vunpack.c.h.b16 %v472
        %v2915 = vunpack.c.l.b16 %v473
        %v2916 = vunpack.c.h.b16 %v473
        %v2917 = vunpack.c.l.b16 %v474
        %v2918 = vunpack.c.h.b16 %v474
        %v2919 = vunpack.c.l.b16 %v475
        %v2920 = vunpack.c.h.b16 %v475
        %v2921 = vunpack.c.l.b16 %v476
        %v2922 = vunpack.c.h.b16 %v476
        %v2923 = vunpack.c.l.b16 %v477
        %v2924 = vunpack.c.h.b16 %v477
        %v2925 = vunpack.c.l.b16 %v478
        %v2926 = vunpack.c.h.b16 %v478
        %v2927 = vunpack.c.l.b16 %v479
        %v2928 = vunpack.c.h.b16 %v479
        %v2929 = vunpack.c.l.b16 %v480
        %v2930 = vunpack.c.h.b16 %v480
        %v2931 = vunpack.c.l.b16 %v481
        %v2932 = vunpack.c.h.b16 %v481
        %v2933 = vunpack.c.l.b16 %v482
        %v2934 = vunpack.c.h.b16 %v482
        %v2935 = vunpack.c.l.b16 %v483
        %v2936 = vunpack.c.h.b16 %v483
        %v2937 = vunpack.c.l.b16 %v484
        %v2938 = vunpack.c.h.b16 %v484
        %v2939 = vunpack.c.l.b16 %v485
        %v2940 = vunpack.c.h.b16 %v485
        %v2941 = vunpack.c.l.b16 %v486
        %v2942 = vunpack.c.h.b16 %v486
        %v2943 = vunpack.c.l.b16 %v487
        %v2944 = vunpack.c.h.b16 %v487
        %v2945 = vunpack.c.l.b16 %v488
        %v2946 = vunpack.c.h.b16 %v488
        %v2947 = vunpack.c.l.b16 %v489
        %v2948 = vunpack.c.h.b16 %v489
        %v2949 = vunpack.c.l.b16 %v490
        %v2950 = vunpack.c.h.b16 %v490
        %v2951 = vunpack.c.l.b16 %v491
        %v2952 = vunpack.c.h.b16 %v491
        %v2953 = vunpack.c.l.b16 %v492
        %v2954 = vunpack.c.h.b16 %v492
        %v2955 = vunpack.c.l.b16 %v493
        %v2956 = vunpack.c.h.b16 %v493
        %v2957 = vunpack.c.l.b16 %v494
        %v2958 = vunpack.c.h.b16 %v494
        %v2959 = vunpack.c.l.b16 %v495
        %v2960 = vunpack.c.h.b16 %v495
        %v2961 = vunpack.c.l.b16 %v496
        %v2962 = vunpack.c.h.b16 %v496
        %v2963 = vunpack.c.l.b16 %v497
        %v2964 = vunpack.c.h.b16 %v497
        %v2965 = vunpack.c.l.b16 %v498
        %v2966 = vunpack.c.h.b16 %v498
        %v2967 = vunpack.c.l.b16 %v499
        %v2968 = vunpack.c.h.b16 %v499
        %v2969 = vunpack.c.l.b16 %v500
        %v2970 = vunpack.c.h.b16 %v500
        %v2971 = vunpack.c.l.b16 %v501
        %v2972 = vunpack.c.h.b16 %v501
        %v2973 = vunpack.c.l.b16 %v502
        %v2974 = vunpack.c.h.b16 %v502
        %v2975 = vunpack.c.l.b16 %v503
        %v2976 = vunpack.c.h.b16 %v503
        %v2977 = vunpack.c.l.b16 %v504
        %v2978 = vunpack.c.h.b16 %v504
        %v2979 = vunpack.c.l.b16 %v505
        %v2980 = vunpack.c.h.b16 %v505
        %v2981 = vunpack.c.l.b16 %v506
        %v2982 = vunpack.c.h.b16 %v506
        %v2983 = vunpack.c.l.b16 %v507
        %v2984 = vunpack.c.h.b16 %v507
        %v2985 = vunpack.c.l.b16 %v508
        %v2986 = vunpack.c.h.b16 %v508
        %v2987 = vunpack.c.l.b16 %v509
        %v2988 = vunpack.c.h.b16 %v509
        %v2989 = vunpack.c.l.b16 %v510
        %v2990 = vunpack.c.h.b16 %v510
        %v2991 = vunpack.c.l.b16 %v511
        %v2992 = vunpack.c.h.b16 %v511
        %v2993 = vunpack.c.l.b16 %v512
        %v2994 = vunpack.c.h.b16 %v512
        %v2995 = vunpack.c.l.b16 %v513
        %v2996 = vunpack.c.h.b16 %v513
        %v2997 = vunpack.c.l.b16 %v514
        %v2998 = vunpack.c.h.b16 %v514
        %v2999 = vunpack.c.l.b16 %v515
        %v3000 = vunpack.c.h.b16 %v515
        %v3001 = vunpack.c.l.b16 %v516
        %v3002 = vunpack.c.h.b16 %v516
        %v3003 = vunpack.c.l.b16 %v517
        %v3004 = vunpack.c.h.b16 %v517
        %v3005 = vunpack.c.l.b16 %v518
        %v3006 = vunpack.c.h.b16 %v518
        %v3007 = vunpack.c.l.b16 %v519
        %v3008 = vunpack.c.h.b16 %v519
        %v3009 = vunpack.c.l.b16 %v520
        %v3010 = vunpack.c.h.b16 %v520
        %v3011 = vunpack.c.l.b16 %v521
        %v3012 = vunpack.c.h.b16 %v521
        %v3013 = vunpack.c.l.b16 %v522
        %v3014 = vunpack.c.h.b16 %v522
        %v3015 = vunpack.c.l.b16 %v523
        %v3016 = vunpack.c.h.b16 %v523
        %v3017 = vunpack.c.l.b16 %v524
        %v3018 = vunpack.c.h.b16 %v524
        %v3019 = vunpack.c.l.b16 %v525
        %v3020 = vunpack.c.h.b16 %v525
        %v3021 = vunpack.c.l.b16 %v526
        %v3022 = vunpack.c.h.b16 %v526
        %v3023 = vunpack.c.l.b16 %v527
        %v3024 = vunpack.c.h.b16 %v527
        %v3025 = vunpack.c.l.b16 %v528
        %v3026 = vunpack.c.h.b16 %v528
        %v3027 = vunpack.c.l.b16 %v529
        %v3028 = vunpack.c.h.b16 %v529
        %v3029 = vunpack.c.l.b16 %v530
        %v3030 = vunpack.c.h.b16 %v530
        %v3031 = vunpack.c.l.b16 %v531
        %v3032 = vunpack.c.h.b16 %v531
        %v3033 = vunpack.c.l.b16 %v532
        %v3034 = vunpack.c.h.b16 %v532
        %v3035 = vunpack.c.l.b16 %v533
        %v3036 = vunpack.c.h.b16 %v533
        %v3037 = vunpack.c.l.b16 %v534
        %v3038 = vunpack.c.h.b16 %v534
        %v3039 = vunpack.c.l.b16 %v535
        %v3040 = vunpack.c.h.b16 %v535
        %v3041 = vunpack.c.l.b16 %v536
        %v3042 = vunpack.c.h.b16 %v536
        %v3043 = vunpack.c.l.b16 %v537
        %v3044 = vunpack.c.h.b16 %v537
        %v3045 = vunpack.c.l.b16 %v538
        %v3046 = vunpack.c.h.b16 %v538
        %v3047 = vunpack.c.l.b16 %v539
        %v3048 = vunpack.c.h.b16 %v539
        %v3049 = vunpack.c.l.b16 %v540
        %v3050 = vunpack.c.h.b16 %v540
        %v3051 = vunpack.c.l.b16 %v541
        %v3052 = vunpack.c.h.b16 %v541
        %v3053 = vunpack.c.l.b16 %v542
        %v3054 = vunpack.c.h.b16 %v542
        %v3055 = vunpack.c.l.b16 %v543
        %v3056 = vunpack.c.h.b16 %v543
        %v3057 = vunpack.c.l.b16 %v544
        %v3058 = vunpack.c.h.b16 %v544
        %v3059 = vunpack.c.l.b16 %v545
        %v3060 = vunpack.c.h.b16 %v545
        %v3061 = vunpack.c.l.b16 %v546
        %v3062 = vunpack.c.h.b16 %v546
        %v3063 = vunpack.c.l.b16 %v547
        %v3064 = vunpack.c.h.b16 %v547
        %v3065 = vunpack.c.l.b16 %v548
        %v3066 = vunpack.c.h.b16 %v548
        %v3067 = vunpack.c.l.b16 %v549
        %v3068 = vunpack.c.h.b16 %v549
        %v3069 = vunpack.c.l.b16 %v550
        %v3070 = vunpack.c.h.b16 %v550
        %v3071 = vunpack.c.l.b16 %v551
        %v3072 = vunpack.c.h.b16 %v551
        %v3073 = vunpack.c.l.b16 %v552
        %v3074 = vunpack.c.h.b16 %v552
        %v3075 = vunpack.c.l.b16 %v553
        %v3076 = vunpack.c.h.b16 %v553
        %v3077 = vunpack.c.l.b16 %v554
        %v3078 = vunpack.c.h.b16 %v554
        %v3079 = vunpack.c.l.b16 %v555
        %v3080 = vunpack.c.h.b16 %v555
        %v3081 = vunpack.c.l.b16 %v556
        %v3082 = vunpack.c.h.b16 %v556
        %v3083 = vunpack.c.l.b16 %v557
        %v3084 = vunpack.c.h.b16 %v557
        %v3085 = vunpack.c.l.b16 %v558
        %v3086 = vunpack.c.h.b16 %v558
        %v3087 = vunpack.c.l.b16 %v559
        %v3088 = vunpack.c.h.b16 %v559
        %v3089 = vunpack.c.l.b16 %v560
        %v3090 = vunpack.c.h.b16 %v560
        %v3091 = vunpack.c.l.b16 %v561
        %v3092 = vunpack.c.h.b16 %v561
        %v3093 = vunpack.c.l.b16 %v562
        %v3094 = vunpack.c.h.b16 %v562
        %v3095 = vunpack.c.l.b16 %v563
        %v3096 = vunpack.c.h.b16 %v563
        %v3097 = vunpack.c.l.b16 %v564
        %v3098 = vunpack.c.h.b16 %v564
        %v3099 = vunpack.c.l.b16 %v565
        %v3100 = vunpack.c.h.b16 %v565
        %v3101 = vunpack.c.l.b16 %v566
        %v3102 = vunpack.c.h.b16 %v566
        %v3103 = vunpack.c.l.b16 %v567
        %v3104 = vunpack.c.h.b16 %v567
        %v3105 = vunpack.c.l.b16 %v568
        %v3106 = vunpack.c.h.b16 %v568
        %v3107 = vunpack.c.l.b16 %v569
        %v3108 = vunpack.c.h.b16 %v569
        %v3109 = vunpack.c.l.b16 %v570
        %v3110 = vunpack.c.h.b16 %v570
        %v3111 = vunpack.c.l.b16 %v571
        %v3112 = vunpack.c.h.b16 %v571
        %v3113 = vunpack.c.l.b16 %v572
        %v3114 = vunpack.c.h.b16 %v572
        %v3115 = vunpack.c.l.b16 %v573
        %v3116 = vunpack.c.h.b16 %v573
        %v3117 = vunpack.c.l.b16 %v574
        %v3118 = vunpack.c.h.b16 %v574
        %v3119 = vunpack.c.l.b16 %v575
        %v3120 = vunpack.c.h.b16 %v575
        %v3121 = vunpack.c.l.b16 %v576
        %v3122 = vunpack.c.h.b16 %v576
        %v3123 = vunpack.c.l.b16 %v577
        %v3124 = vunpack.c.h.b16 %v577
        %v3125 = vunpack.c.l.b16 %v578
        %v3126 = vunpack.c.h.b16 %v578
        %v3127 = vunpack.c.l.b16 %v579
        %v3128 = vunpack.c.h.b16 %v579
        %v3129 = vunpack.c.l.b16 %v580
        %v3130 = vunpack.c.h.b16 %v580
        %v3131 = vunpack.c.l.b16 %v581
        %v3132 = vunpack.c.h.b16 %v581
        %v3133 = vunpack.c.l.b16 %v582
        %v3134 = vunpack.c.h.b16 %v582
        %v3135 = vunpack.c.l.b16 %v583
        %v3136 = vunpack.c.h.b16 %v583
        %v3137 = vunpack.c.l.b16 %v584
        %v3138 = vunpack.c.h.b16 %v584
        %v3139 = vunpack.c.l.b16 %v585
        %v3140 = vunpack.c.h.b16 %v585
        %v3141 = vunpack.c.l.b16 %v586
        %v3142 = vunpack.c.h.b16 %v586
        %v3143 = vunpack.c.l.b16 %v587
        %v3144 = vunpack.c.h.b16 %v587
        %v3145 = vunpack.c.l.b16 %v588
        %v3146 = vunpack.c.h.b16 %v588
        %v3147 = vunpack.c.l.b16 %v589
        %v3148 = vunpack.c.h.b16 %v589
        %v3149 = vunpack.c.l.b16 %v590
        %v3150 = vunpack.c.h.b16 %v590
        %v3151 = vunpack.c.l.b16 %v591
        %v3152 = vunpack.c.h.b16 %v591
        %v3153 = vunpack.c.l.b16 %v592
        %v3154 = vunpack.c.h.b16 %v592
        %v3155 = vunpack.c.l.b16 %v593
        %v3156 = vunpack.c.h.b16 %v593
        %v3157 = vunpack.c.l.b16 %v594
        %v3158 = vunpack.c.h.b16 %v594
        %v3159 = vunpack.c.l.b16 %v595
        %v3160 = vunpack.c.h.b16 %v595
        %v3161 = vunpack.c.l.b16 %v596
        %v3162 = vunpack.c.h.b16 %v596
        %v3163 = vunpack.c.l.b16 %v597
        %v3164 = vunpack.c.h.b16 %v597
        %v3165 = vunpack.c.l.b16 %v598
        %v3166 = vunpack.c.h.b16 %v598
        %v3167 = vunpack.c.l.b16 %v599
        %v3168 = vunpack.c.h.b16 %v599
        %v3169 = vunpack.c.l.b16 %v600
        %v3170 = vunpack.c.h.b16 %v600
        %v3171 = vunpack.c.l.b16 %v601
        %v3172 = vunpack.c.h.b16 %v601
        %v3173 = vunpack.c.l.b16 %v602
        %v3174 = vunpack.c.h.b16 %v602
        %v3175 = vunpack.c.l.b16 %v603
        %v3176 = vunpack.c.h.b16 %v603
        %v3177 = vunpack.c.l.b16 %v604
        %v3178 = vunpack.c.h.b16 %v604
        %v3179 = vunpack.c.l.b16 %v605
        %v3180 = vunpack.c.h.b16 %v605
        %v3181 = vunpack.c.l.b16 %v606
        %v3182 = vunpack.c.h.b16 %v606
        %v3183 = vunpack.c.l.b16 %v607
        %v3184 = vunpack.c.h.b16 %v607
        %v3185 = vunpack.c.l.b16 %v608
        %v3186 = vunpack.c.h.b16 %v608
        %v3187 = vunpack.c.l.b16 %v609
        %v3188 = vunpack.c.h.b16 %v609
        %v3189 = vunpack.c.l.b16 %v610
        %v3190 = vunpack.c.h.b16 %v610
        %v3191 = vunpack.c.l.b16 %v611
        %v3192 = vunpack.c.h.b16 %v611
        %v3193 = vunpack.c.l.b16 %v612
        %v3194 = vunpack.c.h.b16 %v612
        %v3195 = vunpack.c.l.b16 %v613
        %v3196 = vunpack.c.h.b16 %v613
        %v3197 = vunpack.c.l.b16 %v614
        %v3198 = vunpack.c.h.b16 %v614
        %v3199 = vunpack.c.l.b16 %v615
        %v3200 = vunpack.c.h.b16 %v615
        %v3201 = vunpack.c.l.b16 %v616
        %v3202 = vunpack.c.h.b16 %v616
        %v3203 = vunpack.c.l.b16 %v617
        %v3204 = vunpack.c.h.b16 %v617
        %v3205 = vunpack.c.l.b16 %v618
        %v3206 = vunpack.c.h.b16 %v618
        %v3207 = vunpack.c.l.b16 %v619
        %v3208 = vunpack.c.h.b16 %v619
        %v3209 = vunpack.c.l.b16 %v620
        %v3210 = vunpack.c.h.b16 %v620
        %v3211 = vunpack.c.l.b16 %v621
        %v3212 = vunpack.c.h.b16 %v621
        %v3213 = vunpack.c.l.b16 %v622
        %v3214 = vunpack.c.h.b16 %v622
        %v3215 = vunpack.c.l.b16 %v623
        %v3216 = vunpack.c.h.b16 %v623
        %v3217 = vunpack.c.l.b16 %v624
        %v3218 = vunpack.c.h.b16 %v624
        %v3219 = vunpack.c.l.b16 %v625
        %v3220 = vunpack.c.h.b16 %v625
        %v3221 = vunpack.c.l.b16 %v626
        %v3222 = vunpack.c.h.b16 %v626
        %v3223 = vunpack.c.l.b16 %v627
        %v3224 = vunpack.c.h.b16 %v627
        %v3225 = vunpack.c.l.b16 %v628
        %v3226 = vunpack.c.h.b16 %v628
        %v3227 = vunpack.c.l.b16 %v629
        %v3228 = vunpack.c.h.b16 %v629
        %v3229 = vunpack.c.l.b16 %v630
        %v3230 = vunpack.c.h.b16 %v630
        %v3231 = vunpack.c.l.b16 %v631
        %v3232 = vunpack.c.h.b16 %v631
        %v3233 = vunpack.c.l.b16 %v632
        %v3234 = vunpack.c.h.b16 %v632
        %v3235 = vunpack.c.l.b16 %v633
        %v3236 = vunpack.c.h.b16 %v633
        %v3237 = vunpack.c.l.b16 %v634
        %v3238 = vunpack.c.h.b16 %v634
        %v3239 = vunpack.c.l.b16 %v635
        %v3240 = vunpack.c.h.b16 %v635
        %v3241 = vunpack.c.l.b16 %v636
        %v3242 = vunpack.c.h.b16 %v636
        %v3243 = vunpack.c.l.b16 %v637
        %v3244 = vunpack.c.h.b16 %v637
        %v3245 = vunpack.c.l.b16 %v638
        %v3246 = vunpack.c.h.b16 %v638
        %v3247 = vunpack.c.l.b16 %v639
        %v3248 = vunpack.c.h.b16 %v639
        %v3249 = vunpack.c.l.b16 %v640
        %v3250 = vunpack.c.h.b16 %v640
        %v3251 = vunpack.c.l.b16 %v641
        %v3252 = vunpack.c.h.b16 %v641
        %v3253 = vunpack.c.l.b16 %v642
        %v3254 = vunpack.c.h.b16 %v642
        %v3255 = vunpack.c.l.b16 %v643
        %v3256 = vunpack.c.h.b16 %v643
        %v3257 = vunpack.c.l.b16 %v644
        %v3258 = vunpack.c.h.b16 %v644
        %v3259 = vunpack.c.l.b16 %v645
        %v3260 = vunpack.c.h.b16 %v645
        %v3261 = vunpack.c.l.b16 %v646
        %v3262 = vunpack.c.h.b16 %v646
        %v3263 = vunpack.c.l.b16 %v647
        %v3264 = vunpack.c.h.b16 %v647
        %v3265 = vunpack.c.l.b16 %v648
        %v3266 = vunpack.c.h.b16 %v648
        %v3267 = vunpack.c.l.b16 %v649
        %v3268 = vunpack.c.h.b16 %v649
        %v3269 = vunpack.c.l.b16 %v650
        %v3270 = vunpack.c.h.b16 %v650
        %v3271 = vunpack.c.l.b16 %v651
        %v3272 = vunpack.c.h.b16 %v651
        %v3273 = vunpack.c.l.b16 %v652
        %v3274 = vunpack.c.h.b16 %v652
        %v3275 = vunpack.c.l.b16 %v653
        %v3276 = vunpack.c.h.b16 %v653
        %v3277 = vunpack.c.l.b16 %v654
        %v3278 = vunpack.c.h.b16 %v654
        %v3279 = vunpack.c.l.b16 %v655
        %v3280 = vunpack.c.h.b16 %v655
        %v3281 = vunpack.c.l.b16 %v656
        %v3282 = vunpack.c.h.b16 %v656
        %v3283 = vunpack.c.l.b16 %v657
        %v3284 = vunpack.c.h.b16 %v657
        %v3285 = vunpack.c.l.b16 %v658
        %v3286 = vunpack.c.h.b16 %v658
        %v3287 = vunpack.c.l.b16 %v659
        %v3288 = vunpack.c.h.b16 %v659
        %v3289 = vunpack.c.l.b16 %v660
        %v3290 = vunpack.c.h.b16 %v660
        %v3291 = vunpack.c.l.b16 %v661
        %v3292 = vunpack.c.h.b16 %v661
        %v3293 = vunpack.c.l.b16 %v662
        %v3294 = vunpack.c.h.b16 %v662
        %v3295 = vunpack.c.l.b16 %v663
        %v3296 = vunpack.c.h.b16 %v663
        %v3297 = vunpack.c.l.b16 %v664
        %v3298 = vunpack.c.h.b16 %v664
        %v3299 = vunpack.c.l.b16 %v665
        %v3300 = vunpack.c.h.b16 %v665
        %v3301 = vunpack.c.l.b16 %v666
        %v3302 = vunpack.c.h.b16 %v666
        %v3303 = vunpack.c.l.b16 %v667
        %v3304 = vunpack.c.h.b16 %v667
        %v3305 = vunpack.c.l.b16 %v668
        %v3306 = vunpack.c.h.b16 %v668
        %v3307 = vunpack.c.l.b16 %v669
        %v3308 = vunpack.c.h.b16 %v669
        %v3309 = vunpack.c.l.b16 %v670
        %v3310 = vunpack.c.h.b16 %v670
        %v3311 = vunpack.c.l.b16 %v671
        %v3312 = vunpack.c.h.b16 %v671
        %v3313 = vunpack.c.l.b16 %v672
        %v3314 = vunpack.c.h.b16 %v672
        %v3315 = vunpack.c.l.b16 %v673
        %v3316 = vunpack.c.h.b16 %v673
        %v3317 = vunpack.c.l.b16 %v674
        %v3318 = vunpack.c.h.b16 %v674
        %v3319 = vunpack.c.l.b16 %v675
        %v3320 = vunpack.c.h.b16 %v675
        %v3321 = vunpack.c.l.b16 %v676
        %v3322 = vunpack.c.h.b16 %v676
        %v3323 = vunpack.c.l.b16 %v677
        %v3324 = vunpack.c.h.b16 %v677
        %v3325 = vunpack.c.l.b16 %v678
        %v3326 = vunpack.c.h.b16 %v678
        %v3327 = vunpack.c.l.b16 %v679
        %v3328 = vunpack.c.h.b16 %v679
        %v3329 = vunpack.c.l.b16 %v680
        %v3330 = vunpack.c.h.b16 %v680
        %v3331 = vunpack.c.l.b16 %v681
        %v3332 = vunpack.c.h.b16 %v681
        %v3333 = vunpack.c.l.b16 %v682
        %v3334 = vunpack.c.h.b16 %v682
        %v3335 = vunpack.c.l.b16 %v683
        %v3336 = vunpack.c.h.b16 %v683
        %v3337 = vunpack.c.l.b16 %v684
        %v3338 = vunpack.c.h.b16 %v684
        %v3339 = vunpack.c.l.b16 %v685
        %v3340 = vunpack.c.h.b16 %v685
        %v3341 = vunpack.c.l.b16 %v686
        %v3342 = vunpack.c.h.b16 %v686
        %v3343 = vunpack.c.l.b16 %v687
        %v3344 = vunpack.c.h.b16 %v687
        %v3345 = vunpack.c.l.b16 %v688
        %v3346 = vunpack.c.h.b16 %v688
        %v3347 = vunpack.c.l.b16 %v689
        %v3348 = vunpack.c.h.b16 %v689
        %v3349 = vunpack.c.l.b16 %v690
        %v3350 = vunpack.c.h.b16 %v690
        %v3351 = vunpack.c.l.b16 %v691
        %v3352 = vunpack.c.h.b16 %v691
        %v3353 = vunpack.c.l.b16 %v692
        %v3354 = vunpack.c.h.b16 %v692
        %v3355 = vunpack.c.l.b16 %v693
        %v3356 = vunpack.c.h.b16 %v693
        %v3357 = vunpack.c.l.b16 %v694
        %v3358 = vunpack.c.h.b16 %v694
        %v3359 = vunpack.c.l.b16 %v695
        %v3360 = vunpack.c.h.b16 %v695
        %v3361 = vunpack.c.l.b16 %v696
        %v3362 = vunpack.c.h.b16 %v696
        %v3363 = vunpack.c.l.b16 %v697
        %v3364 = vunpack.c.h.b16 %v697
        %v3365 = vunpack.c.l.b16 %v698
        %v3366 = vunpack.c.h.b16 %v698
        %v3367 = vunpack.c.l.b16 %v699
        %v3368 = vunpack.c.h.b16 %v699
        %v3369 = vunpack.c.l.b16 %v700
        %v3370 = vunpack.c.h.b16 %v700
        %v3371 = vunpack.c.l.b16 %v701
        %v3372 = vunpack.c.h.b16 %v701
        %v3373 = vunpack.c.l.b16 %v702
        %v3374 = vunpack.c.h.b16 %v702
        %v3375 = vunpack.c.l.b16 %v703
        %v3376 = vunpack.c.h.b16 %v703
        %v3377 = vunpack.c.l.b16 %v704
        %v3378 = vunpack.c.h.b16 %v704
        %v3379 = vunpack.c.l.b16 %v705
        %v3380 = vunpack.c.h.b16 %v705
        %v3381 = vunpack.c.l.b16 %v706
        %v3382 = vunpack.c.h.b16 %v706
        %v3383 = vunpack.c.l.b16 %v707
        %v3384 = vunpack.c.h.b16 %v707
        %v3385 = vunpack.c.l.b16 %v708
        %v3386 = vunpack.c.h.b16 %v708
        %v3387 = vunpack.c.l.b16 %v709
        %v3388 = vunpack.c.h.b16 %v709
        %v3389 = vunpack.c.l.b16 %v710
        %v3390 = vunpack.c.h.b16 %v710
        %v3391 = vunpack.c.l.b16 %v711
        %v3392 = vunpack.c.h.b16 %v711
        %v3393 = vunpack.c.l.b16 %v712
        %v3394 = vunpack.c.h.b16 %v712
        %v3395 = vunpack.c.l.b16 %v713
        %v3396 = vunpack.c.h.b16 %v713
        %v3397 = vunpack.c.l.b16 %v714
        %v3398 = vunpack.c.h.b16 %v714
        %v3399 = vunpack.c.l.b16 %v715
        %v3400 = vunpack.c.h.b16 %v715
        %v3401 = vunpack.c.l.b16 %v716
        %v3402 = vunpack.c.h.b16 %v716
        %v3403 = vunpack.c.l.b16 %v717
        %v3404 = vunpack.c.h.b16 %v717
        %v3405 = vunpack.c.l.b16 %v718
        %v3406 = vunpack.c.h.b16 %v718
        %v3407 = vunpack.c.l.b16 %v719
        %v3408 = vunpack.c.h.b16 %v719
        %v3409 = vunpack.c.l.b16 %v720
        %v3410 = vunpack.c.h.b16 %v720
        %v3411 = vunpack.c.l.b16 %v721
        %v3412 = vunpack.c.h.b16 %v721
        %v3413 = vunpack.c.l.b16 %v722
        %v3414 = vunpack.c.h.b16 %v722
        %v3415 = vunpack.c.l.b16 %v723
        %v3416 = vunpack.c.h.b16 %v723
        %v3417 = vunpack.c.l.b16 %v724
        %v3418 = vunpack.c.h.b16 %v724
        %v3419 = vunpack.c.l.b16 %v725
        %v3420 = vunpack.c.h.b16 %v725
        %v3421 = vunpack.c.l.b16 %v726
        %v3422 = vunpack.c.h.b16 %v726
        %v3423 = vunpack.c.l.b16 %v727
        %v3424 = vunpack.c.h.b16 %v727
        %v3425 = vunpack.c.l.b16 %v728
        %v3426 = vunpack.c.h.b16 %v728
        %v3427 = vunpack.c.l.b16 %v729
        %v3428 = vunpack.c.h.b16 %v729
        %v3429 = vunpack.c.l.b16 %v730
        %v3430 = vunpack.c.h.b16 %v730
        %v3431 = vunpack.c.l.b16 %v731
        %v3432 = vunpack.c.h.b16 %v731
        %v3433 = vunpack.c.l.b16 %v732
        %v3434 = vunpack.c.h.b16 %v732
        %v3435 = vunpack.c.l.b16 %v733
        %v3436 = vunpack.c.h.b16 %v733
        %v3437 = vunpack.c.l.b16 %v734
        %v3438 = vunpack.c.h.b16 %v734
        %v3439 = vunpack.c.l.b16 %v735
        %v3440 = vunpack.c.h.b16 %v735
        %v3441 = vunpack.c.l.b16 %v736
        %v3442 = vunpack.c.h.b16 %v736
        %v3443 = vunpack.c.l.b16 %v737
        %v3444 = vunpack.c.h.b16 %v737
        %v3445 = vunpack.c.l.b16 %v738
        %v3446 = vunpack.c.h.b16 %v738
        %v3447 = vunpack.c.l.b16 %v739
        %v3448 = vunpack.c.h.b16 %v739
        %v3449 = vunpack.c.l.b16 %v740
        %v3450 = vunpack.c.h.b16 %v740
        %v3451 = vunpack.c.l.b16 %v741
        %v3452 = vunpack.c.h.b16 %v741
        %v3453 = vunpack.c.l.b16 %v742
        %v3454 = vunpack.c.h.b16 %v742
        %v3455 = vunpack.c.l.b16 %v743
        %v3456 = vunpack.c.h.b16 %v743
        %v3457 = vunpack.c.l.b16 %v744
        %v3458 = vunpack.c.h.b16 %v744
        %v3459 = vunpack.c.l.b16 %v745
        %v3460 = vunpack.c.h.b16 %v745
        %v3461 = vunpack.c.l.b16 %v746
        %v3462 = vunpack.c.h.b16 %v746
        %v3463 = vunpack.c.l.b16 %v747
        %v3464 = vunpack.c.h.b16 %v747
        %v3465 = vunpack.c.l.b16 %v748
        %v3466 = vunpack.c.h.b16 %v748
        %v3467 = vunpack.c.l.b16 %v749
        %v3468 = vunpack.c.h.b16 %v749
        %v3469 = vunpack.c.l.b16 %v750
        %v3470 = vunpack.c.h.b16 %v750
        %v3471 = vunpack.c.l.b16 %v751
        %v3472 = vunpack.c.h.b16 %v751
        %v3473 = vunpack.c.l.b16 %v752
        %v3474 = vunpack.c.h.b16 %v752
        %v3475 = vunpack.c.l.b16 %v753
        %v3476 = vunpack.c.h.b16 %v753
        %v3477 = vunpack.c.l.b16 %v754
        %v3478 = vunpack.c.h.b16 %v754
        %v3479 = vunpack.c.l.b16 %v755
        %v3480 = vunpack.c.h.b16 %v755
        %v3481 = vunpack.c.l.b16 %v756
        %v3482 = vunpack.c.h.b16 %v756
        %v3483 = vunpack.c.l.b16 %v757
        %v3484 = vunpack.c.h.b16 %v757
        %v3485 = vunpack.c.l.b16 %v758
        %v3486 = vunpack.c.h.b16 %v758
        %v3487 = vunpack.c.l.b16 %v759
        %v3488 = vunpack.c.h.b16 %v759
        %v3489 = vunpack.c.l.b16 %v760
        %v3490 = vunpack.c.h.b16 %v760
        %v3491 = vunpack.c.l.b16 %v761
        %v3492 = vunpack.c.h.b16 %v761
        %v3493 = vunpack.c.l.b16 %v762
        %v3494 = vunpack.c.h.b16 %v762
        %v3495 = vunpack.c.l.b16 %v763
        %v3496 = vunpack.c.h.b16 %v763
        %v3497 = vunpack.c.l.b16 %v764
        %v3498 = vunpack.c.h.b16 %v764
        %v3499 = vunpack.c.l.b16 %v765
        %v3500 = vunpack.c.h.b16 %v765
        %v3501 = vunpack.c.l.b16 %v766
        %v3502 = vunpack.c.h.b16 %v766
        %v3503 = vunpack.c.l.b16 %v767
        %v3504 = vunpack.c.h.b16 %v767
        %v3505 = vunpack.c.l.b16 %v768
        %v3506 = vunpack.c.h.b16 %v768
        %v3507 = vunpack.c.l.b16 %v769
        %v3508 = vunpack.c.h.b16 %v769
        %v3509 = vunpack.c.l.b16 %v770
        %v3510 = vunpack.c.h.b16 %v770
        %v3511 = vunpack.c.l.b16 %v771
        %v3512 = vunpack.c.h.b16 %v771
        %v3513 = vunpack.c.l.b16 %v772
        %v3514 = vunpack.c.h.b16 %v772
        %v3515 = vunpack.c.l.b16 %v773
        %v3516 = vunpack.c.h.b16 %v773
        %v3517 = vunpack.c.l.b16 %v774
        %v3518 = vunpack.c.h.b16 %v774
        %v3519 = vunpack.c.l.b16 %v775
        %v3520 = vunpack.c.h.b16 %v775
        %v3521 = vunpack.c.l.b16 %v776
        %v3522 = vunpack.c.h.b16 %v776
        %v3523 = vunpack.c.l.b16 %v777
        %v3524 = vunpack.c.h.b16 %v777
        %v3525 = vunpack.c.l.b16 %v778
        %v3526 = vunpack.c.h.b16 %v778
        %v3527 = vunpack.c.l.b16 %v779
        %v3528 = vunpack.c.h.b16 %v779
        %v3529 = vunpack.c.l.b16 %v780
        %v3530 = vunpack.c.h.b16 %v780
        %v3531 = vunpack.c.l.b16 %v781
        %v3532 = vunpack.c.h.b16 %v781
        %v3533 = vunpack.c.l.b16 %v782
        %v3534 = vunpack.c.h.b16 %v782
        %v3535 = vunpack.c.l.b16 %v783
        %v3536 = vunpack.c.h.b16 %v783
        %v3537 = vunpack.c.l.b16 %v784
        %v3538 = vunpack.c.h.b16 %v784
        %v3539 = vunpack.c.l.b16 %v785
        %v3540 = vunpack.c.h.b16 %v785
        %v3541 = vunpack.c.l.b16 %v786
        %v3542 = vunpack.c.h.b16 %v786
        %v3543 = vunpack.c.l.b16 %v787
        %v3544 = vunpack.c.h.b16 %v787
        %v3545 = vunpack.c.l.b16 %v788
        %v3546 = vunpack.c.h.b16 %v788
        %v3547 = vunpack.c.l.b16 %v789
        %v3548 = vunpack.c.h.b16 %v789
        %v3549 = vunpack.c.l.b16 %v790
        %v3550 = vunpack.c.h.b16 %v790
        %v3551 = vunpack.c.l.b16 %v791
        %v3552 = vunpack.c.h.b16 %v791
        %v3553 = vunpack.c.l.b16 %v792
        %v3554 = vunpack.c.h.b16 %v792
        %v3555 = vunpack.c.l.b16 %v793
        %v3556 = vunpack.c.h.b16 %v793
        %v3557 = vunpack.c.l.b16 %v794
        %v3558 = vunpack.c.h.b16 %v794
        %v3559 = vunpack.c.l.b16 %v795
        %v3560 = vunpack.c.h.b16 %v795
        %v3561 = vunpack.c.l.b16 %v796
        %v3562 = vunpack.c.h.b16 %v796
        %v3563 = vunpack.c.l.b16 %v797
        %v3564 = vunpack.c.h.b16 %v797
        %v3565 = vunpack.c.l.b16 %v798
        %v3566 = vunpack.c.h.b16 %v798
        %v3567 = vunpack.c.l.b16 %v799
        %v3568 = vunpack.c.h.b16 %v799
        %v3569 = vunpack.c.l.b16 %v800
        %v3570 = vunpack.c.h.b16 %v800
        %v3571 = vunpack.c.l.b16 %v801
        %v3572 = vunpack.c.h.b16 %v801
        %v3573 = vunpack.c.l.b16 %v802
        %v3574 = vunpack.c.h.b16 %v802
        %v3575 = vunpack.c.l.b16 %v803
        %v3576 = vunpack.c.h.b16 %v803
        %v3577 = vunpack.c.l.b16 %v804
        %v3578 = vunpack.c.h.b16 %v804
        %v3579 = vunpack.c.l.b16 %v805
        %v3580 = vunpack.c.h.b16 %v805
        %v3581 = vunpack.c.l.b16 %v806
        %v3582 = vunpack.c.h.b16 %v806
        %v3583 = vunpack.c.l.b16 %v807
        %v3584 = vunpack.c.h.b16 %v807
        %v3585 = vunpack.c.l.b16 %v808
        %v3586 = vunpack.c.h.b16 %v808
        %v3587 = vunpack.c.l.b16 %v809
        %v3588 = vunpack.c.h.b16 %v809
        %v3589 = vunpack.c.l.b16 %v810
        %v3590 = vunpack.c.h.b16 %v810
        %v3591 = vunpack.c.l.b16 %v811
        %v3592 = vunpack.c.h.b16 %v811
        %v3593 = vunpack.c.l.b16 %v812
        %v3594 = vunpack.c.h.b16 %v812
        %v3595 = vunpack.c.l.b16 %v813
        %v3596 = vunpack.c.h.b16 %v813
        %v3597 = vunpack.c.l.b16 %v814
        %v3598 = vunpack.c.h.b16 %v814
        %v3599 = vunpack.c.l.b16 %v815
        %v3600 = vunpack.c.h.b16 %v815
        %v3601 = vunpack.c.l.b16 %v816
        %v3602 = vunpack.c.h.b16 %v816
        %v3603 = vunpack.c.l.b16 %v817
        %v3604 = vunpack.c.h.b16 %v817
        %v3605 = vunpack.c.l.b16 %v818
        %v3606 = vunpack.c.h.b16 %v818
        %v3607 = vunpack.c.l.b16 %v819
        %v3608 = vunpack.c.h.b16 %v819
        %v3609 = vunpack.c.l.b16 %v820
        %v3610 = vunpack.c.h.b16 %v820
        %v3611 = vunpack.c.l.b16 %v821
        %v3612 = vunpack.c.h.b16 %v821
        %v3613 = vunpack.c.l.b16 %v822
        %v3614 = vunpack.c.h.b16 %v822
        %v3615 = vunpack.c.l.b16 %v823
        %v3616 = vunpack.c.h.b16 %v823
        %v3617 = vunpack.c.l.b16 %v824
        %v3618 = vunpack.c.h.b16 %v824
        %v3619 = vunpack.c.l.b16 %v825
        %v3620 = vunpack.c.h.b16 %v825
        %v3621 = vunpack.c.l.b16 %v826
        %v3622 = vunpack.c.h.b16 %v826
        %v3623 = vunpack.c.l.b16 %v827
        %v3624 = vunpack.c.h.b16 %v827
        %v3625 = vunpack.c.l.b16 %v828
        %v3626 = vunpack.c.h.b16 %v828
        %v3627 = vunpack.c.l.b16 %v829
        %v3628 = vunpack.c.h.b16 %v829
        %v3629 = vunpack.c.l.b16 %v830
        %v3630 = vunpack.c.h.b16 %v830
        %v3631 = vunpack.c.l.b16 %v831
        %v3632 = vunpack.c.h.b16 %v831
        %v3633 = vunpack.c.l.b16 %v832
        %v3634 = vunpack.c.h.b16 %v832
        %v3635 = vunpack.c.l.b16 %v833
        %v3636 = vunpack.c.h.b16 %v833
        %v3637 = vunpack.c.l.b16 %v834
        %v3638 = vunpack.c.h.b16 %v834
        %v3639 = vunpack.c.l.b16 %v835
        %v3640 = vunpack.c.h.b16 %v835
        %v3641 = vunpack.c.l.b16 %v836
        %v3642 = vunpack.c.h.b16 %v836
        %v3643 = vunpack.c.l.b16 %v837
        %v3644 = vunpack.c.h.b16 %v837
        %v3645 = vunpack.c.l.b16 %v838
        %v3646 = vunpack.c.h.b16 %v838
        %v3647 = vunpack.c.l.b16 %v839
        %v3648 = vunpack.c.h.b16 %v839
        %v3649 = vunpack.c.l.b16 %v840
        %v3650 = vunpack.c.h.b16 %v840
        %v3651 = vunpack.c.l.b16 %v841
        %v3652 = vunpack.c.h.b16 %v841
        %v3653 = vunpack.c.l.b16 %v842
        %v3654 = vunpack.c.h.b16 %v842
        %v3655 = vunpack.c.l.b16 %v843
        %v3656 = vunpack.c.h.b16 %v843
        %v3657 = vunpack.c.l.b16 %v844
        %v3658 = vunpack.c.h.b16 %v844
        %v3659 = vunpack.c.l.b16 %v845
        %v3660 = vunpack.c.h.b16 %v845
        %v3661 = vunpack.c.l.b16 %v846
        %v3662 = vunpack.c.h.b16 %v846
        %v3663 = vunpack.c.l.b16 %v847
        %v3664 = vunpack.c.h.b16 %v847
        %v3665 = vunpack.c.l.b16 %v848
        %v3666 = vunpack.c.h.b16 %v848
        %v3667 = vunpack.c.l.b16 %v849
        %v3668 = vunpack.c.h.b16 %v849
        %v3669 = vunpack.c.l.b16 %v850
        %v3670 = vunpack.c.h.b16 %v850
        %v3671 = vunpack.c.l.b16 %v851
        %v3672 = vunpack.c.h.b16 %v851
        %v3673 = vunpack.c.l.b16 %v852
        %v3674 = vunpack.c.h.b16 %v852
        %v3675 = vunpack.c.l.b16 %v853
        %v3676 = vunpack.c.h.b16 %v853
        %v3677 = vunpack.c.l.b16 %v854
        %v3678 = vunpack.c.h.b16 %v854
        %v3679 = vunpack.c.l.b16 %v855
        %v3680 = vunpack.c.h.b16 %v855
        %v3681 = vunpack.c.l.b16 %v856
        %v3682 = vunpack.c.h.b16 %v856
        %v3683 = vunpack.c.l.b16 %v857
        %v3684 = vunpack.c.h.b16 %v857
        %v3685 = vunpack.c.l.b16 %v858
        %v3686 = vunpack.c.h.b16 %v858
        %v3687 = vunpack.c.l.b16 %v859
        %v3688 = vunpack.c.h.b16 %v859
        %v3689 = vunpack.c.l.b16 %v860
        %v3690 = vunpack.c.h.b16 %v860
        %v3691 = vunpack.c.l.b16 %v861
        %v3692 = vunpack.c.h.b16 %v861
        %v3693 = vunpack.c.l.b16 %v862
        %v3694 = vunpack.c.h.b16 %v862
        %v3695 = vunpack.c.l.b16 %v863
        %v3696 = vunpack.c.h.b16 %v863
        %v3697 = vunpack.c.l.b16 %v864
        %v3698 = vunpack.c.h.b16 %v864
        %v3699 = vunpack.c.l.b16 %v865
        %v3700 = vunpack.c.h.b16 %v865
        %v3701 = vunpack.c.l.b16 %v866
        %v3702 = vunpack.c.h.b16 %v866
        %v3703 = vunpack.c.l.b16 %v867
        %v3704 = vunpack.c.h.b16 %v867
        %v3705 = vunpack.c.l.b16 %v868
        %v3706 = vunpack.c.h.b16 %v868
        %v3707 = vunpack.c.l.b16 %v869
        %v3708 = vunpack.c.h.b16 %v869
        %v3709 = vunpack.c.l.b16 %v870
        %v3710 = vunpack.c.h.b16 %v870
        %v3711 = vunpack.c.l.b16 %v871
        %v3712 = vunpack.c.h.b16 %v871
        %v3713 = vunpack.c.l.b16 %v872
        %v3714 = vunpack.c.h.b16 %v872
        %v3715 = vunpack.c.l.b16 %v873
        %v3716 = vunpack.c.h.b16 %v873
        %v3717 = vunpack.c.l.b16 %v874
        %v3718 = vunpack.c.h.b16 %v874
        %v3719 = vunpack.c.l.b16 %v875
        %v3720 = vunpack.c.h.b16 %v875
        %v3721 = vunpack.c.l.b16 %v876
        %v3722 = vunpack.c.h.b16 %v876
        %v3723 = vunpack.c.l.b16 %v877
        %v3724 = vunpack.c.h.b16 %v877
        %v3725 = vunpack.c.l.b16 %v878
        %v3726 = vunpack.c.h.b16 %v878
        %v3727 = vunpack.c.l.b16 %v879
        %v3728 = vunpack.c.h.b16 %v879
        %v3729 = vunpack.c.l.b16 %v880
        %v3730 = vunpack.c.h.b16 %v880
        %v3731 = vunpack.c.l.b16 %v881
        %v3732 = vunpack.c.h.b16 %v881
        %v3733 = vunpack.c.l.b16 %v882
        %v3734 = vunpack.c.h.b16 %v882
        %v3735 = vunpack.c.l.b16 %v883
        %v3736 = vunpack.c.h.b16 %v883
        %v3737 = vunpack.c.l.b16 %v884
        %v3738 = vunpack.c.h.b16 %v884
        %v3739 = vunpack.c.l.b16 %v885
        %v3740 = vunpack.c.h.b16 %v885
        %v3741 = vunpack.c.l.b16 %v886
        %v3742 = vunpack.c.h.b16 %v886
        %v3743 = vunpack.c.l.b16 %v887
        %v3744 = vunpack.c.h.b16 %v887
        %v3745 = vunpack.c.l.b16 %v888
        %v3746 = vunpack.c.h.b16 %v888
        %v3747 = vunpack.c.l.b16 %v889
        %v3748 = vunpack.c.h.b16 %v889
        %v3749 = vunpack.c.l.b16 %v890
        %v3750 = vunpack.c.h.b16 %v890
        %v3751 = vunpack.c.l.b16 %v891
        %v3752 = vunpack.c.h.b16 %v891
        %v3753 = vunpack.c.l.b16 %v892
        %v3754 = vunpack.c.h.b16 %v892
        %v3755 = vunpack.c.l.b16 %v893
        %v3756 = vunpack.c.h.b16 %v893
        %v3757 = vunpack.c.l.b16 %v894
        %v3758 = vunpack.c.h.b16 %v894
        %v3759 = vunpack.c.l.b16 %v895
        %v3760 = vunpack.c.h.b16 %v895
        %v3761 = vunpack.c.l.b16 %v896
        %v3762 = vunpack.c.h.b16 %v896
        %v3763 = vunpack.c.l.b16 %v897
        %v3764 = vunpack.c.h.b16 %v897
        %v3765 = vunpack.c.l.b16 %v898
        %v3766 = vunpack.c.h.b16 %v898
        %v3767 = vunpack.c.l.b16 %v899
        %v3768 = vunpack.c.h.b16 %v899
        %v3769 = vunpack.c.l.b16 %v900
        %v3770 = vunpack.c.h.b16 %v900
        %v3771 = vunpack.c.l.b16 %v901
        %v3772 = vunpack.c.h.b16 %v901
        %v3773 = vunpack.c.l.b16 %v902
        %v3774 = vunpack.c.h.b16 %v902
        %v3775 = vunpack.c.l.b16 %v903
        %v3776 = vunpack.c.h.b16 %v903
        %v3777 = vunpack.c.l.b16 %v904
        %v3778 = vunpack.c.h.b16 %v904
        %v3779 = vunpack.c.l.b16 %v905
        %v3780 = vunpack.c.h.b16 %v905
        %v3781 = vunpack.c.l.b16 %v906
        %v3782 = vunpack.c.h.b16 %v906
        %v3783 = vunpack.c.l.b16 %v907
        %v3784 = vunpack.c.h.b16 %v907
        %v3785 = vunpack.c.l.b16 %v908
        %v3786 = vunpack.c.h.b16 %v908
        %v3787 = vunpack.c.l.b16 %v909
        %v3788 = vunpack.c.h.b16 %v909
        %v3789 = vunpack.c.l.b16 %v910
        %v3790 = vunpack.c.h.b16 %v910
        %v3791 = vunpack.c.l.b16 %v911
        %v3792 = vunpack.c.h.b16 %v911
        %v3793 = vunpack.c.l.b16 %v912
        %v3794 = vunpack.c.h.b16 %v912
        %v3795 = vunpack.c.l.b16 %v913
        %v3796 = vunpack.c.h.b16 %v913
        %v3797 = vunpack.c.l.b16 %v914
        %v3798 = vunpack.c.h.b16 %v914
        %v3799 = vunpack.c.l.b16 %v915
        %v3800 = vunpack.c.h.b16 %v915
        %v3801 = vunpack.c.l.b16 %v916
        %v3802 = vunpack.c.h.b16 %v916
        %v3803 = vunpack.c.l.b16 %v917
        %v3804 = vunpack.c.h.b16 %v917
        %v3805 = vunpack.c.l.b16 %v918
        %v3806 = vunpack.c.h.b16 %v918
        %v3807 = vunpack.c.l.b16 %v919
        %v3808 = vunpack.c.h.b16 %v919
        %v3809 = vunpack.c.l.b16 %v920
        %v3810 = vunpack.c.h.b16 %v920
        %v3811 = vunpack.c.l.b16 %v921
        %v3812 = vunpack.c.h.b16 %v921
        %v3813 = vunpack.c.l.b16 %v922
        %v3814 = vunpack.c.h.b16 %v922
        %v3815 = vunpack.c.l.b16 %v923
        %v3816 = vunpack.c.h.b16 %v923
        %v3817 = vunpack.c.l.b16 %v924
        %v3818 = vunpack.c.h.b16 %v924
        %v3819 = vunpack.c.l.b16 %v925
        %v3820 = vunpack.c.h.b16 %v925
        %v3821 = vunpack.c.l.b16 %v926
        %v3822 = vunpack.c.h.b16 %v926
        %v3823 = vunpack.c.l.b16 %v927
        %v3824 = vunpack.c.h.b16 %v927
        %v3825 = vunpack.c.l.b16 %v928
        %v3826 = vunpack.c.h.b16 %v928
        %v3827 = vunpack.c.l.b16 %v929
        %v3828 = vunpack.c.h.b16 %v929
        %v3829 = vunpack.c.l.b16 %v930
        %v3830 = vunpack.c.h.b16 %v930
        %v3831 = vunpack.c.l.b16 %v931
        %v3832 = vunpack.c.h.b16 %v931
        %v3833 = vunpack.c.l.b16 %v932
        %v3834 = vunpack.c.h.b16 %v932
        %v3835 = vunpack.c.l.b16 %v933
        %v3836 = vunpack.c.h.b16 %v933
        %v3837 = vunpack.c.l.b16 %v934
        %v3838 = vunpack.c.h.b16 %v934
        %v3839 = vunpack.c.l.b16 %v935
        %v3840 = vunpack.c.h.b16 %v935
        %v3841 = vunpack.c.l.b16 %v936
        %v3842 = vunpack.c.h.b16 %v936
        %v3843 = vunpack.c.l.b16 %v937
        %v3844 = vunpack.c.h.b16 %v937
        %v3845 = vunpack.c.l.b16 %v938
        %v3846 = vunpack.c.h.b16 %v938
        %v3847 = vunpack.c.l.b16 %v939
        %v3848 = vunpack.c.h.b16 %v939
        %v3849 = vunpack.c.l.b16 %v940
        %v3850 = vunpack.c.h.b16 %v940
        %v3851 = vunpack.c.l.b16 %v941
        %v3852 = vunpack.c.h.b16 %v941
        %v3853 = vunpack.c.l.b16 %v942
        %v3854 = vunpack.c.h.b16 %v942
        %v3855 = vunpack.c.l.b16 %v943
        %v3856 = vunpack.c.h.b16 %v943
        %v3857 = vunpack.c.l.b16 %v944
        %v3858 = vunpack.c.h.b16 %v944
        %v3859 = vunpack.c.l.b16 %v945
        %v3860 = vunpack.c.h.b16 %v945
        %v3861 = vunpack.c.l.b16 %v946
        %v3862 = vunpack.c.h.b16 %v946
        %v3863 = vunpack.c.l.b16 %v947
        %v3864 = vunpack.c.h.b16 %v947
        %v3865 = vunpack.c.l.b16 %v948
        %v3866 = vunpack.c.h.b16 %v948
        %v3867 = vunpack.c.l.b16 %v949
        %v3868 = vunpack.c.h.b16 %v949
        %v3869 = vunpack.c.l.b16 %v950
        %v3870 = vunpack.c.h.b16 %v950
        %v3871 = vunpack.c.l.b16 %v951
        %v3872 = vunpack.c.h.b16 %v951
        %v3873 = vunpack.c.l.b16 %v952
        %v3874 = vunpack.c.h.b16 %v952
        %v3875 = vunpack.c.l.b16 %v953
        %v3876 = vunpack.c.h.b16 %v953
        %v3877 = vunpack.c.l.b16 %v954
        %v3878 = vunpack.c.h.b16 %v954
        %v3879 = vunpack.c.l.b16 %v955
        %v3880 = vunpack.c.h.b16 %v955
        %v3881 = vunpack.c.l.b16 %v956
        %v3882 = vunpack.c.h.b16 %v956
        %v3883 = vunpack.c.l.b16 %v957
        %v3884 = vunpack.c.h.b16 %v957
        %v3885 = vunpack.c.l.b16 %v958
        %v3886 = vunpack.c.h.b16 %v958
        %v3887 = vunpack.c.l.b16 %v959
        %v3888 = vunpack.c.h.b16 %v959
        %v3889 = vunpack.c.l.b16 %v960
        %v3890 = vunpack.c.h.b16 %v960
        %v3891 = vunpack.c.l.b16 %v961
        %v3892 = vunpack.c.h.b16 %v961
        %v3893 = vunpack.c.l.b16 %v962
        %v3894 = vunpack.c.h.b16 %v962
        %v3895 = vunpack.c.l.b16 %v963
        %v3896 = vunpack.c.h.b16 %v963
        %v3897 = vunpack.c.l.b16 %v964
        %v3898 = vunpack.c.h.b16 %v964
        %v3899 = vunpack.c.l.b16 %v965
        %v3900 = vunpack.c.h.b16 %v965
        %v3901 = vunpack.c.l.b16 %v966
        %v3902 = vunpack.c.h.b16 %v966
        %v3903 = vunpack.c.l.b16 %v967
        %v3904 = vunpack.c.h.b16 %v967
        %v3905 = vunpack.c.l.b16 %v968
        %v3906 = vunpack.c.h.b16 %v968
        %v3907 = vunpack.c.l.b16 %v969
        %v3908 = vunpack.c.h.b16 %v969
        %v3909 = vunpack.c.l.b16 %v970
        %v3910 = vunpack.c.h.b16 %v970
        %v3911 = vunpack.c.l.b16 %v971
        %v3912 = vunpack.c.h.b16 %v971
        %v3913 = vunpack.c.l.b16 %v972
        %v3914 = vunpack.c.h.b16 %v972
        %v3915 = vunpack.c.l.b16 %v973
        %v3916 = vunpack.c.h.b16 %v973
        %v3917 = vunpack.c.l.b16 %v974
        %v3918 = vunpack.c.h.b16 %v974
        %v3919 = vunpack.c.l.b16 %v975
        %v3920 = vunpack.c.h.b16 %v975
        %v3921 = vunpack.c.l.b16 %v976
        %v3922 = vunpack.c.h.b16 %v976
        %v3923 = vunpack.c.l.b16 %v977
        %v3924 = vunpack.c.h.b16 %v977
        %v3925 = vunpack.c.l.b16 %v978
        %v3926 = vunpack.c.h.b16 %v978
        %v3927 = vunpack.c.l.b16 %v979
        %v3928 = vunpack.c.h.b16 %v979
        %v3929 = vunpack.c.l.b16 %v980
        %v3930 = vunpack.c.h.b16 %v980
        %v3931 = vunpack.c.l.b16 %v981
        %v3932 = vunpack.c.h.b16 %v981
        %v3933 = vunpack.c.l.b16 %v982
        %v3934 = vunpack.c.h.b16 %v982
        %v3935 = vunpack.c.l.b16 %v983
        %v3936 = vunpack.c.h.b16 %v983
        %v3937 = vunpack.c.l.b16 %v984
        %v3938 = vunpack.c.h.b16 %v984
        %v3939 = vunpack.c.l.b16 %v985
        %v3940 = vunpack.c.h.b16 %v985
        %v3941 = vunpack.c.l.b16 %v986
        %v3942 = vunpack.c.h.b16 %v986
        %v3943 = vunpack.c.l.b16 %v987
        %v3944 = vunpack.c.h.b16 %v987
        %v3945 = vunpack.c.l.b16 %v988
        %v3946 = vunpack.c.h.b16 %v988
        %v3947 = vunpack.c.l.b16 %v989
        %v3948 = vunpack.c.h.b16 %v989
        %v3949 = vunpack.c.l.b16 %v990
        %v3950 = vunpack.c.h.b16 %v990
        %v3951 = vunpack.c.l.b16 %v991
        %v3952 = vunpack.c.h.b16 %v991
        %v3953 = vunpack.c.l.b16 %v992
        %v3954 = vunpack.c.h.b16 %v992
        %v3955 = vunpack.c.l.b16 %v993
        %v3956 = vunpack.c.h.b16 %v993
        %v3957 = vunpack.c.l.b16 %v994
        %v3958 = vunpack.c.h.b16 %v994
        %v3959 = vunpack.c.l.b16 %v995
        %v3960 = vunpack.c.h.b16 %v995
        %v3961 = vunpack.c.l.b16 %v996
        %v3962 = vunpack.c.h.b16 %v996
        %v3963 = vunpack.c.l.b16 %v997
        %v3964 = vunpack.c.h.b16 %v997
        %v3965 = vunpack.c.l.b16 %v998
        %v3966 = vunpack.c.h.b16 %v998
        %v3967 = vunpack.c.l.b16 %v999
        %v3968 = vunpack.c.h.b16 %v999
        %v3969 = vunpack.c.l.b16 %v1000
        %v3970 = vunpack.c.h.b16 %v1000
        %v3971 = vunpack.c.l.b16 %v1001
        %v3972 = vunpack.c.h.b16 %v1001
        %v3973 = vunpack.c.l.b16 %v1002
        %v3974 = vunpack.c.h.b16 %v1002
        %v3975 = vunpack.c.l.b16 %v1003
        %v3976 = vunpack.c.h.b16 %v1003
        %v3977 = vunpack.c.l.b16 %v1004
        %v3978 = vunpack.c.h.b16 %v1004
        %v3979 = vunpack.c.l.b16 %v1005
        %v3980 = vunpack.c.h.b16 %v1005
        %v3981 = vunpack.c.l.b16 %v1006
        %v3982 = vunpack.c.h.b16 %v1006
        %v3983 = vunpack.c.l.b16 %v1007
        %v3984 = vunpack.c.h.b16 %v1007
        %v3985 = vunpack.c.l.b16 %v1008
        %v3986 = vunpack.c.h.b16 %v1008
        %v3987 = vunpack.c.l.b16 %v1009
        %v3988 = vunpack.c.h.b16 %v1009
        %v3989 = vunpack.c.l.b16 %v1010
        %v3990 = vunpack.c.h.b16 %v1010
        %v3991 = vunpack.c.l.b16 %v1011
        %v3992 = vunpack.c.h.b16 %v1011
        %v3993 = vunpack.c.l.b16 %v1012
        %v3994 = vunpack.c.h.b16 %v1012
        %v3995 = vunpack.c.l.b16 %v1013
        %v3996 = vunpack.c.h.b16 %v1013
        %v3997 = vunpack.c.l.b16 %v1014
        %v3998 = vunpack.c.h.b16 %v1014
        %v3999 = vunpack.c.l.b16 %v1015
        %v4000 = vunpack.c.h.b16 %v1015
        %v4001 = vunpack.c.l.b16 %v1016
        %v4002 = vunpack.c.h.b16 %v1016
        %v4003 = vunpack.c.l.b16 %v1017
        %v4004 = vunpack.c.h.b16 %v1017
        %v4005 = vunpack.c.l.b16 %v1018
        %v4006 = vunpack.c.h.b16 %v1018
        %v4007 = vunpack.c.l.b16 %v1019
        %v4008 = vunpack.c.h.b16 %v1019
        %v4009 = vunpack.c.l.b16 %v1020
        %v4010 = vunpack.c.h.b16 %v1020
        %v4011 = vunpack.c.l.b16 %v1021
        %v4012 = vunpack.c.h.b16 %v1021
        %v4013 = vunpack.c.l.b16 %v1022
        %v4014 = vunpack.c.h.b16 %v1022
        %v4015 = vunpack.c.l.b16 %v1023
        %v4016 = vunpack.c.h.b16 %v1023
        %v4017 = vunpack.c.l.b16 %v1024
        %v4018 = vunpack.c.h.b16 %v1024
        %v4019 = vunpack.c.l.b16 %v1025
        %v4020 = vunpack.c.h.b16 %v1025
        %v4021 = vunpack.c.l.b16 %v1026
        %v4022 = vunpack.c.h.b16 %v1026
        %v4023 = vunpack.c.l.b16 %v1027
        %v4024 = vunpack.c.h.b16 %v1027
        %v4025 = vunpack.c.l.b16 %v1028
        %v4026 = vunpack.c.h.b16 %v1028
        %v4027 = vunpack.c.l.b16 %v1029
        %v4028 = vunpack.c.h.b16 %v1029
        %v4029 = vunpack.c.l.b16 %v1030
        %v4030 = vunpack.c.h.b16 %v1030
        %v4031 = vunpack.c.l.b16 %v1031
        %v4032 = vunpack.c.h.b16 %v1031
        %v4033 = vunpack.c.l.b16 %v1032
        %v4034 = vunpack.c.h.b16 %v1032
        %v4035 = vunpack.c.l.b16 %v1033
        %v4036 = vunpack.c.h.b16 %v1033
        %v4037 = vunpack.c.l.b16 %v1034
        %v4038 = vunpack.c.h.b16 %v1034
        %v4039 = vunpack.c.l.b16 %v1035
        %v4040 = vunpack.c.h.b16 %v1035
        %v4041 = vunpack.c.l.b16 %v1036
        %v4042 = vunpack.c.h.b16 %v1036
        %v4043 = vunpack.c.l.b16 %v1037
        %v4044 = vunpack.c.h.b16 %v1037
        %v4045 = vunpack.c.l.b16 %v1038
        %v4046 = vunpack.c.h.b16 %v1038
        %v4047 = vunpack.c.l.b16 %v1039
        %v4048 = vunpack.c.h.b16 %v1039
        %v4049 = vunpack.c.l.b16 %v1040
        %v4050 = vunpack.c.h.b16 %v1040
        %v4051 = vunpack.c.l.b16 %v1041
        %v4052 = vunpack.c.h.b16 %v1041
        %v4053 = vunpack.c.l.b16 %v1042
        %v4054 = vunpack.c.h.b16 %v1042
        %v4055 = vunpack.c.l.b16 %v1043
        %v4056 = vunpack.c.h.b16 %v1043
        %v4057 = vunpack.c.l.b16 %v1044
        %v4058 = vunpack.c.h.b16 %v1044
        %v4059 = vunpack.c.l.b16 %v1045
        %v4060 = vunpack.c.h.b16 %v1045
        %v4061 = vunpack.c.l.b16 %v1046
        %v4062 = vunpack.c.h.b16 %v1046
        %v4063 = vunpack.c.l.b16 %v1047
        %v4064 = vunpack.c.h.b16 %v1047
        %v4065 = vunpack.c.l.b16 %v1048
        %v4066 = vunpack.c.h.b16 %v1048
        %v4067 = vunpack.c.l.b16 %v1049
        %v4068 = vunpack.c.h.b16 %v1049
        %v4069 = vunpack.c.l.b16 %v1050
        %v4070 = vunpack.c.h.b16 %v1050
        %v4071 = vunpack.c.l.b16 %v1051
        %v4072 = vunpack.c.h.b16 %v1051
        %v4073 = vunpack.c.l.b16 %v1052
        %v4074 = vunpack.c.h.b16 %v1052
        %v4075 = vunpack.c.l.b16 %v1053
        %v4076 = vunpack.c.h.b16 %v1053
        %v4077 = vunpack.c.l.b16 %v1054
        %v4078 = vunpack.c.h.b16 %v1054
        %v4079 = vunpack.c.l.b16 %v1055
        %v4080 = vunpack.c.h.b16 %v1055
        %v4081 = vunpack.c.l.b16 %v1056
        %v4082 = vunpack.c.h.b16 %v1056
        %v4083 = vunpack.c.l.b16 %v1057
        %v4084 = vunpack.c.h.b16 %v1057
        %v4085 = vunpack.c.l.b16 %v1058
        %v4086 = vunpack.c.h.b16 %v1058
        %v4087 = vunpack.c.l.b16 %v1059
        %v4088 = vunpack.c.h.b16 %v1059
        %v4089 = vunpack.c.l.b16 %v1060
        %v4090 = vunpack.c.h.b16 %v1060
        %v4091 = vunpack.c.l.b16 %v1061
        %v4092 = vunpack.c.h.b16 %v1061
        %v4093 = vunpack.c.l.b16 %v1062
        %v4094 = vunpack.c.h.b16 %v1062
        %v4095 = vunpack.c.l.b16 %v1063
        %v4096 = vunpack.c.h.b16 %v1063
        %v4097 = vunpack.c.l.b16 %v1064
        %v4098 = vunpack.c.h.b16 %v1064
        %v4099 = vunpack.c.l.b16 %v1065
        %v4100 = vunpack.c.h.b16 %v1065
        %v4101 = vunpack.c.l.b16 %v1066
        %v4102 = vunpack.c.h.b16 %v1066
        %v4103 = vunpack.c.l.b16 %v1067
        %v4104 = vunpack.c.h.b16 %v1067
        %v4105 = vunpack.c.l.b16 %v1068
        %v4106 = vunpack.c.h.b16 %v1068
        %v4107 = vunpack.c.l.b16 %v1069
        %v4108 = vunpack.c.h.b16 %v1069
        %v4109 = vunpack.c.l.b16 %v1070
        %v4110 = vunpack.c.h.b16 %v1070
        %v4111 = vunpack.c.l.b16 %v1071
        %v4112 = vunpack.c.h.b16 %v1071
        %v4113 = vunpack.c.l.b16 %v1072
        %v4114 = vunpack.c.h.b16 %v1072
        %v4115 = vunpack.c.l.b16 %v1073
        %v4116 = vunpack.c.h.b16 %v1073
        %v4117 = vunpack.c.l.b16 %v1074
        %v4118 = vunpack.c.h.b16 %v1074
        %v4119 = vunpack.c.l.b16 %v1075
        %v4120 = vunpack.c.h.b16 %v1075
        %v4121 = vunpack.c.l.b16 %v1076
        %v4122 = vunpack.c.h.b16 %v1076
        %v4123 = vunpack.c.l.b16 %v1077
        %v4124 = vunpack.c.h.b16 %v1077
        %v4125 = vunpack.c.l.b16 %v1078
        %v4126 = vunpack.c.h.b16 %v1078
        %v4127 = vunpack.c.l.b16 %v1079
        %v4128 = vunpack.c.h.b16 %v1079
        %v4129 = vunpack.c.l.b16 %v1080
        %v4130 = vunpack.c.h.b16 %v1080
        %v4131 = vunpack.c.l.b16 %v1081
        %v4132 = vunpack.c.h.b16 %v1081
        %v4133 = vunpack.c.l.b16 %v1082
        %v4134 = vunpack.c.h.b16 %v1082
        %v4135 = vunpack.c.l.b16 %v1083
        %v4136 = vunpack.c.h.b16 %v1083
        %v4137 = vunpack.c.l.b16 %v1084
        %v4138 = vunpack.c.h.b16 %v1084
        %v4139 = vunpack.c.l.b16 %v1085
        %v4140 = vunpack.c.h.b16 %v1085
        %v4141 = vunpack.c.l.b16 %v1086
        %v4142 = vunpack.c.h.b16 %v1086
        %v4143 = vunpack.c.l.b16 %v1087
        %v4144 = vunpack.c.h.b16 %v1087
        %v4145 = vunpack.c.l.b16 %v1088
        %v4146 = vunpack.c.h.b16 %v1088
        %v4147 = vunpack.c.l.b16 %v1089
        %v4148 = vunpack.c.h.b16 %v1089
        %v4149 = vunpack.c.l.b16 %v1090
        %v4150 = vunpack.c.h.b16 %v1090
        %v4151 = vunpack.c.l.b16 %v1091
        %v4152 = vunpack.c.h.b16 %v1091
        %v4153 = vunpack.c.l.b16 %v1092
        %v4154 = vunpack.c.h.b16 %v1092
        %v4155 = vunpack.c.l.b16 %v1093
        %v4156 = vunpack.c.h.b16 %v1093
        %v4157 = vunpack.c.l.b16 %v1094
        %v4158 = vunpack.c.h.b16 %v1094
        %v4159 = vunpack.c.l.b16 %v1095
        %v4160 = vunpack.c.h.b16 %v1095
        %v4161 = vunpack.c.l.b16 %v1096
        %v4162 = vunpack.c.h.b16 %v1096
        %v4163 = vunpack.c.l.b16 %v1097
        %v4164 = vunpack.c.h.b16 %v1097
        %v4165 = vunpack.c.l.b16 %v1098
        %v4166 = vunpack.c.h.b16 %v1098
        %v4167 = vunpack.c.l.b16 %v1099
        %v4168 = vunpack.c.h.b16 %v1099
        %v4169 = vunpack.c.l.b16 %v1100
        %v4170 = vunpack.c.h.b16 %v1100
        %v4171 = vunpack.c.l.b16 %v1101
        %v4172 = vunpack.c.h.b16 %v1101
        %v4173 = vunpack.c.l.b16 %v1102
        %v4174 = vunpack.c.h.b16 %v1102
        %v4175 = vunpack.c.l.b16 %v1103
        %v4176 = vunpack.c.h.b16 %v1103
        %v4177 = vunpack.c.l.b16 %v1104
        %v4178 = vunpack.c.h.b16 %v1104
        %v4179 = vunpack.c.l.b16 %v1105
        %v4180 = vunpack.c.h.b16 %v1105
        %v4181 = vunpack.c.l.b16 %v1106
        %v4182 = vunpack.c.h.b16 %v1106
        %v4183 = vunpack.c.l.b16 %v1107
        %v4184 = vunpack.c.h.b16 %v1107
        %v4185 = vunpack.c.l.b16 %v1108
        %v4186 = vunpack.c.h.b16 %v1108
        %v4187 = vunpack.c.l.b16 %v1109
        %v4188 = vunpack.c.h.b16 %v1109
        %v4189 = vunpack.c.l.b16 %v1110
        %v4190 = vunpack.c.h.b16 %v1110
        %v4191 = vunpack.c.l.b16 %v1111
        %v4192 = vunpack.c.h.b16 %v1111
        %v4193 = vunpack.c.l.b16 %v1112
        %v4194 = vunpack.c.h.b16 %v1112
        %v4195 = vunpack.c.l.b16 %v1113
        %v4196 = vunpack.c.h.b16 %v1113
        %v4197 = vunpack.c.l.b16 %v1114
        %v4198 = vunpack.c.h.b16 %v1114
        %v4199 = vunpack.c.l.b16 %v1115
        %v4200 = vunpack.c.h.b16 %v1115
        %v4201 = vunpack.c.l.b16 %v1116
        %v4202 = vunpack.c.h.b16 %v1116
        %v4203 = vunpack.c.l.b16 %v1117
        %v4204 = vunpack.c.h.b16 %v1117
        %v4205 = vunpack.c.l.b16 %v1118
        %v4206 = vunpack.c.h.b16 %v1118
        %v4207 = vunpack.c.l.b16 %v1119
        %v4208 = vunpack.c.h.b16 %v1119
        %v4209 = vunpack.c.l.b16 %v1120
        %v4210 = vunpack.c.h.b16 %v1120
        %v4211 = vunpack.c.l.b16 %v1121
        %v4212 = vunpack.c.h.b16 %v1121
        %v4213 = vunpack.c.l.b16 %v1122
        %v4214 = vunpack.c.h.b16 %v1122
        %v4215 = vunpack.c.l.b16 %v1123
        %v4216 = vunpack.c.h.b16 %v1123
        %v4217 = vunpack.c.l.b16 %v1124
        %v4218 = vunpack.c.h.b16 %v1124
        %v4219 = vunpack.c.l.b16 %v1125
        %v4220 = vunpack.c.h.b16 %v1125
        %v4221 = vunpack.c.l.b16 %v1126
        %v4222 = vunpack.c.h.b16 %v1126
        %v4223 = vunpack.c.l.b16 %v1127
        %v4224 = vunpack.c.h.b16 %v1127
        %v4225 = vunpack.c.l.b16 %v1128
        %v4226 = vunpack.c.h.b16 %v1128
        %v4227 = vunpack.c.l.b16 %v1129
        %v4228 = vunpack.c.h.b16 %v1129
        %v4229 = vunpack.c.l.b16 %v1130
        %v4230 = vunpack.c.h.b16 %v1130
        %v4231 = vunpack.c.l.b16 %v1131
        %v4232 = vunpack.c.h.b16 %v1131
        %v4233 = vunpack.c.l.b16 %v1132
        %v4234 = vunpack.c.h.b16 %v1132
        %v4235 = vunpack.c.l.b16 %v1133
        %v4236 = vunpack.c.h.b16 %v1133
        %v4237 = vunpack.c.l.b16 %v1134
        %v4238 = vunpack.c.h.b16 %v1134
        %v4239 = vunpack.c.l.b16 %v1135
        %v4240 = vunpack.c.h.b16 %v1135
        %v4241 = vunpack.c.l.b16 %v1136
        %v4242 = vunpack.c.h.b16 %v1136
        %v4243 = vunpack.c.l.b16 %v1137
        %v4244 = vunpack.c.h.b16 %v1137
        %v4245 = vunpack.c.l.b16 %v1138
        %v4246 = vunpack.c.h.b16 %v1138
        %v4247 = vunpack.c.l.b16 %v1139
        %v4248 = vunpack.c.h.b16 %v1139
        %v4249 = vunpack.c.l.b16 %v1140
        %v4250 = vunpack.c.h.b16 %v1140
        %v4251 = vunpack.c.l.b16 %v1141
        %v4252 = vunpack.c.h.b16 %v1141
        %v4253 = vunpack.c.l.b16 %v1142
        %v4254 = vunpack.c.h.b16 %v1142
        %v4255 = vunpack.c.l.b16 %v1143
        %v4256 = vunpack.c.h.b16 %v1143
        %v4257 = vunpack.c.l.b16 %v1144
        %v4258 = vunpack.c.h.b16 %v1144
        %v4259 = vunpack.c.l.b16 %v1145
        %v4260 = vunpack.c.h.b16 %v1145
        %v4261 = vunpack.c.l.b16 %v1146
        %v4262 = vunpack.c.h.b16 %v1146
        %v4263 = vunpack.c.l.b16 %v1147
        %v4264 = vunpack.c.h.b16 %v1147
        %v4265 = vunpack.c.l.b16 %v1148
        %v4266 = vunpack.c.h.b16 %v1148
        %v4267 = vunpack.c.l.b16 %v1149
        %v4268 = vunpack.c.h.b16 %v1149
        %v4269 = vunpack.c.l.b16 %v1150
        %v4270 = vunpack.c.h.b16 %v1150
        %v4271 = vunpack.c.l.b16 %v1151
        %v4272 = vunpack.c.h.b16 %v1151
        %v4273 = vunpack.c.l.b16 %v1152
        %v4274 = vunpack.c.h.b16 %v1152
        %v4275 = vunpack.c.l.b16 %v1153
        %v4276 = vunpack.c.h.b16 %v1153
        %v4277 = vunpack.c.l.b16 %v1154
        %v4278 = vunpack.c.h.b16 %v1154
        %v4279 = vunpack.c.l.b16 %v1155
        %v4280 = vunpack.c.h.b16 %v1155
        %v4281 = vunpack.c.l.b16 %v1156
        %v4282 = vunpack.c.h.b16 %v1156
        %v4283 = vunpack.c.l.b16 %v1157
        %v4284 = vunpack.c.h.b16 %v1157
        %v4285 = vunpack.c.l.b16 %v1158
        %v4286 = vunpack.c.h.b16 %v1158
        %v4287 = vunpack.c.l.b16 %v1159
        %v4288 = vunpack.c.h.b16 %v1159
        %v4289 = vunpack.c.l.b16 %v1160
        %v4290 = vunpack.c.h.b16 %v1160
        %v4291 = vunpack.c.l.b16 %v1161
        %v4292 = vunpack.c.h.b16 %v1161
        %v4293 = vunpack.c.l.b16 %v1162
        %v4294 = vunpack.c.h.b16 %v1162
        %v4295 = vunpack.c.l.b16 %v1163
        %v4296 = vunpack.c.h.b16 %v1163
        %v4297 = vunpack.c.l.b16 %v1164
        %v4298 = vunpack.c.h.b16 %v1164
        %v4299 = vunpack.c.l.b16 %v1165
        %v4300 = vunpack.c.h.b16 %v1165
        %v4301 = vunpack.c.l.b16 %v1166
        %v4302 = vunpack.c.h.b16 %v1166
        %v4303 = vunpack.c.l.b16 %v1167
        %v4304 = vunpack.c.h.b16 %v1167
        %v4305 = vunpack.c.l.b16 %v1168
        %v4306 = vunpack.c.h.b16 %v1168
        %v4307 = vunpack.c.l.b16 %v1169
        %v4308 = vunpack.c.h.b16 %v1169
        %v4309 = vunpack.c.l.b16 %v1170
        %v4310 = vunpack.c.h.b16 %v1170
        %v4311 = vunpack.c.l.b16 %v1171
        %v4312 = vunpack.c.h.b16 %v1171
        %v4313 = vunpack.c.l.b16 %v1172
        %v4314 = vunpack.c.h.b16 %v1172
        %v4315 = vunpack.c.l.b16 %v1173
        %v4316 = vunpack.c.h.b16 %v1173
        %v4317 = vunpack.c.l.b16 %v1174
        %v4318 = vunpack.c.h.b16 %v1174
        %v4319 = vunpack.c.l.b16 %v1175
        %v4320 = vunpack.c.h.b16 %v1175
        %v4321 = vunpack.c.l.b16 %v1176
        %v4322 = vunpack.c.h.b16 %v1176
        %v4323 = vunpack.c.l.b16 %v1177
        %v4324 = vunpack.c.h.b16 %v1177
        %v4325 = vunpack.c.l.b16 %v1178
        %v4326 = vunpack.c.h.b16 %v1178
        %v4327 = vunpack.c.l.b16 %v1179
        %v4328 = vunpack.c.h.b16 %v1179
        %v4329 = vunpack.c.l.b16 %v1180
        %v4330 = vunpack.c.h.b16 %v1180
        %v4331 = vunpack.c.l.b16 %v1181
        %v4332 = vunpack.c.h.b16 %v1181
        %v4333 = vunpack.c.l.b16 %v1182
        %v4334 = vunpack.c.h.b16 %v1182
        %v4335 = vunpack.c.l.b16 %v1183
        %v4336 = vunpack.c.h.b16 %v1183
        %v4337 = vunpack.c.l.b16 %v1184
        %v4338 = vunpack.c.h.b16 %v1184
        %v4339 = vunpack.c.l.b16 %v1185
        %v4340 = vunpack.c.h.b16 %v1185
        %v4341 = vunpack.c.l.b16 %v1186
        %v4342 = vunpack.c.h.b16 %v1186
        %v4343 = vunpack.c.l.b16 %v1187
        %v4344 = vunpack.c.h.b16 %v1187
        %v4345 = vunpack.c.l.b16 %v1188
        %v4346 = vunpack.c.h.b16 %v1188
        %v4347 = vunpack.c.l.b16 %v1189
        %v4348 = vunpack.c.h.b16 %v1189
        %v4349 = vunpack.c.l.b16 %v1190
        %v4350 = vunpack.c.h.b16 %v1190
        %v4351 = vunpack.c.l.b16 %v1191
        %v4352 = vunpack.c.h.b16 %v1191
        %v4353 = vunpack.c.l.b16 %v1192
        %v4354 = vunpack.c.h.b16 %v1192
        %v4355 = vunpack.c.l.b16 %v1193
        %v4356 = vunpack.c.h.b16 %v1193
        %v4357 = vunpack.c.l.b16 %v1194
        %v4358 = vunpack.c.h.b16 %v1194
        %v4359 = vunpack.c.l.b16 %v1195
        %v4360 = vunpack.c.h.b16 %v1195
        %v4361 = vunpack.c.l.b16 %v1196
        %v4362 = vunpack.c.h.b16 %v1196
        %v4363 = vunpack.c.l.b16 %v1197
        %v4364 = vunpack.c.h.b16 %v1197
        %v4365 = vunpack.c.l.b16 %v1198
        %v4366 = vunpack.c.h.b16 %v1198
        %v4367 = vunpack.c.l.b16 %v1199
        %v4368 = vunpack.c.h.b16 %v1199
        %v4369 = vunpack.c.l.b16 %v1200
        %v4370 = vunpack.c.h.b16 %v1200
        %v4371 = vunpack.c.l.b16 %v1201
        %v4372 = vunpack.c.h.b16 %v1201
        %v4373 = vunpack.c.l.b16 %v1202
        %v4374 = vunpack.c.h.b16 %v1202
        %v4375 = vunpack.c.l.b16 %v1203
        %v4376 = vunpack.c.h.b16 %v1203
        %v4377 = vunpack.c.l.b16 %v1204
        %v4378 = vunpack.c.h.b16 %v1204
        %v4379 = vunpack.c.l.b16 %v1205
        %v4380 = vunpack.c.h.b16 %v1205
        %v4381 = vunpack.c.l.b16 %v1206
        %v4382 = vunpack.c.h.b16 %v1206
        %v4383 = vunpack.c.l.b16 %v1207
        %v4384 = vunpack.c.h.b16 %v1207
        %v4385 = vunpack.c.l.b16 %v1208
        %v4386 = vunpack.c.h.b16 %v1208
        %v4387 = vunpack.c.l.b16 %v1209
        %v4388 = vunpack.c.h.b16 %v1209
        %v4389 = vunpack.c.l.b16 %v1210
        %v4390 = vunpack.c.h.b16 %v1210
        %v4391 = vunpack.c.l.b16 %v1211
        %v4392 = vunpack.c.h.b16 %v1211
        %v4393 = vunpack.c.l.b16 %v1212
        %v4394 = vunpack.c.h.b16 %v1212
        %v4395 = vunpack.c.l.b16 %v1213
        %v4396 = vunpack.c.h.b16 %v1213
        %v4397 = vunpack.c.l.b16 %v1214
        %v4398 = vunpack.c.h.b16 %v1214
        %v4399 = vunpack.c.l.b16 %v1215
        %v4400 = vunpack.c.h.b16 %v1215
        %v4401 = vunpack.c.l.b16 %v1216
        %v4402 = vunpack.c.h.b16 %v1216
        %v4403 = vunpack.c.l.b16 %v1217
        %v4404 = vunpack.c.h.b16 %v1217
        %v4405 = vunpack.c.l.b16 %v1218
        %v4406 = vunpack.c.h.b16 %v1218
        %v4407 = vunpack.c.l.b16 %v1219
        %v4408 = vunpack.c.h.b16 %v1219
        %v4409 = vunpack.c.l.b16 %v1220
        %v4410 = vunpack.c.h.b16 %v1220
        %v4411 = vunpack.c.l.b16 %v1221
        %v4412 = vunpack.c.h.b16 %v1221
        %v4413 = vunpack.c.l.b16 %v1222
        %v4414 = vunpack.c.h.b16 %v1222
        %v4415 = vunpack.c.l.b16 %v1223
        %v4416 = vunpack.c.h.b16 %v1223
        %v4417 = vunpack.c.l.b16 %v1224
        %v4418 = vunpack.c.h.b16 %v1224
        %v4419 = vunpack.c.l.b16 %v1225
        %v4420 = vunpack.c.h.b16 %v1225
        %v4421 = vunpack.c.l.b16 %v1226
        %v4422 = vunpack.c.h.b16 %v1226
        %v4423 = vunpack.c.l.b16 %v1227
        %v4424 = vunpack.c.h.b16 %v1227
        %v4425 = vunpack.c.l.b16 %v1228
        %v4426 = vunpack.c.h.b16 %v1228
        %v4427 = vunpack.c.l.b16 %v1229
        %v4428 = vunpack.c.h.b16 %v1229
        %v4429 = vunpack.c.l.b16 %v1230
        %v4430 = vunpack.c.h.b16 %v1230
        %v4431 = vunpack.c.l.b16 %v1231
        %v4432 = vunpack.c.h.b16 %v1231
        %v4433 = vunpack.c.l.b16 %v1232
        %v4434 = vunpack.c.h.b16 %v1232
        %v4435 = vunpack.c.l.b16 %v1233
        %v4436 = vunpack.c.h.b16 %v1233
        %v4437 = vunpack.c.l.b16 %v1234
        %v4438 = vunpack.c.h.b16 %v1234
        %v4439 = vunpack.c.l.b16 %v1235
        %v4440 = vunpack.c.h.b16 %v1235
        %v4441 = vunpack.c.l.b16 %v1236
        %v4442 = vunpack.c.h.b16 %v1236
        %v4443 = vunpack.c.l.b16 %v1237
        %v4444 = vunpack.c.h.b16 %v1237
        %v4445 = vunpack.c.l.b16 %v1238
        %v4446 = vunpack.c.h.b16 %v1238
        %v4447 = vunpack.c.l.b16 %v1239
        %v4448 = vunpack.c.h.b16 %v1239
        %v4449 = vunpack.c.l.b16 %v1240
        %v4450 = vunpack.c.h.b16 %v1240
        %v4451 = vunpack.c.l.b16 %v1241
        %v4452 = vunpack.c.h.b16 %v1241
        %v4453 = vunpack.c.l.b16 %v1242
        %v4454 = vunpack.c.h.b16 %v1242
        %v4455 = vunpack.c.l.b16 %v1243
        %v4456 = vunpack.c.h.b16 %v1243
        %v4457 = vunpack.c.l.b16 %v1244
        %v4458 = vunpack.c.h.b16 %v1244
        %v4459 = vunpack.c.l.b16 %v1245
        %v4460 = vunpack.c.h.b16 %v1245
        %v4461 = vunpack.c.l.b16 %v1246
        %v4462 = vunpack.c.h.b16 %v1246
        %v4463 = vunpack.c.l.b16 %v1247
        %v4464 = vunpack.c.h.b16 %v1247
        %v4465 = vunpack.c.l.b16 %v1248
        %v4466 = vunpack.c.h.b16 %v1248
        %v4467 = vunpack.c.l.b16 %v1249
        %v4468 = vunpack.c.h.b16 %v1249
        %v4469 = vunpack.c.l.b16 %v1250
        %v4470 = vunpack.c.h.b16 %v1250
        %v4471 = vunpack.c.l.b16 %v1251
        %v4472 = vunpack.c.h.b16 %v1251
        %v4473 = vunpack.c.l.b16 %v1252
        %v4474 = vunpack.c.h.b16 %v1252
        %v4475 = vunpack.c.l.b16 %v1253
        %v4476 = vunpack.c.h.b16 %v1253
        %v4477 = vunpack.c.l.b16 %v1254
        %v4478 = vunpack.c.h.b16 %v1254
        %v4479 = vunpack.c.l.b16 %v1255
        %v4480 = vunpack.c.h.b16 %v1255
        %v4481 = vunpack.c.l.b16 %v1256
        %v4482 = vunpack.c.h.b16 %v1256
        %v4483 = vunpack.c.l.b16 %v1257
        %v4484 = vunpack.c.h.b16 %v1257
        %v4485 = vunpack.c.l.b16 %v1258
        %v4486 = vunpack.c.h.b16 %v1258
        %v4487 = vunpack.c.l.b16 %v1259
        %v4488 = vunpack.c.h.b16 %v1259
        %v4489 = vunpack.c.l.b16 %v1260
        %v4490 = vunpack.c.h.b16 %v1260
        %v4491 = vunpack.c.l.b16 %v1261
        %v4492 = vunpack.c.h.b16 %v1261
        %v4493 = vunpack.c.l.b16 %v1262
        %v4494 = vunpack.c.h.b16 %v1262
        %v4495 = vunpack.c.l.b16 %v1263
        %v4496 = vunpack.c.h.b16 %v1263
        %v4497 = vunpack.c.l.b16 %v1264
        %v4498 = vunpack.c.h.b16 %v1264
        %v4499 = vunpack.c.l.b16 %v1265
        %v4500 = vunpack.c.h.b16 %v1265
        %v4501 = vunpack.c.l.b16 %v1266
        %v4502 = vunpack.c.h.b16 %v1266
        %v4503 = vunpack.c.l.b16 %v1267
        %v4504 = vunpack.c.h.b16 %v1267
        %v4505 = vunpack.c.l.b16 %v1268
        %v4506 = vunpack.c.h.b16 %v1268
        %v4507 = vunpack.c.l.b16 %v1269
        %v4508 = vunpack.c.h.b16 %v1269
        %v4509 = vunpack.c.l.b16 %v1270
        %v4510 = vunpack.c.h.b16 %v1270
        %v4511 = vunpack.c.l.b16 %v1271
        %v4512 = vunpack.c.h.b16 %v1271
        %v4513 = vunpack.c.l.b16 %v1272
        %v4514 = vunpack.c.h.b16 %v1272
        %v4515 = vunpack.c.l.b16 %v1273
        %v4516 = vunpack.c.h.b16 %v1273
        %v4517 = vunpack.c.l.b16 %v1274
        %v4518 = vunpack.c.h.b16 %v1274
        %v4519 = vunpack.c.l.b16 %v1275
        %v4520 = vunpack.c.h.b16 %v1275
        %v4521 = vunpack.c.l.b16 %v1276
        %v4522 = vunpack.c.h.b16 %v1276
        %v4523 = vunpack.c.l.b16 %v1277
        %v4524 = vunpack.c.h.b16 %v1277
        %v4525 = vunpack.c.l.b16 %v1278
        %v4526 = vunpack.c.h.b16 %v1278
        %v4527 = vunpack.c.l.b16 %v1279
        %v4528 = vunpack.c.h.b16 %v1279
        %v4529 = vunpack.c.l.b16 %v1280
        %v4530 = vunpack.c.h.b16 %v1280
        %v4531 = vunpack.c.l.b16 %v1281
        %v4532 = vunpack.c.h.b16 %v1281
        %v4533 = vunpack.c.l.b16 %v1282
        %v4534 = vunpack.c.h.b16 %v1282
        %v4535 = vunpack.c.l.b16 %v1283
        %v4536 = vunpack.c.h.b16 %v1283
        %v4537 = vunpack.c.l.b16 %v1284
        %v4538 = vunpack.c.h.b16 %v1284
        %v4539 = vunpack.c.l.b16 %v1285
        %v4540 = vunpack.c.h.b16 %v1285
        %v4541 = vunpack.c.l.b16 %v1286
        %v4542 = vunpack.c.h.b16 %v1286
        %v4543 = vunpack.c.l.b16 %v1287
        %v4544 = vunpack.c.h.b16 %v1287
        %v4545 = vunpack.c.l.b16 %v1288
        %v4546 = vunpack.c.h.b16 %v1288
        %v4547 = vunpack.c.l.b16 %v1289
        %v4548 = vunpack.c.h.b16 %v1289
        %v4549 = vunpack.c.l.b16 %v1290
        %v4550 = vunpack.c.h.b16 %v1290
        %v4551 = vunpack.c.l.b16 %v1291
        %v4552 = vunpack.c.h.b16 %v1291
        %v4553 = vunpack.c.l.b16 %v1292
        %v4554 = vunpack.c.h.b16 %v1292
        %v4555 = vunpack.c.l.b16 %v1293
        %v4556 = vunpack.c.h.b16 %v1293
        %v4557 = vunpack.c.l.b16 %v1294
        %v4558 = vunpack.c.h.b16 %v1294
        %v4559 = vunpack.c.l.b16 %v1295
        %v4560 = vunpack.c.h.b16 %v1295
        %v4561 = vunpack.c.l.b16 %v1296
        %v4562 = vunpack.c.h.b16 %v1296
        %v4563 = vunpack.c.l.b16 %v1297
        %v4564 = vunpack.c.h.b16 %v1297
        %v4565 = vunpack.c.l.b16 %v1298
        %v4566 = vunpack.c.h.b16 %v1298
        %v4567 = vunpack.c.l.b16 %v1299
        %v4568 = vunpack.c.h.b16 %v1299
        %v4569 = vunpack.c.l.b16 %v1300
        %v4570 = vunpack.c.h.b16 %v1300
        %v4571 = vunpack.c.l.b16 %v1301
        %v4572 = vunpack.c.h.b16 %v1301
        %v4573 = vunpack.c.l.b16 %v1302
        %v4574 = vunpack.c.h.b16 %v1302
        %v4575 = vunpack.c.l.b16 %v1303
        %v4576 = vunpack.c.h.b16 %v1303
        %v4577 = vunpack.c.l.b16 %v1304
        %v4578 = vunpack.c.h.b16 %v1304
        %v4579 = vunpack.c.l.b16 %v1305
        %v4580 = vunpack.c.h.b16 %v1305
        %v4581 = vunpack.c.l.b16 %v1306
        %v4582 = vunpack.c.h.b16 %v1306
        %v4583 = vunpack.c.l.b16 %v1307
        %v4584 = vunpack.c.h.b16 %v1307
        %v4585 = vunpack.c.l.b16 %v1308
        %v4586 = vunpack.c.h.b16 %v1308
        %v4587 = vunpack.c.l.b16 %v1309
        %v4588 = vunpack.c.h.b16 %v1309
        %v4589 = vunpack.c.l.b16 %v1310
        %v4590 = vunpack.c.h.b16 %v1310
        %v4591 = vunpack.c.l.b16 %v1311
        %v4592 = vunpack.c.h.b16 %v1311
        %v4593 = vunpack.c.l.b16 %v1312
        %v4594 = vunpack.c.h.b16 %v1312
        %v4595 = vunpack.c.l.b16 %v1313
        %v4596 = vunpack.c.h.b16 %v1313
        %v4597 = vunpack.c.l.b16 %v1314
        %v4598 = vunpack.c.h.b16 %v1314
        %v4599 = vunpack.c.l.b16 %v1315
        %v4600 = vunpack.c.h.b16 %v1315
        %v4601 = vunpack.c.l.b16 %v1316
        %v4602 = vunpack.c.h.b16 %v1316
        %v4603 = vunpack.c.l.b16 %v1317
        %v4604 = vunpack.c.h.b16 %v1317
        %v4605 = vunpack.c.l.b16 %v1318
        %v4606 = vunpack.c.h.b16 %v1318
        %v4607 = vunpack.c.l.b16 %v1319
        %v4608 = vunpack.c.h.b16 %v1319
        %v4609 = vunpack.c.l.b16 %v1320
        %v4610 = vunpack.c.h.b16 %v1320
        %v4611 = vunpack.c.l.b16 %v1321
        %v4612 = vunpack.c.h.b16 %v1321
        %v4613 = vunpack.c.l.b16 %v1322
        %v4614 = vunpack.c.h.b16 %v1322
        %v4615 = vunpack.c.l.b16 %v1323
        %v4616 = vunpack.c.h.b16 %v1323
        %v4617 = vunpack.c.l.b16 %v1324
        %v4618 = vunpack.c.h.b16 %v1324
        %v4619 = vunpack.c.l.b16 %v1325
        %v4620 = vunpack.c.h.b16 %v1325
        %v4621 = vunpack.c.l.b16 %v1326
        %v4622 = vunpack.c.h.b16 %v1326
        %v4623 = vunpack.c.l.b16 %v1327
        %v4624 = vunpack.c.h.b16 %v1327
        %v4625 = vunpack.c.l.b16 %v1328
        %v4626 = vunpack.c.h.b16 %v1328
        %v4627 = vunpack.c.l.b16 %v1329
        %v4628 = vunpack.c.h.b16 %v1329
        %v4629 = vunpack.c.l.b16 %v1330
        %v4630 = vunpack.c.h.b16 %v1330
        %v4631 = vunpack.c.l.b16 %v1331
        %v4632 = vunpack.c.h.b16 %v1331
        %v4633 = vunpack.c.l.b16 %v1332
        %v4634 = vunpack.c.h.b16 %v1332
        %v4635 = vunpack.c.l.b16 %v1333
        %v4636 = vunpack.c.h.b16 %v1333
        %v4637 = vunpack.c.l.b16 %v1334
        %v4638 = vunpack.c.h.b16 %v1334
        %v4639 = vunpack.c.l.b16 %v1335
        %v4640 = vunpack.c.h.b16 %v1335
        %v4641 = vunpack.c.l.b16 %v1336
        %v4642 = vunpack.c.h.b16 %v1336
        %v4643 = vunpack.c.l.b16 %v1337
        %v4644 = vunpack.c.h.b16 %v1337
        %v4645 = vunpack.c.l.b16 %v1338
        %v4646 = vunpack.c.h.b16 %v1338
        %v4647 = vunpack.c.l.b16 %v1339
        %v4648 = vunpack.c.h.b16 %v1339
        %v4649 = vunpack.c.l.b16 %v1340
        %v4650 = vunpack.c.h.b16 %v1340
        %v4651 = vunpack.c.l.b16 %v1341
        %v4652 = vunpack.c.h.b16 %v1341
        %v4653 = vunpack.c.l.b16 %v1342
        %v4654 = vunpack.c.h.b16 %v1342
        %v4655 = vunpack.c.l.b16 %v1343
        %v4656 = vunpack.c.h.b16 %v1343
        %v4657 = vunpack.c.l.b16 %v1344
        %v4658 = vunpack.c.h.b16 %v1344
        %v4659 = vunpack.c.l.b16 %v1345
        %v4660 = vunpack.c.h.b16 %v1345
        %v4661 = vunpack.c.l.b16 %v1346
        %v4662 = vunpack.c.h.b16 %v1346
        %v4663 = vunpack.c.l.b16 %v1347
        %v4664 = vunpack.c.h.b16 %v1347
        %v4665 = vunpack.c.l.b16 %v1348
        %v4666 = vunpack.c.h.b16 %v1348
        %v4667 = vunpack.c.l.b16 %v1349
        %v4668 = vunpack.c.h.b16 %v1349
        %v4669 = vunpack.c.l.b16 %v1350
        %v4670 = vunpack.c.h.b16 %v1350
        %v4671 = vunpack.c.l.b16 %v1351
        %v4672 = vunpack.c.h.b16 %v1351
        %v4673 = vunpack.c.l.b16 %v1352
        %v4674 = vunpack.c.h.b16 %v1352
        %v4675 = vunpack.c.l.b16 %v1353
        %v4676 = vunpack.c.h.b16 %v1353
        %v4677 = vunpack.c.l.b16 %v1354
        %v4678 = vunpack.c.h.b16 %v1354
        %v4679 = vunpack.c.l.b16 %v1355
        %v4680 = vunpack.c.h.b16 %v1355
        %v4681 = vunpack.c.l.b16 %v1356
        %v4682 = vunpack.c.h.b16 %v1356
        %v4683 = vunpack.c.l.b16 %v1357
        %v4684 = vunpack.c.h.b16 %v1357
        %v4685 = vunpack.c.l.b16 %v1358
        %v4686 = vunpack.c.h.b16 %v1358
        %v4687 = vunpack.c.l.b16 %v1359
        %v4688 = vunpack.c.h.b16 %v1359
        %v4689 = vunpack.c.l.b16 %v1360
        %v4690 = vunpack.c.h.b16 %v1360
        %v4691 = vunpack.c.l.b16 %v1361
        %v4692 = vunpack.c.h.b16 %v1361
        %v4693 = vunpack.c.l.b16 %v1362
        %v4694 = vunpack.c.h.b16 %v1362
        %v4695 = vunpack.c.l.b16 %v1363
        %v4696 = vunpack.c.h.b16 %v1363
        %v4697 = vunpack.c.l.b16 %v1364
        %v4698 = vunpack.c.h.b16 %v1364
        %v4699 = vunpack.c.l.b16 %v1365
        %v4700 = vunpack.c.h.b16 %v1365
        %v4701 = vunpack.c.l.b16 %v1366
        %v4702 = vunpack.c.h.b16 %v1366
        %v4703 = vunpack.c.l.b16 %v1367
        %v4704 = vunpack.c.h.b16 %v1367
        %v4705 = vunpack.c.l.b16 %v1368
        %v4706 = vunpack.c.h.b16 %v1368
        %v4707 = vunpack.c.l.b16 %v1369
        %v4708 = vunpack.c.h.b16 %v1369
        %v4709 = vunpack.c.l.b16 %v1370
        %v4710 = vunpack.c.h.b16 %v1370
        %v4711 = vunpack.c.l.b16 %v1371
        %v4712 = vunpack.c.h.b16 %v1371
        %v4713 = vunpack.c.l.b16 %v1372
        %v4714 = vunpack.c.h.b16 %v1372
        %v4715 = vunpack.c.l.b16 %v1373
        %v4716 = vunpack.c.h.b16 %v1373
        %v4717 = vunpack.c.l.b16 %v1374
        %v4718 = vunpack.c.h.b16 %v1374
        %v4719 = vunpack.c.l.b16 %v1375
        %v4720 = vunpack.c.h.b16 %v1375
        %v4721 = vunpack.c.l.b16 %v1376
        %v4722 = vunpack.c.h.b16 %v1376
        %v4723 = vunpack.c.l.b16 %v1377
        %v4724 = vunpack.c.h.b16 %v1377
        %v4725 = vunpack.c.l.b16 %v1378
        %v4726 = vunpack.c.h.b16 %v1378
        %v4727 = vunpack.c.l.b16 %v1379
        %v4728 = vunpack.c.h.b16 %v1379
        %v4729 = vunpack.c.l.b16 %v1380
        %v4730 = vunpack.c.h.b16 %v1380
        %v4731 = vunpack.c.l.b16 %v1381
        %v4732 = vunpack.c.h.b16 %v1381
        %v4733 = vunpack.c.l.b16 %v1382
        %v4734 = vunpack.c.h.b16 %v1382
        %v4735 = vunpack.c.l.b16 %v1383
        %v4736 = vunpack.c.h.b16 %v1383
        %v4737 = vunpack.c.l.b16 %v1384
        %v4738 = vunpack.c.h.b16 %v1384
        %v4739 = vunpack.c.l.b16 %v1385
        %v4740 = vunpack.c.h.b16 %v1385
        %v4741 = vunpack.c.l.b16 %v1386
        %v4742 = vunpack.c.h.b16 %v1386
        %v4743 = vunpack.c.l.b16 %v1387
        %v4744 = vunpack.c.h.b16 %v1387
        %v4745 = vunpack.c.l.b16 %v1388
        %v4746 = vunpack.c.h.b16 %v1388
        %v4747 = vunpack.c.l.b16 %v1389
        %v4748 = vunpack.c.h.b16 %v1389
        %v4749 = vunpack.c.l.b16 %v1390
        %v4750 = vunpack.c.h.b16 %v1390
        %v4751 = vunpack.c.l.b16 %v1391
        %v4752 = vunpack.c.h.b16 %v1391
        %v4753 = vunpack.c.l.b16 %v1392
        %v4754 = vunpack.c.h.b16 %v1392
        %v4755 = vunpack.c.l.b16 %v1393
        %v4756 = vunpack.c.h.b16 %v1393
        %v4757 = vunpack.c.l.b16 %v1394
        %v4758 = vunpack.c.h.b16 %v1394
        %v4759 = vunpack.c.l.b16 %v1395
        %v4760 = vunpack.c.h.b16 %v1395
        %v4761 = vunpack.c.l.b16 %v1396
        %v4762 = vunpack.c.h.b16 %v1396
        %v4763 = vunpack.c.l.b16 %v1397
        %v4764 = vunpack.c.h.b16 %v1397
        %v4765 = vunpack.c.l.b16 %v1398
        %v4766 = vunpack.c.h.b16 %v1398
        %v4767 = vunpack.c.l.b16 %v1399
        %v4768 = vunpack.c.h.b16 %v1399
        %v4769 = vunpack.c.l.b16 %v1400
        %v4770 = vunpack.c.h.b16 %v1400
        %v4771 = vunpack.c.l.b16 %v1401
        %v4772 = vunpack.c.h.b16 %v1401
        %v4773 = vunpack.c.l.b16 %v1402
        %v4774 = vunpack.c.h.b16 %v1402
        %v4775 = vunpack.c.l.b16 %v1403
        %v4776 = vunpack.c.h.b16 %v1403
        %v4777 = vunpack.c.l.b16 %v1404
        %v4778 = vunpack.c.h.b16 %v1404
        %v4779 = vunpack.c.l.b16 %v1405
        %v4780 = vunpack.c.h.b16 %v1405
        %v4781 = vunpack.c.l.b16 %v1406
        %v4782 = vunpack.c.h.b16 %v1406
        %v4783 = vunpack.c.l.b16 %v1407
        %v4784 = vunpack.c.h.b16 %v1407
        %v4785 = vunpack.c.l.b16 %v1408
        %v4786 = vunpack.c.h.b16 %v1408
        %v4787 = vunpack.c.l.b16 %v1409
        %v4788 = vunpack.c.h.b16 %v1409
        %v4789 = vunpack.c.l.b16 %v1410
        %v4790 = vunpack.c.h.b16 %v1410
        %v4791 = vunpack.c.l.b16 %v1411
        %v4792 = vunpack.c.h.b16 %v1411
        %v4793 = vunpack.c.l.b16 %v1412
        %v4794 = vunpack.c.h.b16 %v1412
        %v4795 = vunpack.c.l.b16 %v1413
        %v4796 = vunpack.c.h.b16 %v1413
        %v4797 = vunpack.c.l.b16 %v1414
        %v4798 = vunpack.c.h.b16 %v1414
        %v4799 = vunpack.c.l.b16 %v1415
        %v4800 = vunpack.c.h.b16 %v1415
        %v4801 = vunpack.c.l.b16 %v1416
        %v4802 = vunpack.c.h.b16 %v1416
        %v4803 = vunpack.c.l.b16 %v1417
        %v4804 = vunpack.c.h.b16 %v1417
        %v4805 = vunpack.c.l.b16 %v1418
        %v4806 = vunpack.c.h.b16 %v1418
        %v4807 = vunpack.c.l.b16 %v1419
        %v4808 = vunpack.c.h.b16 %v1419
        %v4809 = vunpack.c.l.b16 %v1420
        %v4810 = vunpack.c.h.b16 %v1420
        %v4811 = vunpack.c.l.b16 %v1421
        %v4812 = vunpack.c.h.b16 %v1421
        %v4813 = vunpack.c.l.b16 %v1422
        %v4814 = vunpack.c.h.b16 %v1422
        %v4815 = vunpack.c.l.b16 %v1423
        %v4816 = vunpack.c.h.b16 %v1423
        %v4817 = vunpack.c.l.b16 %v1424
        %v4818 = vunpack.c.h.b16 %v1424
        %v4819 = vunpack.c.l.b16 %v1425
        %v4820 = vunpack.c.h.b16 %v1425
        %v4821 = vunpack.c.l.b16 %v1426
        %v4822 = vunpack.c.h.b16 %v1426
        %v4823 = vunpack.c.l.b16 %v1427
        %v4824 = vunpack.c.h.b16 %v1427
        %v4825 = vunpack.c.l.b16 %v1428
        %v4826 = vunpack.c.h.b16 %v1428
        %v4827 = vunpack.c.l.b16 %v1429
        %v4828 = vunpack.c.h.b16 %v1429
        %v4829 = vunpack.c.l.b16 %v1430
        %v4830 = vunpack.c.h.b16 %v1430
        %v4831 = vunpack.c.l.b16 %v1431
        %v4832 = vunpack.c.h.b16 %v1431
        %v4833 = vunpack.c.l.b16 %v1432
        %v4834 = vunpack.c.h.b16 %v1432
        %v4835 = vunpack.c.l.b16 %v1433
        %v4836 = vunpack.c.h.b16 %v1433
        %v4837 = vunpack.c.l.b16 %v1434
        %v4838 = vunpack.c.h.b16 %v1434
        %v4839 = vunpack.c.l.b16 %v1435
        %v4840 = vunpack.c.h.b16 %v1435
        %v4841 = vunpack.c.l.b16 %v1436
        %v4842 = vunpack.c.h.b16 %v1436
        %v4843 = vunpack.c.l.b16 %v1437
        %v4844 = vunpack.c.h.b16 %v1437
        %v4845 = vunpack.c.l.b16 %v1438
        %v4846 = vunpack.c.h.b16 %v1438
        %v4847 = vunpack.c.l.b16 %v1439
        %v4848 = vunpack.c.h.b16 %v1439
        %v4849 = vunpack.c.l.b16 %v1440
        %v4850 = vunpack.c.h.b16 %v1440
        %v4851 = vunpack.c.l.b16 %v1441
        %v4852 = vunpack.c.h.b16 %v1441
        %v4853 = vunpack.c.l.b16 %v1442
        %v4854 = vunpack.c.h.b16 %v1442
        %v4855 = vunpack.c.l.b16 %v1443
        %v4856 = vunpack.c.h.b16 %v1443
        %v4857 = vunpack.c.l.b16 %v1444
        %v4858 = vunpack.c.h.b16 %v1444
        %v4859 = vunpack.c.l.b16 %v1445
        %v4860 = vunpack.c.h.b16 %v1445
        %v4861 = vunpack.c.l.b16 %v1446
        %v4862 = vunpack.c.h.b16 %v1446
        %v4863 = vunpack.c.l.b16 %v1447
        %v4864 = vunpack.c.h.b16 %v1447
        %v4865 = vunpack.c.l.b16 %v1448
        %v4866 = vunpack.c.h.b16 %v1448
        %v4867 = vunpack.c.l.b16 %v1449
        %v4868 = vunpack.c.h.b16 %v1449
        %v4869 = vunpack.c.l.b16 %v1450
        %v4870 = vunpack.c.h.b16 %v1450
        %v4871 = vunpack.c.l.b16 %v1451
        %v4872 = vunpack.c.h.b16 %v1451
        %v4873 = vunpack.c.l.b16 %v1452
        %v4874 = vunpack.c.h.b16 %v1452
        %v4875 = vunpack.c.l.b16 %v1453
        %v4876 = vunpack.c.h.b16 %v1453
        %v4877 = vunpack.c.l.b16 %v1454
        %v4878 = vunpack.c.h.b16 %v1454
        %v4879 = vunpack.c.l.b16 %v1455
        %v4880 = vunpack.c.h.b16 %v1455
        %v4881 = vunpack.c.l.b16 %v1456
        %v4882 = vunpack.c.h.b16 %v1456
        %v4883 = vunpack.c.l.b16 %v1457
        %v4884 = vunpack.c.h.b16 %v1457
        %v4885 = vunpack.c.l.b16 %v1458
        %v4886 = vunpack.c.h.b16 %v1458
        %v4887 = vunpack.c.l.b16 %v1459
        %v4888 = vunpack.c.h.b16 %v1459
        %v4889 = vunpack.c.l.b16 %v1460
        %v4890 = vunpack.c.h.b16 %v1460
        %v4891 = vunpack.c.l.b16 %v1461
        %v4892 = vunpack.c.h.b16 %v1461
        %v4893 = vunpack.c.l.b16 %v1462
        %v4894 = vunpack.c.h.b16 %v1462
        %v4895 = vunpack.c.l.b16 %v1463
        %v4896 = vunpack.c.h.b16 %v1463
        %v4897 = vunpack.c.l.b16 %v1464
        %v4898 = vunpack.c.h.b16 %v1464
        %v4899 = vunpack.c.l.b16 %v1465
        %v4900 = vunpack.c.h.b16 %v1465
        %v4901 = vunpack.c.l.b16 %v1466
        %v4902 = vunpack.c.h.b16 %v1466
        %v4903 = vunpack.c.l.b16 %v1467
        %v4904 = vunpack.c.h.b16 %v1467
        %v4905 = vunpack.c.l.b16 %v1468
        %v4906 = vunpack.c.h.b16 %v1468
        %v4907 = vunpack.c.l.b16 %v1469
        %v4908 = vunpack.c.h.b16 %v1469
        %v4909 = vunpack.c.l.b16 %v1470
        %v4910 = vunpack.c.h.b16 %v1470
        %v4911 = vunpack.c.l.b16 %v1471
        %v4912 = vunpack.c.h.b16 %v1471
        %v4913 = vunpack.c.l.b16 %v1472
        %v4914 = vunpack.c.h.b16 %v1472
        %v4915 = vunpack.c.l.b16 %v1473
        %v4916 = vunpack.c.h.b16 %v1473
        %v4917 = vunpack.c.l.b16 %v1474
        %v4918 = vunpack.c.h.b16 %v1474
        %v4919 = vunpack.c.l.b16 %v1475
        %v4920 = vunpack.c.h.b16 %v1475
        %v4921 = vunpack.c.l.b16 %v1476
        %v4922 = vunpack.c.h.b16 %v1476
        %v4923 = vunpack.c.l.b16 %v1477
        %v4924 = vunpack.c.h.b16 %v1477
        %v4925 = vunpack.c.l.b16 %v1478
        %v4926 = vunpack.c.h.b16 %v1478
        %v4927 = vunpack.c.l.b16 %v1479
        %v4928 = vunpack.c.h.b16 %v1479
        %v4929 = vunpack.c.l.b16 %v1480
        %v4930 = vunpack.c.h.b16 %v1480
        %v4931 = vunpack.c.l.b16 %v1481
        %v4932 = vunpack.c.h.b16 %v1481
        %v4933 = vunpack.c.l.b16 %v1482
        %v4934 = vunpack.c.h.b16 %v1482
        %v4935 = vunpack.c.l.b16 %v1483
        %v4936 = vunpack.c.h.b16 %v1483
        %v4937 = vunpack.c.l.b16 %v1484
        %v4938 = vunpack.c.h.b16 %v1484
        %v4939 = vunpack.c.l.b16 %v1485
        %v4940 = vunpack.c.h.b16 %v1485
        %v4941 = vunpack.c.l.b16 %v1486
        %v4942 = vunpack.c.h.b16 %v1486
        %v4943 = vunpack.c.l.b16 %v1487
        %v4944 = vunpack.c.h.b16 %v1487
        %v4945 = vunpack.c.l.b16 %v1488
        %v4946 = vunpack.c.h.b16 %v1488
        %v4947 = vunpack.c.l.b16 %v1489
        %v4948 = vunpack.c.h.b16 %v1489
        %v4949 = vunpack.c.l.b16 %v1490
        %v4950 = vunpack.c.h.b16 %v1490
        %v4951 = vunpack.c.l.b16 %v1491
        %v4952 = vunpack.c.h.b16 %v1491
        %v4953 = vunpack.c.l.b16 %v1492
        %v4954 = vunpack.c.h.b16 %v1492
        %v4955 = vunpack.c.l.b16 %v1493
        %v4956 = vunpack.c.h.b16 %v1493
        %v4957 = vunpack.c.l.b16 %v1494
        %v4958 = vunpack.c.h.b16 %v1494
        %v4959 = vunpack.c.l.b16 %v1495
        %v4960 = vunpack.c.h.b16 %v1495
        %v4961 = vunpack.c.l.b16 %v1496
        %v4962 = vunpack.c.h.b16 %v1496
        %v4963 = vunpack.c.l.b16 %v1497
        %v4964 = vunpack.c.h.b16 %v1497
        %v4965 = vunpack.c.l.b16 %v1498
        %v4966 = vunpack.c.h.b16 %v1498
        %v4967 = vunpack.c.l.b16 %v1499
        %v4968 = vunpack.c.h.b16 %v1499
        %v4969 = vunpack.c.l.b16 %v1500
        %v4970 = vunpack.c.h.b16 %v1500
        %v4971 = vunpack.c.l.b16 %v1501
        %v4972 = vunpack.c.h.b16 %v1501
        %v4973 = vunpack.c.l.b16 %v1502
        %v4974 = vunpack.c.h.b16 %v1502
        %v4975 = vunpack.c.l.b16 %v1503
        %v4976 = vunpack.c.h.b16 %v1503
        %v4977 = vunpack.c.l.b16 %v1504
        %v4978 = vunpack.c.h.b16 %v1504
        %v4979 = vunpack.c.l.b16 %v1505
        %v4980 = vunpack.c.h.b16 %v1505
        %v4981 = vunpack.c.l.b16 %v1506
        %v4982 = vunpack.c.h.b16 %v1506
        %v4983 = vunpack.c.l.b16 %v1507
        %v4984 = vunpack.c.h.b16 %v1507
        %v4985 = vunpack.c.l.b16 %v1508
        %v4986 = vunpack.c.h.b16 %v1508
        %v4987 = vunpack.c.l.b16 %v1509
        %v4988 = vunpack.c.h.b16 %v1509
        %v4989 = vunpack.c.l.b16 %v1510
        %v4990 = vunpack.c.h.b16 %v1510
        %v4991 = vunpack.c.l.b16 %v1511
        %v4992 = vunpack.c.h.b16 %v1511
        %v4993 = vunpack.c.l.b16 %v1512
        %v4994 = vunpack.c.h.b16 %v1512
        %v4995 = vunpack.c.l.b16 %v1513
        %v4996 = vunpack.c.h.b16 %v1513
        %v4997 = vunpack.c.l.b16 %v1514
        %v4998 = vunpack.c.h.b16 %v1514
        %v4999 = vunpack.c.l.b16 %v1515
        %v5000 = vunpack.c.h.b16 %v1515
        %v5001 = vunpack.c.l.b16 %v1516
        %v5002 = vunpack.c.h.b16 %v1516
        %v5003 = vunpack.c.l.b16 %v1517
        %v5004 = vunpack.c.h.b16 %v1517
        %v5005 = vunpack.c.l.b16 %v1518
        %v5006 = vunpack.c.h.b16 %v1518
        %v5007 = vunpack.c.l.b16 %v1519
        %v5008 = vunpack.c.h.b16 %v1519
        %v5009 = vunpack.c.l.b16 %v1520
        %v5010 = vunpack.c.h.b16 %v1520
        %v5011 = vunpack.c.l.b16 %v1521
        %v5012 = vunpack.c.h.b16 %v1521
        %v5013 = vunpack.c.l.b16 %v1522
        %v5014 = vunpack.c.h.b16 %v1522
        %v5015 = vunpack.c.l.b16 %v1523
        %v5016 = vunpack.c.h.b16 %v1523
        %v5017 = vunpack.c.l.b16 %v1524
        %v5018 = vunpack.c.h.b16 %v1524
        %v5019 = vunpack.c.l.b16 %v1525
        %v5020 = vunpack.c.h.b16 %v1525
        %v5021 = vunpack.c.l.b16 %v1526
        %v5022 = vunpack.c.h.b16 %v1526
        %v5023 = vunpack.c.l.b16 %v1527
        %v5024 = vunpack.c.h.b16 %v1527
        %v5025 = vunpack.c.l.b16 %v1528
        %v5026 = vunpack.c.h.b16 %v1528
        %v5027 = vunpack.c.l.b16 %v1529
        %v5028 = vunpack.c.h.b16 %v1529
        %v5029 = vunpack.c.l.b16 %v1530
        %v5030 = vunpack.c.h.b16 %v1530
        %v5031 = vunpack.c.l.b16 %v1531
        %v5032 = vunpack.c.h.b16 %v1531
        %v5033 = vunpack.c.l.b16 %v1532
        %v5034 = vunpack.c.h.b16 %v1532
        %v5035 = vunpack.c.l.b16 %v1533
        %v5036 = vunpack.c.h.b16 %v1533
        %v5037 = vunpack.c.l.b16 %v1534
        %v5038 = vunpack.c.h.b16 %v1534
        %v5039 = vunpack.c.l.b16 %v1535
        %v5040 = vunpack.c.h.b16 %v1535
        %v5041 = vunpack.c.l.b16 %v1536
        %v5042 = vunpack.c.h.b16 %v1536
        %v5043 = vunpack.c.l.b16 %v1537
        %v5044 = vunpack.c.h.b16 %v1537
        %v5045 = vunpack.c.l.b16 %v1538
        %v5046 = vunpack.c.h.b16 %v1538
        %v5047 = vunpack.c.l.b16 %v1539
        %v5048 = vunpack.c.h.b16 %v1539
        %v5049 = vunpack.c.l.b16 %v1540
        %v5050 = vunpack.c.h.b16 %v1540
        %v5051 = vunpack.c.l.b16 %v1541
        %v5052 = vunpack.c.h.b16 %v1541
        %v5053 = vunpack.c.l.b16 %v1542
        %v5054 = vunpack.c.h.b16 %v1542
        %v5055 = vunpack.c.l.b16 %v1543
        %v5056 = vunpack.c.h.b16 %v1543
        %v5057 = vunpack.c.l.b16 %v1544
        %v5058 = vunpack.c.h.b16 %v1544
        %v5059 = vunpack.c.l.b16 %v1545
        %v5060 = vunpack.c.h.b16 %v1545
        %v5061 = vunpack.c.l.b16 %v1546
        %v5062 = vunpack.c.h.b16 %v1546
        %v5063 = vunpack.c.l.b16 %v1547
        %v5064 = vunpack.c.h.b16 %v1547
        %v5065 = vunpack.c.l.b16 %v1548
        %v5066 = vunpack.c.h.b16 %v1548
        %v5067 = vunpack.c.l.b16 %v1549
        %v5068 = vunpack.c.h.b16 %v1549
        %v5069 = vunpack.c.l.b16 %v1550
        %v5070 = vunpack.c.h.b16 %v1550
        %v5071 = vunpack.c.l.b16 %v1551
        %v5072 = vunpack.c.h.b16 %v1551
        %v5073 = vunpack.c.l.b16 %v1552
        %v5074 = vunpack.c.h.b16 %v1552
        %v5075 = vunpack.c.l.b16 %v1553
        %v5076 = vunpack.c.h.b16 %v1553
        %v5077 = vunpack.c.l.b16 %v1554
        %v5078 = vunpack.c.h.b16 %v1554
        %v5079 = vunpack.c.l.b16 %v1555
        %v5080 = vunpack.c.h.b16 %v1555
        %v5081 = vunpack.c.l.b16 %v1556
        %v5082 = vunpack.c.h.b16 %v1556
        %v5083 = vunpack.c.l.b16 %v1557
        %v5084 = vunpack.c.h.b16 %v1557
        %v5085 = vunpack.c.l.b16 %v1558
        %v5086 = vunpack.c.h.b16 %v1558
        %v5087 = vunpack.c.l.b16 %v1559
        %v5088 = vunpack.c.h.b16 %v1559
        %v5089 = vunpack.c.l.b16 %v1560
        %v5090 = vunpack.c.h.b16 %v1560
        %v5091 = vunpack.c.l.b16 %v1561
        %v5092 = vunpack.c.h.b16 %v1561
        %v5093 = vunpack.c.l.b16 %v1562
        %v5094 = vunpack.c.h.b16 %v1562
        %v5095 = vunpack.c.l.b16 %v1563
        %v5096 = vunpack.c.h.b16 %v1563
        %v5097 = vunpack.c.l.b16 %v1564
        %v5098 = vunpack.c.h.b16 %v1564
        %v5099 = vunpack.c.l.b16 %v1565
        %v5100 = vunpack.c.h.b16 %v1565
        %v5101 = vunpack.c.l.b16 %v1566
        %v5102 = vunpack.c.h.b16 %v1566
        %v5103 = vunpack.c.l.b16 %v1567
        %v5104 = vunpack.c.h.b16 %v1567
        %v5105 = vunpack.c.l.b16 %v1568
        %v5106 = vunpack.c.h.b16 %v1568
        %v5107 = vunpack.c.l.b16 %v1569
        %v5108 = vunpack.c.h.b16 %v1569
        %v5109 = vunpack.c.l.b16 %v1570
        %v5110 = vunpack.c.h.b16 %v1570
        %v5111 = vunpack.c.l.b16 %v1571
        %v5112 = vunpack.c.h.b16 %v1571
        %v5113 = vunpack.c.l.b16 %v1572
        %v5114 = vunpack.c.h.b16 %v1572
        %v5115 = vunpack.c.l.b16 %v1573
        %v5116 = vunpack.c.h.b16 %v1573
        %v5117 = vunpack.c.l.b16 %v1574
        %v5118 = vunpack.c.h.b16 %v1574
        %v5119 = vunpack.c.l.b16 %v1575
        %v5120 = vunpack.c.h.b16 %v1575
        %v5121 = vunpack.c.l.b16 %v1576
        %v5122 = vunpack.c.h.b16 %v1576
        %v5123 = vpack.c.b16 %v2827, %v2819
        %v5124 = vpack.c.b16 %v2828, %v2820
        %v5125 = vpack.c.b16 %v2829, %v2821
        %v5126 = vpack.c.b16 %v2830, %v2822
        %v5127 = vpack.c.b16 %v2831, %v2823
        %v5128 = vpack.c.b16 %v2832, %v2824
        %v5129 = vpack.c.b16 %v2833, %v2825
        %v5130 = vpack.c.b16 %v2834, %v2826
        %v5131 = vpack.c.b16 %v2843, %v2835
        %v5132 = vpack.c.b16 %v2844, %v2836
        %v5133 = vpack.c.b16 %v2845, %v2837
        %v5134 = vpack.c.b16 %v2846, %v2838
        %v5135 = vpack.c.b16 %v2847, %v2839
        %v5136 = vpack.c.b16 %v2848, %v2840
        %v5137 = vpack.c.b16 %v2849, %v2841
        %v5138 = vpack.c.b16 %v2850, %v2842
        %v5139 = vpack.c.b16 %v2859, %v2851
        %v5140 = vpack.c.b16 %v2860, %v2852
        %v5141 = vpack.c.b16 %v2861, %v2853
        %v5142 = vpack.c.b16 %v2862, %v2854
        %v5143 = vpack.c.b16 %v2863, %v2855
        %v5144 = vpack.c.b16 %v2864, %v2856
        %v5145 = vpack.c.b16 %v2865, %v2857
        %v5146 = vpack.c.b16 %v2866, %v2858
        %v5147 = vpack.c.b16 %v2875, %v2867
        %v5148 = vpack.c.b16 %v2876, %v2868
        %v5149 = vpack.c.b16 %v2877, %v2869
        %v5150 = vpack.c.b16 %v2878, %v2870
        %v5151 = vpack.c.b16 %v2879, %v2871
        %v5152 = vpack.c.b16 %v2880, %v2872
        %v5153 = vpack.c.b16 %v2881, %v2873
        %v5154 = vpack.c.b16 %v2882, %v2874
        %v5155 = vpack.c.b16 %v2891, %v2883
        %v5156 = vpack.c.b16 %v2892, %v2884
        %v5157 = vpack.c.b16 %v2893, %v2885
        %v5158 = vpack.c.b16 %v2894, %v2886
        %v5159 = vpack.c.b16 %v2895, %v2887
        %v5160 = vpack.c.b16 %v2896, %v2888
        %v5161 = vpack.c.b16 %v2897, %v2889
        %v5162 = vpack.c.b16 %v2898, %v2890
        %v5163 = vpack.c.b16 %v2907, %v2899
        %v5164 = vpack.c.b16 %v2908, %v2900
        %v5165 = vpack.c.b16 %v2909, %v2901
        %v5166 = vpack.c.b16 %v2910, %v2902
        %v5167 = vpack.c.b16 %v2911, %v2903
        %v5168 = vpack.c.b16 %v2912, %v2904
        %v5169 = vpack.c.b16 %v2913, %v2905
        %v5170 = vpack.c.b16 %v2914, %v2906
        %v5171 = vpack.c.b16 %v2923, %v2915
        %v5172 = vpack.c.b16 %v2924, %v2916
        %v5173 = vpack.c.b16 %v2925, %v2917
        %v5174 = vpack.c.b16 %v2926, %v2918
        %v5175 = vpack.c.b16 %v2927, %v2919
        %v5176 = vpack.c.b16 %v2928, %v2920
        %v5177 = vpack.c.b16 %v2929, %v2921
        %v5178 = vpack.c.b16 %v2930, %v2922
        %v5179 = vpack.c.b16 %v2939, %v2931
        %v5180 = vpack.c.b16 %v2940, %v2932
        %v5181 = vpack.c.b16 %v2941, %v2933
        %v5182 = vpack.c.b16 %v2942, %v2934
        %v5183 = vpack.c.b16 %v2943, %v2935
        %v5184 = vpack.c.b16 %v2944, %v2936
        %v5185 = vpack.c.b16 %v2945, %v2937
        %v5186 = vpack.c.b16 %v2946, %v2938
        %v5187 = vpack.c.b16 %v2955, %v2947
        %v5188 = vpack.c.b16 %v2956, %v2948
        %v5189 = vpack.c.b16 %v2957, %v2949
        %v5190 = vpack.c.b16 %v2958, %v2950
        %v5191 = vpack.c.b16 %v2959, %v2951
        %v5192 = vpack.c.b16 %v2960, %v2952
        %v5193 = vpack.c.b16 %v2961, %v2953
        %v5194 = vpack.c.b16 %v2962, %v2954
        %v5195 = vpack.c.b16 %v2971, %v2963
        %v5196 = vpack.c.b16 %v2972, %v2964
        %v5197 = vpack.c.b16 %v2973, %v2965
        %v5198 = vpack.c.b16 %v2974, %v2966
        %v5199 = vpack.c.b16 %v2975, %v2967
        %v5200 = vpack.c.b16 %v2976, %v2968
        %v5201 = vpack.c.b16 %v2977, %v2969
        %v5202 = vpack.c.b16 %v2978, %v2970
        %v5203 = vpack.c.b16 %v2987, %v2979
        %v5204 = vpack.c.b16 %v2988, %v2980
        %v5205 = vpack.c.b16 %v2989, %v2981
        %v5206 = vpack.c.b16 %v2990, %v2982
        %v5207 = vpack.c.b16 %v2991, %v2983
        %v5208 = vpack.c.b16 %v2992, %v2984
        %v5209 = vpack.c.b16 %v2993, %v2985
        %v5210 = vpack.c.b16 %v2994, %v2986
        %v5211 = vpack.c.b16 %v3003, %v2995
        %v5212 = vpack.c.b16 %v3004, %v2996
        %v5213 = vpack.c.b16 %v3005, %v2997
        %v5214 = vpack.c.b16 %v3006, %v2998
        %v5215 = vpack.c.b16 %v3007, %v2999
        %v5216 = vpack.c.b16 %v3008, %v3000
        %v5217 = vpack.c.b16 %v3009, %v3001
        %v5218 = vpack.c.b16 %v3010, %v3002
        %v5219 = vpack.c.b16 %v3019, %v3011
        %v5220 = vpack.c.b16 %v3020, %v3012
        %v5221 = vpack.c.b16 %v3021, %v3013
        %v5222 = vpack.c.b16 %v3022, %v3014
        %v5223 = vpack.c.b16 %v3023, %v3015
        %v5224 = vpack.c.b16 %v3024, %v3016
        %v5225 = vpack.c.b16 %v3025, %v3017
        %v5226 = vpack.c.b16 %v3026, %v3018
        %v5227 = vpack.c.b16 %v3035, %v3027
        %v5228 = vpack.c.b16 %v3036, %v3028
        %v5229 = vpack.c.b16 %v3037, %v3029
        %v5230 = vpack.c.b16 %v3038, %v3030
        %v5231 = vpack.c.b16 %v3039, %v3031
        %v5232 = vpack.c.b16 %v3040, %v3032
        %v5233 = vpack.c.b16 %v3041, %v3033
        %v5234 = vpack.c.b16 %v3042, %v3034
        %v5235 = vpack.c.b16 %v3051, %v3043
        %v5236 = vpack.c.b16 %v3052, %v3044
        %v5237 = vpack.c.b16 %v3053, %v3045
        %v5238 = vpack.c.b16 %v3054, %v3046
        %v5239 = vpack.c.b16 %v3055, %v3047
        %v5240 = vpack.c.b16 %v3056, %v3048
        %v5241 = vpack.c.b16 %v3057, %v3049
        %v5242 = vpack.c.b16 %v3058, %v3050
        %v5243 = vpack.c.b16 %v3067, %v3059
        %v5244 = vpack.c.b16 %v3068, %v3060
        %v5245 = vpack.c.b16 %v3069, %v3061
        %v5246 = vpack.c.b16 %v3070, %v3062
        %v5247 = vpack.c.b16 %v3071, %v3063
        %v5248 = vpack.c.b16 %v3072, %v3064
        %v5249 = vpack.c.b16 %v3073, %v3065
        %v5250 = vpack.c.b16 %v3074, %v3066
        %v5251 = vpack.c.b16 %v3083, %v3075
        %v5252 = vpack.c.b16 %v3084, %v3076
        %v5253 = vpack.c.b16 %v3085, %v3077
        %v5254 = vpack.c.b16 %v3086, %v3078
        %v5255 = vpack.c.b16 %v3087, %v3079
        %v5256 = vpack.c.b16 %v3088, %v3080
        %v5257 = vpack.c.b16 %v3089, %v3081
        %v5258 = vpack.c.b16 %v3090, %v3082
        %v5259 = vpack.c.b16 %v3099, %v3091
        %v5260 = vpack.c.b16 %v3100, %v3092
        %v5261 = vpack.c.b16 %v3101, %v3093
        %v5262 = vpack.c.b16 %v3102, %v3094
        %v5263 = vpack.c.b16 %v3103, %v3095
        %v5264 = vpack.c.b16 %v3104, %v3096
        %v5265 = vpack.c.b16 %v3105, %v3097
        %v5266 = vpack.c.b16 %v3106, %v3098
        %v5267 = vpack.c.b16 %v3115, %v3107
        %v5268 = vpack.c.b16 %v3116, %v3108
        %v5269 = vpack.c.b16 %v3117, %v3109
        %v5270 = vpack.c.b16 %v3118, %v3110
        %v5271 = vpack.c.b16 %v3119, %v3111
        %v5272 = vpack.c.b16 %v3120, %v3112
        %v5273 = vpack.c.b16 %v3121, %v3113
        %v5274 = vpack.c.b16 %v3122, %v3114
        %v5275 = vpack.c.b16 %v3131, %v3123
        %v5276 = vpack.c.b16 %v3132, %v3124
        %v5277 = vpack.c.b16 %v3133, %v3125
        %v5278 = vpack.c.b16 %v3134, %v3126
        %v5279 = vpack.c.b16 %v3135, %v3127
        %v5280 = vpack.c.b16 %v3136, %v3128
        %v5281 = vpack.c.b16 %v3137, %v3129
        %v5282 = vpack.c.b16 %v3138, %v3130
        %v5283 = vpack.c.b16 %v3147, %v3139
        %v5284 = vpack.c.b16 %v3148, %v3140
        %v5285 = vpack.c.b16 %v3149, %v3141
        %v5286 = vpack.c.b16 %v3150, %v3142
        %v5287 = vpack.c.b16 %v3151, %v3143
        %v5288 = vpack.c.b16 %v3152, %v3144
        %v5289 = vpack.c.b16 %v3153, %v3145
        %v5290 = vpack.c.b16 %v3154, %v3146
        %v5291 = vpack.c.b16 %v3163, %v3155
        %v5292 = vpack.c.b16 %v3164, %v3156
        %v5293 = vpack.c.b16 %v3165, %v3157
        %v5294 = vpack.c.b16 %v3166, %v3158
        %v5295 = vpack.c.b16 %v3167, %v3159
        %v5296 = vpack.c.b16 %v3168, %v3160
        %v5297 = vpack.c.b16 %v3169, %v3161
        %v5298 = vpack.c.b16 %v3170, %v3162
        %v5299 = vpack.c.b16 %v3179, %v3171
        %v5300 = vpack.c.b16 %v3180, %v3172
        %v5301 = vpack.c.b16 %v3181, %v3173
        %v5302 = vpack.c.b16 %v3182, %v3174
        %v5303 = vpack.c.b16 %v3183, %v3175
        %v5304 = vpack.c.b16 %v3184, %v3176
        %v5305 = vpack.c.b16 %v3185, %v3177
        %v5306 = vpack.c.b16 %v3186, %v3178
        %v5307 = vpack.c.b16 %v3195, %v3187
        %v5308 = vpack.c.b16 %v3196, %v3188
        %v5309 = vpack.c.b16 %v3197, %v3189
        %v5310 = vpack.c.b16 %v3198, %v3190
        %v5311 = vpack.c.b16 %v3199, %v3191
        %v5312 = vpack.c.b16 %v3200, %v3192
        %v5313 = vpack.c.b16 %v3201, %v3193
        %v5314 = vpack.c.b16 %v3202, %v3194
        %v5315 = vpack.c.b16 %v3211, %v3203
        %v5316 = vpack.c.b16 %v3212, %v3204
        %v5317 = vpack.c.b16 %v3213, %v3205
        %v5318 = vpack.c.b16 %v3214, %v3206
        %v5319 = vpack.c.b16 %v3215, %v3207
        %v5320 = vpack.c.b16 %v3216, %v3208
        %v5321 = vpack.c.b16 %v3217, %v3209
        %v5322 = vpack.c.b16 %v3218, %v3210
        %v5323 = vpack.c.b16 %v3227, %v3219
        %v5324 = vpack.c.b16 %v3228, %v3220
        %v5325 = vpack.c.b16 %v3229, %v3221
        %v5326 = vpack.c.b16 %v3230, %v3222
        %v5327 = vpack.c.b16 %v3231, %v3223
        %v5328 = vpack.c.b16 %v3232, %v3224
        %v5329 = vpack.c.b16 %v3233, %v3225
        %v5330 = vpack.c.b16 %v3234, %v3226
        %v5331 = vpack.c.b16 %v3243, %v3235
        %v5332 = vpack.c.b16 %v3244, %v3236
        %v5333 = vpack.c.b16 %v3245, %v3237
        %v5334 = vpack.c.b16 %v3246, %v3238
        %v5335 = vpack.c.b16 %v3247, %v3239
        %v5336 = vpack.c.b16 %v3248, %v3240
        %v5337 = vpack.c.b16 %v3249, %v3241
        %v5338 = vpack.c.b16 %v3250, %v3242
        %v5339 = vpack.c.b16 %v3259, %v3251
        %v5340 = vpack.c.b16 %v3260, %v3252
        %v5341 = vpack.c.b16 %v3261, %v3253
        %v5342 = vpack.c.b16 %v3262, %v3254
        %v5343 = vpack.c.b16 %v3263, %v3255
        %v5344 = vpack.c.b16 %v3264, %v3256
        %v5345 = vpack.c.b16 %v3265, %v3257
        %v5346 = vpack.c.b16 %v3266, %v3258
        %v5347 = vpack.c.b16 %v3275, %v3267
        %v5348 = vpack.c.b16 %v3276, %v3268
        %v5349 = vpack.c.b16 %v3277, %v3269
        %v5350 = vpack.c.b16 %v3278, %v3270
        %v5351 = vpack.c.b16 %v3279, %v3271
        %v5352 = vpack.c.b16 %v3280, %v3272
        %v5353 = vpack.c.b16 %v3281, %v3273
        %v5354 = vpack.c.b16 %v3282, %v3274
        %v5355 = vpack.c.b16 %v3291, %v3283
        %v5356 = vpack.c.b16 %v3292, %v3284
        %v5357 = vpack.c.b16 %v3293, %v3285
        %v5358 = vpack.c.b16 %v3294, %v3286
        %v5359 = vpack.c.b16 %v3295, %v3287
        %v5360 = vpack.c.b16 %v3296, %v3288
        %v5361 = vpack.c.b16 %v3297, %v3289
        %v5362 = vpack.c.b16 %v3298, %v3290
        %v5363 = vpack.c.b16 %v3307, %v3299
        %v5364 = vpack.c.b16 %v3308, %v3300
        %v5365 = vpack.c.b16 %v3309, %v3301
        %v5366 = vpack.c.b16 %v3310, %v3302
        %v5367 = vpack.c.b16 %v3311, %v3303
        %v5368 = vpack.c.b16 %v3312, %v3304
        %v5369 = vpack.c.b16 %v3313, %v3305
        %v5370 = vpack.c.b16 %v3314, %v3306
        %v5371 = vpack.c.b16 %v3323, %v3315
        %v5372 = vpack.c.b16 %v3324, %v3316
        %v5373 = vpack.c.b16 %v3325, %v3317
        %v5374 = vpack.c.b16 %v3326, %v3318
        %v5375 = vpack.c.b16 %v3327, %v3319
        %v5376 = vpack.c.b16 %v3328, %v3320
        %v5377 = vpack.c.b16 %v3329, %v3321
        %v5378 = vpack.c.b16 %v3330, %v3322
        %v5379 = vpack.c.b16 %v3339, %v3331
        %v5380 = vpack.c.b16 %v3340, %v3332
        %v5381 = vpack.c.b16 %v3341, %v3333
        %v5382 = vpack.c.b16 %v3342, %v3334
        %v5383 = vpack.c.b16 %v3343, %v3335
        %v5384 = vpack.c.b16 %v3344, %v3336
        %v5385 = vpack.c.b16 %v3345, %v3337
        %v5386 = vpack.c.b16 %v3346, %v3338
        %v5387 = vpack.c.b16 %v3355, %v3347
        %v5388 = vpack.c.b16 %v3356, %v3348
        %v5389 = vpack.c.b16 %v3357, %v3349
        %v5390 = vpack.c.b16 %v3358, %v3350
        %v5391 = vpack.c.b16 %v3359, %v3351
        %v5392 = vpack.c.b16 %v3360, %v3352
        %v5393 = vpack.c.b16 %v3361, %v3353
        %v5394 = vpack.c.b16 %v3362, %v3354
        %v5395 = vpack.c.b16 %v3371, %v3363
        %v5396 = vpack.c.b16 %v3372, %v3364
        %v5397 = vpack.c.b16 %v3373, %v3365
        %v5398 = vpack.c.b16 %v3374, %v3366
        %v5399 = vpack.c.b16 %v3375, %v3367
        %v5400 = vpack.c.b16 %v3376, %v3368
        %v5401 = vpack.c.b16 %v3377, %v3369
        %v5402 = vpack.c.b16 %v3378, %v3370
        %v5403 = vpack.c.b16 %v3387, %v3379
        %v5404 = vpack.c.b16 %v3388, %v3380
        %v5405 = vpack.c.b16 %v3389, %v3381
        %v5406 = vpack.c.b16 %v3390, %v3382
        %v5407 = vpack.c.b16 %v3391, %v3383
        %v5408 = vpack.c.b16 %v3392, %v3384
        %v5409 = vpack.c.b16 %v3393, %v3385
        %v5410 = vpack.c.b16 %v3394, %v3386
        %v5411 = vpack.c.b16 %v3403, %v3395
        %v5412 = vpack.c.b16 %v3404, %v3396
        %v5413 = vpack.c.b16 %v3405, %v3397
        %v5414 = vpack.c.b16 %v3406, %v3398
        %v5415 = vpack.c.b16 %v3407, %v3399
        %v5416 = vpack.c.b16 %v3408, %v3400
        %v5417 = vpack.c.b16 %v3409, %v3401
        %v5418 = vpack.c.b16 %v3410, %v3402
        %v5419 = vpack.c.b16 %v3419, %v3411
        %v5420 = vpack.c.b16 %v3420, %v3412
        %v5421 = vpack.c.b16 %v3421, %v3413
        %v5422 = vpack.c.b16 %v3422, %v3414
        %v5423 = vpack.c.b16 %v3423, %v3415
        %v5424 = vpack.c.b16 %v3424, %v3416
        %v5425 = vpack.c.b16 %v3425, %v3417
        %v5426 = vpack.c.b16 %v3426, %v3418
        %v5427 = vpack.c.b16 %v3435, %v3427
        %v5428 = vpack.c.b16 %v3436, %v3428
        %v5429 = vpack.c.b16 %v3437, %v3429
        %v5430 = vpack.c.b16 %v3438, %v3430
        %v5431 = vpack.c.b16 %v3439, %v3431
        %v5432 = vpack.c.b16 %v3440, %v3432
        %v5433 = vpack.c.b16 %v3441, %v3433
        %v5434 = vpack.c.b16 %v3442, %v3434
        %v5435 = vpack.c.b16 %v3451, %v3443
        %v5436 = vpack.c.b16 %v3452, %v3444
        %v5437 = vpack.c.b16 %v3453, %v3445
        %v5438 = vpack.c.b16 %v3454, %v3446
        %v5439 = vpack.c.b16 %v3455, %v3447
        %v5440 = vpack.c.b16 %v3456, %v3448
        %v5441 = vpack.c.b16 %v3457, %v3449
        %v5442 = vpack.c.b16 %v3458, %v3450
        %v5443 = vpack.c.b16 %v3467, %v3459
        %v5444 = vpack.c.b16 %v3468, %v3460
        %v5445 = vpack.c.b16 %v3469, %v3461
        %v5446 = vpack.c.b16 %v3470, %v3462
        %v5447 = vpack.c.b16 %v3471, %v3463
        %v5448 = vpack.c.b16 %v3472, %v3464
        %v5449 = vpack.c.b16 %v3473, %v3465
        %v5450 = vpack.c.b16 %v3474, %v3466
        %v5451 = vpack.c.b16 %v3483, %v3475
        %v5452 = vpack.c.b16 %v3484, %v3476
        %v5453 = vpack.c.b16 %v3485, %v3477
        %v5454 = vpack.c.b16 %v3486, %v3478
        %v5455 = vpack.c.b16 %v3487, %v3479
        %v5456 = vpack.c.b16 %v3488, %v3480
        %v5457 = vpack.c.b16 %v3489, %v3481
        %v5458 = vpack.c.b16 %v3490, %v3482
        %v5459 = vpack.c.b16 %v3499, %v3491
        %v5460 = vpack.c.b16 %v3500, %v3492
        %v5461 = vpack.c.b16 %v3501, %v3493
        %v5462 = vpack.c.b16 %v3502, %v3494
        %v5463 = vpack.c.b16 %v3503, %v3495
        %v5464 = vpack.c.b16 %v3504, %v3496
        %v5465 = vpack.c.b16 %v3505, %v3497
        %v5466 = vpack.c.b16 %v3506, %v3498
        %v5467 = vpack.c.b16 %v3515, %v3507
        %v5468 = vpack.c.b16 %v3516, %v3508
        %v5469 = vpack.c.b16 %v3517, %v3509
        %v5470 = vpack.c.b16 %v3518, %v3510
        %v5471 = vpack.c.b16 %v3519, %v3511
        %v5472 = vpack.c.b16 %v3520, %v3512
        %v5473 = vpack.c.b16 %v3521, %v3513
        %v5474 = vpack.c.b16 %v3522, %v3514
        %v5475 = vpack.c.b16 %v3531, %v3523
        %v5476 = vpack.c.b16 %v3532, %v3524
        %v5477 = vpack.c.b16 %v3533, %v3525
        %v5478 = vpack.c.b16 %v3534, %v3526
        %v5479 = vpack.c.b16 %v3535, %v3527
        %v5480 = vpack.c.b16 %v3536, %v3528
        %v5481 = vpack.c.b16 %v3537, %v3529
        %v5482 = vpack.c.b16 %v3538, %v3530
        %v5483 = vpack.c.b16 %v3547, %v3539
        %v5484 = vpack.c.b16 %v3548, %v3540
        %v5485 = vpack.c.b16 %v3549, %v3541
        %v5486 = vpack.c.b16 %v3550, %v3542
        %v5487 = vpack.c.b16 %v3551, %v3543
        %v5488 = vpack.c.b16 %v3552, %v3544
        %v5489 = vpack.c.b16 %v3553, %v3545
        %v5490 = vpack.c.b16 %v3554, %v3546
        %v5491 = vpack.c.b16 %v3563, %v3555
        %v5492 = vpack.c.b16 %v3564, %v3556
        %v5493 = vpack.c.b16 %v3565, %v3557
        %v5494 = vpack.c.b16 %v3566, %v3558
        %v5495 = vpack.c.b16 %v3567, %v3559
        %v5496 = vpack.c.b16 %v3568, %v3560
        %v5497 = vpack.c.b16 %v3569, %v3561
        %v5498 = vpack.c.b16 %v3570, %v3562
        %v5499 = vpack.c.b16 %v3579, %v3571
        %v5500 = vpack.c.b16 %v3580, %v3572
        %v5501 = vpack.c.b16 %v3581, %v3573
        %v5502 = vpack.c.b16 %v3582, %v3574
        %v5503 = vpack.c.b16 %v3583, %v3575
        %v5504 = vpack.c.b16 %v3584, %v3576
        %v5505 = vpack.c.b16 %v3585, %v3577
        %v5506 = vpack.c.b16 %v3586, %v3578
        %v5507 = vpack.c.b16 %v3595, %v3587
        %v5508 = vpack.c.b16 %v3596, %v3588
        %v5509 = vpack.c.b16 %v3597, %v3589
        %v5510 = vpack.c.b16 %v3598, %v3590
        %v5511 = vpack.c.b16 %v3599, %v3591
        %v5512 = vpack.c.b16 %v3600, %v3592
        %v5513 = vpack.c.b16 %v3601, %v3593
        %v5514 = vpack.c.b16 %v3602, %v3594
        %v5515 = vpack.c.b16 %v3611, %v3603
        %v5516 = vpack.c.b16 %v3612, %v3604
        %v5517 = vpack.c.b16 %v3613, %v3605
        %v5518 = vpack.c.b16 %v3614, %v3606
        %v5519 = vpack.c.b16 %v3615, %v3607
        %v5520 = vpack.c.b16 %v3616, %v3608
        %v5521 = vpack.c.b16 %v3617, %v3609
        %v5522 = vpack.c.b16 %v3618, %v3610
        %v5523 = vpack.c.b16 %v3627, %v3619
        %v5524 = vpack.c.b16 %v3628, %v3620
        %v5525 = vpack.c.b16 %v3629, %v3621
        %v5526 = vpack.c.b16 %v3630, %v3622
        %v5527 = vpack.c.b16 %v3631, %v3623
        %v5528 = vpack.c.b16 %v3632, %v3624
        %v5529 = vpack.c.b16 %v3633, %v3625
        %v5530 = vpack.c.b16 %v3634, %v3626
        %v5531 = vpack.c.b16 %v3643, %v3635
        %v5532 = vpack.c.b16 %v3644, %v3636
        %v5533 = vpack.c.b16 %v3645, %v3637
        %v5534 = vpack.c.b16 %v3646, %v3638
        %v5535 = vpack.c.b16 %v3647, %v3639
        %v5536 = vpack.c.b16 %v3648, %v3640
        %v5537 = vpack.c.b16 %v3649, %v3641
        %v5538 = vpack.c.b16 %v3650, %v3642
        %v5539 = vpack.c.b16 %v3659, %v3651
        %v5540 = vpack.c.b16 %v3660, %v3652
        %v5541 = vpack.c.b16 %v3661, %v3653
        %v5542 = vpack.c.b16 %v3662, %v3654
        %v5543 = vpack.c.b16 %v3663, %v3655
        %v5544 = vpack.c.b16 %v3664, %v3656
        %v5545 = vpack.c.b16 %v3665, %v3657
        %v5546 = vpack.c.b16 %v3666, %v3658
        %v5547 = vpack.c.b16 %v3675, %v3667
        %v5548 = vpack.c.b16 %v3676, %v3668
        %v5549 = vpack.c.b16 %v3677, %v3669
        %v5550 = vpack.c.b16 %v3678, %v3670
        %v5551 = vpack.c.b16 %v3679, %v3671
        %v5552 = vpack.c.b16 %v3680, %v3672
        %v5553 = vpack.c.b16 %v3681, %v3673
        %v5554 = vpack.c.b16 %v3682, %v3674
        %v5555 = vpack.c.b16 %v3691, %v3683
        %v5556 = vpack.c.b16 %v3692, %v3684
        %v5557 = vpack.c.b16 %v3693, %v3685
        %v5558 = vpack.c.b16 %v3694, %v3686
        %v5559 = vpack.c.b16 %v3695, %v3687
        %v5560 = vpack.c.b16 %v3696, %v3688
        %v5561 = vpack.c.b16 %v3697, %v3689
        %v5562 = vpack.c.b16 %v3698, %v3690
        %v5563 = vpack.c.b16 %v3707, %v3699
        %v5564 = vpack.c.b16 %v3708, %v3700
        %v5565 = vpack.c.b16 %v3709, %v3701
        %v5566 = vpack.c.b16 %v3710, %v3702
        %v5567 = vpack.c.b16 %v3711, %v3703
        %v5568 = vpack.c.b16 %v3712, %v3704
        %v5569 = vpack.c.b16 %v3713, %v3705
        %v5570 = vpack.c.b16 %v3714, %v3706
        %v5571 = vpack.c.b16 %v3723, %v3715
        %v5572 = vpack.c.b16 %v3724, %v3716
        %v5573 = vpack.c.b16 %v3725, %v3717
        %v5574 = vpack.c.b16 %v3726, %v3718
        %v5575 = vpack.c.b16 %v3727, %v3719
        %v5576 = vpack.c.b16 %v3728, %v3720
        %v5577 = vpack.c.b16 %v3729, %v3721
        %v5578 = vpack.c.b16 %v3730, %v3722
        %v5579 = vpack.c.b16 %v3739, %v3731
        %v5580 = vpack.c.b16 %v3740, %v3732
        %v5581 = vpack.c.b16 %v3741, %v3733
        %v5582 = vpack.c.b16 %v3742, %v3734
        %v5583 = vpack.c.b16 %v3743, %v3735
        %v5584 = vpack.c.b16 %v3744, %v3736
        %v5585 = vpack.c.b16 %v3745, %v3737
        %v5586 = vpack.c.b16 %v3746, %v3738
        %v5587 = vpack.c.b16 %v3755, %v3747
        %v5588 = vpack.c.b16 %v3756, %v3748
        %v5589 = vpack.c.b16 %v3757, %v3749
        %v5590 = vpack.c.b16 %v3758, %v3750
        %v5591 = vpack.c.b16 %v3759, %v3751
        %v5592 = vpack.c.b16 %v3760, %v3752
        %v5593 = vpack.c.b16 %v3761, %v3753
        %v5594 = vpack.c.b16 %v3762, %v3754
        %v5595 = vpack.c.b16 %v3771, %v3763
        %v5596 = vpack.c.b16 %v3772, %v3764
        %v5597 = vpack.c.b16 %v3773, %v3765
        %v5598 = vpack.c.b16 %v3774, %v3766
        %v5599 = vpack.c.b16 %v3775, %v3767
        %v5600 = vpack.c.b16 %v3776, %v3768
        %v5601 = vpack.c.b16 %v3777, %v3769
        %v5602 = vpack.c.b16 %v3778, %v3770
        %v5603 = vpack.c.b16 %v3787, %v3779
        %v5604 = vpack.c.b16 %v3788, %v3780
        %v5605 = vpack.c.b16 %v3789, %v3781
        %v5606 = vpack.c.b16 %v3790, %v3782
        %v5607 = vpack.c.b16 %v3791, %v3783
        %v5608 = vpack.c.b16 %v3792, %v3784
        %v5609 = vpack.c.b16 %v3793, %v3785
        %v5610 = vpack.c.b16 %v3794, %v3786
        %v5611 = vpack.c.b16 %v3803, %v3795
        %v5612 = vpack.c.b16 %v3804, %v3796
        %v5613 = vpack.c.b16 %v3805, %v3797
        %v5614 = vpack.c.b16 %v3806, %v3798
        %v5615 = vpack.c.b16 %v3807, %v3799
        %v5616 = vpack.c.b16 %v3808, %v3800
        %v5617 = vpack.c.b16 %v3809, %v3801
        %v5618 = vpack.c.b16 %v3810, %v3802
        %v5619 = vpack.c.b16 %v3819, %v3811
        %v5620 = vpack.c.b16 %v3820, %v3812
        %v5621 = vpack.c.b16 %v3821, %v3813
        %v5622 = vpack.c.b16 %v3822, %v3814
        %v5623 = vpack.c.b16 %v3823, %v3815
        %v5624 = vpack.c.b16 %v3824, %v3816
        %v5625 = vpack.c.b16 %v3825, %v3817
        %v5626 = vpack.c.b16 %v3826, %v3818
        %v5627 = vpack.c.b16 %v3835, %v3827
        %v5628 = vpack.c.b16 %v3836, %v3828
        %v5629 = vpack.c.b16 %v3837, %v3829
        %v5630 = vpack.c.b16 %v3838, %v3830
        %v5631 = vpack.c.b16 %v3839, %v3831
        %v5632 = vpack.c.b16 %v3840, %v3832
        %v5633 = vpack.c.b16 %v3841, %v3833
        %v5634 = vpack.c.b16 %v3842, %v3834
        %v5635 = vpack.c.b16 %v3851, %v3843
        %v5636 = vpack.c.b16 %v3852, %v3844
        %v5637 = vpack.c.b16 %v3853, %v3845
        %v5638 = vpack.c.b16 %v3854, %v3846
        %v5639 = vpack.c.b16 %v3855, %v3847
        %v5640 = vpack.c.b16 %v3856, %v3848
        %v5641 = vpack.c.b16 %v3857, %v3849
        %v5642 = vpack.c.b16 %v3858, %v3850
        %v5643 = vpack.c.b16 %v3867, %v3859
        %v5644 = vpack.c.b16 %v3868, %v3860
        %v5645 = vpack.c.b16 %v3869, %v3861
        %v5646 = vpack.c.b16 %v3870, %v3862
        %v5647 = vpack.c.b16 %v3871, %v3863
        %v5648 = vpack.c.b16 %v3872, %v3864
        %v5649 = vpack.c.b16 %v3873, %v3865
        %v5650 = vpack.c.b16 %v3874, %v3866
        %v5651 = vpack.c.b16 %v3883, %v3875
        %v5652 = vpack.c.b16 %v3884, %v3876
        %v5653 = vpack.c.b16 %v3885, %v3877
        %v5654 = vpack.c.b16 %v3886, %v3878
        %v5655 = vpack.c.b16 %v3887, %v3879
        %v5656 = vpack.c.b16 %v3888, %v3880
        %v5657 = vpack.c.b16 %v3889, %v3881
        %v5658 = vpack.c.b16 %v3890, %v3882
        %v5659 = vpack.c.b16 %v3899, %v3891
        %v5660 = vpack.c.b16 %v3900, %v3892
        %v5661 = vpack.c.b16 %v3901, %v3893
        %v5662 = vpack.c.b16 %v3902, %v3894
        %v5663 = vpack.c.b16 %v3903, %v3895
        %v5664 = vpack.c.b16 %v3904, %v3896
        %v5665 = vpack.c.b16 %v3905, %v3897
        %v5666 = vpack.c.b16 %v3906, %v3898
        %v5667 = vpack.c.b16 %v3915, %v3907
        %v5668 = vpack.c.b16 %v3916, %v3908
        %v5669 = vpack.c.b16 %v3917, %v3909
        %v5670 = vpack.c.b16 %v3918, %v3910
        %v5671 = vpack.c.b16 %v3919, %v3911
        %v5672 = vpack.c.b16 %v3920, %v3912
        %v5673 = vpack.c.b16 %v3921, %v3913
        %v5674 = vpack.c.b16 %v3922, %v3914
        %v5675 = vpack.c.b16 %v3931, %v3923
        %v5676 = vpack.c.b16 %v3932, %v3924
        %v5677 = vpack.c.b16 %v3933, %v3925
        %v5678 = vpack.c.b16 %v3934, %v3926
        %v5679 = vpack.c.b16 %v3935, %v3927
        %v5680 = vpack.c.b16 %v3936, %v3928
        %v5681 = vpack.c.b16 %v3937, %v3929
        %v5682 = vpack.c.b16 %v3938, %v3930
        %v5683 = vpack.c.b16 %v3947, %v3939
        %v5684 = vpack.c.b16 %v3948, %v3940
        %v5685 = vpack.c.b16 %v3949, %v3941
        %v5686 = vpack.c.b16 %v3950, %v3942
        %v5687 = vpack.c.b16 %v3951, %v3943
        %v5688 = vpack.c.b16 %v3952, %v3944
        %v5689 = vpack.c.b16 %v3953, %v3945
        %v5690 = vpack.c.b16 %v3954, %v3946
        %v5691 = vpack.c.b16 %v3963, %v3955
        %v5692 = vpack.c.b16 %v3964, %v3956
        %v5693 = vpack.c.b16 %v3965, %v3957
        %v5694 = vpack.c.b16 %v3966, %v3958
        %v5695 = vpack.c.b16 %v3967, %v3959
        %v5696 = vpack.c.b16 %v3968, %v3960
        %v5697 = vpack.c.b16 %v3969, %v3961
        %v5698 = vpack.c.b16 %v3970, %v3962
        %v5699 = vpack.c.b16 %v3979, %v3971
        %v5700 = vpack.c.b16 %v3980, %v3972
        %v5701 = vpack.c.b16 %v3981, %v3973
        %v5702 = vpack.c.b16 %v3982, %v3974
        %v5703 = vpack.c.b16 %v3983, %v3975
        %v5704 = vpack.c.b16 %v3984, %v3976
        %v5705 = vpack.c.b16 %v3985, %v3977
        %v5706 = vpack.c.b16 %v3986, %v3978
        %v5707 = vpack.c.b16 %v3995, %v3987
        %v5708 = vpack.c.b16 %v3996, %v3988
        %v5709 = vpack.c.b16 %v3997, %v3989
        %v5710 = vpack.c.b16 %v3998, %v3990
        %v5711 = vpack.c.b16 %v3999, %v3991
        %v5712 = vpack.c.b16 %v4000, %v3992
        %v5713 = vpack.c.b16 %v4001, %v3993
        %v5714 = vpack.c.b16 %v4002, %v3994
        %v5715 = vpack.c.b16 %v4011, %v4003
        %v5716 = vpack.c.b16 %v4012, %v4004
        %v5717 = vpack.c.b16 %v4013, %v4005
        %v5718 = vpack.c.b16 %v4014, %v4006
        %v5719 = vpack.c.b16 %v4015, %v4007
        %v5720 = vpack.c.b16 %v4016, %v4008
        %v5721 = vpack.c.b16 %v4017, %v4009
        %v5722 = vpack.c.b16 %v4018, %v4010
        %v5723 = vpack.c.b16 %v4027, %v4019
        %v5724 = vpack.c.b16 %v4028, %v4020
        %v5725 = vpack.c.b16 %v4029, %v4021
        %v5726 = vpack.c.b16 %v4030, %v4022
        %v5727 = vpack.c.b16 %v4031, %v4023
        %v5728 = vpack.c.b16 %v4032, %v4024
        %v5729 = vpack.c.b16 %v4033, %v4025
        %v5730 = vpack.c.b16 %v4034, %v4026
        %v5731 = vpack.c.b16 %v4043, %v4035
        %v5732 = vpack.c.b16 %v4044, %v4036
        %v5733 = vpack.c.b16 %v4045, %v4037
        %v5734 = vpack.c.b16 %v4046, %v4038
        %v5735 = vpack.c.b16 %v4047, %v4039
        %v5736 = vpack.c.b16 %v4048, %v4040
        %v5737 = vpack.c.b16 %v4049, %v4041
        %v5738 = vpack.c.b16 %v4050, %v4042
        %v5739 = vpack.c.b16 %v4059, %v4051
        %v5740 = vpack.c.b16 %v4060, %v4052
        %v5741 = vpack.c.b16 %v4061, %v4053
        %v5742 = vpack.c.b16 %v4062, %v4054
        %v5743 = vpack.c.b16 %v4063, %v4055
        %v5744 = vpack.c.b16 %v4064, %v4056
        %v5745 = vpack.c.b16 %v4065, %v4057
        %v5746 = vpack.c.b16 %v4066, %v4058
        %v5747 = vpack.c.b16 %v4075, %v4067
        %v5748 = vpack.c.b16 %v4076, %v4068
        %v5749 = vpack.c.b16 %v4077, %v4069
        %v5750 = vpack.c.b16 %v4078, %v4070
        %v5751 = vpack.c.b16 %v4079, %v4071
        %v5752 = vpack.c.b16 %v4080, %v4072
        %v5753 = vpack.c.b16 %v4081, %v4073
        %v5754 = vpack.c.b16 %v4082, %v4074
        %v5755 = vpack.c.b16 %v4091, %v4083
        %v5756 = vpack.c.b16 %v4092, %v4084
        %v5757 = vpack.c.b16 %v4093, %v4085
        %v5758 = vpack.c.b16 %v4094, %v4086
        %v5759 = vpack.c.b16 %v4095, %v4087
        %v5760 = vpack.c.b16 %v4096, %v4088
        %v5761 = vpack.c.b16 %v4097, %v4089
        %v5762 = vpack.c.b16 %v4098, %v4090
        %v5763 = vpack.c.b16 %v4107, %v4099
        %v5764 = vpack.c.b16 %v4108, %v4100
        %v5765 = vpack.c.b16 %v4109, %v4101
        %v5766 = vpack.c.b16 %v4110, %v4102
        %v5767 = vpack.c.b16 %v4111, %v4103
        %v5768 = vpack.c.b16 %v4112, %v4104
        %v5769 = vpack.c.b16 %v4113, %v4105
        %v5770 = vpack.c.b16 %v4114, %v4106
        %v5771 = vpack.c.b16 %v4123, %v4115
        %v5772 = vpack.c.b16 %v4124, %v4116
        %v5773 = vpack.c.b16 %v4125, %v4117
        %v5774 = vpack.c.b16 %v4126, %v4118
        %v5775 = vpack.c.b16 %v4127, %v4119
        %v5776 = vpack.c.b16 %v4128, %v4120
        %v5777 = vpack.c.b16 %v4129, %v4121
        %v5778 = vpack.c.b16 %v4130, %v4122
        %v5779 = vpack.c.b16 %v4139, %v4131
        %v5780 = vpack.c.b16 %v4140, %v4132
        %v5781 = vpack.c.b16 %v4141, %v4133
        %v5782 = vpack.c.b16 %v4142, %v4134
        %v5783 = vpack.c.b16 %v4143, %v4135
        %v5784 = vpack.c.b16 %v4144, %v4136
        %v5785 = vpack.c.b16 %v4145, %v4137
        %v5786 = vpack.c.b16 %v4146, %v4138
        %v5787 = vpack.c.b16 %v4155, %v4147
        %v5788 = vpack.c.b16 %v4156, %v4148
        %v5789 = vpack.c.b16 %v4157, %v4149
        %v5790 = vpack.c.b16 %v4158, %v4150
        %v5791 = vpack.c.b16 %v4159, %v4151
        %v5792 = vpack.c.b16 %v4160, %v4152
        %v5793 = vpack.c.b16 %v4161, %v4153
        %v5794 = vpack.c.b16 %v4162, %v4154
        %v5795 = vpack.c.b16 %v4171, %v4163
        %v5796 = vpack.c.b16 %v4172, %v4164
        %v5797 = vpack.c.b16 %v4173, %v4165
        %v5798 = vpack.c.b16 %v4174, %v4166
        %v5799 = vpack.c.b16 %v4175, %v4167
        %v5800 = vpack.c.b16 %v4176, %v4168
        %v5801 = vpack.c.b16 %v4177, %v4169
        %v5802 = vpack.c.b16 %v4178, %v4170
        %v5803 = vpack.c.b16 %v4187, %v4179
        %v5804 = vpack.c.b16 %v4188, %v4180
        %v5805 = vpack.c.b16 %v4189, %v4181
        %v5806 = vpack.c.b16 %v4190, %v4182
        %v5807 = vpack.c.b16 %v4191, %v4183
        %v5808 = vpack.c.b16 %v4192, %v4184
        %v5809 = vpack.c.b16 %v4193, %v4185
        %v5810 = vpack.c.b16 %v4194, %v4186
        %v5811 = vpack.c.b16 %v4203, %v4195
        %v5812 = vpack.c.b16 %v4204, %v4196
        %v5813 = vpack.c.b16 %v4205, %v4197
        %v5814 = vpack.c.b16 %v4206, %v4198
        %v5815 = vpack.c.b16 %v4207, %v4199
        %v5816 = vpack.c.b16 %v4208, %v4200
        %v5817 = vpack.c.b16 %v4209, %v4201
        %v5818 = vpack.c.b16 %v4210, %v4202
        %v5819 = vpack.c.b16 %v4219, %v4211
        %v5820 = vpack.c.b16 %v4220, %v4212
        %v5821 = vpack.c.b16 %v4221, %v4213
        %v5822 = vpack.c.b16 %v4222, %v4214
        %v5823 = vpack.c.b16 %v4223, %v4215
        %v5824 = vpack.c.b16 %v4224, %v4216
        %v5825 = vpack.c.b16 %v4225, %v4217
        %v5826 = vpack.c.b16 %v4226, %v4218
        %v5827 = vpack.c.b16 %v4235, %v4227
        %v5828 = vpack.c.b16 %v4236, %v4228
        %v5829 = vpack.c.b16 %v4237, %v4229
        %v5830 = vpack.c.b16 %v4238, %v4230
        %v5831 = vpack.c.b16 %v4239, %v4231
        %v5832 = vpack.c.b16 %v4240, %v4232
        %v5833 = vpack.c.b16 %v4241, %v4233
        %v5834 = vpack.c.b16 %v4242, %v4234
        %v5835 = vpack.c.b16 %v4251, %v4243
        %v5836 = vpack.c.b16 %v4252, %v4244
        %v5837 = vpack.c.b16 %v4253, %v4245
        %v5838 = vpack.c.b16 %v4254, %v4246
        %v5839 = vpack.c.b16 %v4255, %v4247
        %v5840 = vpack.c.b16 %v4256, %v4248
        %v5841 = vpack.c.b16 %v4257, %v4249
        %v5842 = vpack.c.b16 %v4258, %v4250
        %v5843 = vpack.c.b16 %v4267, %v4259
        %v5844 = vpack.c.b16 %v4268, %v4260
        %v5845 = vpack.c.b16 %v4269, %v4261
        %v5846 = vpack.c.b16 %v4270, %v4262
        %v5847 = vpack.c.b16 %v4271, %v4263
        %v5848 = vpack.c.b16 %v4272, %v4264
        %v5849 = vpack.c.b16 %v4273, %v4265
        %v5850 = vpack.c.b16 %v4274, %v4266
        %v5851 = vpack.c.b16 %v4283, %v4275
        %v5852 = vpack.c.b16 %v4284, %v4276
        %v5853 = vpack.c.b16 %v4285, %v4277
        %v5854 = vpack.c.b16 %v4286, %v4278
        %v5855 = vpack.c.b16 %v4287, %v4279
        %v5856 = vpack.c.b16 %v4288, %v4280
        %v5857 = vpack.c.b16 %v4289, %v4281
        %v5858 = vpack.c.b16 %v4290, %v4282
        %v5859 = vpack.c.b16 %v4299, %v4291
        %v5860 = vpack.c.b16 %v4300, %v4292
        %v5861 = vpack.c.b16 %v4301, %v4293
        %v5862 = vpack.c.b16 %v4302, %v4294
        %v5863 = vpack.c.b16 %v4303, %v4295
        %v5864 = vpack.c.b16 %v4304, %v4296
        %v5865 = vpack.c.b16 %v4305, %v4297
        %v5866 = vpack.c.b16 %v4306, %v4298
        %v5867 = vpack.c.b16 %v4315, %v4307
        %v5868 = vpack.c.b16 %v4316, %v4308
        %v5869 = vpack.c.b16 %v4317, %v4309
        %v5870 = vpack.c.b16 %v4318, %v4310
        %v5871 = vpack.c.b16 %v4319, %v4311
        %v5872 = vpack.c.b16 %v4320, %v4312
        %v5873 = vpack.c.b16 %v4321, %v4313
        %v5874 = vpack.c.b16 %v4322, %v4314
        %v5875 = vpack.c.b16 %v4331, %v4323
        %v5876 = vpack.c.b16 %v4332, %v4324
        %v5877 = vpack.c.b16 %v4333, %v4325
        %v5878 = vpack.c.b16 %v4334, %v4326
        %v5879 = vpack.c.b16 %v4335, %v4327
        %v5880 = vpack.c.b16 %v4336, %v4328
        %v5881 = vpack.c.b16 %v4337, %v4329
        %v5882 = vpack.c.b16 %v4338, %v4330
        %v5883 = vpack.c.b16 %v4347, %v4339
        %v5884 = vpack.c.b16 %v4348, %v4340
        %v5885 = vpack.c.b16 %v4349, %v4341
        %v5886 = vpack.c.b16 %v4350, %v4342
        %v5887 = vpack.c.b16 %v4351, %v4343
        %v5888 = vpack.c.b16 %v4352, %v4344
        %v5889 = vpack.c.b16 %v4353, %v4345
        %v5890 = vpack.c.b16 %v4354, %v4346
        %v5891 = vpack.c.b16 %v4363, %v4355
        %v5892 = vpack.c.b16 %v4364, %v4356
        %v5893 = vpack.c.b16 %v4365, %v4357
        %v5894 = vpack.c.b16 %v4366, %v4358
        %v5895 = vpack.c.b16 %v4367, %v4359
        %v5896 = vpack.c.b16 %v4368, %v4360
        %v5897 = vpack.c.b16 %v4369, %v4361
        %v5898 = vpack.c.b16 %v4370, %v4362
        %v5899 = vpack.c.b16 %v4379, %v4371
        %v5900 = vpack.c.b16 %v4380, %v4372
        %v5901 = vpack.c.b16 %v4381, %v4373
        %v5902 = vpack.c.b16 %v4382, %v4374
        %v5903 = vpack.c.b16 %v4383, %v4375
        %v5904 = vpack.c.b16 %v4384, %v4376
        %v5905 = vpack.c.b16 %v4385, %v4377
        %v5906 = vpack.c.b16 %v4386, %v4378
        %v5907 = vpack.c.b16 %v4395, %v4387
        %v5908 = vpack.c.b16 %v4396, %v4388
        %v5909 = vpack.c.b16 %v4397, %v4389
        %v5910 = vpack.c.b16 %v4398, %v4390
        %v5911 = vpack.c.b16 %v4399, %v4391
        %v5912 = vpack.c.b16 %v4400, %v4392
        %v5913 = vpack.c.b16 %v4401, %v4393
        %v5914 = vpack.c.b16 %v4402, %v4394
        %v5915 = vpack.c.b16 %v4411, %v4403
        %v5916 = vpack.c.b16 %v4412, %v4404
        %v5917 = vpack.c.b16 %v4413, %v4405
        %v5918 = vpack.c.b16 %v4414, %v4406
        %v5919 = vpack.c.b16 %v4415, %v4407
        %v5920 = vpack.c.b16 %v4416, %v4408
        %v5921 = vpack.c.b16 %v4417, %v4409
        %v5922 = vpack.c.b16 %v4418, %v4410
        %v5923 = vpack.c.b16 %v4427, %v4419
        %v5924 = vpack.c.b16 %v4428, %v4420
        %v5925 = vpack.c.b16 %v4429, %v4421
        %v5926 = vpack.c.b16 %v4430, %v4422
        %v5927 = vpack.c.b16 %v4431, %v4423
        %v5928 = vpack.c.b16 %v4432, %v4424
        %v5929 = vpack.c.b16 %v4433, %v4425
        %v5930 = vpack.c.b16 %v4434, %v4426
        %v5931 = vpack.c.b16 %v4443, %v4435
        %v5932 = vpack.c.b16 %v4444, %v4436
        %v5933 = vpack.c.b16 %v4445, %v4437
        %v5934 = vpack.c.b16 %v4446, %v4438
        %v5935 = vpack.c.b16 %v4447, %v4439
        %v5936 = vpack.c.b16 %v4448, %v4440
        %v5937 = vpack.c.b16 %v4449, %v4441
        %v5938 = vpack.c.b16 %v4450, %v4442
        %v5939 = vpack.c.b16 %v4459, %v4451
        %v5940 = vpack.c.b16 %v4460, %v4452
        %v5941 = vpack.c.b16 %v4461, %v4453
        %v5942 = vpack.c.b16 %v4462, %v4454
        %v5943 = vpack.c.b16 %v4463, %v4455
        %v5944 = vpack.c.b16 %v4464, %v4456
        %v5945 = vpack.c.b16 %v4465, %v4457
        %v5946 = vpack.c.b16 %v4466, %v4458
        %v5947 = vpack.c.b16 %v4475, %v4467
        %v5948 = vpack.c.b16 %v4476, %v4468
        %v5949 = vpack.c.b16 %v4477, %v4469
        %v5950 = vpack.c.b16 %v4478, %v4470
        %v5951 = vpack.c.b16 %v4479, %v4471
        %v5952 = vpack.c.b16 %v4480, %v4472
        %v5953 = vpack.c.b16 %v4481, %v4473
        %v5954 = vpack.c.b16 %v4482, %v4474
        %v5955 = vpack.c.b16 %v4491, %v4483
        %v5956 = vpack.c.b16 %v4492, %v4484
        %v5957 = vpack.c.b16 %v4493, %v4485
        %v5958 = vpack.c.b16 %v4494, %v4486
        %v5959 = vpack.c.b16 %v4495, %v4487
        %v5960 = vpack.c.b16 %v4496, %v4488
        %v5961 = vpack.c.b16 %v4497, %v4489
        %v5962 = vpack.c.b16 %v4498, %v4490
        %v5963 = vpack.c.b16 %v4507, %v4499
        %v5964 = vpack.c.b16 %v4508, %v4500
        %v5965 = vpack.c.b16 %v4509, %v4501
        %v5966 = vpack.c.b16 %v4510, %v4502
        %v5967 = vpack.c.b16 %v4511, %v4503
        %v5968 = vpack.c.b16 %v4512, %v4504
        %v5969 = vpack.c.b16 %v4513, %v4505
        %v5970 = vpack.c.b16 %v4514, %v4506
        %v5971 = vpack.c.b16 %v4523, %v4515
        %v5972 = vpack.c.b16 %v4524, %v4516
        %v5973 = vpack.c.b16 %v4525, %v4517
        %v5974 = vpack.c.b16 %v4526, %v4518
        %v5975 = vpack.c.b16 %v4527, %v4519
        %v5976 = vpack.c.b16 %v4528, %v4520
        %v5977 = vpack.c.b16 %v4529, %v4521
        %v5978 = vpack.c.b16 %v4530, %v4522
        %v5979 = vpack.c.b16 %v4539, %v4531
        %v5980 = vpack.c.b16 %v4540, %v4532
        %v5981 = vpack.c.b16 %v4541, %v4533
        %v5982 = vpack.c.b16 %v4542, %v4534
        %v5983 = vpack.c.b16 %v4543, %v4535
        %v5984 = vpack.c.b16 %v4544, %v4536
        %v5985 = vpack.c.b16 %v4545, %v4537
        %v5986 = vpack.c.b16 %v4546, %v4538
        %v5987 = vpack.c.b16 %v4555, %v4547
        %v5988 = vpack.c.b16 %v4556, %v4548
        %v5989 = vpack.c.b16 %v4557, %v4549
        %v5990 = vpack.c.b16 %v4558, %v4550
        %v5991 = vpack.c.b16 %v4559, %v4551
        %v5992 = vpack.c.b16 %v4560, %v4552
        %v5993 = vpack.c.b16 %v4561, %v4553
        %v5994 = vpack.c.b16 %v4562, %v4554
        %v5995 = vpack.c.b16 %v4571, %v4563
        %v5996 = vpack.c.b16 %v4572, %v4564
        %v5997 = vpack.c.b16 %v4573, %v4565
        %v5998 = vpack.c.b16 %v4574, %v4566
        %v5999 = vpack.c.b16 %v4575, %v4567
        %v6000 = vpack.c.b16 %v4576, %v4568
        %v6001 = vpack.c.b16 %v4577, %v4569
        %v6002 = vpack.c.b16 %v4578, %v4570
        %v6003 = vpack.c.b16 %v4587, %v4579
        %v6004 = vpack.c.b16 %v4588, %v4580
        %v6005 = vpack.c.b16 %v4589, %v4581
        %v6006 = vpack.c.b16 %v4590, %v4582
        %v6007 = vpack.c.b16 %v4591, %v4583
        %v6008 = vpack.c.b16 %v4592, %v4584
        %v6009 = vpack.c.b16 %v4593, %v4585
        %v6010 = vpack.c.b16 %v4594, %v4586
        %v6011 = vpack.c.b16 %v4603, %v4595
        %v6012 = vpack.c.b16 %v4604, %v4596
        %v6013 = vpack.c.b16 %v4605, %v4597
        %v6014 = vpack.c.b16 %v4606, %v4598
        %v6015 = vpack.c.b16 %v4607, %v4599
        %v6016 = vpack.c.b16 %v4608, %v4600
        %v6017 = vpack.c.b16 %v4609, %v4601
        %v6018 = vpack.c.b16 %v4610, %v4602
        %v6019 = vpack.c.b16 %v4619, %v4611
        %v6020 = vpack.c.b16 %v4620, %v4612
        %v6021 = vpack.c.b16 %v4621, %v4613
        %v6022 = vpack.c.b16 %v4622, %v4614
        %v6023 = vpack.c.b16 %v4623, %v4615
        %v6024 = vpack.c.b16 %v4624, %v4616
        %v6025 = vpack.c.b16 %v4625, %v4617
        %v6026 = vpack.c.b16 %v4626, %v4618
        %v6027 = vpack.c.b16 %v4635, %v4627
        %v6028 = vpack.c.b16 %v4636, %v4628
        %v6029 = vpack.c.b16 %v4637, %v4629
        %v6030 = vpack.c.b16 %v4638, %v4630
        %v6031 = vpack.c.b16 %v4639, %v4631
        %v6032 = vpack.c.b16 %v4640, %v4632
        %v6033 = vpack.c.b16 %v4641, %v4633
        %v6034 = vpack.c.b16 %v4642, %v4634
        %v6035 = vpack.c.b16 %v4651, %v4643
        %v6036 = vpack.c.b16 %v4652, %v4644
        %v6037 = vpack.c.b16 %v4653, %v4645
        %v6038 = vpack.c.b16 %v4654, %v4646
        %v6039 = vpack.c.b16 %v4655, %v4647
        %v6040 = vpack.c.b16 %v4656, %v4648
        %v6041 = vpack.c.b16 %v4657, %v4649
        %v6042 = vpack.c.b16 %v4658, %v4650
        %v6043 = vpack.c.b16 %v4667, %v4659
        %v6044 = vpack.c.b16 %v4668, %v4660
        %v6045 = vpack.c.b16 %v4669, %v4661
        %v6046 = vpack.c.b16 %v4670, %v4662
        %v6047 = vpack.c.b16 %v4671, %v4663
        %v6048 = vpack.c.b16 %v4672, %v4664
        %v6049 = vpack.c.b16 %v4673, %v4665
        %v6050 = vpack.c.b16 %v4674, %v4666
        %v6051 = vpack.c.b16 %v4683, %v4675
        %v6052 = vpack.c.b16 %v4684, %v4676
        %v6053 = vpack.c.b16 %v4685, %v4677
        %v6054 = vpack.c.b16 %v4686, %v4678
        %v6055 = vpack.c.b16 %v4687, %v4679
        %v6056 = vpack.c.b16 %v4688, %v4680
        %v6057 = vpack.c.b16 %v4689, %v4681
        %v6058 = vpack.c.b16 %v4690, %v4682
        %v6059 = vpack.c.b16 %v4699, %v4691
        %v6060 = vpack.c.b16 %v4700, %v4692
        %v6061 = vpack.c.b16 %v4701, %v4693
        %v6062 = vpack.c.b16 %v4702, %v4694
        %v6063 = vpack.c.b16 %v4703, %v4695
        %v6064 = vpack.c.b16 %v4704, %v4696
        %v6065 = vpack.c.b16 %v4705, %v4697
        %v6066 = vpack.c.b16 %v4706, %v4698
        %v6067 = vpack.c.b16 %v4715, %v4707
        %v6068 = vpack.c.b16 %v4716, %v4708
        %v6069 = vpack.c.b16 %v4717, %v4709
        %v6070 = vpack.c.b16 %v4718, %v4710
        %v6071 = vpack.c.b16 %v4719, %v4711
        %v6072 = vpack.c.b16 %v4720, %v4712
        %v6073 = vpack.c.b16 %v4721, %v4713
        %v6074 = vpack.c.b16 %v4722, %v4714
        %v6075 = vpack.c.b16 %v4731, %v4723
        %v6076 = vpack.c.b16 %v4732, %v4724
        %v6077 = vpack.c.b16 %v4733, %v4725
        %v6078 = vpack.c.b16 %v4734, %v4726
        %v6079 = vpack.c.b16 %v4735, %v4727
        %v6080 = vpack.c.b16 %v4736, %v4728
        %v6081 = vpack.c.b16 %v4737, %v4729
        %v6082 = vpack.c.b16 %v4738, %v4730
        %v6083 = vpack.c.b16 %v4747, %v4739
        %v6084 = vpack.c.b16 %v4748, %v4740
        %v6085 = vpack.c.b16 %v4749, %v4741
        %v6086 = vpack.c.b16 %v4750, %v4742
        %v6087 = vpack.c.b16 %v4751, %v4743
        %v6088 = vpack.c.b16 %v4752, %v4744
        %v6089 = vpack.c.b16 %v4753, %v4745
        %v6090 = vpack.c.b16 %v4754, %v4746
        %v6091 = vpack.c.b16 %v4763, %v4755
        %v6092 = vpack.c.b16 %v4764, %v4756
        %v6093 = vpack.c.b16 %v4765, %v4757
        %v6094 = vpack.c.b16 %v4766, %v4758
        %v6095 = vpack.c.b16 %v4767, %v4759
        %v6096 = vpack.c.b16 %v4768, %v4760
        %v6097 = vpack.c.b16 %v4769, %v4761
        %v6098 = vpack.c.b16 %v4770, %v4762
        %v6099 = vpack.c.b16 %v4779, %v4771
        %v6100 = vpack.c.b16 %v4780, %v4772
        %v6101 = vpack.c.b16 %v4781, %v4773
        %v6102 = vpack.c.b16 %v4782, %v4774
        %v6103 = vpack.c.b16 %v4783, %v4775
        %v6104 = vpack.c.b16 %v4784, %v4776
        %v6105 = vpack.c.b16 %v4785, %v4777
        %v6106 = vpack.c.b16 %v4786, %v4778
        %v6107 = vpack.c.b16 %v4795, %v4787
        %v6108 = vpack.c.b16 %v4796, %v4788
        %v6109 = vpack.c.b16 %v4797, %v4789
        %v6110 = vpack.c.b16 %v4798, %v4790
        %v6111 = vpack.c.b16 %v4799, %v4791
        %v6112 = vpack.c.b16 %v4800, %v4792
        %v6113 = vpack.c.b16 %v4801, %v4793
        %v6114 = vpack.c.b16 %v4802, %v4794
        %v6115 = vpack.c.b16 %v4811, %v4803
        %v6116 = vpack.c.b16 %v4812, %v4804
        %v6117 = vpack.c.b16 %v4813, %v4805
        %v6118 = vpack.c.b16 %v4814, %v4806
        %v6119 = vpack.c.b16 %v4815, %v4807
        %v6120 = vpack.c.b16 %v4816, %v4808
        %v6121 = vpack.c.b16 %v4817, %v4809
        %v6122 = vpack.c.b16 %v4818, %v4810
        %v6123 = vpack.c.b16 %v4827, %v4819
        %v6124 = vpack.c.b16 %v4828, %v4820
        %v6125 = vpack.c.b16 %v4829, %v4821
        %v6126 = vpack.c.b16 %v4830, %v4822
        %v6127 = vpack.c.b16 %v4831, %v4823
        %v6128 = vpack.c.b16 %v4832, %v4824
        %v6129 = vpack.c.b16 %v4833, %v4825
        %v6130 = vpack.c.b16 %v4834, %v4826
        %v6131 = vpack.c.b16 %v4843, %v4835
        %v6132 = vpack.c.b16 %v4844, %v4836
        %v6133 = vpack.c.b16 %v4845, %v4837
        %v6134 = vpack.c.b16 %v4846, %v4838
        %v6135 = vpack.c.b16 %v4847, %v4839
        %v6136 = vpack.c.b16 %v4848, %v4840
        %v6137 = vpack.c.b16 %v4849, %v4841
        %v6138 = vpack.c.b16 %v4850, %v4842
        %v6139 = vpack.c.b16 %v4859, %v4851
        %v6140 = vpack.c.b16 %v4860, %v4852
        %v6141 = vpack.c.b16 %v4861, %v4853
        %v6142 = vpack.c.b16 %v4862, %v4854
        %v6143 = vpack.c.b16 %v4863, %v4855
        %v6144 = vpack.c.b16 %v4864, %v4856
        %v6145 = vpack.c.b16 %v4865, %v4857
        %v6146 = vpack.c.b16 %v4866, %v4858
        %v6147 = vpack.c.b16 %v4875, %v4867
        %v6148 = vpack.c.b16 %v4876, %v4868
        %v6149 = vpack.c.b16 %v4877, %v4869
        %v6150 = vpack.c.b16 %v4878, %v4870
        %v6151 = vpack.c.b16 %v4879, %v4871
        %v6152 = vpack.c.b16 %v4880, %v4872
        %v6153 = vpack.c.b16 %v4881, %v4873
        %v6154 = vpack.c.b16 %v4882, %v4874
        %v6155 = vpack.c.b16 %v4891, %v4883
        %v6156 = vpack.c.b16 %v4892, %v4884
        %v6157 = vpack.c.b16 %v4893, %v4885
        %v6158 = vpack.c.b16 %v4894, %v4886
        %v6159 = vpack.c.b16 %v4895, %v4887
        %v6160 = vpack.c.b16 %v4896, %v4888
        %v6161 = vpack.c.b16 %v4897, %v4889
        %v6162 = vpack.c.b16 %v4898, %v4890
        %v6163 = vpack.c.b16 %v4907, %v4899
        %v6164 = vpack.c.b16 %v4908, %v4900
        %v6165 = vpack.c.b16 %v4909, %v4901
        %v6166 = vpack.c.b16 %v4910, %v4902
        %v6167 = vpack.c.b16 %v4911, %v4903
        %v6168 = vpack.c.b16 %v4912, %v4904
        %v6169 = vpack.c.b16 %v4913, %v4905
        %v6170 = vpack.c.b16 %v4914, %v4906
        %v6171 = vpack.c.b16 %v4923, %v4915
        %v6172 = vpack.c.b16 %v4924, %v4916
        %v6173 = vpack.c.b16 %v4925, %v4917
        %v6174 = vpack.c.b16 %v4926, %v4918
        %v6175 = vpack.c.b16 %v4927, %v4919
        %v6176 = vpack.c.b16 %v4928, %v4920
        %v6177 = vpack.c.b16 %v4929, %v4921
        %v6178 = vpack.c.b16 %v4930, %v4922
        %v6179 = vpack.c.b16 %v4939, %v4931
        %v6180 = vpack.c.b16 %v4940, %v4932
        %v6181 = vpack.c.b16 %v4941, %v4933
        %v6182 = vpack.c.b16 %v4942, %v4934
        %v6183 = vpack.c.b16 %v4943, %v4935
        %v6184 = vpack.c.b16 %v4944, %v4936
        %v6185 = vpack.c.b16 %v4945, %v4937
        %v6186 = vpack.c.b16 %v4946, %v4938
        %v6187 = vpack.c.b16 %v4955, %v4947
        %v6188 = vpack.c.b16 %v4956, %v4948
        %v6189 = vpack.c.b16 %v4957, %v4949
        %v6190 = vpack.c.b16 %v4958, %v4950
        %v6191 = vpack.c.b16 %v4959, %v4951
        %v6192 = vpack.c.b16 %v4960, %v4952
        %v6193 = vpack.c.b16 %v4961, %v4953
        %v6194 = vpack.c.b16 %v4962, %v4954
        %v6195 = vpack.c.b16 %v4971, %v4963
        %v6196 = vpack.c.b16 %v4972, %v4964
        %v6197 = vpack.c.b16 %v4973, %v4965
        %v6198 = vpack.c.b16 %v4974, %v4966
        %v6199 = vpack.c.b16 %v4975, %v4967
        %v6200 = vpack.c.b16 %v4976, %v4968
        %v6201 = vpack.c.b16 %v4977, %v4969
        %v6202 = vpack.c.b16 %v4978, %v4970
        %v6203 = vpack.c.b16 %v4987, %v4979
        %v6204 = vpack.c.b16 %v4988, %v4980
        %v6205 = vpack.c.b16 %v4989, %v4981
        %v6206 = vpack.c.b16 %v4990, %v4982
        %v6207 = vpack.c.b16 %v4991, %v4983
        %v6208 = vpack.c.b16 %v4992, %v4984
        %v6209 = vpack.c.b16 %v4993, %v4985
        %v6210 = vpack.c.b16 %v4994, %v4986
        %v6211 = vpack.c.b16 %v5003, %v4995
        %v6212 = vpack.c.b16 %v5004, %v4996
        %v6213 = vpack.c.b16 %v5005, %v4997
        %v6214 = vpack.c.b16 %v5006, %v4998
        %v6215 = vpack.c.b16 %v5007, %v4999
        %v6216 = vpack.c.b16 %v5008, %v5000
        %v6217 = vpack.c.b16 %v5009, %v5001
        %v6218 = vpack.c.b16 %v5010, %v5002
        %v6219 = vpack.c.b16 %v5019, %v5011
        %v6220 = vpack.c.b16 %v5020, %v5012
        %v6221 = vpack.c.b16 %v5021, %v5013
        %v6222 = vpack.c.b16 %v5022, %v5014
        %v6223 = vpack.c.b16 %v5023, %v5015
        %v6224 = vpack.c.b16 %v5024, %v5016
        %v6225 = vpack.c.b16 %v5025, %v5017
        %v6226 = vpack.c.b16 %v5026, %v5018
        %v6227 = vpack.c.b16 %v5035, %v5027
        %v6228 = vpack.c.b16 %v5036, %v5028
        %v6229 = vpack.c.b16 %v5037, %v5029
        %v6230 = vpack.c.b16 %v5038, %v5030
        %v6231 = vpack.c.b16 %v5039, %v5031
        %v6232 = vpack.c.b16 %v5040, %v5032
        %v6233 = vpack.c.b16 %v5041, %v5033
        %v6234 = vpack.c.b16 %v5042, %v5034
        %v6235 = vpack.c.b16 %v5051, %v5043
        %v6236 = vpack.c.b16 %v5052, %v5044
        %v6237 = vpack.c.b16 %v5053, %v5045
        %v6238 = vpack.c.b16 %v5054, %v5046
        %v6239 = vpack.c.b16 %v5055, %v5047
        %v6240 = vpack.c.b16 %v5056, %v5048
        %v6241 = vpack.c.b16 %v5057, %v5049
        %v6242 = vpack.c.b16 %v5058, %v5050
        %v6243 = vpack.c.b16 %v5067, %v5059
        %v6244 = vpack.c.b16 %v5068, %v5060
        %v6245 = vpack.c.b16 %v5069, %v5061
        %v6246 = vpack.c.b16 %v5070, %v5062
        %v6247 = vpack.c.b16 %v5071, %v5063
        %v6248 = vpack.c.b16 %v5072, %v5064
        %v6249 = vpack.c.b16 %v5073, %v5065
        %v6250 = vpack.c.b16 %v5074, %v5066
        %v6251 = vpack.c.b16 %v5083, %v5075
        %v6252 = vpack.c.b16 %v5084, %v5076
        %v6253 = vpack.c.b16 %v5085, %v5077
        %v6254 = vpack.c.b16 %v5086, %v5078
        %v6255 = vpack.c.b16 %v5087, %v5079
        %v6256 = vpack.c.b16 %v5088, %v5080
        %v6257 = vpack.c.b16 %v5089, %v5081
        %v6258 = vpack.c.b16 %v5090, %v5082
        %v6259 = vpack.c.b16 %v5099, %v5091
        %v6260 = vpack.c.b16 %v5100, %v5092
        %v6261 = vpack.c.b16 %v5101, %v5093
        %v6262 = vpack.c.b16 %v5102, %v5094
        %v6263 = vpack.c.b16 %v5103, %v5095
        %v6264 = vpack.c.b16 %v5104, %v5096
        %v6265 = vpack.c.b16 %v5105, %v5097
        %v6266 = vpack.c.b16 %v5106, %v5098
        %v6267 = vpack.c.b16 %v5115, %v5107
        %v6268 = vpack.c.b16 %v5116, %v5108
        %v6269 = vpack.c.b16 %v5117, %v5109
        %v6270 = vpack.c.b16 %v5118, %v5110
        %v6271 = vpack.c.b16 %v5119, %v5111
        %v6272 = vpack.c.b16 %v5120, %v5112
        %v6273 = vpack.c.b16 %v5121, %v5113
        %v6274 = vpack.c.b16 %v5122, %v5114
        %7427 = vmatpush.bf16.msra.mxu0 %v5179
        %7428 = vmatpush.bf16.msra.mxu0 %v5171
        %7429 = vmatpush.bf16.msra.mxu0 %v5163
        %7430 = vmatpush.bf16.msra.mxu0 %v5155
        %7431 = vmatpush.bf16.msra.mxu0 %v5147
        %7432 = vmatpush.bf16.msra.mxu0 %v5139
        %7433 = vmatpush.bf16.msra.mxu0 %v5131
        %7434 = vmatpush.bf16.msra.mxu0 %v5123
        %7435 = vmatmul.bf16.gmra.mxu0 %v1631
        %v7436 = vpop.f32.mrf.mxu0
        %v7437 = vadd.f32 0.0, %v7436
        %v7438 = vpop.f32.mrf.mxu0
        %v7439 = vadd.f32 0.0, %v7438
        %7440 = vdwg.mxu0
        %7441 = vmatpush.bf16.msra.mxu0 %v5243
        %7442 = vmatpush.bf16.msra.mxu0 %v5235
        %7443 = vmatpush.bf16.msra.mxu0 %v5227
        %7444 = vmatpush.bf16.msra.mxu0 %v5219
        %7445 = vmatpush.bf16.msra.mxu0 %v5211
        %7446 = vmatpush.bf16.msra.mxu0 %v5203
        %7447 = vmatpush.bf16.msra.mxu0 %v5195
        %7448 = vmatpush.bf16.msra.mxu0 %v5187
        %7449 = vmatmul.bf16.gmra.mxu0 %v1632
        %v7450 = vpop.f32.mrf.mxu0
        %v7451 = vadd.f32 %v7437, %v7450
        %v7452 = vpop.f32.mrf.mxu0
        %v7453 = vadd.f32 %v7439, %v7452
        %7454 = vdwg.mxu0
        %7455 = vmatpush.bf16.msra.mxu0 %v5307
        %7456 = vmatpush.bf16.msra.mxu0 %v5299
        %7457 = vmatpush.bf16.msra.mxu0 %v5291
        %7458 = vmatpush.bf16.msra.mxu0 %v5283
        %7459 = vmatpush.bf16.msra.mxu0 %v5275
        %7460 = vmatpush.bf16.msra.mxu0 %v5267
        %7461 = vmatpush.bf16.msra.mxu0 %v5259
        %7462 = vmatpush.bf16.msra.mxu0 %v5251
        %7463 = vmatmul.bf16.gmra.mxu0 %v1633
        %v7464 = vpop.f32.mrf.mxu0
        %v7465 = vadd.f32 %v7451, %v7464
        %v7466 = vpop.f32.mrf.mxu0
        %v7467 = vadd.f32 %v7453, %v7466
        %7468 = vdwg.mxu0
        %7469 = vmatpush.bf16.msra.mxu0 %v5371
        %7470 = vmatpush.bf16.msra.mxu0 %v5363
        %7471 = vmatpush.bf16.msra.mxu0 %v5355
        %7472 = vmatpush.bf16.msra.mxu0 %v5347
        %7473 = vmatpush.bf16.msra.mxu0 %v5339
        %7474 = vmatpush.bf16.msra.mxu0 %v5331
        %7475 = vmatpush.bf16.msra.mxu0 %v5323
        %7476 = vmatpush.bf16.msra.mxu0 %v5315
        %7477 = vmatmul.bf16.gmra.mxu0 %v1634
        %v7478 = vpop.f32.mrf.mxu0
        %v7479 = vadd.f32 %v7465, %v7478
        %v7480 = vpop.f32.mrf.mxu0
        %v7481 = vadd.f32 %v7467, %v7480
        %7482 = vdwg.mxu0
        %7483 = vmatpush.bf16.msra.mxu0 %v5435
        %7484 = vmatpush.bf16.msra.mxu0 %v5427
        %7485 = vmatpush.bf16.msra.mxu0 %v5419
        %7486 = vmatpush.bf16.msra.mxu0 %v5411
        %7487 = vmatpush.bf16.msra.mxu0 %v5403
        %7488 = vmatpush.bf16.msra.mxu0 %v5395
        %7489 = vmatpush.bf16.msra.mxu0 %v5387
        %7490 = vmatpush.bf16.msra.mxu0 %v5379
        %7491 = vmatmul.bf16.gmra.mxu0 %v1635
        %v7492 = vpop.f32.mrf.mxu0
        %v7493 = vadd.f32 %v7479, %v7492
        %v7494 = vpop.f32.mrf.mxu0
        %v7495 = vadd.f32 %v7481, %v7494
        %7496 = vdwg.mxu0
        %7497 = vmatpush.bf16.msra.mxu0 %v5499
        %7498 = vmatpush.bf16.msra.mxu0 %v5491
        %7499 = vmatpush.bf16.msra.mxu0 %v5483
        %7500 = vmatpush.bf16.msra.mxu0 %v5475
        %7501 = vmatpush.bf16.msra.mxu0 %v5467
        %7502 = vmatpush.bf16.msra.mxu0 %v5459
        %7503 = vmatpush.bf16.msra.mxu0 %v5451
        %7504 = vmatpush.bf16.msra.mxu0 %v5443
        %7505 = vmatmul.bf16.gmra.mxu0 %v1636
        %v7506 = vpop.f32.mrf.mxu0
        %v7507 = vadd.f32 %v7493, %v7506
        %v7508 = vpop.f32.mrf.mxu0
        %v7509 = vadd.f32 %v7495, %v7508
        %7510 = vdwg.mxu0
        %7511 = vmatpush.bf16.msra.mxu0 %v5563
        %7512 = vmatpush.bf16.msra.mxu0 %v5555
        %7513 = vmatpush.bf16.msra.mxu0 %v5547
        %7514 = vmatpush.bf16.msra.mxu0 %v5539
        %7515 = vmatpush.bf16.msra.mxu0 %v5531
        %7516 = vmatpush.bf16.msra.mxu0 %v5523
        %7517 = vmatpush.bf16.msra.mxu0 %v5515
        %7518 = vmatpush.bf16.msra.mxu0 %v5507
        %7519 = vmatmul.bf16.gmra.mxu0 %v1637
        %v7520 = vpop.f32.mrf.mxu0
        %v7521 = vadd.f32 %v7507, %v7520
        %v7522 = vpop.f32.mrf.mxu0
        %v7523 = vadd.f32 %v7509, %v7522
        %7524 = vdwg.mxu0
        %7525 = vmatpush.bf16.msra.mxu0 %v5627
        %7526 = vmatpush.bf16.msra.mxu0 %v5619
        %7527 = vmatpush.bf16.msra.mxu0 %v5611
        %7528 = vmatpush.bf16.msra.mxu0 %v5603
        %7529 = vmatpush.bf16.msra.mxu0 %v5595
        %7530 = vmatpush.bf16.msra.mxu0 %v5587
        %7531 = vmatpush.bf16.msra.mxu0 %v5579
        %7532 = vmatpush.bf16.msra.mxu0 %v5571
        %7533 = vmatmul.bf16.gmra.mxu0 %v1638
        %v7534 = vpop.f32.mrf.mxu0
        %v7535 = vadd.f32 %v7521, %v7534
        %v7536 = vpop.f32.mrf.mxu0
        %v7537 = vadd.f32 %v7523, %v7536
        %7538 = vdwg.mxu0
        %7539 = vmatpush.bf16.msra.mxu0 %v5691
        %7540 = vmatpush.bf16.msra.mxu0 %v5683
        %7541 = vmatpush.bf16.msra.mxu0 %v5675
        %7542 = vmatpush.bf16.msra.mxu0 %v5667
        %7543 = vmatpush.bf16.msra.mxu0 %v5659
        %7544 = vmatpush.bf16.msra.mxu0 %v5651
        %7545 = vmatpush.bf16.msra.mxu0 %v5643
        %7546 = vmatpush.bf16.msra.mxu0 %v5635
        %7547 = vmatmul.bf16.gmra.mxu0 %v1639
        %v7548 = vpop.f32.mrf.mxu0
        %v7549 = vadd.f32 %v7535, %v7548
        %v7550 = vpop.f32.mrf.mxu0
        %v7551 = vadd.f32 %v7537, %v7550
        %7552 = vdwg.mxu0
        %7553 = vmatpush.bf16.msra.mxu0 %v5755
        %7554 = vmatpush.bf16.msra.mxu0 %v5747
        %7555 = vmatpush.bf16.msra.mxu0 %v5739
        %7556 = vmatpush.bf16.msra.mxu0 %v5731
        %7557 = vmatpush.bf16.msra.mxu0 %v5723
        %7558 = vmatpush.bf16.msra.mxu0 %v5715
        %7559 = vmatpush.bf16.msra.mxu0 %v5707
        %7560 = vmatpush.bf16.msra.mxu0 %v5699
        %7561 = vmatmul.bf16.gmra.mxu0 %v1640
        %v7562 = vpop.f32.mrf.mxu0
        %v7563 = vadd.f32 %v7549, %v7562
        %v7564 = vpop.f32.mrf.mxu0
        %v7565 = vadd.f32 %v7551, %v7564
        %7566 = vdwg.mxu0
        %7567 = vmatpush.bf16.msra.mxu0 %v5819
        %7568 = vmatpush.bf16.msra.mxu0 %v5811
        %7569 = vmatpush.bf16.msra.mxu0 %v5803
        %7570 = vmatpush.bf16.msra.mxu0 %v5795
        %7571 = vmatpush.bf16.msra.mxu0 %v5787
        %7572 = vmatpush.bf16.msra.mxu0 %v5779
        %7573 = vmatpush.bf16.msra.mxu0 %v5771
        %7574 = vmatpush.bf16.msra.mxu0 %v5763
        %7575 = vmatmul.bf16.gmra.mxu0 %v1641
        %v7576 = vpop.f32.mrf.mxu0
        %v7577 = vadd.f32 %v7563, %v7576
        %v7578 = vpop.f32.mrf.mxu0
        %v7579 = vadd.f32 %v7565, %v7578
        %7580 = vdwg.mxu0
        %7581 = vmatpush.bf16.msra.mxu0 %v5883
        %7582 = vmatpush.bf16.msra.mxu0 %v5875
        %7583 = vmatpush.bf16.msra.mxu0 %v5867
        %7584 = vmatpush.bf16.msra.mxu0 %v5859
        %7585 = vmatpush.bf16.msra.mxu0 %v5851
        %7586 = vmatpush.bf16.msra.mxu0 %v5843
        %7587 = vmatpush.bf16.msra.mxu0 %v5835
        %7588 = vmatpush.bf16.msra.mxu0 %v5827
        %7589 = vmatmul.bf16.gmra.mxu0 %v1642
        %v7590 = vpop.f32.mrf.mxu0
        %v7591 = vadd.f32 %v7577, %v7590
        %v7592 = vpop.f32.mrf.mxu0
        %v7593 = vadd.f32 %v7579, %v7592
        %7594 = vdwg.mxu0
        %7595 = vmatpush.bf16.msra.mxu0 %v5947
        %7596 = vmatpush.bf16.msra.mxu0 %v5939
        %7597 = vmatpush.bf16.msra.mxu0 %v5931
        %7598 = vmatpush.bf16.msra.mxu0 %v5923
        %7599 = vmatpush.bf16.msra.mxu0 %v5915
        %7600 = vmatpush.bf16.msra.mxu0 %v5907
        %7601 = vmatpush.bf16.msra.mxu0 %v5899
        %7602 = vmatpush.bf16.msra.mxu0 %v5891
        %7603 = vmatmul.bf16.gmra.mxu0 %v1643
        %v7604 = vpop.f32.mrf.mxu0
        %v7605 = vadd.f32 %v7591, %v7604
        %v7606 = vpop.f32.mrf.mxu0
        %v7607 = vadd.f32 %v7593, %v7606
        %7608 = vdwg.mxu0
        %7609 = vmatpush.bf16.msra.mxu0 %v6011
        %7610 = vmatpush.bf16.msra.mxu0 %v6003
        %7611 = vmatpush.bf16.msra.mxu0 %v5995
        %7612 = vmatpush.bf16.msra.mxu0 %v5987
        %7613 = vmatpush.bf16.msra.mxu0 %v5979
        %7614 = vmatpush.bf16.msra.mxu0 %v5971
        %7615 = vmatpush.bf16.msra.mxu0 %v5963
        %7616 = vmatpush.bf16.msra.mxu0 %v5955
        %7617 = vmatmul.bf16.gmra.mxu0 %v1644
        %v7618 = vpop.f32.mrf.mxu0
        %v7619 = vadd.f32 %v7605, %v7618
        %v7620 = vpop.f32.mrf.mxu0
        %v7621 = vadd.f32 %v7607, %v7620
        %7622 = vdwg.mxu0
        %7623 = vmatpush.bf16.msra.mxu0 %v6075
        %7624 = vmatpush.bf16.msra.mxu0 %v6067
        %7625 = vmatpush.bf16.msra.mxu0 %v6059
        %7626 = vmatpush.bf16.msra.mxu0 %v6051
        %7627 = vmatpush.bf16.msra.mxu0 %v6043
        %7628 = vmatpush.bf16.msra.mxu0 %v6035
        %7629 = vmatpush.bf16.msra.mxu0 %v6027
        %7630 = vmatpush.bf16.msra.mxu0 %v6019
        %7631 = vmatmul.bf16.gmra.mxu0 %v1645
        %v7632 = vpop.f32.mrf.mxu0
        %v7633 = vadd.f32 %v7619, %v7632
        %v7634 = vpop.f32.mrf.mxu0
        %v7635 = vadd.f32 %v7621, %v7634
        %7636 = vdwg.mxu0
        %7637 = vmatpush.bf16.msra.mxu0 %v6139
        %7638 = vmatpush.bf16.msra.mxu0 %v6131
        %7639 = vmatpush.bf16.msra.mxu0 %v6123
        %7640 = vmatpush.bf16.msra.mxu0 %v6115
        %7641 = vmatpush.bf16.msra.mxu0 %v6107
        %7642 = vmatpush.bf16.msra.mxu0 %v6099
        %7643 = vmatpush.bf16.msra.mxu0 %v6091
        %7644 = vmatpush.bf16.msra.mxu0 %v6083
        %7645 = vmatmul.bf16.gmra.mxu0 %v1646
        %v7646 = vpop.f32.mrf.mxu0
        %v7647 = vadd.f32 %v7633, %v7646
        %v7648 = vpop.f32.mrf.mxu0
        %v7649 = vadd.f32 %v7635, %v7648
        %7650 = vdwg.mxu0
        %7651 = vmatpush.bf16.msra.mxu0 %v6203
        %7652 = vmatpush.bf16.msra.mxu0 %v6195
        %7653 = vmatpush.bf16.msra.mxu0 %v6187
        %7654 = vmatpush.bf16.msra.mxu0 %v6179
        %7655 = vmatpush.bf16.msra.mxu0 %v6171
        %7656 = vmatpush.bf16.msra.mxu0 %v6163
        %7657 = vmatpush.bf16.msra.mxu0 %v6155
        %7658 = vmatpush.bf16.msra.mxu0 %v6147
        %7659 = vmatmul.bf16.gmra.mxu0 %v1647
        %v7660 = vpop.f32.mrf.mxu0
        %v7661 = vadd.f32 %v7647, %v7660
        %v7662 = vpop.f32.mrf.mxu0
        %v7663 = vadd.f32 %v7649, %v7662
        %7664 = vdwg.mxu0
        %7665 = vmatpush.bf16.msra.mxu0 %v6267
        %7666 = vmatpush.bf16.msra.mxu0 %v6259
        %7667 = vmatpush.bf16.msra.mxu0 %v6251
        %7668 = vmatpush.bf16.msra.mxu0 %v6243
        %7669 = vmatpush.bf16.msra.mxu0 %v6235
        %7670 = vmatpush.bf16.msra.mxu0 %v6227
        %7671 = vmatpush.bf16.msra.mxu0 %v6219
        %7672 = vmatpush.bf16.msra.mxu0 %v6211
        %7673 = vmatmul.bf16.gmra.mxu0 %v1648
        %v7674 = vpop.f32.mrf.mxu0
        %v7675 = vadd.f32 %v7661, %v7674
        %v7676 = vpop.f32.mrf.mxu0
        %v7677 = vadd.f32 %v7663, %v7676
        %7678 = vdwg.mxu0
        %7679 = vmatpush.bf16.msra.mxu0 %v5180
        %7680 = vmatpush.bf16.msra.mxu0 %v5172
        %7681 = vmatpush.bf16.msra.mxu0 %v5164
        %7682 = vmatpush.bf16.msra.mxu0 %v5156
        %7683 = vmatpush.bf16.msra.mxu0 %v5148
        %7684 = vmatpush.bf16.msra.mxu0 %v5140
        %7685 = vmatpush.bf16.msra.mxu0 %v5132
        %7686 = vmatpush.bf16.msra.mxu0 %v5124
        %7687 = vmatmul.bf16.gmra.mxu0 %v1631
        %v7688 = vpop.f32.mrf.mxu0
        %v7689 = vadd.f32 0.0, %v7688
        %v7690 = vpop.f32.mrf.mxu0
        %v7691 = vadd.f32 0.0, %v7690
        %7692 = vdwg.mxu0
        %7693 = vmatpush.bf16.msra.mxu0 %v5244
        %7694 = vmatpush.bf16.msra.mxu0 %v5236
        %7695 = vmatpush.bf16.msra.mxu0 %v5228
        %7696 = vmatpush.bf16.msra.mxu0 %v5220
        %7697 = vmatpush.bf16.msra.mxu0 %v5212
        %7698 = vmatpush.bf16.msra.mxu0 %v5204
        %7699 = vmatpush.bf16.msra.mxu0 %v5196
        %7700 = vmatpush.bf16.msra.mxu0 %v5188
        %7701 = vmatmul.bf16.gmra.mxu0 %v1632
        %v7702 = vpop.f32.mrf.mxu0
        %v7703 = vadd.f32 %v7689, %v7702
        %v7704 = vpop.f32.mrf.mxu0
        %v7705 = vadd.f32 %v7691, %v7704
        %7706 = vdwg.mxu0
        %7707 = vmatpush.bf16.msra.mxu0 %v5308
        %7708 = vmatpush.bf16.msra.mxu0 %v5300
        %7709 = vmatpush.bf16.msra.mxu0 %v5292
        %7710 = vmatpush.bf16.msra.mxu0 %v5284
        %7711 = vmatpush.bf16.msra.mxu0 %v5276
        %7712 = vmatpush.bf16.msra.mxu0 %v5268
        %7713 = vmatpush.bf16.msra.mxu0 %v5260
        %7714 = vmatpush.bf16.msra.mxu0 %v5252
        %7715 = vmatmul.bf16.gmra.mxu0 %v1633
        %v7716 = vpop.f32.mrf.mxu0
        %v7717 = vadd.f32 %v7703, %v7716
        %v7718 = vpop.f32.mrf.mxu0
        %v7719 = vadd.f32 %v7705, %v7718
        %7720 = vdwg.mxu0
        %7721 = vmatpush.bf16.msra.mxu0 %v5372
        %7722 = vmatpush.bf16.msra.mxu0 %v5364
        %7723 = vmatpush.bf16.msra.mxu0 %v5356
        %7724 = vmatpush.bf16.msra.mxu0 %v5348
        %7725 = vmatpush.bf16.msra.mxu0 %v5340
        %7726 = vmatpush.bf16.msra.mxu0 %v5332
        %7727 = vmatpush.bf16.msra.mxu0 %v5324
        %7728 = vmatpush.bf16.msra.mxu0 %v5316
        %7729 = vmatmul.bf16.gmra.mxu0 %v1634
        %v7730 = vpop.f32.mrf.mxu0
        %v7731 = vadd.f32 %v7717, %v7730
        %v7732 = vpop.f32.mrf.mxu0
        %v7733 = vadd.f32 %v7719, %v7732
        %7734 = vdwg.mxu0
        %7735 = vmatpush.bf16.msra.mxu0 %v5436
        %7736 = vmatpush.bf16.msra.mxu0 %v5428
        %7737 = vmatpush.bf16.msra.mxu0 %v5420
        %7738 = vmatpush.bf16.msra.mxu0 %v5412
        %7739 = vmatpush.bf16.msra.mxu0 %v5404
        %7740 = vmatpush.bf16.msra.mxu0 %v5396
        %7741 = vmatpush.bf16.msra.mxu0 %v5388
        %7742 = vmatpush.bf16.msra.mxu0 %v5380
        %7743 = vmatmul.bf16.gmra.mxu0 %v1635
        %v7744 = vpop.f32.mrf.mxu0
        %v7745 = vadd.f32 %v7731, %v7744
        %v7746 = vpop.f32.mrf.mxu0
        %v7747 = vadd.f32 %v7733, %v7746
        %7748 = vdwg.mxu0
        %7749 = vmatpush.bf16.msra.mxu0 %v5500
        %7750 = vmatpush.bf16.msra.mxu0 %v5492
        %7751 = vmatpush.bf16.msra.mxu0 %v5484
        %7752 = vmatpush.bf16.msra.mxu0 %v5476
        %7753 = vmatpush.bf16.msra.mxu0 %v5468
        %7754 = vmatpush.bf16.msra.mxu0 %v5460
        %7755 = vmatpush.bf16.msra.mxu0 %v5452
        %7756 = vmatpush.bf16.msra.mxu0 %v5444
        %7757 = vmatmul.bf16.gmra.mxu0 %v1636
        %v7758 = vpop.f32.mrf.mxu0
        %v7759 = vadd.f32 %v7745, %v7758
        %v7760 = vpop.f32.mrf.mxu0
        %v7761 = vadd.f32 %v7747, %v7760
        %7762 = vdwg.mxu0
        %7763 = vmatpush.bf16.msra.mxu0 %v5564
        %7764 = vmatpush.bf16.msra.mxu0 %v5556
        %7765 = vmatpush.bf16.msra.mxu0 %v5548
        %7766 = vmatpush.bf16.msra.mxu0 %v5540
        %7767 = vmatpush.bf16.msra.mxu0 %v5532
        %7768 = vmatpush.bf16.msra.mxu0 %v5524
        %7769 = vmatpush.bf16.msra.mxu0 %v5516
        %7770 = vmatpush.bf16.msra.mxu0 %v5508
        %7771 = vmatmul.bf16.gmra.mxu0 %v1637
        %v7772 = vpop.f32.mrf.mxu0
        %v7773 = vadd.f32 %v7759, %v7772
        %v7774 = vpop.f32.mrf.mxu0
        %v7775 = vadd.f32 %v7761, %v7774
        %7776 = vdwg.mxu0
        %7777 = vmatpush.bf16.msra.mxu0 %v5628
        %7778 = vmatpush.bf16.msra.mxu0 %v5620
        %7779 = vmatpush.bf16.msra.mxu0 %v5612
        %7780 = vmatpush.bf16.msra.mxu0 %v5604
        %7781 = vmatpush.bf16.msra.mxu0 %v5596
        %7782 = vmatpush.bf16.msra.mxu0 %v5588
        %7783 = vmatpush.bf16.msra.mxu0 %v5580
        %7784 = vmatpush.bf16.msra.mxu0 %v5572
        %7785 = vmatmul.bf16.gmra.mxu0 %v1638
        %v7786 = vpop.f32.mrf.mxu0
        %v7787 = vadd.f32 %v7773, %v7786
        %v7788 = vpop.f32.mrf.mxu0
        %v7789 = vadd.f32 %v7775, %v7788
        %7790 = vdwg.mxu0
        %7791 = vmatpush.bf16.msra.mxu0 %v5692
        %7792 = vmatpush.bf16.msra.mxu0 %v5684
        %7793 = vmatpush.bf16.msra.mxu0 %v5676
        %7794 = vmatpush.bf16.msra.mxu0 %v5668
        %7795 = vmatpush.bf16.msra.mxu0 %v5660
        %7796 = vmatpush.bf16.msra.mxu0 %v5652
        %7797 = vmatpush.bf16.msra.mxu0 %v5644
        %7798 = vmatpush.bf16.msra.mxu0 %v5636
        %7799 = vmatmul.bf16.gmra.mxu0 %v1639
        %v7800 = vpop.f32.mrf.mxu0
        %v7801 = vadd.f32 %v7787, %v7800
        %v7802 = vpop.f32.mrf.mxu0
        %v7803 = vadd.f32 %v7789, %v7802
        %7804 = vdwg.mxu0
        %7805 = vmatpush.bf16.msra.mxu0 %v5756
        %7806 = vmatpush.bf16.msra.mxu0 %v5748
        %7807 = vmatpush.bf16.msra.mxu0 %v5740
        %7808 = vmatpush.bf16.msra.mxu0 %v5732
        %7809 = vmatpush.bf16.msra.mxu0 %v5724
        %7810 = vmatpush.bf16.msra.mxu0 %v5716
        %7811 = vmatpush.bf16.msra.mxu0 %v5708
        %7812 = vmatpush.bf16.msra.mxu0 %v5700
        %7813 = vmatmul.bf16.gmra.mxu0 %v1640
        %v7814 = vpop.f32.mrf.mxu0
        %v7815 = vadd.f32 %v7801, %v7814
        %v7816 = vpop.f32.mrf.mxu0
        %v7817 = vadd.f32 %v7803, %v7816
        %7818 = vdwg.mxu0
        %7819 = vmatpush.bf16.msra.mxu0 %v5820
        %7820 = vmatpush.bf16.msra.mxu0 %v5812
        %7821 = vmatpush.bf16.msra.mxu0 %v5804
        %7822 = vmatpush.bf16.msra.mxu0 %v5796
        %7823 = vmatpush.bf16.msra.mxu0 %v5788
        %7824 = vmatpush.bf16.msra.mxu0 %v5780
        %7825 = vmatpush.bf16.msra.mxu0 %v5772
        %7826 = vmatpush.bf16.msra.mxu0 %v5764
        %7827 = vmatmul.bf16.gmra.mxu0 %v1641
        %v7828 = vpop.f32.mrf.mxu0
        %v7829 = vadd.f32 %v7815, %v7828
        %v7830 = vpop.f32.mrf.mxu0
        %v7831 = vadd.f32 %v7817, %v7830
        %7832 = vdwg.mxu0
        %7833 = vmatpush.bf16.msra.mxu0 %v5884
        %7834 = vmatpush.bf16.msra.mxu0 %v5876
        %7835 = vmatpush.bf16.msra.mxu0 %v5868
        %7836 = vmatpush.bf16.msra.mxu0 %v5860
        %7837 = vmatpush.bf16.msra.mxu0 %v5852
        %7838 = vmatpush.bf16.msra.mxu0 %v5844
        %7839 = vmatpush.bf16.msra.mxu0 %v5836
        %7840 = vmatpush.bf16.msra.mxu0 %v5828
        %7841 = vmatmul.bf16.gmra.mxu0 %v1642
        %v7842 = vpop.f32.mrf.mxu0
        %v7843 = vadd.f32 %v7829, %v7842
        %v7844 = vpop.f32.mrf.mxu0
        %v7845 = vadd.f32 %v7831, %v7844
        %7846 = vdwg.mxu0
        %7847 = vmatpush.bf16.msra.mxu0 %v5948
        %7848 = vmatpush.bf16.msra.mxu0 %v5940
        %7849 = vmatpush.bf16.msra.mxu0 %v5932
        %7850 = vmatpush.bf16.msra.mxu0 %v5924
        %7851 = vmatpush.bf16.msra.mxu0 %v5916
        %7852 = vmatpush.bf16.msra.mxu0 %v5908
        %7853 = vmatpush.bf16.msra.mxu0 %v5900
        %7854 = vmatpush.bf16.msra.mxu0 %v5892
        %7855 = vmatmul.bf16.gmra.mxu0 %v1643
        %v7856 = vpop.f32.mrf.mxu0
        %v7857 = vadd.f32 %v7843, %v7856
        %v7858 = vpop.f32.mrf.mxu0
        %v7859 = vadd.f32 %v7845, %v7858
        %7860 = vdwg.mxu0
        %7861 = vmatpush.bf16.msra.mxu0 %v6012
        %7862 = vmatpush.bf16.msra.mxu0 %v6004
        %7863 = vmatpush.bf16.msra.mxu0 %v5996
        %7864 = vmatpush.bf16.msra.mxu0 %v5988
        %7865 = vmatpush.bf16.msra.mxu0 %v5980
        %7866 = vmatpush.bf16.msra.mxu0 %v5972
        %7867 = vmatpush.bf16.msra.mxu0 %v5964
        %7868 = vmatpush.bf16.msra.mxu0 %v5956
        %7869 = vmatmul.bf16.gmra.mxu0 %v1644
        %v7870 = vpop.f32.mrf.mxu0
        %v7871 = vadd.f32 %v7857, %v7870
        %v7872 = vpop.f32.mrf.mxu0
        %v7873 = vadd.f32 %v7859, %v7872
        %7874 = vdwg.mxu0
        %7875 = vmatpush.bf16.msra.mxu0 %v6076
        %7876 = vmatpush.bf16.msra.mxu0 %v6068
        %7877 = vmatpush.bf16.msra.mxu0 %v6060
        %7878 = vmatpush.bf16.msra.mxu0 %v6052
        %7879 = vmatpush.bf16.msra.mxu0 %v6044
        %7880 = vmatpush.bf16.msra.mxu0 %v6036
        %7881 = vmatpush.bf16.msra.mxu0 %v6028
        %7882 = vmatpush.bf16.msra.mxu0 %v6020
        %7883 = vmatmul.bf16.gmra.mxu0 %v1645
        %v7884 = vpop.f32.mrf.mxu0
        %v7885 = vadd.f32 %v7871, %v7884
        %v7886 = vpop.f32.mrf.mxu0
        %v7887 = vadd.f32 %v7873, %v7886
        %7888 = vdwg.mxu0
        %7889 = vmatpush.bf16.msra.mxu0 %v6140
        %7890 = vmatpush.bf16.msra.mxu0 %v6132
        %7891 = vmatpush.bf16.msra.mxu0 %v6124
        %7892 = vmatpush.bf16.msra.mxu0 %v6116
        %7893 = vmatpush.bf16.msra.mxu0 %v6108
        %7894 = vmatpush.bf16.msra.mxu0 %v6100
        %7895 = vmatpush.bf16.msra.mxu0 %v6092
        %7896 = vmatpush.bf16.msra.mxu0 %v6084
        %7897 = vmatmul.bf16.gmra.mxu0 %v1646
        %v7898 = vpop.f32.mrf.mxu0
        %v7899 = vadd.f32 %v7885, %v7898
        %v7900 = vpop.f32.mrf.mxu0
        %v7901 = vadd.f32 %v7887, %v7900
        %7902 = vdwg.mxu0
        %7903 = vmatpush.bf16.msra.mxu0 %v6204
        %7904 = vmatpush.bf16.msra.mxu0 %v6196
        %7905 = vmatpush.bf16.msra.mxu0 %v6188
        %7906 = vmatpush.bf16.msra.mxu0 %v6180
        %7907 = vmatpush.bf16.msra.mxu0 %v6172
        %7908 = vmatpush.bf16.msra.mxu0 %v6164
        %7909 = vmatpush.bf16.msra.mxu0 %v6156
        %7910 = vmatpush.bf16.msra.mxu0 %v6148
        %7911 = vmatmul.bf16.gmra.mxu0 %v1647
        %v7912 = vpop.f32.mrf.mxu0
        %v7913 = vadd.f32 %v7899, %v7912
        %v7914 = vpop.f32.mrf.mxu0
        %v7915 = vadd.f32 %v7901, %v7914
        %7916 = vdwg.mxu0
        %7917 = vmatpush.bf16.msra.mxu0 %v6268
        %7918 = vmatpush.bf16.msra.mxu0 %v6260
        %7919 = vmatpush.bf16.msra.mxu0 %v6252
        %7920 = vmatpush.bf16.msra.mxu0 %v6244
        %7921 = vmatpush.bf16.msra.mxu0 %v6236
        %7922 = vmatpush.bf16.msra.mxu0 %v6228
        %7923 = vmatpush.bf16.msra.mxu0 %v6220
        %7924 = vmatpush.bf16.msra.mxu0 %v6212
        %7925 = vmatmul.bf16.gmra.mxu0 %v1648
        %v7926 = vpop.f32.mrf.mxu0
        %v7927 = vadd.f32 %v7913, %v7926
        %v7928 = vpop.f32.mrf.mxu0
        %v7929 = vadd.f32 %v7915, %v7928
        %7930 = vdwg.mxu0
        %7931 = vmatpush.bf16.msra.mxu0 %v5181
        %7932 = vmatpush.bf16.msra.mxu0 %v5173
        %7933 = vmatpush.bf16.msra.mxu0 %v5165
        %7934 = vmatpush.bf16.msra.mxu0 %v5157
        %7935 = vmatpush.bf16.msra.mxu0 %v5149
        %7936 = vmatpush.bf16.msra.mxu0 %v5141
        %7937 = vmatpush.bf16.msra.mxu0 %v5133
        %7938 = vmatpush.bf16.msra.mxu0 %v5125
        %7939 = vmatmul.bf16.gmra.mxu0 %v1631
        %v7940 = vpop.f32.mrf.mxu0
        %v7941 = vadd.f32 0.0, %v7940
        %v7942 = vpop.f32.mrf.mxu0
        %v7943 = vadd.f32 0.0, %v7942
        %7944 = vdwg.mxu0
        %7945 = vmatpush.bf16.msra.mxu0 %v5245
        %7946 = vmatpush.bf16.msra.mxu0 %v5237
        %7947 = vmatpush.bf16.msra.mxu0 %v5229
        %7948 = vmatpush.bf16.msra.mxu0 %v5221
        %7949 = vmatpush.bf16.msra.mxu0 %v5213
        %7950 = vmatpush.bf16.msra.mxu0 %v5205
        %7951 = vmatpush.bf16.msra.mxu0 %v5197
        %7952 = vmatpush.bf16.msra.mxu0 %v5189
        %7953 = vmatmul.bf16.gmra.mxu0 %v1632
        %v7954 = vpop.f32.mrf.mxu0
        %v7955 = vadd.f32 %v7941, %v7954
        %v7956 = vpop.f32.mrf.mxu0
        %v7957 = vadd.f32 %v7943, %v7956
        %7958 = vdwg.mxu0
        %7959 = vmatpush.bf16.msra.mxu0 %v5309
        %7960 = vmatpush.bf16.msra.mxu0 %v5301
        %7961 = vmatpush.bf16.msra.mxu0 %v5293
        %7962 = vmatpush.bf16.msra.mxu0 %v5285
        %7963 = vmatpush.bf16.msra.mxu0 %v5277
        %7964 = vmatpush.bf16.msra.mxu0 %v5269
        %7965 = vmatpush.bf16.msra.mxu0 %v5261
        %7966 = vmatpush.bf16.msra.mxu0 %v5253
        %7967 = vmatmul.bf16.gmra.mxu0 %v1633
        %v7968 = vpop.f32.mrf.mxu0
        %v7969 = vadd.f32 %v7955, %v7968
        %v7970 = vpop.f32.mrf.mxu0
        %v7971 = vadd.f32 %v7957, %v7970
        %7972 = vdwg.mxu0
        %7973 = vmatpush.bf16.msra.mxu0 %v5373
        %7974 = vmatpush.bf16.msra.mxu0 %v5365
        %7975 = vmatpush.bf16.msra.mxu0 %v5357
        %7976 = vmatpush.bf16.msra.mxu0 %v5349
        %7977 = vmatpush.bf16.msra.mxu0 %v5341
        %7978 = vmatpush.bf16.msra.mxu0 %v5333
        %7979 = vmatpush.bf16.msra.mxu0 %v5325
        %7980 = vmatpush.bf16.msra.mxu0 %v5317
        %7981 = vmatmul.bf16.gmra.mxu0 %v1634
        %v7982 = vpop.f32.mrf.mxu0
        %v7983 = vadd.f32 %v7969, %v7982
        %v7984 = vpop.f32.mrf.mxu0
        %v7985 = vadd.f32 %v7971, %v7984
        %7986 = vdwg.mxu0
        %7987 = vmatpush.bf16.msra.mxu0 %v5437
        %7988 = vmatpush.bf16.msra.mxu0 %v5429
        %7989 = vmatpush.bf16.msra.mxu0 %v5421
        %7990 = vmatpush.bf16.msra.mxu0 %v5413
        %7991 = vmatpush.bf16.msra.mxu0 %v5405
        %7992 = vmatpush.bf16.msra.mxu0 %v5397
        %7993 = vmatpush.bf16.msra.mxu0 %v5389
        %7994 = vmatpush.bf16.msra.mxu0 %v5381
        %7995 = vmatmul.bf16.gmra.mxu0 %v1635
        %v7996 = vpop.f32.mrf.mxu0
        %v7997 = vadd.f32 %v7983, %v7996
        %v7998 = vpop.f32.mrf.mxu0
        %v7999 = vadd.f32 %v7985, %v7998
        %8000 = vdwg.mxu0
        %8001 = vmatpush.bf16.msra.mxu0 %v5501
        %8002 = vmatpush.bf16.msra.mxu0 %v5493
        %8003 = vmatpush.bf16.msra.mxu0 %v5485
        %8004 = vmatpush.bf16.msra.mxu0 %v5477
        %8005 = vmatpush.bf16.msra.mxu0 %v5469
        %8006 = vmatpush.bf16.msra.mxu0 %v5461
        %8007 = vmatpush.bf16.msra.mxu0 %v5453
        %8008 = vmatpush.bf16.msra.mxu0 %v5445
        %8009 = vmatmul.bf16.gmra.mxu0 %v1636
        %v8010 = vpop.f32.mrf.mxu0
        %v8011 = vadd.f32 %v7997, %v8010
        %v8012 = vpop.f32.mrf.mxu0
        %v8013 = vadd.f32 %v7999, %v8012
        %8014 = vdwg.mxu0
        %8015 = vmatpush.bf16.msra.mxu0 %v5565
        %8016 = vmatpush.bf16.msra.mxu0 %v5557
        %8017 = vmatpush.bf16.msra.mxu0 %v5549
        %8018 = vmatpush.bf16.msra.mxu0 %v5541
        %8019 = vmatpush.bf16.msra.mxu0 %v5533
        %8020 = vmatpush.bf16.msra.mxu0 %v5525
        %8021 = vmatpush.bf16.msra.mxu0 %v5517
        %8022 = vmatpush.bf16.msra.mxu0 %v5509
        %8023 = vmatmul.bf16.gmra.mxu0 %v1637
        %v8024 = vpop.f32.mrf.mxu0
        %v8025 = vadd.f32 %v8011, %v8024
        %v8026 = vpop.f32.mrf.mxu0
        %v8027 = vadd.f32 %v8013, %v8026
        %8028 = vdwg.mxu0
        %8029 = vmatpush.bf16.msra.mxu0 %v5629
        %8030 = vmatpush.bf16.msra.mxu0 %v5621
        %8031 = vmatpush.bf16.msra.mxu0 %v5613
        %8032 = vmatpush.bf16.msra.mxu0 %v5605
        %8033 = vmatpush.bf16.msra.mxu0 %v5597
        %8034 = vmatpush.bf16.msra.mxu0 %v5589
        %8035 = vmatpush.bf16.msra.mxu0 %v5581
        %8036 = vmatpush.bf16.msra.mxu0 %v5573
        %8037 = vmatmul.bf16.gmra.mxu0 %v1638
        %v8038 = vpop.f32.mrf.mxu0
        %v8039 = vadd.f32 %v8025, %v8038
        %v8040 = vpop.f32.mrf.mxu0
        %v8041 = vadd.f32 %v8027, %v8040
        %8042 = vdwg.mxu0
        %8043 = vmatpush.bf16.msra.mxu0 %v5693
        %8044 = vmatpush.bf16.msra.mxu0 %v5685
        %8045 = vmatpush.bf16.msra.mxu0 %v5677
        %8046 = vmatpush.bf16.msra.mxu0 %v5669
        %8047 = vmatpush.bf16.msra.mxu0 %v5661
        %8048 = vmatpush.bf16.msra.mxu0 %v5653
        %8049 = vmatpush.bf16.msra.mxu0 %v5645
        %8050 = vmatpush.bf16.msra.mxu0 %v5637
        %8051 = vmatmul.bf16.gmra.mxu0 %v1639
        %v8052 = vpop.f32.mrf.mxu0
        %v8053 = vadd.f32 %v8039, %v8052
        %v8054 = vpop.f32.mrf.mxu0
        %v8055 = vadd.f32 %v8041, %v8054
        %8056 = vdwg.mxu0
        %8057 = vmatpush.bf16.msra.mxu0 %v5757
        %8058 = vmatpush.bf16.msra.mxu0 %v5749
        %8059 = vmatpush.bf16.msra.mxu0 %v5741
        %8060 = vmatpush.bf16.msra.mxu0 %v5733
        %8061 = vmatpush.bf16.msra.mxu0 %v5725
        %8062 = vmatpush.bf16.msra.mxu0 %v5717
        %8063 = vmatpush.bf16.msra.mxu0 %v5709
        %8064 = vmatpush.bf16.msra.mxu0 %v5701
        %8065 = vmatmul.bf16.gmra.mxu0 %v1640
        %v8066 = vpop.f32.mrf.mxu0
        %v8067 = vadd.f32 %v8053, %v8066
        %v8068 = vpop.f32.mrf.mxu0
        %v8069 = vadd.f32 %v8055, %v8068
        %8070 = vdwg.mxu0
        %8071 = vmatpush.bf16.msra.mxu0 %v5821
        %8072 = vmatpush.bf16.msra.mxu0 %v5813
        %8073 = vmatpush.bf16.msra.mxu0 %v5805
        %8074 = vmatpush.bf16.msra.mxu0 %v5797
        %8075 = vmatpush.bf16.msra.mxu0 %v5789
        %8076 = vmatpush.bf16.msra.mxu0 %v5781
        %8077 = vmatpush.bf16.msra.mxu0 %v5773
        %8078 = vmatpush.bf16.msra.mxu0 %v5765
        %8079 = vmatmul.bf16.gmra.mxu0 %v1641
        %v8080 = vpop.f32.mrf.mxu0
        %v8081 = vadd.f32 %v8067, %v8080
        %v8082 = vpop.f32.mrf.mxu0
        %v8083 = vadd.f32 %v8069, %v8082
        %8084 = vdwg.mxu0
        %8085 = vmatpush.bf16.msra.mxu0 %v5885
        %8086 = vmatpush.bf16.msra.mxu0 %v5877
        %8087 = vmatpush.bf16.msra.mxu0 %v5869
        %8088 = vmatpush.bf16.msra.mxu0 %v5861
        %8089 = vmatpush.bf16.msra.mxu0 %v5853
        %8090 = vmatpush.bf16.msra.mxu0 %v5845
        %8091 = vmatpush.bf16.msra.mxu0 %v5837
        %8092 = vmatpush.bf16.msra.mxu0 %v5829
        %8093 = vmatmul.bf16.gmra.mxu0 %v1642
        %v8094 = vpop.f32.mrf.mxu0
        %v8095 = vadd.f32 %v8081, %v8094
        %v8096 = vpop.f32.mrf.mxu0
        %v8097 = vadd.f32 %v8083, %v8096
        %8098 = vdwg.mxu0
        %8099 = vmatpush.bf16.msra.mxu0 %v5949
        %8100 = vmatpush.bf16.msra.mxu0 %v5941
        %8101 = vmatpush.bf16.msra.mxu0 %v5933
        %8102 = vmatpush.bf16.msra.mxu0 %v5925
        %8103 = vmatpush.bf16.msra.mxu0 %v5917
        %8104 = vmatpush.bf16.msra.mxu0 %v5909
        %8105 = vmatpush.bf16.msra.mxu0 %v5901
        %8106 = vmatpush.bf16.msra.mxu0 %v5893
        %8107 = vmatmul.bf16.gmra.mxu0 %v1643
        %v8108 = vpop.f32.mrf.mxu0
        %v8109 = vadd.f32 %v8095, %v8108
        %v8110 = vpop.f32.mrf.mxu0
        %v8111 = vadd.f32 %v8097, %v8110
        %8112 = vdwg.mxu0
        %8113 = vmatpush.bf16.msra.mxu0 %v6013
        %8114 = vmatpush.bf16.msra.mxu0 %v6005
        %8115 = vmatpush.bf16.msra.mxu0 %v5997
        %8116 = vmatpush.bf16.msra.mxu0 %v5989
        %8117 = vmatpush.bf16.msra.mxu0 %v5981
        %8118 = vmatpush.bf16.msra.mxu0 %v5973
        %8119 = vmatpush.bf16.msra.mxu0 %v5965
        %8120 = vmatpush.bf16.msra.mxu0 %v5957
        %8121 = vmatmul.bf16.gmra.mxu0 %v1644
        %v8122 = vpop.f32.mrf.mxu0
        %v8123 = vadd.f32 %v8109, %v8122
        %v8124 = vpop.f32.mrf.mxu0
        %v8125 = vadd.f32 %v8111, %v8124
        %8126 = vdwg.mxu0
        %8127 = vmatpush.bf16.msra.mxu0 %v6077
        %8128 = vmatpush.bf16.msra.mxu0 %v6069
        %8129 = vmatpush.bf16.msra.mxu0 %v6061
        %8130 = vmatpush.bf16.msra.mxu0 %v6053
        %8131 = vmatpush.bf16.msra.mxu0 %v6045
        %8132 = vmatpush.bf16.msra.mxu0 %v6037
        %8133 = vmatpush.bf16.msra.mxu0 %v6029
        %8134 = vmatpush.bf16.msra.mxu0 %v6021
        %8135 = vmatmul.bf16.gmra.mxu0 %v1645
        %v8136 = vpop.f32.mrf.mxu0
        %v8137 = vadd.f32 %v8123, %v8136
        %v8138 = vpop.f32.mrf.mxu0
        %v8139 = vadd.f32 %v8125, %v8138
        %8140 = vdwg.mxu0
        %8141 = vmatpush.bf16.msra.mxu0 %v6141
        %8142 = vmatpush.bf16.msra.mxu0 %v6133
        %8143 = vmatpush.bf16.msra.mxu0 %v6125
        %8144 = vmatpush.bf16.msra.mxu0 %v6117
        %8145 = vmatpush.bf16.msra.mxu0 %v6109
        %8146 = vmatpush.bf16.msra.mxu0 %v6101
        %8147 = vmatpush.bf16.msra.mxu0 %v6093
        %8148 = vmatpush.bf16.msra.mxu0 %v6085
        %8149 = vmatmul.bf16.gmra.mxu0 %v1646
        %v8150 = vpop.f32.mrf.mxu0
        %v8151 = vadd.f32 %v8137, %v8150
        %v8152 = vpop.f32.mrf.mxu0
        %v8153 = vadd.f32 %v8139, %v8152
        %8154 = vdwg.mxu0
        %8155 = vmatpush.bf16.msra.mxu0 %v6205
        %8156 = vmatpush.bf16.msra.mxu0 %v6197
        %8157 = vmatpush.bf16.msra.mxu0 %v6189
        %8158 = vmatpush.bf16.msra.mxu0 %v6181
        %8159 = vmatpush.bf16.msra.mxu0 %v6173
        %8160 = vmatpush.bf16.msra.mxu0 %v6165
        %8161 = vmatpush.bf16.msra.mxu0 %v6157
        %8162 = vmatpush.bf16.msra.mxu0 %v6149
        %8163 = vmatmul.bf16.gmra.mxu0 %v1647
        %v8164 = vpop.f32.mrf.mxu0
        %v8165 = vadd.f32 %v8151, %v8164
        %v8166 = vpop.f32.mrf.mxu0
        %v8167 = vadd.f32 %v8153, %v8166
        %8168 = vdwg.mxu0
        %8169 = vmatpush.bf16.msra.mxu0 %v6269
        %8170 = vmatpush.bf16.msra.mxu0 %v6261
        %8171 = vmatpush.bf16.msra.mxu0 %v6253
        %8172 = vmatpush.bf16.msra.mxu0 %v6245
        %8173 = vmatpush.bf16.msra.mxu0 %v6237
        %8174 = vmatpush.bf16.msra.mxu0 %v6229
        %8175 = vmatpush.bf16.msra.mxu0 %v6221
        %8176 = vmatpush.bf16.msra.mxu0 %v6213
        %8177 = vmatmul.bf16.gmra.mxu0 %v1648
        %v8178 = vpop.f32.mrf.mxu0
        %v8179 = vadd.f32 %v8165, %v8178
        %v8180 = vpop.f32.mrf.mxu0
        %v8181 = vadd.f32 %v8167, %v8180
        %8182 = vdwg.mxu0
        %8183 = vmatpush.bf16.msra.mxu0 %v5182
        %8184 = vmatpush.bf16.msra.mxu0 %v5174
        %8185 = vmatpush.bf16.msra.mxu0 %v5166
        %8186 = vmatpush.bf16.msra.mxu0 %v5158
        %8187 = vmatpush.bf16.msra.mxu0 %v5150
        %8188 = vmatpush.bf16.msra.mxu0 %v5142
        %8189 = vmatpush.bf16.msra.mxu0 %v5134
        %8190 = vmatpush.bf16.msra.mxu0 %v5126
        %8191 = vmatmul.bf16.gmra.mxu0 %v1631
        %v8192 = vpop.f32.mrf.mxu0
        %v8193 = vadd.f32 0.0, %v8192
        %v8194 = vpop.f32.mrf.mxu0
        %v8195 = vadd.f32 0.0, %v8194
        %8196 = vdwg.mxu0
        %8197 = vmatpush.bf16.msra.mxu0 %v5246
        %8198 = vmatpush.bf16.msra.mxu0 %v5238
        %8199 = vmatpush.bf16.msra.mxu0 %v5230
        %8200 = vmatpush.bf16.msra.mxu0 %v5222
        %8201 = vmatpush.bf16.msra.mxu0 %v5214
        %8202 = vmatpush.bf16.msra.mxu0 %v5206
        %8203 = vmatpush.bf16.msra.mxu0 %v5198
        %8204 = vmatpush.bf16.msra.mxu0 %v5190
        %8205 = vmatmul.bf16.gmra.mxu0 %v1632
        %v8206 = vpop.f32.mrf.mxu0
        %v8207 = vadd.f32 %v8193, %v8206
        %v8208 = vpop.f32.mrf.mxu0
        %v8209 = vadd.f32 %v8195, %v8208
        %8210 = vdwg.mxu0
        %8211 = vmatpush.bf16.msra.mxu0 %v5310
        %8212 = vmatpush.bf16.msra.mxu0 %v5302
        %8213 = vmatpush.bf16.msra.mxu0 %v5294
        %8214 = vmatpush.bf16.msra.mxu0 %v5286
        %8215 = vmatpush.bf16.msra.mxu0 %v5278
        %8216 = vmatpush.bf16.msra.mxu0 %v5270
        %8217 = vmatpush.bf16.msra.mxu0 %v5262
        %8218 = vmatpush.bf16.msra.mxu0 %v5254
        %8219 = vmatmul.bf16.gmra.mxu0 %v1633
        %v8220 = vpop.f32.mrf.mxu0
        %v8221 = vadd.f32 %v8207, %v8220
        %v8222 = vpop.f32.mrf.mxu0
        %v8223 = vadd.f32 %v8209, %v8222
        %8224 = vdwg.mxu0
        %8225 = vmatpush.bf16.msra.mxu0 %v5374
        %8226 = vmatpush.bf16.msra.mxu0 %v5366
        %8227 = vmatpush.bf16.msra.mxu0 %v5358
        %8228 = vmatpush.bf16.msra.mxu0 %v5350
        %8229 = vmatpush.bf16.msra.mxu0 %v5342
        %8230 = vmatpush.bf16.msra.mxu0 %v5334
        %8231 = vmatpush.bf16.msra.mxu0 %v5326
        %8232 = vmatpush.bf16.msra.mxu0 %v5318
        %8233 = vmatmul.bf16.gmra.mxu0 %v1634
        %v8234 = vpop.f32.mrf.mxu0
        %v8235 = vadd.f32 %v8221, %v8234
        %v8236 = vpop.f32.mrf.mxu0
        %v8237 = vadd.f32 %v8223, %v8236
        %8238 = vdwg.mxu0
        %8239 = vmatpush.bf16.msra.mxu0 %v5438
        %8240 = vmatpush.bf16.msra.mxu0 %v5430
        %8241 = vmatpush.bf16.msra.mxu0 %v5422
        %8242 = vmatpush.bf16.msra.mxu0 %v5414
        %8243 = vmatpush.bf16.msra.mxu0 %v5406
        %8244 = vmatpush.bf16.msra.mxu0 %v5398
        %8245 = vmatpush.bf16.msra.mxu0 %v5390
        %8246 = vmatpush.bf16.msra.mxu0 %v5382
        %8247 = vmatmul.bf16.gmra.mxu0 %v1635
        %v8248 = vpop.f32.mrf.mxu0
        %v8249 = vadd.f32 %v8235, %v8248
        %v8250 = vpop.f32.mrf.mxu0
        %v8251 = vadd.f32 %v8237, %v8250
        %8252 = vdwg.mxu0
        %8253 = vmatpush.bf16.msra.mxu0 %v5502
        %8254 = vmatpush.bf16.msra.mxu0 %v5494
        %8255 = vmatpush.bf16.msra.mxu0 %v5486
        %8256 = vmatpush.bf16.msra.mxu0 %v5478
        %8257 = vmatpush.bf16.msra.mxu0 %v5470
        %8258 = vmatpush.bf16.msra.mxu0 %v5462
        %8259 = vmatpush.bf16.msra.mxu0 %v5454
        %8260 = vmatpush.bf16.msra.mxu0 %v5446
        %8261 = vmatmul.bf16.gmra.mxu0 %v1636
        %v8262 = vpop.f32.mrf.mxu0
        %v8263 = vadd.f32 %v8249, %v8262
        %v8264 = vpop.f32.mrf.mxu0
        %v8265 = vadd.f32 %v8251, %v8264
        %8266 = vdwg.mxu0
        %8267 = vmatpush.bf16.msra.mxu0 %v5566
        %8268 = vmatpush.bf16.msra.mxu0 %v5558
        %8269 = vmatpush.bf16.msra.mxu0 %v5550
        %8270 = vmatpush.bf16.msra.mxu0 %v5542
        %8271 = vmatpush.bf16.msra.mxu0 %v5534
        %8272 = vmatpush.bf16.msra.mxu0 %v5526
        %8273 = vmatpush.bf16.msra.mxu0 %v5518
        %8274 = vmatpush.bf16.msra.mxu0 %v5510
        %8275 = vmatmul.bf16.gmra.mxu0 %v1637
        %v8276 = vpop.f32.mrf.mxu0
        %v8277 = vadd.f32 %v8263, %v8276
        %v8278 = vpop.f32.mrf.mxu0
        %v8279 = vadd.f32 %v8265, %v8278
        %8280 = vdwg.mxu0
        %8281 = vmatpush.bf16.msra.mxu0 %v5630
        %8282 = vmatpush.bf16.msra.mxu0 %v5622
        %8283 = vmatpush.bf16.msra.mxu0 %v5614
        %8284 = vmatpush.bf16.msra.mxu0 %v5606
        %8285 = vmatpush.bf16.msra.mxu0 %v5598
        %8286 = vmatpush.bf16.msra.mxu0 %v5590
        %8287 = vmatpush.bf16.msra.mxu0 %v5582
        %8288 = vmatpush.bf16.msra.mxu0 %v5574
        %8289 = vmatmul.bf16.gmra.mxu0 %v1638
        %v8290 = vpop.f32.mrf.mxu0
        %v8291 = vadd.f32 %v8277, %v8290
        %v8292 = vpop.f32.mrf.mxu0
        %v8293 = vadd.f32 %v8279, %v8292
        %8294 = vdwg.mxu0
        %8295 = vmatpush.bf16.msra.mxu0 %v5694
        %8296 = vmatpush.bf16.msra.mxu0 %v5686
        %8297 = vmatpush.bf16.msra.mxu0 %v5678
        %8298 = vmatpush.bf16.msra.mxu0 %v5670
        %8299 = vmatpush.bf16.msra.mxu0 %v5662
        %8300 = vmatpush.bf16.msra.mxu0 %v5654
        %8301 = vmatpush.bf16.msra.mxu0 %v5646
        %8302 = vmatpush.bf16.msra.mxu0 %v5638
        %8303 = vmatmul.bf16.gmra.mxu0 %v1639
        %v8304 = vpop.f32.mrf.mxu0
        %v8305 = vadd.f32 %v8291, %v8304
        %v8306 = vpop.f32.mrf.mxu0
        %v8307 = vadd.f32 %v8293, %v8306
        %8308 = vdwg.mxu0
        %8309 = vmatpush.bf16.msra.mxu0 %v5758
        %8310 = vmatpush.bf16.msra.mxu0 %v5750
        %8311 = vmatpush.bf16.msra.mxu0 %v5742
        %8312 = vmatpush.bf16.msra.mxu0 %v5734
        %8313 = vmatpush.bf16.msra.mxu0 %v5726
        %8314 = vmatpush.bf16.msra.mxu0 %v5718
        %8315 = vmatpush.bf16.msra.mxu0 %v5710
        %8316 = vmatpush.bf16.msra.mxu0 %v5702
        %8317 = vmatmul.bf16.gmra.mxu0 %v1640
        %v8318 = vpop.f32.mrf.mxu0
        %v8319 = vadd.f32 %v8305, %v8318
        %v8320 = vpop.f32.mrf.mxu0
        %v8321 = vadd.f32 %v8307, %v8320
        %8322 = vdwg.mxu0
        %8323 = vmatpush.bf16.msra.mxu0 %v5822
        %8324 = vmatpush.bf16.msra.mxu0 %v5814
        %8325 = vmatpush.bf16.msra.mxu0 %v5806
        %8326 = vmatpush.bf16.msra.mxu0 %v5798
        %8327 = vmatpush.bf16.msra.mxu0 %v5790
        %8328 = vmatpush.bf16.msra.mxu0 %v5782
        %8329 = vmatpush.bf16.msra.mxu0 %v5774
        %8330 = vmatpush.bf16.msra.mxu0 %v5766
        %8331 = vmatmul.bf16.gmra.mxu0 %v1641
        %v8332 = vpop.f32.mrf.mxu0
        %v8333 = vadd.f32 %v8319, %v8332
        %v8334 = vpop.f32.mrf.mxu0
        %v8335 = vadd.f32 %v8321, %v8334
        %8336 = vdwg.mxu0
        %8337 = vmatpush.bf16.msra.mxu0 %v5886
        %8338 = vmatpush.bf16.msra.mxu0 %v5878
        %8339 = vmatpush.bf16.msra.mxu0 %v5870
        %8340 = vmatpush.bf16.msra.mxu0 %v5862
        %8341 = vmatpush.bf16.msra.mxu0 %v5854
        %8342 = vmatpush.bf16.msra.mxu0 %v5846
        %8343 = vmatpush.bf16.msra.mxu0 %v5838
        %8344 = vmatpush.bf16.msra.mxu0 %v5830
        %8345 = vmatmul.bf16.gmra.mxu0 %v1642
        %v8346 = vpop.f32.mrf.mxu0
        %v8347 = vadd.f32 %v8333, %v8346
        %v8348 = vpop.f32.mrf.mxu0
        %v8349 = vadd.f32 %v8335, %v8348
        %8350 = vdwg.mxu0
        %8351 = vmatpush.bf16.msra.mxu0 %v5950
        %8352 = vmatpush.bf16.msra.mxu0 %v5942
        %8353 = vmatpush.bf16.msra.mxu0 %v5934
        %8354 = vmatpush.bf16.msra.mxu0 %v5926
        %8355 = vmatpush.bf16.msra.mxu0 %v5918
        %8356 = vmatpush.bf16.msra.mxu0 %v5910
        %8357 = vmatpush.bf16.msra.mxu0 %v5902
        %8358 = vmatpush.bf16.msra.mxu0 %v5894
        %8359 = vmatmul.bf16.gmra.mxu0 %v1643
        %v8360 = vpop.f32.mrf.mxu0
        %v8361 = vadd.f32 %v8347, %v8360
        %v8362 = vpop.f32.mrf.mxu0
        %v8363 = vadd.f32 %v8349, %v8362
        %8364 = vdwg.mxu0
        %8365 = vmatpush.bf16.msra.mxu0 %v6014
        %8366 = vmatpush.bf16.msra.mxu0 %v6006
        %8367 = vmatpush.bf16.msra.mxu0 %v5998
        %8368 = vmatpush.bf16.msra.mxu0 %v5990
        %8369 = vmatpush.bf16.msra.mxu0 %v5982
        %8370 = vmatpush.bf16.msra.mxu0 %v5974
        %8371 = vmatpush.bf16.msra.mxu0 %v5966
        %8372 = vmatpush.bf16.msra.mxu0 %v5958
        %8373 = vmatmul.bf16.gmra.mxu0 %v1644
        %v8374 = vpop.f32.mrf.mxu0
        %v8375 = vadd.f32 %v8361, %v8374
        %v8376 = vpop.f32.mrf.mxu0
        %v8377 = vadd.f32 %v8363, %v8376
        %8378 = vdwg.mxu0
        %8379 = vmatpush.bf16.msra.mxu0 %v6078
        %8380 = vmatpush.bf16.msra.mxu0 %v6070
        %8381 = vmatpush.bf16.msra.mxu0 %v6062
        %8382 = vmatpush.bf16.msra.mxu0 %v6054
        %8383 = vmatpush.bf16.msra.mxu0 %v6046
        %8384 = vmatpush.bf16.msra.mxu0 %v6038
        %8385 = vmatpush.bf16.msra.mxu0 %v6030
        %8386 = vmatpush.bf16.msra.mxu0 %v6022
        %8387 = vmatmul.bf16.gmra.mxu0 %v1645
        %v8388 = vpop.f32.mrf.mxu0
        %v8389 = vadd.f32 %v8375, %v8388
        %v8390 = vpop.f32.mrf.mxu0
        %v8391 = vadd.f32 %v8377, %v8390
        %8392 = vdwg.mxu0
        %8393 = vmatpush.bf16.msra.mxu0 %v6142
        %8394 = vmatpush.bf16.msra.mxu0 %v6134
        %8395 = vmatpush.bf16.msra.mxu0 %v6126
        %8396 = vmatpush.bf16.msra.mxu0 %v6118
        %8397 = vmatpush.bf16.msra.mxu0 %v6110
        %8398 = vmatpush.bf16.msra.mxu0 %v6102
        %8399 = vmatpush.bf16.msra.mxu0 %v6094
        %8400 = vmatpush.bf16.msra.mxu0 %v6086
        %8401 = vmatmul.bf16.gmra.mxu0 %v1646
        %v8402 = vpop.f32.mrf.mxu0
        %v8403 = vadd.f32 %v8389, %v8402
        %v8404 = vpop.f32.mrf.mxu0
        %v8405 = vadd.f32 %v8391, %v8404
        %8406 = vdwg.mxu0
        %8407 = vmatpush.bf16.msra.mxu0 %v6206
        %8408 = vmatpush.bf16.msra.mxu0 %v6198
        %8409 = vmatpush.bf16.msra.mxu0 %v6190
        %8410 = vmatpush.bf16.msra.mxu0 %v6182
        %8411 = vmatpush.bf16.msra.mxu0 %v6174
        %8412 = vmatpush.bf16.msra.mxu0 %v6166
        %8413 = vmatpush.bf16.msra.mxu0 %v6158
        %8414 = vmatpush.bf16.msra.mxu0 %v6150
        %8415 = vmatmul.bf16.gmra.mxu0 %v1647
        %v8416 = vpop.f32.mrf.mxu0
        %v8417 = vadd.f32 %v8403, %v8416
        %v8418 = vpop.f32.mrf.mxu0
        %v8419 = vadd.f32 %v8405, %v8418
        %8420 = vdwg.mxu0
        %8421 = vmatpush.bf16.msra.mxu0 %v6270
        %8422 = vmatpush.bf16.msra.mxu0 %v6262
        %8423 = vmatpush.bf16.msra.mxu0 %v6254
        %8424 = vmatpush.bf16.msra.mxu0 %v6246
        %8425 = vmatpush.bf16.msra.mxu0 %v6238
        %8426 = vmatpush.bf16.msra.mxu0 %v6230
        %8427 = vmatpush.bf16.msra.mxu0 %v6222
        %8428 = vmatpush.bf16.msra.mxu0 %v6214
        %8429 = vmatmul.bf16.gmra.mxu0 %v1648
        %v8430 = vpop.f32.mrf.mxu0
        %v8431 = vadd.f32 %v8417, %v8430
        %v8432 = vpop.f32.mrf.mxu0
        %v8433 = vadd.f32 %v8419, %v8432
        %8434 = vdwg.mxu0
        %8435 = vmatpush.bf16.msra.mxu0 %v5183
        %8436 = vmatpush.bf16.msra.mxu0 %v5175
        %8437 = vmatpush.bf16.msra.mxu0 %v5167
        %8438 = vmatpush.bf16.msra.mxu0 %v5159
        %8439 = vmatpush.bf16.msra.mxu0 %v5151
        %8440 = vmatpush.bf16.msra.mxu0 %v5143
        %8441 = vmatpush.bf16.msra.mxu0 %v5135
        %8442 = vmatpush.bf16.msra.mxu0 %v5127
        %8443 = vmatmul.bf16.gmra.mxu0 %v1631
        %v8444 = vpop.f32.mrf.mxu0
        %v8445 = vadd.f32 0.0, %v8444
        %v8446 = vpop.f32.mrf.mxu0
        %v8447 = vadd.f32 0.0, %v8446
        %8448 = vdwg.mxu0
        %8449 = vmatpush.bf16.msra.mxu0 %v5247
        %8450 = vmatpush.bf16.msra.mxu0 %v5239
        %8451 = vmatpush.bf16.msra.mxu0 %v5231
        %8452 = vmatpush.bf16.msra.mxu0 %v5223
        %8453 = vmatpush.bf16.msra.mxu0 %v5215
        %8454 = vmatpush.bf16.msra.mxu0 %v5207
        %8455 = vmatpush.bf16.msra.mxu0 %v5199
        %8456 = vmatpush.bf16.msra.mxu0 %v5191
        %8457 = vmatmul.bf16.gmra.mxu0 %v1632
        %v8458 = vpop.f32.mrf.mxu0
        %v8459 = vadd.f32 %v8445, %v8458
        %v8460 = vpop.f32.mrf.mxu0
        %v8461 = vadd.f32 %v8447, %v8460
        %8462 = vdwg.mxu0
        %8463 = vmatpush.bf16.msra.mxu0 %v5311
        %8464 = vmatpush.bf16.msra.mxu0 %v5303
        %8465 = vmatpush.bf16.msra.mxu0 %v5295
        %8466 = vmatpush.bf16.msra.mxu0 %v5287
        %8467 = vmatpush.bf16.msra.mxu0 %v5279
        %8468 = vmatpush.bf16.msra.mxu0 %v5271
        %8469 = vmatpush.bf16.msra.mxu0 %v5263
        %8470 = vmatpush.bf16.msra.mxu0 %v5255
        %8471 = vmatmul.bf16.gmra.mxu0 %v1633
        %v8472 = vpop.f32.mrf.mxu0
        %v8473 = vadd.f32 %v8459, %v8472
        %v8474 = vpop.f32.mrf.mxu0
        %v8475 = vadd.f32 %v8461, %v8474
        %8476 = vdwg.mxu0
        %8477 = vmatpush.bf16.msra.mxu0 %v5375
        %8478 = vmatpush.bf16.msra.mxu0 %v5367
        %8479 = vmatpush.bf16.msra.mxu0 %v5359
        %8480 = vmatpush.bf16.msra.mxu0 %v5351
        %8481 = vmatpush.bf16.msra.mxu0 %v5343
        %8482 = vmatpush.bf16.msra.mxu0 %v5335
        %8483 = vmatpush.bf16.msra.mxu0 %v5327
        %8484 = vmatpush.bf16.msra.mxu0 %v5319
        %8485 = vmatmul.bf16.gmra.mxu0 %v1634
        %v8486 = vpop.f32.mrf.mxu0
        %v8487 = vadd.f32 %v8473, %v8486
        %v8488 = vpop.f32.mrf.mxu0
        %v8489 = vadd.f32 %v8475, %v8488
        %8490 = vdwg.mxu0
        %8491 = vmatpush.bf16.msra.mxu0 %v5439
        %8492 = vmatpush.bf16.msra.mxu0 %v5431
        %8493 = vmatpush.bf16.msra.mxu0 %v5423
        %8494 = vmatpush.bf16.msra.mxu0 %v5415
        %8495 = vmatpush.bf16.msra.mxu0 %v5407
        %8496 = vmatpush.bf16.msra.mxu0 %v5399
        %8497 = vmatpush.bf16.msra.mxu0 %v5391
        %8498 = vmatpush.bf16.msra.mxu0 %v5383
        %8499 = vmatmul.bf16.gmra.mxu0 %v1635
        %v8500 = vpop.f32.mrf.mxu0
        %v8501 = vadd.f32 %v8487, %v8500
        %v8502 = vpop.f32.mrf.mxu0
        %v8503 = vadd.f32 %v8489, %v8502
        %8504 = vdwg.mxu0
        %8505 = vmatpush.bf16.msra.mxu0 %v5503
        %8506 = vmatpush.bf16.msra.mxu0 %v5495
        %8507 = vmatpush.bf16.msra.mxu0 %v5487
        %8508 = vmatpush.bf16.msra.mxu0 %v5479
        %8509 = vmatpush.bf16.msra.mxu0 %v5471
        %8510 = vmatpush.bf16.msra.mxu0 %v5463
        %8511 = vmatpush.bf16.msra.mxu0 %v5455
        %8512 = vmatpush.bf16.msra.mxu0 %v5447
        %8513 = vmatmul.bf16.gmra.mxu0 %v1636
        %v8514 = vpop.f32.mrf.mxu0
        %v8515 = vadd.f32 %v8501, %v8514
        %v8516 = vpop.f32.mrf.mxu0
        %v8517 = vadd.f32 %v8503, %v8516
        %8518 = vdwg.mxu0
        %8519 = vmatpush.bf16.msra.mxu0 %v5567
        %8520 = vmatpush.bf16.msra.mxu0 %v5559
        %8521 = vmatpush.bf16.msra.mxu0 %v5551
        %8522 = vmatpush.bf16.msra.mxu0 %v5543
        %8523 = vmatpush.bf16.msra.mxu0 %v5535
        %8524 = vmatpush.bf16.msra.mxu0 %v5527
        %8525 = vmatpush.bf16.msra.mxu0 %v5519
        %8526 = vmatpush.bf16.msra.mxu0 %v5511
        %8527 = vmatmul.bf16.gmra.mxu0 %v1637
        %v8528 = vpop.f32.mrf.mxu0
        %v8529 = vadd.f32 %v8515, %v8528
        %v8530 = vpop.f32.mrf.mxu0
        %v8531 = vadd.f32 %v8517, %v8530
        %8532 = vdwg.mxu0
        %8533 = vmatpush.bf16.msra.mxu0 %v5631
        %8534 = vmatpush.bf16.msra.mxu0 %v5623
        %8535 = vmatpush.bf16.msra.mxu0 %v5615
        %8536 = vmatpush.bf16.msra.mxu0 %v5607
        %8537 = vmatpush.bf16.msra.mxu0 %v5599
        %8538 = vmatpush.bf16.msra.mxu0 %v5591
        %8539 = vmatpush.bf16.msra.mxu0 %v5583
        %8540 = vmatpush.bf16.msra.mxu0 %v5575
        %8541 = vmatmul.bf16.gmra.mxu0 %v1638
        %v8542 = vpop.f32.mrf.mxu0
        %v8543 = vadd.f32 %v8529, %v8542
        %v8544 = vpop.f32.mrf.mxu0
        %v8545 = vadd.f32 %v8531, %v8544
        %8546 = vdwg.mxu0
        %8547 = vmatpush.bf16.msra.mxu0 %v5695
        %8548 = vmatpush.bf16.msra.mxu0 %v5687
        %8549 = vmatpush.bf16.msra.mxu0 %v5679
        %8550 = vmatpush.bf16.msra.mxu0 %v5671
        %8551 = vmatpush.bf16.msra.mxu0 %v5663
        %8552 = vmatpush.bf16.msra.mxu0 %v5655
        %8553 = vmatpush.bf16.msra.mxu0 %v5647
        %8554 = vmatpush.bf16.msra.mxu0 %v5639
        %8555 = vmatmul.bf16.gmra.mxu0 %v1639
        %v8556 = vpop.f32.mrf.mxu0
        %v8557 = vadd.f32 %v8543, %v8556
        %v8558 = vpop.f32.mrf.mxu0
        %v8559 = vadd.f32 %v8545, %v8558
        %8560 = vdwg.mxu0
        %8561 = vmatpush.bf16.msra.mxu0 %v5759
        %8562 = vmatpush.bf16.msra.mxu0 %v5751
        %8563 = vmatpush.bf16.msra.mxu0 %v5743
        %8564 = vmatpush.bf16.msra.mxu0 %v5735
        %8565 = vmatpush.bf16.msra.mxu0 %v5727
        %8566 = vmatpush.bf16.msra.mxu0 %v5719
        %8567 = vmatpush.bf16.msra.mxu0 %v5711
        %8568 = vmatpush.bf16.msra.mxu0 %v5703
        %8569 = vmatmul.bf16.gmra.mxu0 %v1640
        %v8570 = vpop.f32.mrf.mxu0
        %v8571 = vadd.f32 %v8557, %v8570
        %v8572 = vpop.f32.mrf.mxu0
        %v8573 = vadd.f32 %v8559, %v8572
        %8574 = vdwg.mxu0
        %8575 = vmatpush.bf16.msra.mxu0 %v5823
        %8576 = vmatpush.bf16.msra.mxu0 %v5815
        %8577 = vmatpush.bf16.msra.mxu0 %v5807
        %8578 = vmatpush.bf16.msra.mxu0 %v5799
        %8579 = vmatpush.bf16.msra.mxu0 %v5791
        %8580 = vmatpush.bf16.msra.mxu0 %v5783
        %8581 = vmatpush.bf16.msra.mxu0 %v5775
        %8582 = vmatpush.bf16.msra.mxu0 %v5767
        %8583 = vmatmul.bf16.gmra.mxu0 %v1641
        %v8584 = vpop.f32.mrf.mxu0
        %v8585 = vadd.f32 %v8571, %v8584
        %v8586 = vpop.f32.mrf.mxu0
        %v8587 = vadd.f32 %v8573, %v8586
        %8588 = vdwg.mxu0
        %8589 = vmatpush.bf16.msra.mxu0 %v5887
        %8590 = vmatpush.bf16.msra.mxu0 %v5879
        %8591 = vmatpush.bf16.msra.mxu0 %v5871
        %8592 = vmatpush.bf16.msra.mxu0 %v5863
        %8593 = vmatpush.bf16.msra.mxu0 %v5855
        %8594 = vmatpush.bf16.msra.mxu0 %v5847
        %8595 = vmatpush.bf16.msra.mxu0 %v5839
        %8596 = vmatpush.bf16.msra.mxu0 %v5831
        %8597 = vmatmul.bf16.gmra.mxu0 %v1642
        %v8598 = vpop.f32.mrf.mxu0
        %v8599 = vadd.f32 %v8585, %v8598
        %v8600 = vpop.f32.mrf.mxu0
        %v8601 = vadd.f32 %v8587, %v8600
        %8602 = vdwg.mxu0
        %8603 = vmatpush.bf16.msra.mxu0 %v5951
        %8604 = vmatpush.bf16.msra.mxu0 %v5943
        %8605 = vmatpush.bf16.msra.mxu0 %v5935
        %8606 = vmatpush.bf16.msra.mxu0 %v5927
        %8607 = vmatpush.bf16.msra.mxu0 %v5919
        %8608 = vmatpush.bf16.msra.mxu0 %v5911
        %8609 = vmatpush.bf16.msra.mxu0 %v5903
        %8610 = vmatpush.bf16.msra.mxu0 %v5895
        %8611 = vmatmul.bf16.gmra.mxu0 %v1643
        %v8612 = vpop.f32.mrf.mxu0
        %v8613 = vadd.f32 %v8599, %v8612
        %v8614 = vpop.f32.mrf.mxu0
        %v8615 = vadd.f32 %v8601, %v8614
        %8616 = vdwg.mxu0
        %8617 = vmatpush.bf16.msra.mxu0 %v6015
        %8618 = vmatpush.bf16.msra.mxu0 %v6007
        %8619 = vmatpush.bf16.msra.mxu0 %v5999
        %8620 = vmatpush.bf16.msra.mxu0 %v5991
        %8621 = vmatpush.bf16.msra.mxu0 %v5983
        %8622 = vmatpush.bf16.msra.mxu0 %v5975
        %8623 = vmatpush.bf16.msra.mxu0 %v5967
        %8624 = vmatpush.bf16.msra.mxu0 %v5959
        %8625 = vmatmul.bf16.gmra.mxu0 %v1644
        %v8626 = vpop.f32.mrf.mxu0
        %v8627 = vadd.f32 %v8613, %v8626
        %v8628 = vpop.f32.mrf.mxu0
        %v8629 = vadd.f32 %v8615, %v8628
        %8630 = vdwg.mxu0
        %8631 = vmatpush.bf16.msra.mxu0 %v6079
        %8632 = vmatpush.bf16.msra.mxu0 %v6071
        %8633 = vmatpush.bf16.msra.mxu0 %v6063
        %8634 = vmatpush.bf16.msra.mxu0 %v6055
        %8635 = vmatpush.bf16.msra.mxu0 %v6047
        %8636 = vmatpush.bf16.msra.mxu0 %v6039
        %8637 = vmatpush.bf16.msra.mxu0 %v6031
        %8638 = vmatpush.bf16.msra.mxu0 %v6023
        %8639 = vmatmul.bf16.gmra.mxu0 %v1645
        %v8640 = vpop.f32.mrf.mxu0
        %v8641 = vadd.f32 %v8627, %v8640
        %v8642 = vpop.f32.mrf.mxu0
        %v8643 = vadd.f32 %v8629, %v8642
        %8644 = vdwg.mxu0
        %8645 = vmatpush.bf16.msra.mxu0 %v6143
        %8646 = vmatpush.bf16.msra.mxu0 %v6135
        %8647 = vmatpush.bf16.msra.mxu0 %v6127
        %8648 = vmatpush.bf16.msra.mxu0 %v6119
        %8649 = vmatpush.bf16.msra.mxu0 %v6111
        %8650 = vmatpush.bf16.msra.mxu0 %v6103
        %8651 = vmatpush.bf16.msra.mxu0 %v6095
        %8652 = vmatpush.bf16.msra.mxu0 %v6087
        %8653 = vmatmul.bf16.gmra.mxu0 %v1646
        %v8654 = vpop.f32.mrf.mxu0
        %v8655 = vadd.f32 %v8641, %v8654
        %v8656 = vpop.f32.mrf.mxu0
        %v8657 = vadd.f32 %v8643, %v8656
        %8658 = vdwg.mxu0
        %8659 = vmatpush.bf16.msra.mxu0 %v6207
        %8660 = vmatpush.bf16.msra.mxu0 %v6199
        %8661 = vmatpush.bf16.msra.mxu0 %v6191
        %8662 = vmatpush.bf16.msra.mxu0 %v6183
        %8663 = vmatpush.bf16.msra.mxu0 %v6175
        %8664 = vmatpush.bf16.msra.mxu0 %v6167
        %8665 = vmatpush.bf16.msra.mxu0 %v6159
        %8666 = vmatpush.bf16.msra.mxu0 %v6151
        %8667 = vmatmul.bf16.gmra.mxu0 %v1647
        %v8668 = vpop.f32.mrf.mxu0
        %v8669 = vadd.f32 %v8655, %v8668
        %v8670 = vpop.f32.mrf.mxu0
        %v8671 = vadd.f32 %v8657, %v8670
        %8672 = vdwg.mxu0
        %8673 = vmatpush.bf16.msra.mxu0 %v6271
        %8674 = vmatpush.bf16.msra.mxu0 %v6263
        %8675 = vmatpush.bf16.msra.mxu0 %v6255
        %8676 = vmatpush.bf16.msra.mxu0 %v6247
        %8677 = vmatpush.bf16.msra.mxu0 %v6239
        %8678 = vmatpush.bf16.msra.mxu0 %v6231
        %8679 = vmatpush.bf16.msra.mxu0 %v6223
        %8680 = vmatpush.bf16.msra.mxu0 %v6215
        %8681 = vmatmul.bf16.gmra.mxu0 %v1648
        %v8682 = vpop.f32.mrf.mxu0
        %v8683 = vadd.f32 %v8669, %v8682
        %v8684 = vpop.f32.mrf.mxu0
        %v8685 = vadd.f32 %v8671, %v8684
        %8686 = vdwg.mxu0
        %8687 = vmatpush.bf16.msra.mxu0 %v5184
        %8688 = vmatpush.bf16.msra.mxu0 %v5176
        %8689 = vmatpush.bf16.msra.mxu0 %v5168
        %8690 = vmatpush.bf16.msra.mxu0 %v5160
        %8691 = vmatpush.bf16.msra.mxu0 %v5152
        %8692 = vmatpush.bf16.msra.mxu0 %v5144
        %8693 = vmatpush.bf16.msra.mxu0 %v5136
        %8694 = vmatpush.bf16.msra.mxu0 %v5128
        %8695 = vmatmul.bf16.gmra.mxu0 %v1631
        %v8696 = vpop.f32.mrf.mxu0
        %v8697 = vadd.f32 0.0, %v8696
        %v8698 = vpop.f32.mrf.mxu0
        %v8699 = vadd.f32 0.0, %v8698
        %8700 = vdwg.mxu0
        %8701 = vmatpush.bf16.msra.mxu0 %v5248
        %8702 = vmatpush.bf16.msra.mxu0 %v5240
        %8703 = vmatpush.bf16.msra.mxu0 %v5232
        %8704 = vmatpush.bf16.msra.mxu0 %v5224
        %8705 = vmatpush.bf16.msra.mxu0 %v5216
        %8706 = vmatpush.bf16.msra.mxu0 %v5208
        %8707 = vmatpush.bf16.msra.mxu0 %v5200
        %8708 = vmatpush.bf16.msra.mxu0 %v5192
        %8709 = vmatmul.bf16.gmra.mxu0 %v1632
        %v8710 = vpop.f32.mrf.mxu0
        %v8711 = vadd.f32 %v8697, %v8710
        %v8712 = vpop.f32.mrf.mxu0
        %v8713 = vadd.f32 %v8699, %v8712
        %8714 = vdwg.mxu0
        %8715 = vmatpush.bf16.msra.mxu0 %v5312
        %8716 = vmatpush.bf16.msra.mxu0 %v5304
        %8717 = vmatpush.bf16.msra.mxu0 %v5296
        %8718 = vmatpush.bf16.msra.mxu0 %v5288
        %8719 = vmatpush.bf16.msra.mxu0 %v5280
        %8720 = vmatpush.bf16.msra.mxu0 %v5272
        %8721 = vmatpush.bf16.msra.mxu0 %v5264
        %8722 = vmatpush.bf16.msra.mxu0 %v5256
        %8723 = vmatmul.bf16.gmra.mxu0 %v1633
        %v8724 = vpop.f32.mrf.mxu0
        %v8725 = vadd.f32 %v8711, %v8724
        %v8726 = vpop.f32.mrf.mxu0
        %v8727 = vadd.f32 %v8713, %v8726
        %8728 = vdwg.mxu0
        %8729 = vmatpush.bf16.msra.mxu0 %v5376
        %8730 = vmatpush.bf16.msra.mxu0 %v5368
        %8731 = vmatpush.bf16.msra.mxu0 %v5360
        %8732 = vmatpush.bf16.msra.mxu0 %v5352
        %8733 = vmatpush.bf16.msra.mxu0 %v5344
        %8734 = vmatpush.bf16.msra.mxu0 %v5336
        %8735 = vmatpush.bf16.msra.mxu0 %v5328
        %8736 = vmatpush.bf16.msra.mxu0 %v5320
        %8737 = vmatmul.bf16.gmra.mxu0 %v1634
        %v8738 = vpop.f32.mrf.mxu0
        %v8739 = vadd.f32 %v8725, %v8738
        %v8740 = vpop.f32.mrf.mxu0
        %v8741 = vadd.f32 %v8727, %v8740
        %8742 = vdwg.mxu0
        %8743 = vmatpush.bf16.msra.mxu0 %v5440
        %8744 = vmatpush.bf16.msra.mxu0 %v5432
        %8745 = vmatpush.bf16.msra.mxu0 %v5424
        %8746 = vmatpush.bf16.msra.mxu0 %v5416
        %8747 = vmatpush.bf16.msra.mxu0 %v5408
        %8748 = vmatpush.bf16.msra.mxu0 %v5400
        %8749 = vmatpush.bf16.msra.mxu0 %v5392
        %8750 = vmatpush.bf16.msra.mxu0 %v5384
        %8751 = vmatmul.bf16.gmra.mxu0 %v1635
        %v8752 = vpop.f32.mrf.mxu0
        %v8753 = vadd.f32 %v8739, %v8752
        %v8754 = vpop.f32.mrf.mxu0
        %v8755 = vadd.f32 %v8741, %v8754
        %8756 = vdwg.mxu0
        %8757 = vmatpush.bf16.msra.mxu0 %v5504
        %8758 = vmatpush.bf16.msra.mxu0 %v5496
        %8759 = vmatpush.bf16.msra.mxu0 %v5488
        %8760 = vmatpush.bf16.msra.mxu0 %v5480
        %8761 = vmatpush.bf16.msra.mxu0 %v5472
        %8762 = vmatpush.bf16.msra.mxu0 %v5464
        %8763 = vmatpush.bf16.msra.mxu0 %v5456
        %8764 = vmatpush.bf16.msra.mxu0 %v5448
        %8765 = vmatmul.bf16.gmra.mxu0 %v1636
        %v8766 = vpop.f32.mrf.mxu0
        %v8767 = vadd.f32 %v8753, %v8766
        %v8768 = vpop.f32.mrf.mxu0
        %v8769 = vadd.f32 %v8755, %v8768
        %8770 = vdwg.mxu0
        %8771 = vmatpush.bf16.msra.mxu0 %v5568
        %8772 = vmatpush.bf16.msra.mxu0 %v5560
        %8773 = vmatpush.bf16.msra.mxu0 %v5552
        %8774 = vmatpush.bf16.msra.mxu0 %v5544
        %8775 = vmatpush.bf16.msra.mxu0 %v5536
        %8776 = vmatpush.bf16.msra.mxu0 %v5528
        %8777 = vmatpush.bf16.msra.mxu0 %v5520
        %8778 = vmatpush.bf16.msra.mxu0 %v5512
        %8779 = vmatmul.bf16.gmra.mxu0 %v1637
        %v8780 = vpop.f32.mrf.mxu0
        %v8781 = vadd.f32 %v8767, %v8780
        %v8782 = vpop.f32.mrf.mxu0
        %v8783 = vadd.f32 %v8769, %v8782
        %8784 = vdwg.mxu0
        %8785 = vmatpush.bf16.msra.mxu0 %v5632
        %8786 = vmatpush.bf16.msra.mxu0 %v5624
        %8787 = vmatpush.bf16.msra.mxu0 %v5616
        %8788 = vmatpush.bf16.msra.mxu0 %v5608
        %8789 = vmatpush.bf16.msra.mxu0 %v5600
        %8790 = vmatpush.bf16.msra.mxu0 %v5592
        %8791 = vmatpush.bf16.msra.mxu0 %v5584
        %8792 = vmatpush.bf16.msra.mxu0 %v5576
        %8793 = vmatmul.bf16.gmra.mxu0 %v1638
        %v8794 = vpop.f32.mrf.mxu0
        %v8795 = vadd.f32 %v8781, %v8794
        %v8796 = vpop.f32.mrf.mxu0
        %v8797 = vadd.f32 %v8783, %v8796
        %8798 = vdwg.mxu0
        %8799 = vmatpush.bf16.msra.mxu0 %v5696
        %8800 = vmatpush.bf16.msra.mxu0 %v5688
        %8801 = vmatpush.bf16.msra.mxu0 %v5680
        %8802 = vmatpush.bf16.msra.mxu0 %v5672
        %8803 = vmatpush.bf16.msra.mxu0 %v5664
        %8804 = vmatpush.bf16.msra.mxu0 %v5656
        %8805 = vmatpush.bf16.msra.mxu0 %v5648
        %8806 = vmatpush.bf16.msra.mxu0 %v5640
        %8807 = vmatmul.bf16.gmra.mxu0 %v1639
        %v8808 = vpop.f32.mrf.mxu0
        %v8809 = vadd.f32 %v8795, %v8808
        %v8810 = vpop.f32.mrf.mxu0
        %v8811 = vadd.f32 %v8797, %v8810
        %8812 = vdwg.mxu0
        %8813 = vmatpush.bf16.msra.mxu0 %v5760
        %8814 = vmatpush.bf16.msra.mxu0 %v5752
        %8815 = vmatpush.bf16.msra.mxu0 %v5744
        %8816 = vmatpush.bf16.msra.mxu0 %v5736
        %8817 = vmatpush.bf16.msra.mxu0 %v5728
        %8818 = vmatpush.bf16.msra.mxu0 %v5720
        %8819 = vmatpush.bf16.msra.mxu0 %v5712
        %8820 = vmatpush.bf16.msra.mxu0 %v5704
        %8821 = vmatmul.bf16.gmra.mxu0 %v1640
        %v8822 = vpop.f32.mrf.mxu0
        %v8823 = vadd.f32 %v8809, %v8822
        %v8824 = vpop.f32.mrf.mxu0
        %v8825 = vadd.f32 %v8811, %v8824
        %8826 = vdwg.mxu0
        %8827 = vmatpush.bf16.msra.mxu0 %v5824
        %8828 = vmatpush.bf16.msra.mxu0 %v5816
        %8829 = vmatpush.bf16.msra.mxu0 %v5808
        %8830 = vmatpush.bf16.msra.mxu0 %v5800
        %8831 = vmatpush.bf16.msra.mxu0 %v5792
        %8832 = vmatpush.bf16.msra.mxu0 %v5784
        %8833 = vmatpush.bf16.msra.mxu0 %v5776
        %8834 = vmatpush.bf16.msra.mxu0 %v5768
        %8835 = vmatmul.bf16.gmra.mxu0 %v1641
        %v8836 = vpop.f32.mrf.mxu0
        %v8837 = vadd.f32 %v8823, %v8836
        %v8838 = vpop.f32.mrf.mxu0
        %v8839 = vadd.f32 %v8825, %v8838
        %8840 = vdwg.mxu0
        %8841 = vmatpush.bf16.msra.mxu0 %v5888
        %8842 = vmatpush.bf16.msra.mxu0 %v5880
        %8843 = vmatpush.bf16.msra.mxu0 %v5872
        %8844 = vmatpush.bf16.msra.mxu0 %v5864
        %8845 = vmatpush.bf16.msra.mxu0 %v5856
        %8846 = vmatpush.bf16.msra.mxu0 %v5848
        %8847 = vmatpush.bf16.msra.mxu0 %v5840
        %8848 = vmatpush.bf16.msra.mxu0 %v5832
        %8849 = vmatmul.bf16.gmra.mxu0 %v1642
        %v8850 = vpop.f32.mrf.mxu0
        %v8851 = vadd.f32 %v8837, %v8850
        %v8852 = vpop.f32.mrf.mxu0
        %v8853 = vadd.f32 %v8839, %v8852
        %8854 = vdwg.mxu0
        %8855 = vmatpush.bf16.msra.mxu0 %v5952
        %8856 = vmatpush.bf16.msra.mxu0 %v5944
        %8857 = vmatpush.bf16.msra.mxu0 %v5936
        %8858 = vmatpush.bf16.msra.mxu0 %v5928
        %8859 = vmatpush.bf16.msra.mxu0 %v5920
        %8860 = vmatpush.bf16.msra.mxu0 %v5912
        %8861 = vmatpush.bf16.msra.mxu0 %v5904
        %8862 = vmatpush.bf16.msra.mxu0 %v5896
        %8863 = vmatmul.bf16.gmra.mxu0 %v1643
        %v8864 = vpop.f32.mrf.mxu0
        %v8865 = vadd.f32 %v8851, %v8864
        %v8866 = vpop.f32.mrf.mxu0
        %v8867 = vadd.f32 %v8853, %v8866
        %8868 = vdwg.mxu0
        %8869 = vmatpush.bf16.msra.mxu0 %v6016
        %8870 = vmatpush.bf16.msra.mxu0 %v6008
        %8871 = vmatpush.bf16.msra.mxu0 %v6000
        %8872 = vmatpush.bf16.msra.mxu0 %v5992
        %8873 = vmatpush.bf16.msra.mxu0 %v5984
        %8874 = vmatpush.bf16.msra.mxu0 %v5976
        %8875 = vmatpush.bf16.msra.mxu0 %v5968
        %8876 = vmatpush.bf16.msra.mxu0 %v5960
        %8877 = vmatmul.bf16.gmra.mxu0 %v1644
        %v8878 = vpop.f32.mrf.mxu0
        %v8879 = vadd.f32 %v8865, %v8878
        %v8880 = vpop.f32.mrf.mxu0
        %v8881 = vadd.f32 %v8867, %v8880
        %8882 = vdwg.mxu0
        %8883 = vmatpush.bf16.msra.mxu0 %v6080
        %8884 = vmatpush.bf16.msra.mxu0 %v6072
        %8885 = vmatpush.bf16.msra.mxu0 %v6064
        %8886 = vmatpush.bf16.msra.mxu0 %v6056
        %8887 = vmatpush.bf16.msra.mxu0 %v6048
        %8888 = vmatpush.bf16.msra.mxu0 %v6040
        %8889 = vmatpush.bf16.msra.mxu0 %v6032
        %8890 = vmatpush.bf16.msra.mxu0 %v6024
        %8891 = vmatmul.bf16.gmra.mxu0 %v1645
        %v8892 = vpop.f32.mrf.mxu0
        %v8893 = vadd.f32 %v8879, %v8892
        %v8894 = vpop.f32.mrf.mxu0
        %v8895 = vadd.f32 %v8881, %v8894
        %8896 = vdwg.mxu0
        %8897 = vmatpush.bf16.msra.mxu0 %v6144
        %8898 = vmatpush.bf16.msra.mxu0 %v6136
        %8899 = vmatpush.bf16.msra.mxu0 %v6128
        %8900 = vmatpush.bf16.msra.mxu0 %v6120
        %8901 = vmatpush.bf16.msra.mxu0 %v6112
        %8902 = vmatpush.bf16.msra.mxu0 %v6104
        %8903 = vmatpush.bf16.msra.mxu0 %v6096
        %8904 = vmatpush.bf16.msra.mxu0 %v6088
        %8905 = vmatmul.bf16.gmra.mxu0 %v1646
        %v8906 = vpop.f32.mrf.mxu0
        %v8907 = vadd.f32 %v8893, %v8906
        %v8908 = vpop.f32.mrf.mxu0
        %v8909 = vadd.f32 %v8895, %v8908
        %8910 = vdwg.mxu0
        %8911 = vmatpush.bf16.msra.mxu0 %v6208
        %8912 = vmatpush.bf16.msra.mxu0 %v6200
        %8913 = vmatpush.bf16.msra.mxu0 %v6192
        %8914 = vmatpush.bf16.msra.mxu0 %v6184
        %8915 = vmatpush.bf16.msra.mxu0 %v6176
        %8916 = vmatpush.bf16.msra.mxu0 %v6168
        %8917 = vmatpush.bf16.msra.mxu0 %v6160
        %8918 = vmatpush.bf16.msra.mxu0 %v6152
        %8919 = vmatmul.bf16.gmra.mxu0 %v1647
        %v8920 = vpop.f32.mrf.mxu0
        %v8921 = vadd.f32 %v8907, %v8920
        %v8922 = vpop.f32.mrf.mxu0
        %v8923 = vadd.f32 %v8909, %v8922
        %8924 = vdwg.mxu0
        %8925 = vmatpush.bf16.msra.mxu0 %v6272
        %8926 = vmatpush.bf16.msra.mxu0 %v6264
        %8927 = vmatpush.bf16.msra.mxu0 %v6256
        %8928 = vmatpush.bf16.msra.mxu0 %v6248
        %8929 = vmatpush.bf16.msra.mxu0 %v6240
        %8930 = vmatpush.bf16.msra.mxu0 %v6232
        %8931 = vmatpush.bf16.msra.mxu0 %v6224
        %8932 = vmatpush.bf16.msra.mxu0 %v6216
        %8933 = vmatmul.bf16.gmra.mxu0 %v1648
        %v8934 = vpop.f32.mrf.mxu0
        %v8935 = vadd.f32 %v8921, %v8934
        %v8936 = vpop.f32.mrf.mxu0
        %v8937 = vadd.f32 %v8923, %v8936
        %8938 = vdwg.mxu0
        %8939 = vmatpush.bf16.msra.mxu0 %v5185
        %8940 = vmatpush.bf16.msra.mxu0 %v5177
        %8941 = vmatpush.bf16.msra.mxu0 %v5169
        %8942 = vmatpush.bf16.msra.mxu0 %v5161
        %8943 = vmatpush.bf16.msra.mxu0 %v5153
        %8944 = vmatpush.bf16.msra.mxu0 %v5145
        %8945 = vmatpush.bf16.msra.mxu0 %v5137
        %8946 = vmatpush.bf16.msra.mxu0 %v5129
        %8947 = vmatmul.bf16.gmra.mxu0 %v1631
        %v8948 = vpop.f32.mrf.mxu0
        %v8949 = vadd.f32 0.0, %v8948
        %v8950 = vpop.f32.mrf.mxu0
        %v8951 = vadd.f32 0.0, %v8950
        %8952 = vdwg.mxu0
        %8953 = vmatpush.bf16.msra.mxu0 %v5249
        %8954 = vmatpush.bf16.msra.mxu0 %v5241
        %8955 = vmatpush.bf16.msra.mxu0 %v5233
        %8956 = vmatpush.bf16.msra.mxu0 %v5225
        %8957 = vmatpush.bf16.msra.mxu0 %v5217
        %8958 = vmatpush.bf16.msra.mxu0 %v5209
        %8959 = vmatpush.bf16.msra.mxu0 %v5201
        %8960 = vmatpush.bf16.msra.mxu0 %v5193
        %8961 = vmatmul.bf16.gmra.mxu0 %v1632
        %v8962 = vpop.f32.mrf.mxu0
        %v8963 = vadd.f32 %v8949, %v8962
        %v8964 = vpop.f32.mrf.mxu0
        %v8965 = vadd.f32 %v8951, %v8964
        %8966 = vdwg.mxu0
        %8967 = vmatpush.bf16.msra.mxu0 %v5313
        %8968 = vmatpush.bf16.msra.mxu0 %v5305
        %8969 = vmatpush.bf16.msra.mxu0 %v5297
        %8970 = vmatpush.bf16.msra.mxu0 %v5289
        %8971 = vmatpush.bf16.msra.mxu0 %v5281
        %8972 = vmatpush.bf16.msra.mxu0 %v5273
        %8973 = vmatpush.bf16.msra.mxu0 %v5265
        %8974 = vmatpush.bf16.msra.mxu0 %v5257
        %8975 = vmatmul.bf16.gmra.mxu0 %v1633
        %v8976 = vpop.f32.mrf.mxu0
        %v8977 = vadd.f32 %v8963, %v8976
        %v8978 = vpop.f32.mrf.mxu0
        %v8979 = vadd.f32 %v8965, %v8978
        %8980 = vdwg.mxu0
        %8981 = vmatpush.bf16.msra.mxu0 %v5377
        %8982 = vmatpush.bf16.msra.mxu0 %v5369
        %8983 = vmatpush.bf16.msra.mxu0 %v5361
        %8984 = vmatpush.bf16.msra.mxu0 %v5353
        %8985 = vmatpush.bf16.msra.mxu0 %v5345
        %8986 = vmatpush.bf16.msra.mxu0 %v5337
        %8987 = vmatpush.bf16.msra.mxu0 %v5329
        %8988 = vmatpush.bf16.msra.mxu0 %v5321
        %8989 = vmatmul.bf16.gmra.mxu0 %v1634
        %v8990 = vpop.f32.mrf.mxu0
        %v8991 = vadd.f32 %v8977, %v8990
        %v8992 = vpop.f32.mrf.mxu0
        %v8993 = vadd.f32 %v8979, %v8992
        %8994 = vdwg.mxu0
        %8995 = vmatpush.bf16.msra.mxu0 %v5441
        %8996 = vmatpush.bf16.msra.mxu0 %v5433
        %8997 = vmatpush.bf16.msra.mxu0 %v5425
        %8998 = vmatpush.bf16.msra.mxu0 %v5417
        %8999 = vmatpush.bf16.msra.mxu0 %v5409
        %9000 = vmatpush.bf16.msra.mxu0 %v5401
        %9001 = vmatpush.bf16.msra.mxu0 %v5393
        %9002 = vmatpush.bf16.msra.mxu0 %v5385
        %9003 = vmatmul.bf16.gmra.mxu0 %v1635
        %v9004 = vpop.f32.mrf.mxu0
        %v9005 = vadd.f32 %v8991, %v9004
        %v9006 = vpop.f32.mrf.mxu0
        %v9007 = vadd.f32 %v8993, %v9006
        %9008 = vdwg.mxu0
        %9009 = vmatpush.bf16.msra.mxu0 %v5505
        %9010 = vmatpush.bf16.msra.mxu0 %v5497
        %9011 = vmatpush.bf16.msra.mxu0 %v5489
        %9012 = vmatpush.bf16.msra.mxu0 %v5481
        %9013 = vmatpush.bf16.msra.mxu0 %v5473
        %9014 = vmatpush.bf16.msra.mxu0 %v5465
        %9015 = vmatpush.bf16.msra.mxu0 %v5457
        %9016 = vmatpush.bf16.msra.mxu0 %v5449
        %9017 = vmatmul.bf16.gmra.mxu0 %v1636
        %v9018 = vpop.f32.mrf.mxu0
        %v9019 = vadd.f32 %v9005, %v9018
        %v9020 = vpop.f32.mrf.mxu0
        %v9021 = vadd.f32 %v9007, %v9020
        %9022 = vdwg.mxu0
        %9023 = vmatpush.bf16.msra.mxu0 %v5569
        %9024 = vmatpush.bf16.msra.mxu0 %v5561
        %9025 = vmatpush.bf16.msra.mxu0 %v5553
        %9026 = vmatpush.bf16.msra.mxu0 %v5545
        %9027 = vmatpush.bf16.msra.mxu0 %v5537
        %9028 = vmatpush.bf16.msra.mxu0 %v5529
        %9029 = vmatpush.bf16.msra.mxu0 %v5521
        %9030 = vmatpush.bf16.msra.mxu0 %v5513
        %9031 = vmatmul.bf16.gmra.mxu0 %v1637
        %v9032 = vpop.f32.mrf.mxu0
        %v9033 = vadd.f32 %v9019, %v9032
        %v9034 = vpop.f32.mrf.mxu0
        %v9035 = vadd.f32 %v9021, %v9034
        %9036 = vdwg.mxu0
        %9037 = vmatpush.bf16.msra.mxu0 %v5633
        %9038 = vmatpush.bf16.msra.mxu0 %v5625
        %9039 = vmatpush.bf16.msra.mxu0 %v5617
        %9040 = vmatpush.bf16.msra.mxu0 %v5609
        %9041 = vmatpush.bf16.msra.mxu0 %v5601
        %9042 = vmatpush.bf16.msra.mxu0 %v5593
        %9043 = vmatpush.bf16.msra.mxu0 %v5585
        %9044 = vmatpush.bf16.msra.mxu0 %v5577
        %9045 = vmatmul.bf16.gmra.mxu0 %v1638
        %v9046 = vpop.f32.mrf.mxu0
        %v9047 = vadd.f32 %v9033, %v9046
        %v9048 = vpop.f32.mrf.mxu0
        %v9049 = vadd.f32 %v9035, %v9048
        %9050 = vdwg.mxu0
        %9051 = vmatpush.bf16.msra.mxu0 %v5697
        %9052 = vmatpush.bf16.msra.mxu0 %v5689
        %9053 = vmatpush.bf16.msra.mxu0 %v5681
        %9054 = vmatpush.bf16.msra.mxu0 %v5673
        %9055 = vmatpush.bf16.msra.mxu0 %v5665
        %9056 = vmatpush.bf16.msra.mxu0 %v5657
        %9057 = vmatpush.bf16.msra.mxu0 %v5649
        %9058 = vmatpush.bf16.msra.mxu0 %v5641
        %9059 = vmatmul.bf16.gmra.mxu0 %v1639
        %v9060 = vpop.f32.mrf.mxu0
        %v9061 = vadd.f32 %v9047, %v9060
        %v9062 = vpop.f32.mrf.mxu0
        %v9063 = vadd.f32 %v9049, %v9062
        %9064 = vdwg.mxu0
        %9065 = vmatpush.bf16.msra.mxu0 %v5761
        %9066 = vmatpush.bf16.msra.mxu0 %v5753
        %9067 = vmatpush.bf16.msra.mxu0 %v5745
        %9068 = vmatpush.bf16.msra.mxu0 %v5737
        %9069 = vmatpush.bf16.msra.mxu0 %v5729
        %9070 = vmatpush.bf16.msra.mxu0 %v5721
        %9071 = vmatpush.bf16.msra.mxu0 %v5713
        %9072 = vmatpush.bf16.msra.mxu0 %v5705
        %9073 = vmatmul.bf16.gmra.mxu0 %v1640
        %v9074 = vpop.f32.mrf.mxu0
        %v9075 = vadd.f32 %v9061, %v9074
        %v9076 = vpop.f32.mrf.mxu0
        %v9077 = vadd.f32 %v9063, %v9076
        %9078 = vdwg.mxu0
        %9079 = vmatpush.bf16.msra.mxu0 %v5825
        %9080 = vmatpush.bf16.msra.mxu0 %v5817
        %9081 = vmatpush.bf16.msra.mxu0 %v5809
        %9082 = vmatpush.bf16.msra.mxu0 %v5801
        %9083 = vmatpush.bf16.msra.mxu0 %v5793
        %9084 = vmatpush.bf16.msra.mxu0 %v5785
        %9085 = vmatpush.bf16.msra.mxu0 %v5777
        %9086 = vmatpush.bf16.msra.mxu0 %v5769
        %9087 = vmatmul.bf16.gmra.mxu0 %v1641
        %v9088 = vpop.f32.mrf.mxu0
        %v9089 = vadd.f32 %v9075, %v9088
        %v9090 = vpop.f32.mrf.mxu0
        %v9091 = vadd.f32 %v9077, %v9090
        %9092 = vdwg.mxu0
        %9093 = vmatpush.bf16.msra.mxu0 %v5889
        %9094 = vmatpush.bf16.msra.mxu0 %v5881
        %9095 = vmatpush.bf16.msra.mxu0 %v5873
        %9096 = vmatpush.bf16.msra.mxu0 %v5865
        %9097 = vmatpush.bf16.msra.mxu0 %v5857
        %9098 = vmatpush.bf16.msra.mxu0 %v5849
        %9099 = vmatpush.bf16.msra.mxu0 %v5841
        %9100 = vmatpush.bf16.msra.mxu0 %v5833
        %9101 = vmatmul.bf16.gmra.mxu0 %v1642
        %v9102 = vpop.f32.mrf.mxu0
        %v9103 = vadd.f32 %v9089, %v9102
        %v9104 = vpop.f32.mrf.mxu0
        %v9105 = vadd.f32 %v9091, %v9104
        %9106 = vdwg.mxu0
        %9107 = vmatpush.bf16.msra.mxu0 %v5953
        %9108 = vmatpush.bf16.msra.mxu0 %v5945
        %9109 = vmatpush.bf16.msra.mxu0 %v5937
        %9110 = vmatpush.bf16.msra.mxu0 %v5929
        %9111 = vmatpush.bf16.msra.mxu0 %v5921
        %9112 = vmatpush.bf16.msra.mxu0 %v5913
        %9113 = vmatpush.bf16.msra.mxu0 %v5905
        %9114 = vmatpush.bf16.msra.mxu0 %v5897
        %9115 = vmatmul.bf16.gmra.mxu0 %v1643
        %v9116 = vpop.f32.mrf.mxu0
        %v9117 = vadd.f32 %v9103, %v9116
        %v9118 = vpop.f32.mrf.mxu0
        %v9119 = vadd.f32 %v9105, %v9118
        %9120 = vdwg.mxu0
        %9121 = vmatpush.bf16.msra.mxu0 %v6017
        %9122 = vmatpush.bf16.msra.mxu0 %v6009
        %9123 = vmatpush.bf16.msra.mxu0 %v6001
        %9124 = vmatpush.bf16.msra.mxu0 %v5993
        %9125 = vmatpush.bf16.msra.mxu0 %v5985
        %9126 = vmatpush.bf16.msra.mxu0 %v5977
        %9127 = vmatpush.bf16.msra.mxu0 %v5969
        %9128 = vmatpush.bf16.msra.mxu0 %v5961
        %9129 = vmatmul.bf16.gmra.mxu0 %v1644
        %v9130 = vpop.f32.mrf.mxu0
        %v9131 = vadd.f32 %v9117, %v9130
        %v9132 = vpop.f32.mrf.mxu0
        %v9133 = vadd.f32 %v9119, %v9132
        %9134 = vdwg.mxu0
        %9135 = vmatpush.bf16.msra.mxu0 %v6081
        %9136 = vmatpush.bf16.msra.mxu0 %v6073
        %9137 = vmatpush.bf16.msra.mxu0 %v6065
        %9138 = vmatpush.bf16.msra.mxu0 %v6057
        %9139 = vmatpush.bf16.msra.mxu0 %v6049
        %9140 = vmatpush.bf16.msra.mxu0 %v6041
        %9141 = vmatpush.bf16.msra.mxu0 %v6033
        %9142 = vmatpush.bf16.msra.mxu0 %v6025
        %9143 = vmatmul.bf16.gmra.mxu0 %v1645
        %v9144 = vpop.f32.mrf.mxu0
        %v9145 = vadd.f32 %v9131, %v9144
        %v9146 = vpop.f32.mrf.mxu0
        %v9147 = vadd.f32 %v9133, %v9146
        %9148 = vdwg.mxu0
        %9149 = vmatpush.bf16.msra.mxu0 %v6145
        %9150 = vmatpush.bf16.msra.mxu0 %v6137
        %9151 = vmatpush.bf16.msra.mxu0 %v6129
        %9152 = vmatpush.bf16.msra.mxu0 %v6121
        %9153 = vmatpush.bf16.msra.mxu0 %v6113
        %9154 = vmatpush.bf16.msra.mxu0 %v6105
        %9155 = vmatpush.bf16.msra.mxu0 %v6097
        %9156 = vmatpush.bf16.msra.mxu0 %v6089
        %9157 = vmatmul.bf16.gmra.mxu0 %v1646
        %v9158 = vpop.f32.mrf.mxu0
        %v9159 = vadd.f32 %v9145, %v9158
        %v9160 = vpop.f32.mrf.mxu0
        %v9161 = vadd.f32 %v9147, %v9160
        %9162 = vdwg.mxu0
        %9163 = vmatpush.bf16.msra.mxu0 %v6209
        %9164 = vmatpush.bf16.msra.mxu0 %v6201
        %9165 = vmatpush.bf16.msra.mxu0 %v6193
        %9166 = vmatpush.bf16.msra.mxu0 %v6185
        %9167 = vmatpush.bf16.msra.mxu0 %v6177
        %9168 = vmatpush.bf16.msra.mxu0 %v6169
        %9169 = vmatpush.bf16.msra.mxu0 %v6161
        %9170 = vmatpush.bf16.msra.mxu0 %v6153
        %9171 = vmatmul.bf16.gmra.mxu0 %v1647
        %v9172 = vpop.f32.mrf.mxu0
        %v9173 = vadd.f32 %v9159, %v9172
        %v9174 = vpop.f32.mrf.mxu0
        %v9175 = vadd.f32 %v9161, %v9174
        %9176 = vdwg.mxu0
        %9177 = vmatpush.bf16.msra.mxu0 %v6273
        %9178 = vmatpush.bf16.msra.mxu0 %v6265
        %9179 = vmatpush.bf16.msra.mxu0 %v6257
        %9180 = vmatpush.bf16.msra.mxu0 %v6249
        %9181 = vmatpush.bf16.msra.mxu0 %v6241
        %9182 = vmatpush.bf16.msra.mxu0 %v6233
        %9183 = vmatpush.bf16.msra.mxu0 %v6225
        %9184 = vmatpush.bf16.msra.mxu0 %v6217
        %9185 = vmatmul.bf16.gmra.mxu0 %v1648
        %v9186 = vpop.f32.mrf.mxu0
        %v9187 = vadd.f32 %v9173, %v9186
        %v9188 = vpop.f32.mrf.mxu0
        %v9189 = vadd.f32 %v9175, %v9188
        %9190 = vdwg.mxu0
        %9191 = vmatpush.bf16.msra.mxu0 %v5186
        %9192 = vmatpush.bf16.msra.mxu0 %v5178
        %9193 = vmatpush.bf16.msra.mxu0 %v5170
        %9194 = vmatpush.bf16.msra.mxu0 %v5162
        %9195 = vmatpush.bf16.msra.mxu0 %v5154
        %9196 = vmatpush.bf16.msra.mxu0 %v5146
        %9197 = vmatpush.bf16.msra.mxu0 %v5138
        %9198 = vmatpush.bf16.msra.mxu0 %v5130
        %9199 = vmatmul.bf16.gmra.mxu0 %v1631
        %v9200 = vpop.f32.mrf.mxu0
        %v9201 = vadd.f32 0.0, %v9200
        %v9202 = vpop.f32.mrf.mxu0
        %v9203 = vadd.f32 0.0, %v9202
        %9204 = vdwg.mxu0
        %9205 = vmatpush.bf16.msra.mxu0 %v5250
        %9206 = vmatpush.bf16.msra.mxu0 %v5242
        %9207 = vmatpush.bf16.msra.mxu0 %v5234
        %9208 = vmatpush.bf16.msra.mxu0 %v5226
        %9209 = vmatpush.bf16.msra.mxu0 %v5218
        %9210 = vmatpush.bf16.msra.mxu0 %v5210
        %9211 = vmatpush.bf16.msra.mxu0 %v5202
        %9212 = vmatpush.bf16.msra.mxu0 %v5194
        %9213 = vmatmul.bf16.gmra.mxu0 %v1632
        %v9214 = vpop.f32.mrf.mxu0
        %v9215 = vadd.f32 %v9201, %v9214
        %v9216 = vpop.f32.mrf.mxu0
        %v9217 = vadd.f32 %v9203, %v9216
        %9218 = vdwg.mxu0
        %9219 = vmatpush.bf16.msra.mxu0 %v5314
        %9220 = vmatpush.bf16.msra.mxu0 %v5306
        %9221 = vmatpush.bf16.msra.mxu0 %v5298
        %9222 = vmatpush.bf16.msra.mxu0 %v5290
        %9223 = vmatpush.bf16.msra.mxu0 %v5282
        %9224 = vmatpush.bf16.msra.mxu0 %v5274
        %9225 = vmatpush.bf16.msra.mxu0 %v5266
        %9226 = vmatpush.bf16.msra.mxu0 %v5258
        %9227 = vmatmul.bf16.gmra.mxu0 %v1633
        %v9228 = vpop.f32.mrf.mxu0
        %v9229 = vadd.f32 %v9215, %v9228
        %v9230 = vpop.f32.mrf.mxu0
        %v9231 = vadd.f32 %v9217, %v9230
        %9232 = vdwg.mxu0
        %9233 = vmatpush.bf16.msra.mxu0 %v5378
        %9234 = vmatpush.bf16.msra.mxu0 %v5370
        %9235 = vmatpush.bf16.msra.mxu0 %v5362
        %9236 = vmatpush.bf16.msra.mxu0 %v5354
        %9237 = vmatpush.bf16.msra.mxu0 %v5346
        %9238 = vmatpush.bf16.msra.mxu0 %v5338
        %9239 = vmatpush.bf16.msra.mxu0 %v5330
        %9240 = vmatpush.bf16.msra.mxu0 %v5322
        %9241 = vmatmul.bf16.gmra.mxu0 %v1634
        %v9242 = vpop.f32.mrf.mxu0
        %v9243 = vadd.f32 %v9229, %v9242
        %v9244 = vpop.f32.mrf.mxu0
        %v9245 = vadd.f32 %v9231, %v9244
        %9246 = vdwg.mxu0
        %9247 = vmatpush.bf16.msra.mxu0 %v5442
        %9248 = vmatpush.bf16.msra.mxu0 %v5434
        %9249 = vmatpush.bf16.msra.mxu0 %v5426
        %9250 = vmatpush.bf16.msra.mxu0 %v5418
        %9251 = vmatpush.bf16.msra.mxu0 %v5410
        %9252 = vmatpush.bf16.msra.mxu0 %v5402
        %9253 = vmatpush.bf16.msra.mxu0 %v5394
        %9254 = vmatpush.bf16.msra.mxu0 %v5386
        %9255 = vmatmul.bf16.gmra.mxu0 %v1635
        %v9256 = vpop.f32.mrf.mxu0
        %v9257 = vadd.f32 %v9243, %v9256
        %v9258 = vpop.f32.mrf.mxu0
        %v9259 = vadd.f32 %v9245, %v9258
        %9260 = vdwg.mxu0
        %9261 = vmatpush.bf16.msra.mxu0 %v5506
        %9262 = vmatpush.bf16.msra.mxu0 %v5498
        %9263 = vmatpush.bf16.msra.mxu0 %v5490
        %9264 = vmatpush.bf16.msra.mxu0 %v5482
        %9265 = vmatpush.bf16.msra.mxu0 %v5474
        %9266 = vmatpush.bf16.msra.mxu0 %v5466
        %9267 = vmatpush.bf16.msra.mxu0 %v5458
        %9268 = vmatpush.bf16.msra.mxu0 %v5450
        %9269 = vmatmul.bf16.gmra.mxu0 %v1636
        %v9270 = vpop.f32.mrf.mxu0
        %v9271 = vadd.f32 %v9257, %v9270
        %v9272 = vpop.f32.mrf.mxu0
        %v9273 = vadd.f32 %v9259, %v9272
        %9274 = vdwg.mxu0
        %9275 = vmatpush.bf16.msra.mxu0 %v5570
        %9276 = vmatpush.bf16.msra.mxu0 %v5562
        %9277 = vmatpush.bf16.msra.mxu0 %v5554
        %9278 = vmatpush.bf16.msra.mxu0 %v5546
        %9279 = vmatpush.bf16.msra.mxu0 %v5538
        %9280 = vmatpush.bf16.msra.mxu0 %v5530
        %9281 = vmatpush.bf16.msra.mxu0 %v5522
        %9282 = vmatpush.bf16.msra.mxu0 %v5514
        %9283 = vmatmul.bf16.gmra.mxu0 %v1637
        %v9284 = vpop.f32.mrf.mxu0
        %v9285 = vadd.f32 %v9271, %v9284
        %v9286 = vpop.f32.mrf.mxu0
        %v9287 = vadd.f32 %v9273, %v9286
        %9288 = vdwg.mxu0
        %9289 = vmatpush.bf16.msra.mxu0 %v5634
        %9290 = vmatpush.bf16.msra.mxu0 %v5626
        %9291 = vmatpush.bf16.msra.mxu0 %v5618
        %9292 = vmatpush.bf16.msra.mxu0 %v5610
        %9293 = vmatpush.bf16.msra.mxu0 %v5602
        %9294 = vmatpush.bf16.msra.mxu0 %v5594
        %9295 = vmatpush.bf16.msra.mxu0 %v5586
        %9296 = vmatpush.bf16.msra.mxu0 %v5578
        %9297 = vmatmul.bf16.gmra.mxu0 %v1638
        %v9298 = vpop.f32.mrf.mxu0
        %v9299 = vadd.f32 %v9285, %v9298
        %v9300 = vpop.f32.mrf.mxu0
        %v9301 = vadd.f32 %v9287, %v9300
        %9302 = vdwg.mxu0
        %9303 = vmatpush.bf16.msra.mxu0 %v5698
        %9304 = vmatpush.bf16.msra.mxu0 %v5690
        %9305 = vmatpush.bf16.msra.mxu0 %v5682
        %9306 = vmatpush.bf16.msra.mxu0 %v5674
        %9307 = vmatpush.bf16.msra.mxu0 %v5666
        %9308 = vmatpush.bf16.msra.mxu0 %v5658
        %9309 = vmatpush.bf16.msra.mxu0 %v5650
        %9310 = vmatpush.bf16.msra.mxu0 %v5642
        %9311 = vmatmul.bf16.gmra.mxu0 %v1639
        %v9312 = vpop.f32.mrf.mxu0
        %v9313 = vadd.f32 %v9299, %v9312
        %v9314 = vpop.f32.mrf.mxu0
        %v9315 = vadd.f32 %v9301, %v9314
        %9316 = vdwg.mxu0
        %9317 = vmatpush.bf16.msra.mxu0 %v5762
        %9318 = vmatpush.bf16.msra.mxu0 %v5754
        %9319 = vmatpush.bf16.msra.mxu0 %v5746
        %9320 = vmatpush.bf16.msra.mxu0 %v5738
        %9321 = vmatpush.bf16.msra.mxu0 %v5730
        %9322 = vmatpush.bf16.msra.mxu0 %v5722
        %9323 = vmatpush.bf16.msra.mxu0 %v5714
        %9324 = vmatpush.bf16.msra.mxu0 %v5706
        %9325 = vmatmul.bf16.gmra.mxu0 %v1640
        %v9326 = vpop.f32.mrf.mxu0
        %v9327 = vadd.f32 %v9313, %v9326
        %v9328 = vpop.f32.mrf.mxu0
        %v9329 = vadd.f32 %v9315, %v9328
        %9330 = vdwg.mxu0
        %9331 = vmatpush.bf16.msra.mxu0 %v5826
        %9332 = vmatpush.bf16.msra.mxu0 %v5818
        %9333 = vmatpush.bf16.msra.mxu0 %v5810
        %9334 = vmatpush.bf16.msra.mxu0 %v5802
        %9335 = vmatpush.bf16.msra.mxu0 %v5794
        %9336 = vmatpush.bf16.msra.mxu0 %v5786
        %9337 = vmatpush.bf16.msra.mxu0 %v5778
        %9338 = vmatpush.bf16.msra.mxu0 %v5770
        %9339 = vmatmul.bf16.gmra.mxu0 %v1641
        %v9340 = vpop.f32.mrf.mxu0
        %v9341 = vadd.f32 %v9327, %v9340
        %v9342 = vpop.f32.mrf.mxu0
        %v9343 = vadd.f32 %v9329, %v9342
        %9344 = vdwg.mxu0
        %9345 = vmatpush.bf16.msra.mxu0 %v5890
        %9346 = vmatpush.bf16.msra.mxu0 %v5882
        %9347 = vmatpush.bf16.msra.mxu0 %v5874
        %9348 = vmatpush.bf16.msra.mxu0 %v5866
        %9349 = vmatpush.bf16.msra.mxu0 %v5858
        %9350 = vmatpush.bf16.msra.mxu0 %v5850
        %9351 = vmatpush.bf16.msra.mxu0 %v5842
        %9352 = vmatpush.bf16.msra.mxu0 %v5834
        %9353 = vmatmul.bf16.gmra.mxu0 %v1642
        %v9354 = vpop.f32.mrf.mxu0
        %v9355 = vadd.f32 %v9341, %v9354
        %v9356 = vpop.f32.mrf.mxu0
        %v9357 = vadd.f32 %v9343, %v9356
        %9358 = vdwg.mxu0
        %9359 = vmatpush.bf16.msra.mxu0 %v5954
        %9360 = vmatpush.bf16.msra.mxu0 %v5946
        %9361 = vmatpush.bf16.msra.mxu0 %v5938
        %9362 = vmatpush.bf16.msra.mxu0 %v5930
        %9363 = vmatpush.bf16.msra.mxu0 %v5922
        %9364 = vmatpush.bf16.msra.mxu0 %v5914
        %9365 = vmatpush.bf16.msra.mxu0 %v5906
        %9366 = vmatpush.bf16.msra.mxu0 %v5898
        %9367 = vmatmul.bf16.gmra.mxu0 %v1643
        %v9368 = vpop.f32.mrf.mxu0
        %v9369 = vadd.f32 %v9355, %v9368
        %v9370 = vpop.f32.mrf.mxu0
        %v9371 = vadd.f32 %v9357, %v9370
        %9372 = vdwg.mxu0
        %9373 = vmatpush.bf16.msra.mxu0 %v6018
        %9374 = vmatpush.bf16.msra.mxu0 %v6010
        %9375 = vmatpush.bf16.msra.mxu0 %v6002
        %9376 = vmatpush.bf16.msra.mxu0 %v5994
        %9377 = vmatpush.bf16.msra.mxu0 %v5986
        %9378 = vmatpush.bf16.msra.mxu0 %v5978
        %9379 = vmatpush.bf16.msra.mxu0 %v5970
        %9380 = vmatpush.bf16.msra.mxu0 %v5962
        %9381 = vmatmul.bf16.gmra.mxu0 %v1644
        %v9382 = vpop.f32.mrf.mxu0
        %v9383 = vadd.f32 %v9369, %v9382
        %v9384 = vpop.f32.mrf.mxu0
        %v9385 = vadd.f32 %v9371, %v9384
        %9386 = vdwg.mxu0
        %9387 = vmatpush.bf16.msra.mxu0 %v6082
        %9388 = vmatpush.bf16.msra.mxu0 %v6074
        %9389 = vmatpush.bf16.msra.mxu0 %v6066
        %9390 = vmatpush.bf16.msra.mxu0 %v6058
        %9391 = vmatpush.bf16.msra.mxu0 %v6050
        %9392 = vmatpush.bf16.msra.mxu0 %v6042
        %9393 = vmatpush.bf16.msra.mxu0 %v6034
        %9394 = vmatpush.bf16.msra.mxu0 %v6026
        %9395 = vmatmul.bf16.gmra.mxu0 %v1645
        %v9396 = vpop.f32.mrf.mxu0
        %v9397 = vadd.f32 %v9383, %v9396
        %v9398 = vpop.f32.mrf.mxu0
        %v9399 = vadd.f32 %v9385, %v9398
        %9400 = vdwg.mxu0
        %9401 = vmatpush.bf16.msra.mxu0 %v6146
        %9402 = vmatpush.bf16.msra.mxu0 %v6138
        %9403 = vmatpush.bf16.msra.mxu0 %v6130
        %9404 = vmatpush.bf16.msra.mxu0 %v6122
        %9405 = vmatpush.bf16.msra.mxu0 %v6114
        %9406 = vmatpush.bf16.msra.mxu0 %v6106
        %9407 = vmatpush.bf16.msra.mxu0 %v6098
        %9408 = vmatpush.bf16.msra.mxu0 %v6090
        %9409 = vmatmul.bf16.gmra.mxu0 %v1646
        %v9410 = vpop.f32.mrf.mxu0
        %v9411 = vadd.f32 %v9397, %v9410
        %v9412 = vpop.f32.mrf.mxu0
        %v9413 = vadd.f32 %v9399, %v9412
        %9414 = vdwg.mxu0
        %9415 = vmatpush.bf16.msra.mxu0 %v6210
        %9416 = vmatpush.bf16.msra.mxu0 %v6202
        %9417 = vmatpush.bf16.msra.mxu0 %v6194
        %9418 = vmatpush.bf16.msra.mxu0 %v6186
        %9419 = vmatpush.bf16.msra.mxu0 %v6178
        %9420 = vmatpush.bf16.msra.mxu0 %v6170
        %9421 = vmatpush.bf16.msra.mxu0 %v6162
        %9422 = vmatpush.bf16.msra.mxu0 %v6154
        %9423 = vmatmul.bf16.gmra.mxu0 %v1647
        %v9424 = vpop.f32.mrf.mxu0
        %v9425 = vadd.f32 %v9411, %v9424
        %v9426 = vpop.f32.mrf.mxu0
        %v9427 = vadd.f32 %v9413, %v9426
        %9428 = vdwg.mxu0
        %9429 = vmatpush.bf16.msra.mxu0 %v6274
        %9430 = vmatpush.bf16.msra.mxu0 %v6266
        %9431 = vmatpush.bf16.msra.mxu0 %v6258
        %9432 = vmatpush.bf16.msra.mxu0 %v6250
        %9433 = vmatpush.bf16.msra.mxu0 %v6242
        %9434 = vmatpush.bf16.msra.mxu0 %v6234
        %9435 = vmatpush.bf16.msra.mxu0 %v6226
        %9436 = vmatpush.bf16.msra.mxu0 %v6218
        %9437 = vmatmul.bf16.gmra.mxu0 %v1648
        %v9438 = vpop.f32.mrf.mxu0
        %v9439 = vadd.f32 %v9425, %v9438
        %v9440 = vpop.f32.mrf.mxu0
        %v9441 = vadd.f32 %v9427, %v9440
        %9442 = vdwg.mxu0
        %v9443 = vadd.f32 %v391, %v7675
        %v9444 = vadd.f32 %v392, %v7927
        %v9445 = vadd.f32 %v393, %v8179
        %v9446 = vadd.f32 %v394, %v8431
        %v9447 = vadd.f32 %v395, %v8683
        %v9448 = vadd.f32 %v396, %v8935
        %v9449 = vadd.f32 %v397, %v9187
        %v9450 = vadd.f32 %v398, %v9439
        %v9451 = vadd.f32 %v399, %v7677
        %v9452 = vadd.f32 %v400, %v7929
        %v9453 = vadd.f32 %v401, %v8181
        %v9454 = vadd.f32 %v402, %v8433
        %v9455 = vadd.f32 %v403, %v8685
        %v9456 = vadd.f32 %v404, %v8937
        %v9457 = vadd.f32 %v405, %v9189
        %v9458 = vadd.f32 %v406, %v9441
        %9459 = vst [vmem:[#allocation2] sm:$0xff] %v9443
        %9460 = vst [vmem:[#allocation2 + $0x8] sm:$0xff] %v9444
        %9461 = vst [vmem:[#allocation2 + $0x10] sm:$0xff] %v9445
        %9462 = vst [vmem:[#allocation2 + $0x18] sm:$0xff] %v9446
        %9463 = vst [vmem:[#allocation2 + $0x20] sm:$0xff] %v9447
        %9464 = vst [vmem:[#allocation2 + $0x28] sm:$0xff] %v9448
        %9465 = vst [vmem:[#allocation2 + $0x30] sm:$0xff] %v9449
        %9466 = vst [vmem:[#allocation2 + $0x38] sm:$0xff] %v9450
        %9467 = vst [vmem:[#allocation2 + $0x40] sm:$0xff] %v9451
        %9468 = vst [vmem:[#allocation2 + $0x48] sm:$0xff] %v9452
        %9469 = vst [vmem:[#allocation2 + $0x50] sm:$0xff] %v9453
        %9470 = vst [vmem:[#allocation2 + $0x58] sm:$0xff] %v9454
        %9471 = vst [vmem:[#allocation2 + $0x60] sm:$0xff] %v9455
        %9472 = vst [vmem:[#allocation2 + $0x68] sm:$0xff] %v9456
        %9473 = vst [vmem:[#allocation2 + $0x70] sm:$0xff] %v9457
        %9474 = vst [vmem:[#allocation2 + $0x78] sm:$0xff] %v9458
        %p9475 = scmp.eq.s32.totalorder %s19, 1
        // Predicated region
        $region80: #{conv2_forward.5} parent=70 // pred_check
          %p9476 = pneg %p9475
        $region81: #{conv2_forward.5} parent=70 // pred_check_branch
          %9478 = sbr.rel (%p9476) target = $region83
        $region82: #{conv2_forward.5} parent=70 // pred_region
          %v9479 = vld [vmem:[#allocation2] sm:$0xff]
          %v9480 = vld [vmem:[#allocation2 + $0x8] sm:$0xff]
          %v9481 = vld [vmem:[#allocation2 + $0x10] sm:$0xff]
          %v9482 = vld [vmem:[#allocation2 + $0x18] sm:$0xff]
          %v9483 = vld [vmem:[#allocation2 + $0x20] sm:$0xff]
          %v9484 = vld [vmem:[#allocation2 + $0x28] sm:$0xff]
          %v9485 = vld [vmem:[#allocation2 + $0x30] sm:$0xff]
          %v9486 = vld [vmem:[#allocation2 + $0x38] sm:$0xff]
          %v9487 = vld [vmem:[#allocation2 + $0x40] sm:$0xff]
          %v9488 = vld [vmem:[#allocation2 + $0x48] sm:$0xff]
          %v9489 = vld [vmem:[#allocation2 + $0x50] sm:$0xff]
          %v9490 = vld [vmem:[#allocation2 + $0x58] sm:$0xff]
          %v9491 = vld [vmem:[#allocation2 + $0x60] sm:$0xff]
          %v9492 = vld [vmem:[#allocation2 + $0x68] sm:$0xff]
          %v9493 = vld [vmem:[#allocation2 + $0x70] sm:$0xff]
          %v9494 = vld [vmem:[#allocation2 + $0x78] sm:$0xff]
          %v9495 = vld [vmem:[%s2] sm:$0xff]
          %v9497 = vperm.slane %v9495, 0
          %v9498 = vperm.slane %v9495, 1
          %v9499 = vperm.slane %v9495, 2
          %v9500 = vperm.slane %v9495, 3
          %v9501 = vperm.slane %v9495, 4
          %v9502 = vperm.slane %v9495, 5
          %v9503 = vperm.slane %v9495, 6
          %v9504 = vperm.slane %v9495, 7
          %v9513 = vadd.f32 %v9479, %v9497
          %v9514 = vadd.f32 %v9480, %v9498
          %v9515 = vadd.f32 %v9481, %v9499
          %v9516 = vadd.f32 %v9482, %v9500
          %v9517 = vadd.f32 %v9483, %v9501
          %v9518 = vadd.f32 %v9484, %v9502
          %v9519 = vadd.f32 %v9485, %v9503
          %v9520 = vadd.f32 %v9486, %v9504
          %v9521 = vadd.f32 %v9487, %v9497
          %v9522 = vadd.f32 %v9488, %v9498
          %v9523 = vadd.f32 %v9489, %v9499
          %v9524 = vadd.f32 %v9490, %v9500
          %v9525 = vadd.f32 %v9491, %v9501
          %v9526 = vadd.f32 %v9492, %v9502
          %v9527 = vadd.f32 %v9493, %v9503
          %v9528 = vadd.f32 %v9494, %v9504
          %v9529 = vmax.f32 %v9513, 0.0
          %v9530 = vmax.f32 %v9514, 0.0
          %v9531 = vmax.f32 %v9515, 0.0
          %v9532 = vmax.f32 %v9516, 0.0
          %v9533 = vmax.f32 %v9517, 0.0
          %v9534 = vmax.f32 %v9518, 0.0
          %v9535 = vmax.f32 %v9519, 0.0
          %v9536 = vmax.f32 %v9520, 0.0
          %v9537 = vmax.f32 %v9521, 0.0
          %v9538 = vmax.f32 %v9522, 0.0
          %v9539 = vmax.f32 %v9523, 0.0
          %v9540 = vmax.f32 %v9524, 0.0
          %v9541 = vmax.f32 %v9525, 0.0
          %v9542 = vmax.f32 %v9526, 0.0
          %v9543 = vmax.f32 %v9527, 0.0
          %v9544 = vmax.f32 %v9528, 0.0
          %v9545 = vld [vmem:[%s3] sm:$0xff]
          %v9546 = vld [vmem:[%s3 + $0x8] sm:$0xff]
          %v9547 = vld [vmem:[%s3 + $0x10] sm:$0xff]
          %v9548 = vld [vmem:[%s3 + $0x18] sm:$0xff]
          %v9549 = vld [vmem:[%s3 + $0x20] sm:$0xff]
          %v9550 = vld [vmem:[%s3 + $0x28] sm:$0xff]
          %v9551 = vld [vmem:[%s3 + $0x30] sm:$0xff]
          %v9552 = vld [vmem:[%s3 + $0x38] sm:$0xff]
          %v9553 = vld [vmem:[%s3 + $0x40] sm:$0xff]
          %v9554 = vld [vmem:[%s3 + $0x48] sm:$0xff]
          %v9555 = vld [vmem:[%s3 + $0x50] sm:$0xff]
          %v9556 = vld [vmem:[%s3 + $0x58] sm:$0xff]
          %v9557 = vld [vmem:[%s3 + $0x60] sm:$0xff]
          %v9558 = vld [vmem:[%s3 + $0x68] sm:$0xff]
          %v9559 = vld [vmem:[%s3 + $0x70] sm:$0xff]
          %v9560 = vld [vmem:[%s3 + $0x78] sm:$0xff]
          %v9561 = vld [vmem:[%s3 + $0x80] sm:$0xff]
          %v9562 = vld [vmem:[%s3 + $0x88] sm:$0xff]
          %v9563 = vld [vmem:[%s3 + $0x90] sm:$0xff]
          %v9564 = vld [vmem:[%s3 + $0x98] sm:$0xff]
          %v9565 = vld [vmem:[%s3 + $0xa0] sm:$0xff]
          %v9566 = vld [vmem:[%s3 + $0xa8] sm:$0xff]
          %v9567 = vld [vmem:[%s3 + $0xb0] sm:$0xff]
          %v9568 = vld [vmem:[%s3 + $0xb8] sm:$0xff]
          %v9569 = vld [vmem:[%s3 + $0xc0] sm:$0xff]
          %v9570 = vld [vmem:[%s3 + $0xc8] sm:$0xff]
          %v9571 = vld [vmem:[%s3 + $0xd0] sm:$0xff]
          %v9572 = vld [vmem:[%s3 + $0xd8] sm:$0xff]
          %v9573 = vld [vmem:[%s3 + $0xe0] sm:$0xff]
          %v9574 = vld [vmem:[%s3 + $0xe8] sm:$0xff]
          %v9575 = vld [vmem:[%s3 + $0xf0] sm:$0xff]
          %v9576 = vld [vmem:[%s3 + $0xf8] sm:$0xff]
          %v9577 = vld [vmem:[%s3 + $0x100] sm:$0xff]
          %v9578 = vld [vmem:[%s3 + $0x108] sm:$0xff]
          %v9579 = vld [vmem:[%s3 + $0x110] sm:$0xff]
          %v9580 = vld [vmem:[%s3 + $0x118] sm:$0xff]
          %v9581 = vld [vmem:[%s3 + $0x120] sm:$0xff]
          %v9582 = vld [vmem:[%s3 + $0x128] sm:$0xff]
          %v9583 = vld [vmem:[%s3 + $0x130] sm:$0xff]
          %v9584 = vld [vmem:[%s3 + $0x138] sm:$0xff]
          %v9585 = vld [vmem:[%s3 + $0x140] sm:$0xff]
          %v9586 = vld [vmem:[%s3 + $0x148] sm:$0xff]
          %v9587 = vld [vmem:[%s3 + $0x150] sm:$0xff]
          %v9588 = vld [vmem:[%s3 + $0x158] sm:$0xff]
          %v9589 = vld [vmem:[%s3 + $0x160] sm:$0xff]
          %v9590 = vld [vmem:[%s3 + $0x168] sm:$0xff]
          %v9591 = vld [vmem:[%s3 + $0x170] sm:$0xff]
          %v9592 = vld [vmem:[%s3 + $0x178] sm:$0xff]
          %v9593 = vld [vmem:[%s3 + $0x180] sm:$0xff]
          %v9594 = vld [vmem:[%s3 + $0x188] sm:$0xff]
          %v9595 = vld [vmem:[%s3 + $0x190] sm:$0xff]
          %v9596 = vld [vmem:[%s3 + $0x198] sm:$0xff]
          %v9597 = vld [vmem:[%s3 + $0x1a0] sm:$0xff]
          %v9598 = vld [vmem:[%s3 + $0x1a8] sm:$0xff]
          %v9599 = vld [vmem:[%s3 + $0x1b0] sm:$0xff]
          %v9600 = vld [vmem:[%s3 + $0x1b8] sm:$0xff]
          %v9601 = vld [vmem:[%s3 + $0x1c0] sm:$0xff]
          %v9602 = vld [vmem:[%s3 + $0x1c8] sm:$0xff]
          %v9603 = vld [vmem:[%s3 + $0x1d0] sm:$0xff]
          %v9604 = vld [vmem:[%s3 + $0x1d8] sm:$0xff]
          %v9605 = vld [vmem:[%s3 + $0x1e0] sm:$0xff]
          %v9606 = vld [vmem:[%s3 + $0x1e8] sm:$0xff]
          %v9607 = vld [vmem:[%s3 + $0x1f0] sm:$0xff]
          %v9608 = vld [vmem:[%s3 + $0x1f8] sm:$0xff]
          %v9609 = vld [vmem:[%s3 + $0x200] sm:$0xff]
          %v9610 = vld [vmem:[%s3 + $0x208] sm:$0xff]
          %v9611 = vld [vmem:[%s3 + $0x210] sm:$0xff]
          %v9612 = vld [vmem:[%s3 + $0x218] sm:$0xff]
          %v9613 = vld [vmem:[%s3 + $0x220] sm:$0xff]
          %v9614 = vld [vmem:[%s3 + $0x228] sm:$0xff]
          %v9615 = vld [vmem:[%s3 + $0x230] sm:$0xff]
          %v9616 = vld [vmem:[%s3 + $0x238] sm:$0xff]
          %v9617 = vld [vmem:[%s3 + $0x240] sm:$0xff]
          %v9618 = vld [vmem:[%s3 + $0x248] sm:$0xff]
          %v9619 = vld [vmem:[%s3 + $0x250] sm:$0xff]
          %v9620 = vld [vmem:[%s3 + $0x258] sm:$0xff]
          %v9621 = vld [vmem:[%s3 + $0x260] sm:$0xff]
          %v9622 = vld [vmem:[%s3 + $0x268] sm:$0xff]
          %v9623 = vld [vmem:[%s3 + $0x270] sm:$0xff]
          %v9624 = vld [vmem:[%s3 + $0x278] sm:$0xff]
          %v9625 = vld [vmem:[%s3 + $0x280] sm:$0xff]
          %v9626 = vld [vmem:[%s3 + $0x288] sm:$0xff]
          %v9627 = vld [vmem:[%s3 + $0x290] sm:$0xff]
          %v9628 = vld [vmem:[%s3 + $0x298] sm:$0xff]
          %v9629 = vld [vmem:[%s3 + $0x2a0] sm:$0xff]
          %v9630 = vld [vmem:[%s3 + $0x2a8] sm:$0xff]
          %v9631 = vld [vmem:[%s3 + $0x2b0] sm:$0xff]
          %v9632 = vld [vmem:[%s3 + $0x2b8] sm:$0xff]
          %v9633 = vld [vmem:[%s3 + $0x2c0] sm:$0xff]
          %v9634 = vld [vmem:[%s3 + $0x2c8] sm:$0xff]
          %v9635 = vld [vmem:[%s3 + $0x2d0] sm:$0xff]
          %v9636 = vld [vmem:[%s3 + $0x2d8] sm:$0xff]
          %v9637 = vld [vmem:[%s3 + $0x2e0] sm:$0xff]
          %v9638 = vld [vmem:[%s3 + $0x2e8] sm:$0xff]
          %v9639 = vld [vmem:[%s3 + $0x2f0] sm:$0xff]
          %v9640 = vld [vmem:[%s3 + $0x2f8] sm:$0xff]
          %v9641 = vld [vmem:[%s3 + $0x300] sm:$0xff]
          %v9642 = vld [vmem:[%s3 + $0x308] sm:$0xff]
          %v9643 = vld [vmem:[%s3 + $0x310] sm:$0xff]
          %v9644 = vld [vmem:[%s3 + $0x318] sm:$0xff]
          %v9645 = vld [vmem:[%s3 + $0x320] sm:$0xff]
          %v9646 = vld [vmem:[%s3 + $0x328] sm:$0xff]
          %v9647 = vld [vmem:[%s3 + $0x330] sm:$0xff]
          %v9648 = vld [vmem:[%s3 + $0x338] sm:$0xff]
          %v9649 = vld [vmem:[%s3 + $0x340] sm:$0xff]
          %v9650 = vld [vmem:[%s3 + $0x348] sm:$0xff]
          %v9651 = vld [vmem:[%s3 + $0x350] sm:$0xff]
          %v9652 = vld [vmem:[%s3 + $0x358] sm:$0xff]
          %v9653 = vld [vmem:[%s3 + $0x360] sm:$0xff]
          %v9654 = vld [vmem:[%s3 + $0x368] sm:$0xff]
          %v9655 = vld [vmem:[%s3 + $0x370] sm:$0xff]
          %v9656 = vld [vmem:[%s3 + $0x378] sm:$0xff]
          %v9657 = vld [vmem:[%s3 + $0x380] sm:$0xff]
          %v9658 = vld [vmem:[%s3 + $0x388] sm:$0xff]
          %v9659 = vld [vmem:[%s3 + $0x390] sm:$0xff]
          %v9660 = vld [vmem:[%s3 + $0x398] sm:$0xff]
          %v9661 = vld [vmem:[%s3 + $0x3a0] sm:$0xff]
          %v9662 = vld [vmem:[%s3 + $0x3a8] sm:$0xff]
          %v9663 = vld [vmem:[%s3 + $0x3b0] sm:$0xff]
          %v9664 = vld [vmem:[%s3 + $0x3b8] sm:$0xff]
          %v9665 = vld [vmem:[%s3 + $0x3c0] sm:$0xff]
          %v9666 = vld [vmem:[%s3 + $0x3c8] sm:$0xff]
          %v9667 = vld [vmem:[%s3 + $0x3d0] sm:$0xff]
          %v9668 = vld [vmem:[%s3 + $0x3d8] sm:$0xff]
          %v9669 = vld [vmem:[%s3 + $0x3e0] sm:$0xff]
          %v9670 = vld [vmem:[%s3 + $0x3e8] sm:$0xff]
          %v9671 = vld [vmem:[%s3 + $0x3f0] sm:$0xff]
          %v9672 = vld [vmem:[%s3 + $0x3f8] sm:$0xff]
          %9673 = vmatpush.msra.mxu0 %v9560
          %9674 = vmatpush.msra.mxu0 %v9559
          %9675 = vmatpush.msra.mxu0 %v9558
          %9676 = vmatpush.msra.mxu0 %v9557
          %9677 = vmatpush.msra.mxu0 %v9556
          %9678 = vmatpush.msra.mxu0 %v9555
          %9679 = vmatpush.msra.mxu0 %v9554
          %9680 = vmatpush.msra.mxu0 %v9553
          %9681 = vmatpush.msra.mxu0 %v9552
          %9682 = vmatpush.msra.mxu0 %v9551
          %9683 = vmatpush.msra.mxu0 %v9550
          %9684 = vmatpush.msra.mxu0 %v9549
          %9685 = vmatpush.msra.mxu0 %v9548
          %9686 = vmatpush.msra.mxu0 %v9547
          %9687 = vmatpush.msra.mxu0 %v9546
          %9688 = vmatpush.msra.mxu0 %v9545
          %9689 = vmatmul.f32.gmra.mxu0 %v9529
          %v9690 = vpop.f32.mrf.mxu0
          %v9691 = vadd.f32 0.0, %v9690
          %9692 = vmatmul.f32.gmra.mxu0 %v9537
          %v9693 = vpop.f32.mrf.mxu0
          %v9694 = vadd.f32 0.0, %v9693
          %9695 = vdwg.mxu0
          %9696 = vmatpush.msra.mxu0 %v9576
          %9697 = vmatpush.msra.mxu0 %v9575
          %9698 = vmatpush.msra.mxu0 %v9574
          %9699 = vmatpush.msra.mxu0 %v9573
          %9700 = vmatpush.msra.mxu0 %v9572
          %9701 = vmatpush.msra.mxu0 %v9571
          %9702 = vmatpush.msra.mxu0 %v9570
          %9703 = vmatpush.msra.mxu0 %v9569
          %9704 = vmatpush.msra.mxu0 %v9568
          %9705 = vmatpush.msra.mxu0 %v9567
          %9706 = vmatpush.msra.mxu0 %v9566
          %9707 = vmatpush.msra.mxu0 %v9565
          %9708 = vmatpush.msra.mxu0 %v9564
          %9709 = vmatpush.msra.mxu0 %v9563
          %9710 = vmatpush.msra.mxu0 %v9562
          %9711 = vmatpush.msra.mxu0 %v9561
          %9712 = vmatmul.f32.gmra.mxu0 %v9530
          %v9713 = vpop.f32.mrf.mxu0
          %v9714 = vadd.f32 %v9691, %v9713
          %9715 = vmatmul.f32.gmra.mxu0 %v9538
          %v9716 = vpop.f32.mrf.mxu0
          %v9717 = vadd.f32 %v9694, %v9716
          %9718 = vdwg.mxu0
          %9719 = vmatpush.msra.mxu0 %v9592
          %9720 = vmatpush.msra.mxu0 %v9591
          %9721 = vmatpush.msra.mxu0 %v9590
          %9722 = vmatpush.msra.mxu0 %v9589
          %9723 = vmatpush.msra.mxu0 %v9588
          %9724 = vmatpush.msra.mxu0 %v9587
          %9725 = vmatpush.msra.mxu0 %v9586
          %9726 = vmatpush.msra.mxu0 %v9585
          %9727 = vmatpush.msra.mxu0 %v9584
          %9728 = vmatpush.msra.mxu0 %v9583
          %9729 = vmatpush.msra.mxu0 %v9582
          %9730 = vmatpush.msra.mxu0 %v9581
          %9731 = vmatpush.msra.mxu0 %v9580
          %9732 = vmatpush.msra.mxu0 %v9579
          %9733 = vmatpush.msra.mxu0 %v9578
          %9734 = vmatpush.msra.mxu0 %v9577
          %9735 = vmatmul.f32.gmra.mxu0 %v9531
          %v9736 = vpop.f32.mrf.mxu0
          %v9737 = vadd.f32 %v9714, %v9736
          %9738 = vmatmul.f32.gmra.mxu0 %v9539
          %v9739 = vpop.f32.mrf.mxu0
          %v9740 = vadd.f32 %v9717, %v9739
          %9741 = vdwg.mxu0
          %9742 = vmatpush.msra.mxu0 %v9608
          %9743 = vmatpush.msra.mxu0 %v9607
          %9744 = vmatpush.msra.mxu0 %v9606
          %9745 = vmatpush.msra.mxu0 %v9605
          %9746 = vmatpush.msra.mxu0 %v9604
          %9747 = vmatpush.msra.mxu0 %v9603
          %9748 = vmatpush.msra.mxu0 %v9602
          %9749 = vmatpush.msra.mxu0 %v9601
          %9750 = vmatpush.msra.mxu0 %v9600
          %9751 = vmatpush.msra.mxu0 %v9599
          %9752 = vmatpush.msra.mxu0 %v9598
          %9753 = vmatpush.msra.mxu0 %v9597
          %9754 = vmatpush.msra.mxu0 %v9596
          %9755 = vmatpush.msra.mxu0 %v9595
          %9756 = vmatpush.msra.mxu0 %v9594
          %9757 = vmatpush.msra.mxu0 %v9593
          %9758 = vmatmul.f32.gmra.mxu0 %v9532
          %v9759 = vpop.f32.mrf.mxu0
          %v9760 = vadd.f32 %v9737, %v9759
          %9761 = vmatmul.f32.gmra.mxu0 %v9540
          %v9762 = vpop.f32.mrf.mxu0
          %v9763 = vadd.f32 %v9740, %v9762
          %9764 = vdwg.mxu0
          %9765 = vmatpush.msra.mxu0 %v9624
          %9766 = vmatpush.msra.mxu0 %v9623
          %9767 = vmatpush.msra.mxu0 %v9622
          %9768 = vmatpush.msra.mxu0 %v9621
          %9769 = vmatpush.msra.mxu0 %v9620
          %9770 = vmatpush.msra.mxu0 %v9619
          %9771 = vmatpush.msra.mxu0 %v9618
          %9772 = vmatpush.msra.mxu0 %v9617
          %9773 = vmatpush.msra.mxu0 %v9616
          %9774 = vmatpush.msra.mxu0 %v9615
          %9775 = vmatpush.msra.mxu0 %v9614
          %9776 = vmatpush.msra.mxu0 %v9613
          %9777 = vmatpush.msra.mxu0 %v9612
          %9778 = vmatpush.msra.mxu0 %v9611
          %9779 = vmatpush.msra.mxu0 %v9610
          %9780 = vmatpush.msra.mxu0 %v9609
          %9781 = vmatmul.f32.gmra.mxu0 %v9533
          %v9782 = vpop.f32.mrf.mxu0
          %v9783 = vadd.f32 %v9760, %v9782
          %9784 = vmatmul.f32.gmra.mxu0 %v9541
          %v9785 = vpop.f32.mrf.mxu0
          %v9786 = vadd.f32 %v9763, %v9785
          %9787 = vdwg.mxu0
          %9788 = vmatpush.msra.mxu0 %v9640
          %9789 = vmatpush.msra.mxu0 %v9639
          %9790 = vmatpush.msra.mxu0 %v9638
          %9791 = vmatpush.msra.mxu0 %v9637
          %9792 = vmatpush.msra.mxu0 %v9636
          %9793 = vmatpush.msra.mxu0 %v9635
          %9794 = vmatpush.msra.mxu0 %v9634
          %9795 = vmatpush.msra.mxu0 %v9633
          %9796 = vmatpush.msra.mxu0 %v9632
          %9797 = vmatpush.msra.mxu0 %v9631
          %9798 = vmatpush.msra.mxu0 %v9630
          %9799 = vmatpush.msra.mxu0 %v9629
          %9800 = vmatpush.msra.mxu0 %v9628
          %9801 = vmatpush.msra.mxu0 %v9627
          %9802 = vmatpush.msra.mxu0 %v9626
          %9803 = vmatpush.msra.mxu0 %v9625
          %9804 = vmatmul.f32.gmra.mxu0 %v9534
          %v9805 = vpop.f32.mrf.mxu0
          %v9806 = vadd.f32 %v9783, %v9805
          %9807 = vmatmul.f32.gmra.mxu0 %v9542
          %v9808 = vpop.f32.mrf.mxu0
          %v9809 = vadd.f32 %v9786, %v9808
          %9810 = vdwg.mxu0
          %9811 = vmatpush.msra.mxu0 %v9656
          %9812 = vmatpush.msra.mxu0 %v9655
          %9813 = vmatpush.msra.mxu0 %v9654
          %9814 = vmatpush.msra.mxu0 %v9653
          %9815 = vmatpush.msra.mxu0 %v9652
          %9816 = vmatpush.msra.mxu0 %v9651
          %9817 = vmatpush.msra.mxu0 %v9650
          %9818 = vmatpush.msra.mxu0 %v9649
          %9819 = vmatpush.msra.mxu0 %v9648
          %9820 = vmatpush.msra.mxu0 %v9647
          %9821 = vmatpush.msra.mxu0 %v9646
          %9822 = vmatpush.msra.mxu0 %v9645
          %9823 = vmatpush.msra.mxu0 %v9644
          %9824 = vmatpush.msra.mxu0 %v9643
          %9825 = vmatpush.msra.mxu0 %v9642
          %9826 = vmatpush.msra.mxu0 %v9641
          %9827 = vmatmul.f32.gmra.mxu0 %v9535
          %v9828 = vpop.f32.mrf.mxu0
          %v9829 = vadd.f32 %v9806, %v9828
          %9830 = vmatmul.f32.gmra.mxu0 %v9543
          %v9831 = vpop.f32.mrf.mxu0
          %v9832 = vadd.f32 %v9809, %v9831
          %9833 = vdwg.mxu0
          %9834 = vmatpush.msra.mxu0 %v9672
          %9835 = vmatpush.msra.mxu0 %v9671
          %9836 = vmatpush.msra.mxu0 %v9670
          %9837 = vmatpush.msra.mxu0 %v9669
          %9838 = vmatpush.msra.mxu0 %v9668
          %9839 = vmatpush.msra.mxu0 %v9667
          %9840 = vmatpush.msra.mxu0 %v9666
          %9841 = vmatpush.msra.mxu0 %v9665
          %9842 = vmatpush.msra.mxu0 %v9664
          %9843 = vmatpush.msra.mxu0 %v9663
          %9844 = vmatpush.msra.mxu0 %v9662
          %9845 = vmatpush.msra.mxu0 %v9661
          %9846 = vmatpush.msra.mxu0 %v9660
          %9847 = vmatpush.msra.mxu0 %v9659
          %9848 = vmatpush.msra.mxu0 %v9658
          %9849 = vmatpush.msra.mxu0 %v9657
          %9850 = vmatmul.f32.gmra.mxu0 %v9536
          %v9851 = vpop.f32.mrf.mxu0
          %v9852 = vadd.f32 %v9829, %v9851
          %9853 = vmatmul.f32.gmra.mxu0 %v9544
          %v9854 = vpop.f32.mrf.mxu0
          %v9855 = vadd.f32 %v9832, %v9854
          %9856 = vdwg.mxu0
          %v9857 = vld [vmem:[%s4] sm:$0x1]
          %v9859 = vperm.slane %v9857, 0
          %v9861 = vmul.f32 %v9852, %v9859
          %v9862 = vmul.f32 %v9855, %v9859
          %v9863 = vld [vmem:[%s5] sm:$0x1]
          %v9865 = vperm.slane %v9863, 0
          %v9867 = vadd.f32 %v9861, %v9865
          %v9868 = vadd.f32 %v9862, %v9865
          %v9869 = vmax.f32 %v9867, 0.0
          %v9870 = vmax.f32 %v9868, 0.0
          %v9871 = vld [vmem:[%s6] sm:$0xff]
          %v9872 = vld [vmem:[%s6 + $0x8] sm:$0xff]
          %v9873 = vld [vmem:[%s6 + $0x10] sm:$0xff]
          %v9874 = vld [vmem:[%s6 + $0x18] sm:$0xff]
          %v9875 = vld [vmem:[%s6 + $0x20] sm:$0xff]
          %v9876 = vld [vmem:[%s6 + $0x28] sm:$0xff]
          %v9877 = vld [vmem:[%s6 + $0x30] sm:$0xff]
          %v9878 = vld [vmem:[%s6 + $0x38] sm:$0xff]
          %v9879 = vld [vmem:[%s6 + $0x40] sm:$0xff]
          %v9880 = vld [vmem:[%s6 + $0x48] sm:$0xff]
          %v9881 = vld [vmem:[%s6 + $0x50] sm:$0xff]
          %v9882 = vld [vmem:[%s6 + $0x58] sm:$0xff]
          %v9883 = vld [vmem:[%s6 + $0x60] sm:$0xff]
          %v9884 = vld [vmem:[%s6 + $0x68] sm:$0xff]
          %v9885 = vld [vmem:[%s6 + $0x70] sm:$0xff]
          %v9886 = vld [vmem:[%s6 + $0x78] sm:$0xff]
          %v9887 = vld [vmem:[%s7] sm:$0x1]
          %v9889 = vperm.slane %v9887, 0
          %9891 = vmatpush.msra.mxu0 %v9886
          %9892 = vmatpush.msra.mxu0 %v9885
          %9893 = vmatpush.msra.mxu0 %v9884
          %9894 = vmatpush.msra.mxu0 %v9883
          %9895 = vmatpush.msra.mxu0 %v9882
          %9896 = vmatpush.msra.mxu0 %v9881
          %9897 = vmatpush.msra.mxu0 %v9880
          %9898 = vmatpush.msra.mxu0 %v9879
          %9899 = vmatpush.msra.mxu0 %v9878
          %9900 = vmatpush.msra.mxu0 %v9877
          %9901 = vmatpush.msra.mxu0 %v9876
          %9902 = vmatpush.msra.mxu0 %v9875
          %9903 = vmatpush.msra.mxu0 %v9874
          %9904 = vmatpush.msra.mxu0 %v9873
          %9905 = vmatpush.msra.mxu0 %v9872
          %9906 = vmatpush.msra.mxu0 %v9871
          %9907 = vmatmul.f32.gmra.mxu0 %v9869
          %v9908 = vpop.f32.mrf.mxu0
          %v9909 = vadd.f32 %v9889, %v9908
          %9910 = vmatmul.f32.gmra.mxu0 %v9870
          %v9911 = vpop.f32.mrf.mxu0
          %v9912 = vadd.f32 %v9889, %v9911
          %9913 = vdwg.mxu0
          %9914 = vmax.xlane.f32.xlu0 %v9909
          %v9915 = vpop.xlane.xlu0 %9914
          %9916 = vmax.xlane.f32.xlu0 %v9912
          %v9917 = vpop.xlane.xlu0 %9916
          %v9918 = vsub.f32 %v9909, %v9915
          %v9919 = vsub.f32 %v9912, %v9917
          %v9920 = vmul.f32 %v9918, 1.442695
          %v9921 = vpow.pop %v9920
          %v9922 = vmul.f32 %v9919, 1.442695
          %v9923 = vpow.pop %v9922
          %9924 = vadd.xlane.f32.xlu0 %v9921
          %v9925 = vpop.xlane.xlu0 %9924
          %9926 = vadd.xlane.f32.xlu0 %v9923
          %v9927 = vpop.xlane.xlu0 %9926
          %v9928 = vrcp.pop %v9925
          %v9929 = vmul.f32 %v9925, %v9928
          %v9930 = vsub.f32 1.0, %v9929
          %v9931 = vmul.f32 %v9928, %v9930
          %v9932 = vadd.f32 %v9928, %v9931
          %vm9933 = vweird.f32 %v9925
          %vm9934 = vweird.f32 %v9928
          %vm9935 = vmor %vm9933, %vm9934
          %v9936 = vsel %vm9935, %v9928, %v9932
          %v9937 = vand.u32 2147483647, %v9925
          %vm9938 = vcmp.eq.f32.partialorder %v9937, 8.507059e+37
          %v9939 = vand.u32 %v9925, 2147483648
          %v9940 = vor.u32 1.1754944e-38, %v9939
          %v9941 = vsel %vm9938, %v9940, %v9936
          %v9942 = vmul.f32 %v9921, %v9941
          %v9943 = vrcp.pop %v9927
          %v9944 = vmul.f32 %v9927, %v9943
          %v9945 = vsub.f32 1.0, %v9944
          %v9946 = vmul.f32 %v9943, %v9945
          %v9947 = vadd.f32 %v9943, %v9946
          %vm9948 = vweird.f32 %v9927
          %vm9949 = vweird.f32 %v9943
          %vm9950 = vmor %vm9948, %vm9949
          %v9951 = vsel %vm9950, %v9943, %v9947
          %v9952 = vand.u32 2147483647, %v9927
          %vm9953 = vcmp.eq.f32.partialorder %v9952, 8.507059e+37
          %v9954 = vand.u32 %v9927, 2147483648
          %v9955 = vor.u32 1.1754944e-38, %v9954
          %v9956 = vsel %vm9953, %v9955, %v9951
          %v9957 = vmul.f32 %v9923, %v9956
          %9958 = vst [vmem:[%s8] sm:$0xff] %v9942
          %9959 = vst [vmem:[%s8 + $0x8] sm:$0xff] %v9957
        $region83: #{conv2_forward.5} parent=70 // pred_fallthru
          _
        // Predicated region
        $region84: #{conv2_forward.5} parent=70 // pred_check
          %p9960 = pneg %p210
        $region85: #{conv2_forward.5} parent=70 // pred_check_branch
          %9962 = sbr.rel (%p9960) target = $region87
        $region86: #{conv2_forward.5} parent=70 // pred_region
          _
        $region87: #{conv2_forward.5} parent=70 // pred_fallthru
          _
        // Predicated region
        $region88: #{conv2_forward.5} parent=70 // pred_check
          %p9963 = pneg %p210
        $region89: #{conv2_forward.5} parent=70 // pred_check_branch
          %9965 = sbr.rel (%p9963) target = $region91
        $region90: #{conv2_forward.5} parent=70 // pred_region
          _
        $region91: #{conv2_forward.5} parent=70 // pred_fallthru
          _
      $region71: #{conv2_forward.5} parent=5 // pred_fallthru
        _
      %p9966 = scmp.le.s32.totalorder 2, %s14
      // Predicated region
      $region92: #{conv2_forward.5} parent=5 // pred_check
        %p9967 = pneg %p9966
      $region93: #{conv2_forward.5} parent=5 // pred_check_branch
        %9969 = sbr.rel (%p9967) target = $region95
      $region94: #{conv2_forward.5} parent=5 // pred_region
        %s9970 = ssub.s32 %s14, 2
      $region95: #{conv2_forward.5} parent=5 // pred_fallthru
        _
    $region6: #{conv2_forward.5} parent=1 // loop_footer
      %s18 = sadd.s32 1, %s14
    $region7: #{conv2_forward.5} parent=1 // loop_footer_branch
      %13 = sbr.rel target = $region3
    $region8: #{conv2_forward.5} parent=1 // loop_exit
      _

</llo_original>
